<compile_context>
chip_gen: v7x
topology: tpu7x:2x2x1
jax: 0.10.0
libtpu: 0.0.40
codegen_flags: <defaults>
</compile_context>

<pallas_src>
import functools
import math

import jax
import jax.numpy as jnp
from jax.experimental import pallas as pl
from jax.experimental.pallas import tpu as pltpu


LEAKY_SLOPE = 0.1   # nn.LeakyReLU(0.1)
BN_EPS = 1e-5
CPAD = 8            # Cin=3 zero-padded to 8 (lane-friendly x tiles / layer-1 weight)


def _round_up(v, m):
    return (v + m - 1) // m * m


def _tpu_kind():
    try:
        return jax.devices()[0].device_kind.lower()
    except Exception:
        return ""


def _auto_flags():
    kind = _tpu_kind()
    is_v5e = ("v5e" in kind) or ("v5 lite" in kind) or ("v5lite" in kind)
    is_v7x = "v7" in kind
    return {
        "bf16_epilogue": not is_v5e,   # v6e/v7x VPUs do bf16; v5e does not
        "layer1_on_vpu": is_v5e,       # v5e is MXU-bound; K=3 layer wastes a full pass
        "is_v7x": is_v7x,              # 2 TensorCores / 64 MiB VMEM
    }


def _pick_tb(B, tile_b, want_multi):
    """Largest divisor of B <= tile_b; on v7x prefer >=2 batch steps (2 TensorCores)."""
    divs = [d for d in range(1, B + 1) if B % d == 0 and d <= max(1, tile_b)]
    tb = max(divs)
    if want_multi and B // tb < 2:
        multi = [d for d in divs if B // d >= 2]
        if multi:
            tb = max(multi)
    return tb


def _pointnet_kernel(x_ref, eps_ref,
                     w1_ref, b1_ref, w2_ref, b2_ref, w3_ref, b3_ref,
                     w4_ref, b4_ref, w5_ref, b5_ref, wh_ref, bh_ref,
                     out_ref, acc_ref,
                     *, n_points, z_dim, bf16_epilogue, layer1_on_vpu):
    t = pl.program_id(1)
    num_t = pl.num_programs(1)

    TB, TN, CP = x_ref.shape
    TBP, latent = acc_ref.shape
    out_w = out_ref.shape[-1]

    x = x_ref[...].reshape(TB * TN, CP)                        # bf16 rows

    def epilogue(y_f32, b_ref, to_bf16):
        # BN folded into the matmul; LeakyReLU(0.1) == max(y, 0.1*y) since 0<slope<1.
        if to_bf16:
            a = y_f32.astype(jnp.bfloat16) + b_ref[...].astype(jnp.bfloat16)
        else:
            a = y_f32 + b_ref[...]
        return jnp.maximum(a, LEAKY_SLOPE * a)

    # ---- layer 1 (Cin=3, zero-padded to CP) ----
    if layer1_on_vpu:
        # v5e: a K=3 matmul still costs a full 128-wide MXU pass; use 3 VPU MACs.
        xf = x.astype(jnp.float32)
        w1 = w1_ref[...].astype(jnp.float32)
        y1 = (xf[:, 0:1] * w1[0:1, :]
              + xf[:, 1:2] * w1[1:2, :]
              + xf[:, 2:3] * w1[2:3, :])
    else:
        y1 = jnp.dot(x, w1_ref[...], preferred_element_type=jnp.float32)
    h = epilogue(y1, b1_ref, bf16_epilogue)

    def conv_bn_act(h_in, w_ref, b_ref, to_bf16):
        y = jnp.dot(h_in.astype(jnp.bfloat16), w_ref[...],
                    preferred_element_type=jnp.float32)
        return epilogue(y, b_ref, to_bf16)

    h = conv_bn_act(h, w2_ref, b2_ref, bf16_epilogue)
    h = conv_bn_act(h, w3_ref, b3_ref, bf16_epilogue)
    h = conv_bn_act(h, w4_ref, b4_ref, bf16_epilogue)
    h = conv_bn_act(h, w5_ref, b5_ref, False)                  # keep f32 for the max

    h = h.reshape(TB, TN, latent)

    if n_points % TN != 0:
        # Tail tile: mask zero-padded points out of the max (static branch).
        pt = t * TN + jax.lax.broadcasted_iota(jnp.int32, (1, TN, 1), 1)
        h = jnp.where(pt < n_points, h, -jnp.inf)

    tile_max = jnp.max(h, axis=1)                              # (TB, latent) f32

    @pl.when(t == 0)
    def _init():
        acc_ref[0:TB, :] = tile_max                            # no -inf fill + extra max
        if TBP > TB:                                           # static padding rows
            acc_ref[TB:TBP, :] = jnp.zeros((TBP - TB, latent), jnp.float32)

    @pl.when(t > 0)
    def _update():
        acc_ref[0:TB, :] = jnp.maximum(acc_ref[0:TB, :], tile_max)

    # Heads + reparameterization once per batch tile, on the last point tile.
    @pl.when(t == num_t - 1)
    def _finish():
        pooled = acc_ref[...].astype(jnp.bfloat16)             # (TBP, latent)
        heads = jnp.dot(pooled, wh_ref[...],
                        preferred_element_type=jnp.float32) + bh_ref[...]
        mean = heads[:, :z_dim]
        logvar = heads[:, z_dim:2 * z_dim]
        z = mean + jnp.exp(logvar * 0.5) * eps_ref[0]
        parts = [heads, z]                                     # [mean | logvar | z | pad]
        pad = out_w - 3 * z_dim
        if pad:
            parts.append(jnp.zeros((TBP, pad), jnp.float32))
        out_ref[0] = jnp.concatenate(parts, axis=-1)           # single lane-dense store


def latent_encoder_pointnet(x, params, eps, *, tile_b=8, tile_n=512,
                            bf16_epilogue=None, layer1_on_vpu=None):
    """x: (B, 3, N) f32; params: folded/packed weights; eps: (B, z_dim) f32."""
    B, Cin, N = x.shape
    z_dim = eps.shape[-1]
    latent_dim = params["wh"].shape[0]

    flags = _auto_flags()
    if bf16_epilogue is None:
        bf16_epilogue = flags["bf16_epilogue"]
    if layer1_on_vpu is None:
        layer1_on_vpu = flags["layer1_on_vpu"]
    is_v7x = flags["is_v7x"]

    # Batch tiling: >=2 "parallel" steps on v7x so both TensorCores get work.
    TB = _pick_tb(B, tile_b, want_multi=is_v7x)
    nB = B // TB
    TBP = _round_up(TB, 8)                     # sublane-padded rows for eps/out blocks

    # Point tiling: large tiles amortize the ~0.35us/step overhead; pad + mask tail.
    TN = max(8, min(_round_up(tile_n, 8), _round_up(N, 8)))
    if is_v7x and TB * TN > 8192:              # keep live activations modest (64 MiB VMEM)
        TN = max(128, (8192 // TB) // 8 * 8)
    N_pad = _round_up(N, TN)
    nT = N_pad // TN

    W_out = _round_up(3 * z_dim, 128)          # lane-dense packed output width

    # Point-major x, zero-padded to (B, N_pad, CPAD), bf16 for the MXU.
    x_t = jnp.transpose(x, (0, 2, 1))
    x_t = jnp.pad(x_t, ((0, 0), (0, N_pad - N), (0, CPAD - Cin))).astype(jnp.bfloat16)

    eps_t = eps.astype(jnp.float32).reshape(nB, TB, z_dim)
    if TBP > TB:
        eps_t = jnp.pad(eps_t, ((0, 0), (0, TBP - TB), (0, 0)))

    w1p = jnp.pad(params["w1"], ((0, CPAD - Cin), (0, 0)))     # zero rows: exact result
    weights = [w1p, params["b1"], params["w2"], params["b2"], params["w3"],
               params["b3"], params["w4"], params["b4"], params["w5"],
               params["b5"], params["wh"], params["bh"]]

    in_specs = [
        pl.BlockSpec((TB, TN, CPAD), lambda b, t: (b, t, 0)),      # x tile
        pl.BlockSpec((1, TBP, z_dim), lambda b, t: (b, 0, 0)),     # eps (resident per b)
    ] + [
        pl.BlockSpec(w.shape, lambda b, t: (0, 0)) for w in weights  # resident weights
    ]
    out_spec = pl.BlockSpec((1, TBP, W_out), lambda b, t: (b, 0, 0))

    # VMEM budget: double-buffered blocks + weights + generous room for layer temps.
    rows = TB * TN
    weight_bytes = sum(int(w.size) * w.dtype.itemsize for w in weights)
    io_bytes = 2 * (TB * TN * CPAD * 2 + TBP * z_dim * 4 + TBP * W_out * 4)
    need = 2 * weight_bytes + io_bytes + rows * 4096 + TBP * latent_dim * 4
    vmem_cap = (48 << 20) if is_v7x else (100 << 20)
    vmem_limit = int(min(max(need, 32 << 20), vmem_cap))

    layer_flops = sum(int(params[f"w{i}"].shape[0]) * int(params[f"w{i}"].shape[1])
                      for i in range(1, 6))
    flops = 2 * B * N_pad * layer_flops + 2 * B * latent_dim * 2 * z_dim
    bytes_accessed = int(x_t.size * 2 + eps_t.size * 4 + nB * TBP * W_out * 4
                         + weight_bytes)
    cost = pl.CostEstimate(flops=int(flops), transcendentals=int(B * z_dim),
                           bytes_accessed=bytes_accessed)

    kernel = functools.partial(_pointnet_kernel, n_points=N, z_dim=z_dim,
                               bf16_epilogue=bf16_epilogue,
                               layer1_on_vpu=layer1_on_vpu)

    packed = pl.pallas_call(
        kernel,
        out_shape=jax.ShapeDtypeStruct((nB, TBP, W_out), jnp.float32),
        grid_spec=pltpu.PrefetchScalarGridSpec(
            num_scalar_prefetch=0,
            grid=(nB, nT),
            in_specs=in_specs,
            out_specs=out_spec,
            scratch_shapes=[pltpu.VMEM((TBP, latent_dim), jnp.float32)]),  # running max
        compiler_params=pltpu.CompilerParams(
            dimension_semantics=("parallel", "arbitrary"),
            vmem_limit_bytes=vmem_limit),
        cost_estimate=cost,
    )(x_t, eps_t, *weights)

    flat = packed[:, :TB, :].reshape(B, W_out)
    mean = flat[:, :z_dim]
    logvar = flat[:, z_dim:2 * z_dim]
    z = flat[:, 2 * z_dim:3 * z_dim]
    return z, mean, logvar


def init_params(key, n_filters=(64, 128, 128, 256), latent_dim=128, z_dim=64):
    """PyTorch-style init; Conv1d(k=1)+BatchNorm(eval) folded into (in, out) matmuls."""
    dims = [3] + list(n_filters) + [latent_dim]
    keys = iter(jax.random.split(key, 64))
    params = {}

    for i in range(len(dims) - 1):
        cin, cout = dims[i], dims[i + 1]
        bound = 1.0 / math.sqrt(cin)
        w = jax.random.uniform(next(keys), (cout, cin), jnp.float32, -bound, bound)
        b = jax.random.uniform(next(keys), (cout,), jnp.float32, -bound, bound)
        gamma = 1.0 + 0.1 * jax.random.normal(next(keys), (cout,), jnp.float32)
        beta = 0.1 * jax.random.normal(next(keys), (cout,), jnp.float32)
        rmean = 0.1 * jax.random.normal(next(keys), (cout,), jnp.float32)
        rvar = jax.random.uniform(next(keys), (cout,), jnp.float32, 0.5, 1.5)
        scale = gamma / jnp.sqrt(rvar + BN_EPS)
        w_fold = (w * scale[:, None]).T                    # (cin, cout)
        b_fold = (scale * (b - rmean) + beta)[None, :]     # (1, cout)
        params[f"w{i + 1}"] = w_fold.astype(jnp.bfloat16)
        params[f"b{i + 1}"] = b_fold

    fan_in = latent_dim
    bound = 1.0 / math.sqrt(fan_in)
    wm = jax.random.uniform(next(keys), (z_dim, fan_in), jnp.float32, -bound, bound)
    bm = jax.random.uniform(next(keys), (z_dim,), jnp.float32, -bound, bound)
    wv = jax.random.uniform(next(keys), (z_dim, fan_in), jnp.float32, -bound, bound)
    bv = jax.random.uniform(next(keys), (z_dim,), jnp.float32, -bound, bound)
    params["wh"] = jnp.concatenate([wm.T, wv.T], axis=1).astype(jnp.bfloat16)
    params["bh"] = jnp.concatenate([bm, bv])[None, :]
    return params


def reference_forward(x, params, eps, *, bf16_epilogue=True):
    """Pure-JAX reference mirroring the kernel's dtype strategy."""
    B, _, N = x.shape
    h = jnp.transpose(x, (0, 2, 1)).astype(jnp.bfloat16).reshape(B * N, 3)
    for i in range(1, 6):
        y = jnp.dot(h.astype(jnp.bfloat16), params[f"w{i}"],
                    preferred_element_type=jnp.float32)
        if bf16_epilogue and i < 5:
            a = y.astype(jnp.bfloat16) + params[f"b{i}"].astype(jnp.bfloat16)
        else:
            a = y + params[f"b{i}"]
        h = jnp.maximum(a, LEAKY_SLOPE * a)
    latent = h.shape[-1]
    pooled = jnp.max(h.astype(jnp.float32).reshape(B, N, latent), axis=1)
    heads = jnp.dot(pooled.astype(jnp.bfloat16), params["wh"],
                    preferred_element_type=jnp.float32) + params["bh"]
    zd = heads.shape[-1] // 2
    mean, logvar = heads[:, :zd], heads[:, zd:]
    z = mean + jnp.exp(logvar * 0.5) * eps
    return z, mean, logvar


if __name__ == "__main__":
    B, N = 8, 256          # small point cloud: 8 clouds x 256 points x 3 coords
    LATENT_DIM, Z_DIM = 128, 64

    key = jax.random.PRNGKey(0)
    k_params, k_x, k_eps = jax.random.split(key, 3)

    params = init_params(k_params, latent_dim=LATENT_DIM, z_dim=Z_DIM)
    x = jax.random.normal(k_x, (B, 3, N), jnp.float32)
    # eps ~ Normal(0, 1), sampled deterministically outside the kernel.
    eps = jax.random.normal(k_eps, (B, Z_DIM), jnp.float32)

    flags = _auto_flags()
    z, mean, logvar = latent_encoder_pointnet(x, params, eps)
    jax.block_until_ready((z, mean, logvar))

    z_ref, mean_ref, logvar_ref = reference_forward(
        x, params, eps, bf16_epilogue=flags["bf16_epilogue"])
    assert jnp.allclose(mean, mean_ref, atol=1e-2, rtol=1e-2), "mean mismatch"
    assert jnp.allclose(logvar, logvar_ref, atol=1e-2, rtol=1e-2), "logvar mismatch"
    assert jnp.allclose(z, z_ref, atol=1e-2, rtol=1e-2), "z mismatch"

    print("KERNEL_OK")
</pallas_src>

<mosaic_0001>
module attributes {stable_mosaic.version = 11 : i64} {
  func.func @_pointnet_kernel(%arg0: i32, %arg1: i32, %arg2: memref<8x256x8xbf16, #tpu.memory_space<vmem>>, %arg3: memref<1x8x64xf32, #tpu.memory_space<vmem>>, %arg4: memref<8x64xbf16, #tpu.memory_space<vmem>>, %arg5: memref<1x64xf32, #tpu.memory_space<vmem>>, %arg6: memref<64x128xbf16, #tpu.memory_space<vmem>>, %arg7: memref<1x128xf32, #tpu.memory_space<vmem>>, %arg8: memref<128x128xbf16, #tpu.memory_space<vmem>>, %arg9: memref<1x128xf32, #tpu.memory_space<vmem>>, %arg10: memref<128x256xbf16, #tpu.memory_space<vmem>>, %arg11: memref<1x256xf32, #tpu.memory_space<vmem>>, %arg12: memref<256x128xbf16, #tpu.memory_space<vmem>>, %arg13: memref<1x128xf32, #tpu.memory_space<vmem>>, %arg14: memref<128x128xbf16, #tpu.memory_space<vmem>>, %arg15: memref<1x128xf32, #tpu.memory_space<vmem>>, %arg16: memref<1x8x256xf32, #tpu.memory_space<vmem>>, %arg17: memref<8x128xf32, #tpu.memory_space<vmem>>) attributes {dimension_semantics = [#tpu.dimension_semantics<parallel>, #tpu.dimension_semantics<arbitrary>], iteration_bounds = array<i64: 1, 1>, scalar_prefetch = 0 : i64, scratch_operands = 1 : i64, tpu.core_type = #tpu.core_type<tc>, window_params = [{transform_indices = @transform_0, window_bounds = array<i64: 8, 256, 8>}, {transform_indices = @transform_1, window_bounds = array<i64: 1, 8, 64>}, {pipeline_mode = #tpu.pipeline_mode<synchronous>, transform_indices = @transform_2, window_bounds = array<i64: 8, 64>}, {pipeline_mode = #tpu.pipeline_mode<synchronous>, transform_indices = @transform_3, window_bounds = array<i64: 1, 64>}, {pipeline_mode = #tpu.pipeline_mode<synchronous>, transform_indices = @transform_4, window_bounds = array<i64: 64, 128>}, {pipeline_mode = #tpu.pipeline_mode<synchronous>, transform_indices = @transform_5, window_bounds = array<i64: 1, 128>}, {pipeline_mode = #tpu.pipeline_mode<synchronous>, transform_indices = @transform_6, window_bounds = array<i64: 128, 128>}, {pipeline_mode = #tpu.pipeline_mode<synchronous>, transform_indices = @transform_7, window_bounds = array<i64: 1, 128>}, {pipeline_mode = #tpu.pipeline_mode<synchronous>, transform_indices = @transform_8, window_bounds = array<i64: 128, 256>}, {pipeline_mode = #tpu.pipeline_mode<synchronous>, transform_indices = @transform_9, window_bounds = array<i64: 1, 256>}, {pipeline_mode = #tpu.pipeline_mode<synchronous>, transform_indices = @transform_10, window_bounds = array<i64: 256, 128>}, {pipeline_mode = #tpu.pipeline_mode<synchronous>, transform_indices = @transform_11, window_bounds = array<i64: 1, 128>}, {pipeline_mode = #tpu.pipeline_mode<synchronous>, transform_indices = @transform_12, window_bounds = array<i64: 128, 128>}, {pipeline_mode = #tpu.pipeline_mode<synchronous>, transform_indices = @transform_13, window_bounds = array<i64: 1, 128>}, {transform_indices = @transform_14, window_bounds = array<i64: 1, 8, 256>}]} {
    %c0 = arith.constant 0 : index
    %c0_0 = arith.constant 0 : index
    %c0_1 = arith.constant 0 : index
    %0 = vector.load %arg2[%c0, %c0_0, %c0_1] : memref<8x256x8xbf16, #tpu.memory_space<vmem>>, vector<8x256x8xbf16>
    %1 = vector.shape_cast %0 : vector<8x256x8xbf16> to vector<2048x8xbf16>
    %c0_2 = arith.constant 0 : index
    %c0_3 = arith.constant 0 : index
    %2 = vector.load %arg4[%c0_2, %c0_3] : memref<8x64xbf16, #tpu.memory_space<vmem>>, vector<8x64xbf16>
    %cst = arith.constant dense<0.000000e+00> : vector<2048x64xf32>
    %3 = tpu.matmul %1, %2, %cst {dimension_numbers = #tpu.dot_dimension_numbers<[1], [0], [0], [1], [0, 0, 1, 1], [], []>} : vector<2048x8xbf16>, vector<8x64xbf16>, vector<2048x64xf32> -> vector<2048x64xf32>
    %4 = arith.truncf %3 : vector<2048x64xf32> to vector<2048x64xbf16>
    %c0_4 = arith.constant 0 : index
    %c0_5 = arith.constant 0 : index
    %5 = vector.load %arg5[%c0_4, %c0_5] : memref<1x64xf32, #tpu.memory_space<vmem>>, vector<1x64xf32>
    %6 = arith.truncf %5 : vector<1x64xf32> to vector<1x64xbf16>
    %7 = vector.broadcast %6 : vector<1x64xbf16> to vector<2048x64xbf16>
    %8 = arith.addf %4, %7 : vector<2048x64xbf16>
    %cst_6 = arith.constant 1.000980e-01 : bf16
    %9 = vector.broadcast %cst_6 : bf16 to vector<2048x64xbf16>
    %10 = arith.mulf %9, %8 : vector<2048x64xbf16>
    %11 = arith.maximumf %8, %10 : vector<2048x64xbf16>
    %c0_7 = arith.constant 0 : index
    %c0_8 = arith.constant 0 : index
    %12 = vector.load %arg6[%c0_7, %c0_8] : memref<64x128xbf16, #tpu.memory_space<vmem>>, vector<64x128xbf16>
    %cst_9 = arith.constant dense<0.000000e+00> : vector<2048x128xf32>
    %13 = tpu.matmul %11, %12, %cst_9 {dimension_numbers = #tpu.dot_dimension_numbers<[1], [0], [0], [1], [0, 0, 1, 1], [], []>} : vector<2048x64xbf16>, vector<64x128xbf16>, vector<2048x128xf32> -> vector<2048x128xf32>
    %14 = arith.truncf %13 : vector<2048x128xf32> to vector<2048x128xbf16>
    %c0_10 = arith.constant 0 : index
    %c0_11 = arith.constant 0 : index
    %15 = vector.load %arg7[%c0_10, %c0_11] : memref<1x128xf32, #tpu.memory_space<vmem>>, vector<1x128xf32>
    %16 = arith.truncf %15 : vector<1x128xf32> to vector<1x128xbf16>
    %17 = vector.broadcast %16 : vector<1x128xbf16> to vector<2048x128xbf16>
    %18 = arith.addf %14, %17 : vector<2048x128xbf16>
    %cst_12 = arith.constant 1.000980e-01 : bf16
    %19 = vector.broadcast %cst_12 : bf16 to vector<2048x128xbf16>
    %20 = arith.mulf %19, %18 : vector<2048x128xbf16>
    %21 = arith.maximumf %18, %20 : vector<2048x128xbf16>
    %c0_13 = arith.constant 0 : index
    %c0_14 = arith.constant 0 : index
    %22 = vector.load %arg8[%c0_13, %c0_14] : memref<128x128xbf16, #tpu.memory_space<vmem>>, vector<128x128xbf16>
    %cst_15 = arith.constant dense<0.000000e+00> : vector<2048x128xf32>
    %23 = tpu.matmul %21, %22, %cst_15 {dimension_numbers = #tpu.dot_dimension_numbers<[1], [0], [0], [1], [0, 0, 1, 1], [], []>} : vector<2048x128xbf16>, vector<128x128xbf16>, vector<2048x128xf32> -> vector<2048x128xf32>
    %24 = arith.truncf %23 : vector<2048x128xf32> to vector<2048x128xbf16>
    %c0_16 = arith.constant 0 : index
    %c0_17 = arith.constant 0 : index
    %25 = vector.load %arg9[%c0_16, %c0_17] : memref<1x128xf32, #tpu.memory_space<vmem>>, vector<1x128xf32>
    %26 = arith.truncf %25 : vector<1x128xf32> to vector<1x128xbf16>
    %27 = vector.broadcast %26 : vector<1x128xbf16> to vector<2048x128xbf16>
    %28 = arith.addf %24, %27 : vector<2048x128xbf16>
    %cst_18 = arith.constant 1.000980e-01 : bf16
    %29 = vector.broadcast %cst_18 : bf16 to vector<2048x128xbf16>
    %30 = arith.mulf %29, %28 : vector<2048x128xbf16>
    %31 = arith.maximumf %28, %30 : vector<2048x128xbf16>
    %c0_19 = arith.constant 0 : index
    %c0_20 = arith.constant 0 : index
    %32 = vector.load %arg10[%c0_19, %c0_20] : memref<128x256xbf16, #tpu.memory_space<vmem>>, vector<128x256xbf16>
    %cst_21 = arith.constant dense<0.000000e+00> : vector<2048x256xf32>
    %33 = tpu.matmul %31, %32, %cst_21 {dimension_numbers = #tpu.dot_dimension_numbers<[1], [0], [0], [1], [0, 0, 1, 1], [], []>} : vector<2048x128xbf16>, vector<128x256xbf16>, vector<2048x256xf32> -> vector<2048x256xf32>
    %34 = arith.truncf %33 : vector<2048x256xf32> to vector<2048x256xbf16>
    %c0_22 = arith.constant 0 : index
    %c0_23 = arith.constant 0 : index
    %35 = vector.load %arg11[%c0_22, %c0_23] : memref<1x256xf32, #tpu.memory_space<vmem>>, vector<1x256xf32>
    %36 = arith.truncf %35 : vector<1x256xf32> to vector<1x256xbf16>
    %37 = vector.broadcast %36 : vector<1x256xbf16> to vector<2048x256xbf16>
    %38 = arith.addf %34, %37 : vector<2048x256xbf16>
    %cst_24 = arith.constant 1.000980e-01 : bf16
    %39 = vector.broadcast %cst_24 : bf16 to vector<2048x256xbf16>
    %40 = arith.mulf %39, %38 : vector<2048x256xbf16>
    %41 = arith.maximumf %38, %40 : vector<2048x256xbf16>
    %c0_25 = arith.constant 0 : index
    %c0_26 = arith.constant 0 : index
    %42 = vector.load %arg12[%c0_25, %c0_26] : memref<256x128xbf16, #tpu.memory_space<vmem>>, vector<256x128xbf16>
    %cst_27 = arith.constant dense<0.000000e+00> : vector<2048x128xf32>
    %43 = tpu.matmul %41, %42, %cst_27 {dimension_numbers = #tpu.dot_dimension_numbers<[1], [0], [0], [1], [0, 0, 1, 1], [], []>} : vector<2048x256xbf16>, vector<256x128xbf16>, vector<2048x128xf32> -> vector<2048x128xf32>
    %c0_28 = arith.constant 0 : index
    %c0_29 = arith.constant 0 : index
    %44 = vector.load %arg13[%c0_28, %c0_29] : memref<1x128xf32, #tpu.memory_space<vmem>>, vector<1x128xf32>
    %45 = vector.broadcast %44 : vector<1x128xf32> to vector<2048x128xf32>
    %46 = arith.addf %43, %45 : vector<2048x128xf32>
    %cst_30 = arith.constant 1.000000e-01 : f32
    %47 = vector.broadcast %cst_30 : f32 to vector<2048x128xf32>
    %48 = arith.mulf %47, %46 : vector<2048x128xf32>
    %49 = arith.maximumf %46, %48 : vector<2048x128xf32>
    %50 = vector.shape_cast %49 : vector<2048x128xf32> to vector<8x256x128xf32>
    %cst_31 = arith.constant dense<0xFF800000> : vector<8x128xf32>
    %51 = vector.multi_reduction <maximumf>, %50, %cst_31 [1] : vector<8x256x128xf32> to vector<8x128xf32>
    %c0_i32 = arith.constant 0 : i32
    %52 = arith.cmpi eq, %arg1, %c0_i32 : i32
    %53 = arith.extui %52 : i1 to i32
    %c0_i32_32 = arith.constant 0 : i32
    %54 = arith.cmpi ne, %53, %c0_i32_32 : i32
    scf.if %54 {
      %c0_37 = arith.constant 0 : index
      %c0_38 = arith.constant 0 : index
      %61 = vector.load %arg17[%c0_37, %c0_38] : memref<8x128xf32, #tpu.memory_space<vmem>>, vector<8x128xf32>
      tpu.vector_store %arg17[%c0_37, %c0_38], %51 {strides = array<i32>} : memref<8x128xf32, #tpu.memory_space<vmem>>, vector<8x128xf32>,
    } else {
    }
    %c0_i32_33 = arith.constant 0 : i32
    %55 = arith.cmpi sgt, %arg1, %c0_i32_33 : i32
    %56 = arith.extui %55 : i1 to i32
    %c0_i32_34 = arith.constant 0 : i32
    %57 = arith.cmpi ne, %56, %c0_i32_34 : i32
    scf.if %57 {
      %c0_37 = arith.constant 0 : index
      %c0_38 = arith.constant 0 : index
      %61 = vector.load %arg17[%c0_37, %c0_38] : memref<8x128xf32, #tpu.memory_space<vmem>>, vector<8x128xf32>
      %62 = arith.maximumf %61, %51 : vector<8x128xf32>
      %c0_39 = arith.constant 0 : index
      %c0_40 = arith.constant 0 : index
      %63 = vector.load %arg17[%c0_39, %c0_40] : memref<8x128xf32, #tpu.memory_space<vmem>>, vector<8x128xf32>
      tpu.vector_store %arg17[%c0_39, %c0_40], %62 {strides = array<i32>} : memref<8x128xf32, #tpu.memory_space<vmem>>, vector<8x128xf32>,
    } else {
    }
    %c0_i32_35 = arith.constant 0 : i32
    %58 = arith.cmpi eq, %arg1, %c0_i32_35 : i32
    %59 = arith.extui %58 : i1 to i32
    %c0_i32_36 = arith.constant 0 : i32
    %60 = arith.cmpi ne, %59, %c0_i32_36 : i32
    scf.if %60 {
      %c0_37 = arith.constant 0 : index
      %c0_38 = arith.constant 0 : index
      %61 = vector.load %arg17[%c0_37, %c0_38] : memref<8x128xf32, #tpu.memory_space<vmem>>, vector<8x128xf32>
      %62 = arith.truncf %61 : vector<8x128xf32> to vector<8x128xbf16>
      %c0_39 = arith.constant 0 : index
      %c0_40 = arith.constant 0 : index
      %63 = vector.load %arg14[%c0_39, %c0_40] : memref<128x128xbf16, #tpu.memory_space<vmem>>, vector<128x128xbf16>
      %cst_41 = arith.constant dense<0.000000e+00> : vector<8x128xf32>
      %64 = tpu.matmul %62, %63, %cst_41 {dimension_numbers = #tpu.dot_dimension_numbers<[1], [0], [0], [1], [0, 0, 1, 1], [], []>} : vector<8x128xbf16>, vector<128x128xbf16>, vector<8x128xf32> -> vector<8x128xf32>
      %c0_42 = arith.constant 0 : index
      %c0_43 = arith.constant 0 : index
      %65 = vector.load %arg15[%c0_42, %c0_43] : memref<1x128xf32, #tpu.memory_space<vmem>>, vector<1x128xf32>
      %66 = vector.broadcast %65 : vector<1x128xf32> to vector<8x128xf32>
      %67 = arith.addf %64, %66 : vector<8x128xf32>
      %68 = vector.extract_strided_slice %67 {offsets = [0, 0], sizes = [8, 64], strides = [1, 1]} : vector<8x128xf32> to vector<8x64xf32>
      %69 = vector.extract_strided_slice %67 {offsets = [0, 64], sizes = [8, 64], strides = [1, 1]} : vector<8x128xf32> to vector<8x64xf32>
      %cst_44 = arith.constant 5.000000e-01 : f32
      %70 = vector.broadcast %cst_44 : f32 to vector<8x64xf32>
      %71 = arith.mulf %69, %70 : vector<8x64xf32>
      %72 = math.exp %71 : vector<8x64xf32>
      %c0_45 = arith.constant 0 : index
      %c0_46 = arith.constant 0 : index
      %c0_47 = arith.constant 0 : index
      %73 = vector.load %arg3[%c0_45, %c0_46, %c0_47] : memref<1x8x64xf32, #tpu.memory_space<vmem>>, vector<1x8x64xf32>
      %74 = vector.shape_cast %73 : vector<1x8x64xf32> to vector<8x64xf32>
      %75 = arith.mulf %72, %74 : vector<8x64xf32>
      %76 = arith.addf %68, %75 : vector<8x64xf32>
      %cst_48 = arith.constant 0.000000e+00 : f32
      %77 = vector.broadcast %cst_48 : f32 to vector<8x64xf32>
      %78 = tpu.concatenate %67, %76, %77 in 1 : vector<8x128xf32>, vector<8x64xf32>, vector<8x64xf32> -> vector<8x256xf32>
      %c0_49 = arith.constant 0 : index
      %c0_50 = arith.constant 0 : index
      %c0_51 = arith.constant 0 : index
      %79 = vector.load %arg16[%c0_49, %c0_50, %c0_51] : memref<1x8x256xf32, #tpu.memory_space<vmem>>, vector<1x8x256xf32>
      %80 = vector.shape_cast %79 : vector<1x8x256xf32> to vector<8x256xf32>
      %81 = vector.shape_cast %78 : vector<8x256xf32> to vector<1x8x256xf32>
      tpu.vector_store %arg16[%c0_49, %c0_50, %c0_51], %81 {strides = array<i32>} : memref<1x8x256xf32, #tpu.memory_space<vmem>>, vector<1x8x256xf32>,
    } else {
    }
    return
  }
  func.func @transform_0(%arg0: i32, %arg1: i32) -> (i32, i32, i32) {
    %c0_i32 = arith.constant 0 : i32
    %c0_i32_0 = arith.constant 0 : i32
    return %arg0, %arg1, %c0_i32 : i32, i32, i32
  }
  func.func @transform_1(%arg0: i32, %arg1: i32) -> (i32, i32, i32) {
    %c0_i32 = arith.constant 0 : i32
    %c0_i32_0 = arith.constant 0 : i32
    %c0_i32_1 = arith.constant 0 : i32
    return %arg0, %c0_i32, %c0_i32_0 : i32, i32, i32
  }
  func.func @transform_2(%arg0: i32, %arg1: i32) -> (i32, i32) {
    %c0_i32 = arith.constant 0 : i32
    %c0_i32_0 = arith.constant 0 : i32
    %c0_i32_1 = arith.constant 0 : i32
    return %c0_i32, %c0_i32_0 : i32, i32
  }
  func.func @transform_3(%arg0: i32, %arg1: i32) -> (i32, i32) {
    %c0_i32 = arith.constant 0 : i32
    %c0_i32_0 = arith.constant 0 : i32
    %c0_i32_1 = arith.constant 0 : i32
    return %c0_i32, %c0_i32_0 : i32, i32
  }
  func.func @transform_4(%arg0: i32, %arg1: i32) -> (i32, i32) {
    %c0_i32 = arith.constant 0 : i32
    %c0_i32_0 = arith.constant 0 : i32
    %c0_i32_1 = arith.constant 0 : i32
    return %c0_i32, %c0_i32_0 : i32, i32
  }
  func.func @transform_5(%arg0: i32, %arg1: i32) -> (i32, i32) {
    %c0_i32 = arith.constant 0 : i32
    %c0_i32_0 = arith.constant 0 : i32
    %c0_i32_1 = arith.constant 0 : i32
    return %c0_i32, %c0_i32_0 : i32, i32
  }
  func.func @transform_6(%arg0: i32, %arg1: i32) -> (i32, i32) {
    %c0_i32 = arith.constant 0 : i32
    %c0_i32_0 = arith.constant 0 : i32
    %c0_i32_1 = arith.constant 0 : i32
    return %c0_i32, %c0_i32_0 : i32, i32
  }
  func.func @transform_7(%arg0: i32, %arg1: i32) -> (i32, i32) {
    %c0_i32 = arith.constant 0 : i32
    %c0_i32_0 = arith.constant 0 : i32
    %c0_i32_1 = arith.constant 0 : i32
    return %c0_i32, %c0_i32_0 : i32, i32
  }
  func.func @transform_8(%arg0: i32, %arg1: i32) -> (i32, i32) {
    %c0_i32 = arith.constant 0 : i32
    %c0_i32_0 = arith.constant 0 : i32
    %c0_i32_1 = arith.constant 0 : i32
    return %c0_i32, %c0_i32_0 : i32, i32
  }
  func.func @transform_9(%arg0: i32, %arg1: i32) -> (i32, i32) {
    %c0_i32 = arith.constant 0 : i32
    %c0_i32_0 = arith.constant 0 : i32
    %c0_i32_1 = arith.constant 0 : i32
    return %c0_i32, %c0_i32_0 : i32, i32
  }
  func.func @transform_10(%arg0: i32, %arg1: i32) -> (i32, i32) {
    %c0_i32 = arith.constant 0 : i32
    %c0_i32_0 = arith.constant 0 : i32
    %c0_i32_1 = arith.constant 0 : i32
    return %c0_i32, %c0_i32_0 : i32, i32
  }
  func.func @transform_11(%arg0: i32, %arg1: i32) -> (i32, i32) {
    %c0_i32 = arith.constant 0 : i32
    %c0_i32_0 = arith.constant 0 : i32
    %c0_i32_1 = arith.constant 0 : i32
    return %c0_i32, %c0_i32_0 : i32, i32
  }
  func.func @transform_12(%arg0: i32, %arg1: i32) -> (i32, i32) {
    %c0_i32 = arith.constant 0 : i32
    %c0_i32_0 = arith.constant 0 : i32
    %c0_i32_1 = arith.constant 0 : i32
    return %c0_i32, %c0_i32_0 : i32, i32
  }
  func.func @transform_13(%arg0: i32, %arg1: i32) -> (i32, i32) {
    %c0_i32 = arith.constant 0 : i32
    %c0_i32_0 = arith.constant 0 : i32
    %c0_i32_1 = arith.constant 0 : i32
    return %c0_i32, %c0_i32_0 : i32, i32
  }
  func.func @transform_14(%arg0: i32, %arg1: i32) -> (i32, i32, i32) {
    %c0_i32 = arith.constant 0 : i32
    %c0_i32_0 = arith.constant 0 : i32
    %c0_i32_1 = arith.constant 0 : i32
    return %arg0, %c0_i32, %c0_i32_0 : i32, i32, i32
  }
}

</mosaic_0001>

<llo_original>
// kernel: tpu_custom_call.1
$region0: #{tpu_custom_call.1}
  #allocation0 [shape = 'u32[]', space=smem, size = 0x4, offset = 0x4, fixed_abs, tag = 'smem constant byte address 0x4 - core index']
  #allocation1 [shape = 'u32[144,128]{1,0:T(1,128)}', space=vmem, size = 0x12000, scoped, tag = 'internal scratch']
  #allocation2 [shape = 'f32[8,128]{1,0:T(8,128)}', space=vmem, size = 0x1000, scoped, tag = 'scratch operand']
  %s0 = inlined_call_operand.vmem [shape: bf16[8,256,8], index: 0, kind: input, shape index: {}]
  %s1 = inlined_call_operand.vmem [shape: f32[1,8,64], index: 1, kind: input, shape index: {}]
  %s2 = inlined_call_operand.vmem [shape: bf16[8,64], index: 2, kind: input, shape index: {}]
  %s3 = inlined_call_operand.vmem [shape: f32[1,64], index: 3, kind: input, shape index: {}]
  %s4 = inlined_call_operand.vmem [shape: bf16[64,128], index: 4, kind: input, shape index: {}]
  %s5 = inlined_call_operand.vmem [shape: f32[1,128], index: 5, kind: input, shape index: {}]
  %s6 = inlined_call_operand.vmem [shape: bf16[128,128], index: 6, kind: input, shape index: {}]
  %s7 = inlined_call_operand.vmem [shape: f32[1,128], index: 7, kind: input, shape index: {}]
  %s8 = inlined_call_operand.vmem [shape: bf16[128,256], index: 8, kind: input, shape index: {}]
  %s9 = inlined_call_operand.vmem [shape: f32[1,256], index: 9, kind: input, shape index: {}]
  %s10 = inlined_call_operand.vmem [shape: bf16[256,128], index: 10, kind: input, shape index: {}]
  %s11 = inlined_call_operand.vmem [shape: f32[1,128], index: 11, kind: input, shape index: {}]
  %s12 = inlined_call_operand.vmem [shape: bf16[128,128], index: 12, kind: input, shape index: {}]
  %s13 = inlined_call_operand.vmem [shape: f32[1,128], index: 13, kind: input, shape index: {}]
  %s14 = inlined_call_operand.hbm [shape: f32[1,8,256], index: 14, kind: output, shape index: {}]
  %s15 = sld [smem:[#allocation0]]
  $region78: #{tpu_custom_call.1} parent=0
    _
  %s17 = ssub.s32 1, %s15
  %s18 = scalar_select 0, %s17, %s15
  $region1: #{tpu_custom_call.1} parent=0
    #allocation3 [shape = 'u8[8192]{0}', space=vmem, size = 0x2000, scoped, tag = 'output window, operand 0, single buffered']
    #allocation4 [shape = 's32[1]{0}', space=sflag, size = 0x4, scoped, tag = 'scoped memory for tpu_custom_call.1']
    %19 = vsyncpa [#allocation4], 0
    // Predicated region
    $region2: #{tpu_custom_call.1} parent=1 // pred_check
      _
    $region3: #{tpu_custom_call.1} parent=1 // pred_check_branch
      %21 = sbr.rel (0) target = $region5
    $region4: #{tpu_custom_call.1} parent=1 // pred_region
      _
    $region5: #{tpu_custom_call.1} parent=1 // pred_fallthru
      _
    // Predicated region
    $region6: #{tpu_custom_call.1} parent=1 // pred_check
      _
    $region7: #{tpu_custom_call.1} parent=1 // pred_check_branch
      %23 = sbr.rel (0) target = $region9
    $region8: #{tpu_custom_call.1} parent=1 // pred_region
      _
    $region9: #{tpu_custom_call.1} parent=1 // pred_fallthru
      _
    // Predicated region
    $region10: #{tpu_custom_call.1} parent=1 // pred_check
      _
    $region11: #{tpu_custom_call.1} parent=1 // pred_check_branch
      %25 = sbr.rel (0) target = $region13
    $region12: #{tpu_custom_call.1} parent=1 // pred_region
      _
    $region13: #{tpu_custom_call.1} parent=1 // pred_fallthru
      _
    // Predicated region
    $region14: #{tpu_custom_call.1} parent=1 // pred_check
      _
    $region15: #{tpu_custom_call.1} parent=1 // pred_check_branch
      %27 = sbr.rel (0) target = $region17
    $region16: #{tpu_custom_call.1} parent=1 // pred_region
      _
    $region17: #{tpu_custom_call.1} parent=1 // pred_fallthru
      _
    // Predicated region
    $region18: #{tpu_custom_call.1} parent=1 // pred_check
      _
    $region19: #{tpu_custom_call.1} parent=1 // pred_check_branch
      %29 = sbr.rel (0) target = $region21
    $region20: #{tpu_custom_call.1} parent=1 // pred_region
      _
    $region21: #{tpu_custom_call.1} parent=1 // pred_fallthru
      _
    // Predicated region
    $region22: #{tpu_custom_call.1} parent=1 // pred_check
      _
    $region23: #{tpu_custom_call.1} parent=1 // pred_check_branch
      %31 = sbr.rel (0) target = $region25
    $region24: #{tpu_custom_call.1} parent=1 // pred_region
      _
    $region25: #{tpu_custom_call.1} parent=1 // pred_fallthru
      _
    // Predicated region
    $region26: #{tpu_custom_call.1} parent=1 // pred_check
      _
    $region27: #{tpu_custom_call.1} parent=1 // pred_check_branch
      %33 = sbr.rel (0) target = $region29
    $region28: #{tpu_custom_call.1} parent=1 // pred_region
      _
    $region29: #{tpu_custom_call.1} parent=1 // pred_fallthru
      _
    // Predicated region
    $region30: #{tpu_custom_call.1} parent=1 // pred_check
      _
    $region31: #{tpu_custom_call.1} parent=1 // pred_check_branch
      %35 = sbr.rel (0) target = $region33
    $region32: #{tpu_custom_call.1} parent=1 // pred_region
      _
    $region33: #{tpu_custom_call.1} parent=1 // pred_fallthru
      _
    // Predicated region
    $region34: #{tpu_custom_call.1} parent=1 // pred_check
      _
    $region35: #{tpu_custom_call.1} parent=1 // pred_check_branch
      %37 = sbr.rel (0) target = $region37
    $region36: #{tpu_custom_call.1} parent=1 // pred_region
      _
    $region37: #{tpu_custom_call.1} parent=1 // pred_fallthru
      _
    // Predicated region
    $region38: #{tpu_custom_call.1} parent=1 // pred_check
      _
    $region39: #{tpu_custom_call.1} parent=1 // pred_check_branch
      %39 = sbr.rel (0) target = $region41
    $region40: #{tpu_custom_call.1} parent=1 // pred_region
      _
    $region41: #{tpu_custom_call.1} parent=1 // pred_fallthru
      _
    // Predicated region
    $region42: #{tpu_custom_call.1} parent=1 // pred_check
      _
    $region43: #{tpu_custom_call.1} parent=1 // pred_check_branch
      %41 = sbr.rel (0) target = $region45
    $region44: #{tpu_custom_call.1} parent=1 // pred_region
      _
    $region45: #{tpu_custom_call.1} parent=1 // pred_fallthru
      _
    // Predicated region
    $region46: #{tpu_custom_call.1} parent=1 // pred_check
      _
    $region47: #{tpu_custom_call.1} parent=1 // pred_check_branch
      %43 = sbr.rel (0) target = $region49
    $region48: #{tpu_custom_call.1} parent=1 // pred_region
      _
    $region49: #{tpu_custom_call.1} parent=1 // pred_fallthru
      _
    // Predicated region
    $region50: #{tpu_custom_call.1} parent=1 // pred_check
      _
    $region51: #{tpu_custom_call.1} parent=1 // pred_check_branch
      %45 = sbr.rel (0) target = $region53
    $region52: #{tpu_custom_call.1} parent=1 // pred_region
      _
    $region53: #{tpu_custom_call.1} parent=1 // pred_fallthru
      _
    // Predicated region
    $region54: #{tpu_custom_call.1} parent=1 // pred_check
      _
    $region55: #{tpu_custom_call.1} parent=1 // pred_check_branch
      %47 = sbr.rel (0) target = $region57
    $region56: #{tpu_custom_call.1} parent=1 // pred_region
      _
    $region57: #{tpu_custom_call.1} parent=1 // pred_fallthru
      _
    %v50 = vld [vmem:[%s0] sm:$0xf]
    %v51 = vld [vmem:[%s0 + $0x4] sm:$0xf]
    %v52 = vld [vmem:[%s0 + $0x8] sm:$0xf]
    %v53 = vld [vmem:[%s0 + $0xc] sm:$0xf]
    %v54 = vld [vmem:[%s0 + $0x10] sm:$0xf]
    %v55 = vld [vmem:[%s0 + $0x14] sm:$0xf]
    %v56 = vld [vmem:[%s0 + $0x18] sm:$0xf]
    %v57 = vld [vmem:[%s0 + $0x1c] sm:$0xf]
    %v58 = vld [vmem:[%s0 + $0x20] sm:$0xf]
    %v59 = vld [vmem:[%s0 + $0x24] sm:$0xf]
    %v60 = vld [vmem:[%s0 + $0x28] sm:$0xf]
    %v61 = vld [vmem:[%s0 + $0x2c] sm:$0xf]
    %v62 = vld [vmem:[%s0 + $0x30] sm:$0xf]
    %v63 = vld [vmem:[%s0 + $0x34] sm:$0xf]
    %v64 = vld [vmem:[%s0 + $0x38] sm:$0xf]
    %v65 = vld [vmem:[%s0 + $0x3c] sm:$0xf]
    %v66 = vld [vmem:[%s0 + $0x40] sm:$0xf]
    %v67 = vld [vmem:[%s0 + $0x44] sm:$0xf]
    %v68 = vld [vmem:[%s0 + $0x48] sm:$0xf]
    %v69 = vld [vmem:[%s0 + $0x4c] sm:$0xf]
    %v70 = vld [vmem:[%s0 + $0x50] sm:$0xf]
    %v71 = vld [vmem:[%s0 + $0x54] sm:$0xf]
    %v72 = vld [vmem:[%s0 + $0x58] sm:$0xf]
    %v73 = vld [vmem:[%s0 + $0x5c] sm:$0xf]
    %v74 = vld [vmem:[%s0 + $0x60] sm:$0xf]
    %v75 = vld [vmem:[%s0 + $0x64] sm:$0xf]
    %v76 = vld [vmem:[%s0 + $0x68] sm:$0xf]
    %v77 = vld [vmem:[%s0 + $0x6c] sm:$0xf]
    %v78 = vld [vmem:[%s0 + $0x70] sm:$0xf]
    %v79 = vld [vmem:[%s0 + $0x74] sm:$0xf]
    %v80 = vld [vmem:[%s0 + $0x78] sm:$0xf]
    %v81 = vld [vmem:[%s0 + $0x7c] sm:$0xf]
    %v82 = vld [vmem:[%s0 + $0x80] sm:$0xf]
    %v83 = vld [vmem:[%s0 + $0x84] sm:$0xf]
    %v84 = vld [vmem:[%s0 + $0x88] sm:$0xf]
    %v85 = vld [vmem:[%s0 + $0x8c] sm:$0xf]
    %v86 = vld [vmem:[%s0 + $0x90] sm:$0xf]
    %v87 = vld [vmem:[%s0 + $0x94] sm:$0xf]
    %v88 = vld [vmem:[%s0 + $0x98] sm:$0xf]
    %v89 = vld [vmem:[%s0 + $0x9c] sm:$0xf]
    %v90 = vld [vmem:[%s0 + $0xa0] sm:$0xf]
    %v91 = vld [vmem:[%s0 + $0xa4] sm:$0xf]
    %v92 = vld [vmem:[%s0 + $0xa8] sm:$0xf]
    %v93 = vld [vmem:[%s0 + $0xac] sm:$0xf]
    %v94 = vld [vmem:[%s0 + $0xb0] sm:$0xf]
    %v95 = vld [vmem:[%s0 + $0xb4] sm:$0xf]
    %v96 = vld [vmem:[%s0 + $0xb8] sm:$0xf]
    %v97 = vld [vmem:[%s0 + $0xbc] sm:$0xf]
    %v98 = vld [vmem:[%s0 + $0xc0] sm:$0xf]
    %v99 = vld [vmem:[%s0 + $0xc4] sm:$0xf]
    %v100 = vld [vmem:[%s0 + $0xc8] sm:$0xf]
    %v101 = vld [vmem:[%s0 + $0xcc] sm:$0xf]
    %v102 = vld [vmem:[%s0 + $0xd0] sm:$0xf]
    %v103 = vld [vmem:[%s0 + $0xd4] sm:$0xf]
    %v104 = vld [vmem:[%s0 + $0xd8] sm:$0xf]
    %v105 = vld [vmem:[%s0 + $0xdc] sm:$0xf]
    %v106 = vld [vmem:[%s0 + $0xe0] sm:$0xf]
    %v107 = vld [vmem:[%s0 + $0xe4] sm:$0xf]
    %v108 = vld [vmem:[%s0 + $0xe8] sm:$0xf]
    %v109 = vld [vmem:[%s0 + $0xec] sm:$0xf]
    %v110 = vld [vmem:[%s0 + $0xf0] sm:$0xf]
    %v111 = vld [vmem:[%s0 + $0xf4] sm:$0xf]
    %v112 = vld [vmem:[%s0 + $0xf8] sm:$0xf]
    %v113 = vld [vmem:[%s0 + $0xfc] sm:$0xf]
    %v114 = vld [vmem:[%s0 + $0x100] sm:$0xf]
    %v115 = vld [vmem:[%s0 + $0x104] sm:$0xf]
    %v116 = vld [vmem:[%s0 + $0x108] sm:$0xf]
    %v117 = vld [vmem:[%s0 + $0x10c] sm:$0xf]
    %v118 = vld [vmem:[%s0 + $0x110] sm:$0xf]
    %v119 = vld [vmem:[%s0 + $0x114] sm:$0xf]
    %v120 = vld [vmem:[%s0 + $0x118] sm:$0xf]
    %v121 = vld [vmem:[%s0 + $0x11c] sm:$0xf]
    %v122 = vld [vmem:[%s0 + $0x120] sm:$0xf]
    %v123 = vld [vmem:[%s0 + $0x124] sm:$0xf]
    %v124 = vld [vmem:[%s0 + $0x128] sm:$0xf]
    %v125 = vld [vmem:[%s0 + $0x12c] sm:$0xf]
    %v126 = vld [vmem:[%s0 + $0x130] sm:$0xf]
    %v127 = vld [vmem:[%s0 + $0x134] sm:$0xf]
    %v128 = vld [vmem:[%s0 + $0x138] sm:$0xf]
    %v129 = vld [vmem:[%s0 + $0x13c] sm:$0xf]
    %v130 = vld [vmem:[%s0 + $0x140] sm:$0xf]
    %v131 = vld [vmem:[%s0 + $0x144] sm:$0xf]
    %v132 = vld [vmem:[%s0 + $0x148] sm:$0xf]
    %v133 = vld [vmem:[%s0 + $0x14c] sm:$0xf]
    %v134 = vld [vmem:[%s0 + $0x150] sm:$0xf]
    %v135 = vld [vmem:[%s0 + $0x154] sm:$0xf]
    %v136 = vld [vmem:[%s0 + $0x158] sm:$0xf]
    %v137 = vld [vmem:[%s0 + $0x15c] sm:$0xf]
    %v138 = vld [vmem:[%s0 + $0x160] sm:$0xf]
    %v139 = vld [vmem:[%s0 + $0x164] sm:$0xf]
    %v140 = vld [vmem:[%s0 + $0x168] sm:$0xf]
    %v141 = vld [vmem:[%s0 + $0x16c] sm:$0xf]
    %v142 = vld [vmem:[%s0 + $0x170] sm:$0xf]
    %v143 = vld [vmem:[%s0 + $0x174] sm:$0xf]
    %v144 = vld [vmem:[%s0 + $0x178] sm:$0xf]
    %v145 = vld [vmem:[%s0 + $0x17c] sm:$0xf]
    %v146 = vld [vmem:[%s0 + $0x180] sm:$0xf]
    %v147 = vld [vmem:[%s0 + $0x184] sm:$0xf]
    %v148 = vld [vmem:[%s0 + $0x188] sm:$0xf]
    %v149 = vld [vmem:[%s0 + $0x18c] sm:$0xf]
    %v150 = vld [vmem:[%s0 + $0x190] sm:$0xf]
    %v151 = vld [vmem:[%s0 + $0x194] sm:$0xf]
    %v152 = vld [vmem:[%s0 + $0x198] sm:$0xf]
    %v153 = vld [vmem:[%s0 + $0x19c] sm:$0xf]
    %v154 = vld [vmem:[%s0 + $0x1a0] sm:$0xf]
    %v155 = vld [vmem:[%s0 + $0x1a4] sm:$0xf]
    %v156 = vld [vmem:[%s0 + $0x1a8] sm:$0xf]
    %v157 = vld [vmem:[%s0 + $0x1ac] sm:$0xf]
    %v158 = vld [vmem:[%s0 + $0x1b0] sm:$0xf]
    %v159 = vld [vmem:[%s0 + $0x1b4] sm:$0xf]
    %v160 = vld [vmem:[%s0 + $0x1b8] sm:$0xf]
    %v161 = vld [vmem:[%s0 + $0x1bc] sm:$0xf]
    %v162 = vld [vmem:[%s0 + $0x1c0] sm:$0xf]
    %v163 = vld [vmem:[%s0 + $0x1c4] sm:$0xf]
    %v164 = vld [vmem:[%s0 + $0x1c8] sm:$0xf]
    %v165 = vld [vmem:[%s0 + $0x1cc] sm:$0xf]
    %v166 = vld [vmem:[%s0 + $0x1d0] sm:$0xf]
    %v167 = vld [vmem:[%s0 + $0x1d4] sm:$0xf]
    %v168 = vld [vmem:[%s0 + $0x1d8] sm:$0xf]
    %v169 = vld [vmem:[%s0 + $0x1dc] sm:$0xf]
    %v170 = vld [vmem:[%s0 + $0x1e0] sm:$0xf]
    %v171 = vld [vmem:[%s0 + $0x1e4] sm:$0xf]
    %v172 = vld [vmem:[%s0 + $0x1e8] sm:$0xf]
    %v173 = vld [vmem:[%s0 + $0x1ec] sm:$0xf]
    %v174 = vld [vmem:[%s0 + $0x1f0] sm:$0xf]
    %v175 = vld [vmem:[%s0 + $0x1f4] sm:$0xf]
    %v176 = vld [vmem:[%s0 + $0x1f8] sm:$0xf]
    %v177 = vld [vmem:[%s0 + $0x1fc] sm:$0xf]
    %v178 = vld [vmem:[%s0 + $0x200] sm:$0xf]
    %v179 = vld [vmem:[%s0 + $0x204] sm:$0xf]
    %v180 = vld [vmem:[%s0 + $0x208] sm:$0xf]
    %v181 = vld [vmem:[%s0 + $0x20c] sm:$0xf]
    %v182 = vld [vmem:[%s0 + $0x210] sm:$0xf]
    %v183 = vld [vmem:[%s0 + $0x214] sm:$0xf]
    %v184 = vld [vmem:[%s0 + $0x218] sm:$0xf]
    %v185 = vld [vmem:[%s0 + $0x21c] sm:$0xf]
    %v186 = vld [vmem:[%s0 + $0x220] sm:$0xf]
    %v187 = vld [vmem:[%s0 + $0x224] sm:$0xf]
    %v188 = vld [vmem:[%s0 + $0x228] sm:$0xf]
    %v189 = vld [vmem:[%s0 + $0x22c] sm:$0xf]
    %v190 = vld [vmem:[%s0 + $0x230] sm:$0xf]
    %v191 = vld [vmem:[%s0 + $0x234] sm:$0xf]
    %v192 = vld [vmem:[%s0 + $0x238] sm:$0xf]
    %v193 = vld [vmem:[%s0 + $0x23c] sm:$0xf]
    %v194 = vld [vmem:[%s0 + $0x240] sm:$0xf]
    %v195 = vld [vmem:[%s0 + $0x244] sm:$0xf]
    %v196 = vld [vmem:[%s0 + $0x248] sm:$0xf]
    %v197 = vld [vmem:[%s0 + $0x24c] sm:$0xf]
    %v198 = vld [vmem:[%s0 + $0x250] sm:$0xf]
    %v199 = vld [vmem:[%s0 + $0x254] sm:$0xf]
    %v200 = vld [vmem:[%s0 + $0x258] sm:$0xf]
    %v201 = vld [vmem:[%s0 + $0x25c] sm:$0xf]
    %v202 = vld [vmem:[%s0 + $0x260] sm:$0xf]
    %v203 = vld [vmem:[%s0 + $0x264] sm:$0xf]
    %v204 = vld [vmem:[%s0 + $0x268] sm:$0xf]
    %v205 = vld [vmem:[%s0 + $0x26c] sm:$0xf]
    %v206 = vld [vmem:[%s0 + $0x270] sm:$0xf]
    %v207 = vld [vmem:[%s0 + $0x274] sm:$0xf]
    %v208 = vld [vmem:[%s0 + $0x278] sm:$0xf]
    %v209 = vld [vmem:[%s0 + $0x27c] sm:$0xf]
    %v210 = vld [vmem:[%s0 + $0x280] sm:$0xf]
    %v211 = vld [vmem:[%s0 + $0x284] sm:$0xf]
    %v212 = vld [vmem:[%s0 + $0x288] sm:$0xf]
    %v213 = vld [vmem:[%s0 + $0x28c] sm:$0xf]
    %v214 = vld [vmem:[%s0 + $0x290] sm:$0xf]
    %v215 = vld [vmem:[%s0 + $0x294] sm:$0xf]
    %v216 = vld [vmem:[%s0 + $0x298] sm:$0xf]
    %v217 = vld [vmem:[%s0 + $0x29c] sm:$0xf]
    %v218 = vld [vmem:[%s0 + $0x2a0] sm:$0xf]
    %v219 = vld [vmem:[%s0 + $0x2a4] sm:$0xf]
    %v220 = vld [vmem:[%s0 + $0x2a8] sm:$0xf]
    %v221 = vld [vmem:[%s0 + $0x2ac] sm:$0xf]
    %v222 = vld [vmem:[%s0 + $0x2b0] sm:$0xf]
    %v223 = vld [vmem:[%s0 + $0x2b4] sm:$0xf]
    %v224 = vld [vmem:[%s0 + $0x2b8] sm:$0xf]
    %v225 = vld [vmem:[%s0 + $0x2bc] sm:$0xf]
    %v226 = vld [vmem:[%s0 + $0x2c0] sm:$0xf]
    %v227 = vld [vmem:[%s0 + $0x2c4] sm:$0xf]
    %v228 = vld [vmem:[%s0 + $0x2c8] sm:$0xf]
    %v229 = vld [vmem:[%s0 + $0x2cc] sm:$0xf]
    %v230 = vld [vmem:[%s0 + $0x2d0] sm:$0xf]
    %v231 = vld [vmem:[%s0 + $0x2d4] sm:$0xf]
    %v232 = vld [vmem:[%s0 + $0x2d8] sm:$0xf]
    %v233 = vld [vmem:[%s0 + $0x2dc] sm:$0xf]
    %v234 = vld [vmem:[%s0 + $0x2e0] sm:$0xf]
    %v235 = vld [vmem:[%s0 + $0x2e4] sm:$0xf]
    %v236 = vld [vmem:[%s0 + $0x2e8] sm:$0xf]
    %v237 = vld [vmem:[%s0 + $0x2ec] sm:$0xf]
    %v238 = vld [vmem:[%s0 + $0x2f0] sm:$0xf]
    %v239 = vld [vmem:[%s0 + $0x2f4] sm:$0xf]
    %v240 = vld [vmem:[%s0 + $0x2f8] sm:$0xf]
    %v241 = vld [vmem:[%s0 + $0x2fc] sm:$0xf]
    %v242 = vld [vmem:[%s0 + $0x300] sm:$0xf]
    %v243 = vld [vmem:[%s0 + $0x304] sm:$0xf]
    %v244 = vld [vmem:[%s0 + $0x308] sm:$0xf]
    %v245 = vld [vmem:[%s0 + $0x30c] sm:$0xf]
    %v246 = vld [vmem:[%s0 + $0x310] sm:$0xf]
    %v247 = vld [vmem:[%s0 + $0x314] sm:$0xf]
    %v248 = vld [vmem:[%s0 + $0x318] sm:$0xf]
    %v249 = vld [vmem:[%s0 + $0x31c] sm:$0xf]
    %v250 = vld [vmem:[%s0 + $0x320] sm:$0xf]
    %v251 = vld [vmem:[%s0 + $0x324] sm:$0xf]
    %v252 = vld [vmem:[%s0 + $0x328] sm:$0xf]
    %v253 = vld [vmem:[%s0 + $0x32c] sm:$0xf]
    %v254 = vld [vmem:[%s0 + $0x330] sm:$0xf]
    %v255 = vld [vmem:[%s0 + $0x334] sm:$0xf]
    %v256 = vld [vmem:[%s0 + $0x338] sm:$0xf]
    %v257 = vld [vmem:[%s0 + $0x33c] sm:$0xf]
    %v258 = vld [vmem:[%s0 + $0x340] sm:$0xf]
    %v259 = vld [vmem:[%s0 + $0x344] sm:$0xf]
    %v260 = vld [vmem:[%s0 + $0x348] sm:$0xf]
    %v261 = vld [vmem:[%s0 + $0x34c] sm:$0xf]
    %v262 = vld [vmem:[%s0 + $0x350] sm:$0xf]
    %v263 = vld [vmem:[%s0 + $0x354] sm:$0xf]
    %v264 = vld [vmem:[%s0 + $0x358] sm:$0xf]
    %v265 = vld [vmem:[%s0 + $0x35c] sm:$0xf]
    %v266 = vld [vmem:[%s0 + $0x360] sm:$0xf]
    %v267 = vld [vmem:[%s0 + $0x364] sm:$0xf]
    %v268 = vld [vmem:[%s0 + $0x368] sm:$0xf]
    %v269 = vld [vmem:[%s0 + $0x36c] sm:$0xf]
    %v270 = vld [vmem:[%s0 + $0x370] sm:$0xf]
    %v271 = vld [vmem:[%s0 + $0x374] sm:$0xf]
    %v272 = vld [vmem:[%s0 + $0x378] sm:$0xf]
    %v273 = vld [vmem:[%s0 + $0x37c] sm:$0xf]
    %v274 = vld [vmem:[%s0 + $0x380] sm:$0xf]
    %v275 = vld [vmem:[%s0 + $0x384] sm:$0xf]
    %v276 = vld [vmem:[%s0 + $0x388] sm:$0xf]
    %v277 = vld [vmem:[%s0 + $0x38c] sm:$0xf]
    %v278 = vld [vmem:[%s0 + $0x390] sm:$0xf]
    %v279 = vld [vmem:[%s0 + $0x394] sm:$0xf]
    %v280 = vld [vmem:[%s0 + $0x398] sm:$0xf]
    %v281 = vld [vmem:[%s0 + $0x39c] sm:$0xf]
    %v282 = vld [vmem:[%s0 + $0x3a0] sm:$0xf]
    %v283 = vld [vmem:[%s0 + $0x3a4] sm:$0xf]
    %v284 = vld [vmem:[%s0 + $0x3a8] sm:$0xf]
    %v285 = vld [vmem:[%s0 + $0x3ac] sm:$0xf]
    %v286 = vld [vmem:[%s0 + $0x3b0] sm:$0xf]
    %v287 = vld [vmem:[%s0 + $0x3b4] sm:$0xf]
    %v288 = vld [vmem:[%s0 + $0x3b8] sm:$0xf]
    %v289 = vld [vmem:[%s0 + $0x3bc] sm:$0xf]
    %v290 = vld [vmem:[%s0 + $0x3c0] sm:$0xf]
    %v291 = vld [vmem:[%s0 + $0x3c4] sm:$0xf]
    %v292 = vld [vmem:[%s0 + $0x3c8] sm:$0xf]
    %v293 = vld [vmem:[%s0 + $0x3cc] sm:$0xf]
    %v294 = vld [vmem:[%s0 + $0x3d0] sm:$0xf]
    %v295 = vld [vmem:[%s0 + $0x3d4] sm:$0xf]
    %v296 = vld [vmem:[%s0 + $0x3d8] sm:$0xf]
    %v297 = vld [vmem:[%s0 + $0x3dc] sm:$0xf]
    %v298 = vld [vmem:[%s0 + $0x3e0] sm:$0xf]
    %v299 = vld [vmem:[%s0 + $0x3e4] sm:$0xf]
    %v300 = vld [vmem:[%s0 + $0x3e8] sm:$0xf]
    %v301 = vld [vmem:[%s0 + $0x3ec] sm:$0xf]
    %v302 = vld [vmem:[%s0 + $0x3f0] sm:$0xf]
    %v303 = vld [vmem:[%s0 + $0x3f4] sm:$0xf]
    %v304 = vld [vmem:[%s0 + $0x3f8] sm:$0xf]
    %v305 = vld [vmem:[%s0 + $0x3fc] sm:$0xf]
    %v306 = vld [vmem:[%s2] sm:$0xf]
    %v563 = vunpack.c.l.b16 %v50
    %v564 = vunpack.c.l.b16 %v51
    %v565 = vunpack.c.l.b16 %v52
    %v566 = vunpack.c.l.b16 %v53
    %v567 = vunpack.c.l.b16 %v54
    %v568 = vunpack.c.l.b16 %v55
    %v569 = vunpack.c.l.b16 %v56
    %v570 = vunpack.c.l.b16 %v57
    %v571 = vunpack.c.l.b16 %v58
    %v572 = vunpack.c.l.b16 %v59
    %v573 = vunpack.c.l.b16 %v60
    %v574 = vunpack.c.l.b16 %v61
    %v575 = vunpack.c.l.b16 %v62
    %v576 = vunpack.c.l.b16 %v63
    %v577 = vunpack.c.l.b16 %v64
    %v578 = vunpack.c.l.b16 %v65
    %v579 = vunpack.c.l.b16 %v66
    %v580 = vunpack.c.l.b16 %v67
    %v581 = vunpack.c.l.b16 %v68
    %v582 = vunpack.c.l.b16 %v69
    %v583 = vunpack.c.l.b16 %v70
    %v584 = vunpack.c.l.b16 %v71
    %v585 = vunpack.c.l.b16 %v72
    %v586 = vunpack.c.l.b16 %v73
    %v587 = vunpack.c.l.b16 %v74
    %v588 = vunpack.c.l.b16 %v75
    %v589 = vunpack.c.l.b16 %v76
    %v590 = vunpack.c.l.b16 %v77
    %v591 = vunpack.c.l.b16 %v78
    %v592 = vunpack.c.l.b16 %v79
    %v593 = vunpack.c.l.b16 %v80
    %v594 = vunpack.c.l.b16 %v81
    %v595 = vunpack.c.l.b16 %v82
    %v596 = vunpack.c.l.b16 %v83
    %v597 = vunpack.c.l.b16 %v84
    %v598 = vunpack.c.l.b16 %v85
    %v599 = vunpack.c.l.b16 %v86
    %v600 = vunpack.c.l.b16 %v87
    %v601 = vunpack.c.l.b16 %v88
    %v602 = vunpack.c.l.b16 %v89
    %v603 = vunpack.c.l.b16 %v90
    %v604 = vunpack.c.l.b16 %v91
    %v605 = vunpack.c.l.b16 %v92
    %v606 = vunpack.c.l.b16 %v93
    %v607 = vunpack.c.l.b16 %v94
    %v608 = vunpack.c.l.b16 %v95
    %v609 = vunpack.c.l.b16 %v96
    %v610 = vunpack.c.l.b16 %v97
    %v611 = vunpack.c.l.b16 %v98
    %v612 = vunpack.c.l.b16 %v99
    %v613 = vunpack.c.l.b16 %v100
    %v614 = vunpack.c.l.b16 %v101
    %v615 = vunpack.c.l.b16 %v102
    %v616 = vunpack.c.l.b16 %v103
    %v617 = vunpack.c.l.b16 %v104
    %v618 = vunpack.c.l.b16 %v105
    %v619 = vunpack.c.l.b16 %v106
    %v620 = vunpack.c.l.b16 %v107
    %v621 = vunpack.c.l.b16 %v108
    %v622 = vunpack.c.l.b16 %v109
    %v623 = vunpack.c.l.b16 %v110
    %v624 = vunpack.c.l.b16 %v111
    %v625 = vunpack.c.l.b16 %v112
    %v626 = vunpack.c.l.b16 %v113
    %v627 = vunpack.c.l.b16 %v114
    %v628 = vunpack.c.l.b16 %v115
    %v629 = vunpack.c.l.b16 %v116
    %v630 = vunpack.c.l.b16 %v117
    %v631 = vunpack.c.l.b16 %v118
    %v632 = vunpack.c.l.b16 %v119
    %v633 = vunpack.c.l.b16 %v120
    %v634 = vunpack.c.l.b16 %v121
    %v635 = vunpack.c.l.b16 %v122
    %v636 = vunpack.c.l.b16 %v123
    %v637 = vunpack.c.l.b16 %v124
    %v638 = vunpack.c.l.b16 %v125
    %v639 = vunpack.c.l.b16 %v126
    %v640 = vunpack.c.l.b16 %v127
    %v641 = vunpack.c.l.b16 %v128
    %v642 = vunpack.c.l.b16 %v129
    %v643 = vunpack.c.l.b16 %v130
    %v644 = vunpack.c.l.b16 %v131
    %v645 = vunpack.c.l.b16 %v132
    %v646 = vunpack.c.l.b16 %v133
    %v647 = vunpack.c.l.b16 %v134
    %v648 = vunpack.c.l.b16 %v135
    %v649 = vunpack.c.l.b16 %v136
    %v650 = vunpack.c.l.b16 %v137
    %v651 = vunpack.c.l.b16 %v138
    %v652 = vunpack.c.l.b16 %v139
    %v653 = vunpack.c.l.b16 %v140
    %v654 = vunpack.c.l.b16 %v141
    %v655 = vunpack.c.l.b16 %v142
    %v656 = vunpack.c.l.b16 %v143
    %v657 = vunpack.c.l.b16 %v144
    %v658 = vunpack.c.l.b16 %v145
    %v659 = vunpack.c.l.b16 %v146
    %v660 = vunpack.c.l.b16 %v147
    %v661 = vunpack.c.l.b16 %v148
    %v662 = vunpack.c.l.b16 %v149
    %v663 = vunpack.c.l.b16 %v150
    %v664 = vunpack.c.l.b16 %v151
    %v665 = vunpack.c.l.b16 %v152
    %v666 = vunpack.c.l.b16 %v153
    %v667 = vunpack.c.l.b16 %v154
    %v668 = vunpack.c.l.b16 %v155
    %v669 = vunpack.c.l.b16 %v156
    %v670 = vunpack.c.l.b16 %v157
    %v671 = vunpack.c.l.b16 %v158
    %v672 = vunpack.c.l.b16 %v159
    %v673 = vunpack.c.l.b16 %v160
    %v674 = vunpack.c.l.b16 %v161
    %v675 = vunpack.c.l.b16 %v162
    %v676 = vunpack.c.l.b16 %v163
    %v677 = vunpack.c.l.b16 %v164
    %v678 = vunpack.c.l.b16 %v165
    %v679 = vunpack.c.l.b16 %v166
    %v680 = vunpack.c.l.b16 %v167
    %v681 = vunpack.c.l.b16 %v168
    %v682 = vunpack.c.l.b16 %v169
    %v683 = vunpack.c.l.b16 %v170
    %v684 = vunpack.c.l.b16 %v171
    %v685 = vunpack.c.l.b16 %v172
    %v686 = vunpack.c.l.b16 %v173
    %v687 = vunpack.c.l.b16 %v174
    %v688 = vunpack.c.l.b16 %v175
    %v689 = vunpack.c.l.b16 %v176
    %v690 = vunpack.c.l.b16 %v177
    %v691 = vunpack.c.l.b16 %v178
    %v692 = vunpack.c.l.b16 %v179
    %v693 = vunpack.c.l.b16 %v180
    %v694 = vunpack.c.l.b16 %v181
    %v695 = vunpack.c.l.b16 %v182
    %v696 = vunpack.c.l.b16 %v183
    %v697 = vunpack.c.l.b16 %v184
    %v698 = vunpack.c.l.b16 %v185
    %v699 = vunpack.c.l.b16 %v186
    %v700 = vunpack.c.l.b16 %v187
    %v701 = vunpack.c.l.b16 %v188
    %v702 = vunpack.c.l.b16 %v189
    %v703 = vunpack.c.l.b16 %v190
    %v704 = vunpack.c.l.b16 %v191
    %v705 = vunpack.c.l.b16 %v192
    %v706 = vunpack.c.l.b16 %v193
    %v707 = vunpack.c.l.b16 %v194
    %v708 = vunpack.c.l.b16 %v195
    %v709 = vunpack.c.l.b16 %v196
    %v710 = vunpack.c.l.b16 %v197
    %v711 = vunpack.c.l.b16 %v198
    %v712 = vunpack.c.l.b16 %v199
    %v713 = vunpack.c.l.b16 %v200
    %v714 = vunpack.c.l.b16 %v201
    %v715 = vunpack.c.l.b16 %v202
    %v716 = vunpack.c.l.b16 %v203
    %v717 = vunpack.c.l.b16 %v204
    %v718 = vunpack.c.l.b16 %v205
    %v719 = vunpack.c.l.b16 %v206
    %v720 = vunpack.c.l.b16 %v207
    %v721 = vunpack.c.l.b16 %v208
    %v722 = vunpack.c.l.b16 %v209
    %v723 = vunpack.c.l.b16 %v210
    %v724 = vunpack.c.l.b16 %v211
    %v725 = vunpack.c.l.b16 %v212
    %v726 = vunpack.c.l.b16 %v213
    %v727 = vunpack.c.l.b16 %v214
    %v728 = vunpack.c.l.b16 %v215
    %v729 = vunpack.c.l.b16 %v216
    %v730 = vunpack.c.l.b16 %v217
    %v731 = vunpack.c.l.b16 %v218
    %v732 = vunpack.c.l.b16 %v219
    %v733 = vunpack.c.l.b16 %v220
    %v734 = vunpack.c.l.b16 %v221
    %v735 = vunpack.c.l.b16 %v222
    %v736 = vunpack.c.l.b16 %v223
    %v737 = vunpack.c.l.b16 %v224
    %v738 = vunpack.c.l.b16 %v225
    %v739 = vunpack.c.l.b16 %v226
    %v740 = vunpack.c.l.b16 %v227
    %v741 = vunpack.c.l.b16 %v228
    %v742 = vunpack.c.l.b16 %v229
    %v743 = vunpack.c.l.b16 %v230
    %v744 = vunpack.c.l.b16 %v231
    %v745 = vunpack.c.l.b16 %v232
    %v746 = vunpack.c.l.b16 %v233
    %v747 = vunpack.c.l.b16 %v234
    %v748 = vunpack.c.l.b16 %v235
    %v749 = vunpack.c.l.b16 %v236
    %v750 = vunpack.c.l.b16 %v237
    %v751 = vunpack.c.l.b16 %v238
    %v752 = vunpack.c.l.b16 %v239
    %v753 = vunpack.c.l.b16 %v240
    %v754 = vunpack.c.l.b16 %v241
    %v755 = vunpack.c.l.b16 %v242
    %v756 = vunpack.c.l.b16 %v243
    %v757 = vunpack.c.l.b16 %v244
    %v758 = vunpack.c.l.b16 %v245
    %v759 = vunpack.c.l.b16 %v246
    %v760 = vunpack.c.l.b16 %v247
    %v761 = vunpack.c.l.b16 %v248
    %v762 = vunpack.c.l.b16 %v249
    %v763 = vunpack.c.l.b16 %v250
    %v764 = vunpack.c.l.b16 %v251
    %v765 = vunpack.c.l.b16 %v252
    %v766 = vunpack.c.l.b16 %v253
    %v767 = vunpack.c.l.b16 %v254
    %v768 = vunpack.c.l.b16 %v255
    %v769 = vunpack.c.l.b16 %v256
    %v770 = vunpack.c.l.b16 %v257
    %v771 = vunpack.c.l.b16 %v258
    %v772 = vunpack.c.l.b16 %v259
    %v773 = vunpack.c.l.b16 %v260
    %v774 = vunpack.c.l.b16 %v261
    %v775 = vunpack.c.l.b16 %v262
    %v776 = vunpack.c.l.b16 %v263
    %v777 = vunpack.c.l.b16 %v264
    %v778 = vunpack.c.l.b16 %v265
    %v779 = vunpack.c.l.b16 %v266
    %v780 = vunpack.c.l.b16 %v267
    %v781 = vunpack.c.l.b16 %v268
    %v782 = vunpack.c.l.b16 %v269
    %v783 = vunpack.c.l.b16 %v270
    %v784 = vunpack.c.l.b16 %v271
    %v785 = vunpack.c.l.b16 %v272
    %v786 = vunpack.c.l.b16 %v273
    %v787 = vunpack.c.l.b16 %v274
    %v788 = vunpack.c.l.b16 %v275
    %v789 = vunpack.c.l.b16 %v276
    %v790 = vunpack.c.l.b16 %v277
    %v791 = vunpack.c.l.b16 %v278
    %v792 = vunpack.c.l.b16 %v279
    %v793 = vunpack.c.l.b16 %v280
    %v794 = vunpack.c.l.b16 %v281
    %v795 = vunpack.c.l.b16 %v282
    %v796 = vunpack.c.l.b16 %v283
    %v797 = vunpack.c.l.b16 %v284
    %v798 = vunpack.c.l.b16 %v285
    %v799 = vunpack.c.l.b16 %v286
    %v800 = vunpack.c.l.b16 %v287
    %v801 = vunpack.c.l.b16 %v288
    %v802 = vunpack.c.l.b16 %v289
    %v803 = vunpack.c.l.b16 %v290
    %v804 = vunpack.c.l.b16 %v291
    %v805 = vunpack.c.l.b16 %v292
    %v806 = vunpack.c.l.b16 %v293
    %v807 = vunpack.c.l.b16 %v294
    %v808 = vunpack.c.l.b16 %v295
    %v809 = vunpack.c.l.b16 %v296
    %v810 = vunpack.c.l.b16 %v297
    %v811 = vunpack.c.l.b16 %v298
    %v812 = vunpack.c.l.b16 %v299
    %v813 = vunpack.c.l.b16 %v300
    %v814 = vunpack.c.l.b16 %v301
    %v815 = vunpack.c.l.b16 %v302
    %v816 = vunpack.c.l.b16 %v303
    %v817 = vunpack.c.l.b16 %v304
    %v818 = vunpack.c.l.b16 %v305
    %v819 = vpack.c.b16 %v564, %v563
    %v820 = vpack.c.b16 %v566, %v565
    %v821 = vpack.c.b16 %v568, %v567
    %v822 = vpack.c.b16 %v570, %v569
    %v823 = vpack.c.b16 %v572, %v571
    %v824 = vpack.c.b16 %v574, %v573
    %v825 = vpack.c.b16 %v576, %v575
    %v826 = vpack.c.b16 %v578, %v577
    %v827 = vpack.c.b16 %v580, %v579
    %v828 = vpack.c.b16 %v582, %v581
    %v829 = vpack.c.b16 %v584, %v583
    %v830 = vpack.c.b16 %v586, %v585
    %v831 = vpack.c.b16 %v588, %v587
    %v832 = vpack.c.b16 %v590, %v589
    %v833 = vpack.c.b16 %v592, %v591
    %v834 = vpack.c.b16 %v594, %v593
    %v835 = vpack.c.b16 %v596, %v595
    %v836 = vpack.c.b16 %v598, %v597
    %v837 = vpack.c.b16 %v600, %v599
    %v838 = vpack.c.b16 %v602, %v601
    %v839 = vpack.c.b16 %v604, %v603
    %v840 = vpack.c.b16 %v606, %v605
    %v841 = vpack.c.b16 %v608, %v607
    %v842 = vpack.c.b16 %v610, %v609
    %v843 = vpack.c.b16 %v612, %v611
    %v844 = vpack.c.b16 %v614, %v613
    %v845 = vpack.c.b16 %v616, %v615
    %v846 = vpack.c.b16 %v618, %v617
    %v847 = vpack.c.b16 %v620, %v619
    %v848 = vpack.c.b16 %v622, %v621
    %v849 = vpack.c.b16 %v624, %v623
    %v850 = vpack.c.b16 %v626, %v625
    %v851 = vpack.c.b16 %v628, %v627
    %v852 = vpack.c.b16 %v630, %v629
    %v853 = vpack.c.b16 %v632, %v631
    %v854 = vpack.c.b16 %v634, %v633
    %v855 = vpack.c.b16 %v636, %v635
    %v856 = vpack.c.b16 %v638, %v637
    %v857 = vpack.c.b16 %v640, %v639
    %v858 = vpack.c.b16 %v642, %v641
    %v859 = vpack.c.b16 %v644, %v643
    %v860 = vpack.c.b16 %v646, %v645
    %v861 = vpack.c.b16 %v648, %v647
    %v862 = vpack.c.b16 %v650, %v649
    %v863 = vpack.c.b16 %v652, %v651
    %v864 = vpack.c.b16 %v654, %v653
    %v865 = vpack.c.b16 %v656, %v655
    %v866 = vpack.c.b16 %v658, %v657
    %v867 = vpack.c.b16 %v660, %v659
    %v868 = vpack.c.b16 %v662, %v661
    %v869 = vpack.c.b16 %v664, %v663
    %v870 = vpack.c.b16 %v666, %v665
    %v871 = vpack.c.b16 %v668, %v667
    %v872 = vpack.c.b16 %v670, %v669
    %v873 = vpack.c.b16 %v672, %v671
    %v874 = vpack.c.b16 %v674, %v673
    %v875 = vpack.c.b16 %v676, %v675
    %v876 = vpack.c.b16 %v678, %v677
    %v877 = vpack.c.b16 %v680, %v679
    %v878 = vpack.c.b16 %v682, %v681
    %v879 = vpack.c.b16 %v684, %v683
    %v880 = vpack.c.b16 %v686, %v685
    %v881 = vpack.c.b16 %v688, %v687
    %v882 = vpack.c.b16 %v690, %v689
    %v883 = vpack.c.b16 %v692, %v691
    %v884 = vpack.c.b16 %v694, %v693
    %v885 = vpack.c.b16 %v696, %v695
    %v886 = vpack.c.b16 %v698, %v697
    %v887 = vpack.c.b16 %v700, %v699
    %v888 = vpack.c.b16 %v702, %v701
    %v889 = vpack.c.b16 %v704, %v703
    %v890 = vpack.c.b16 %v706, %v705
    %v891 = vpack.c.b16 %v708, %v707
    %v892 = vpack.c.b16 %v710, %v709
    %v893 = vpack.c.b16 %v712, %v711
    %v894 = vpack.c.b16 %v714, %v713
    %v895 = vpack.c.b16 %v716, %v715
    %v896 = vpack.c.b16 %v718, %v717
    %v897 = vpack.c.b16 %v720, %v719
    %v898 = vpack.c.b16 %v722, %v721
    %v899 = vpack.c.b16 %v724, %v723
    %v900 = vpack.c.b16 %v726, %v725
    %v901 = vpack.c.b16 %v728, %v727
    %v902 = vpack.c.b16 %v730, %v729
    %v903 = vpack.c.b16 %v732, %v731
    %v904 = vpack.c.b16 %v734, %v733
    %v905 = vpack.c.b16 %v736, %v735
    %v906 = vpack.c.b16 %v738, %v737
    %v907 = vpack.c.b16 %v740, %v739
    %v908 = vpack.c.b16 %v742, %v741
    %v909 = vpack.c.b16 %v744, %v743
    %v910 = vpack.c.b16 %v746, %v745
    %v911 = vpack.c.b16 %v748, %v747
    %v912 = vpack.c.b16 %v750, %v749
    %v913 = vpack.c.b16 %v752, %v751
    %v914 = vpack.c.b16 %v754, %v753
    %v915 = vpack.c.b16 %v756, %v755
    %v916 = vpack.c.b16 %v758, %v757
    %v917 = vpack.c.b16 %v760, %v759
    %v918 = vpack.c.b16 %v762, %v761
    %v919 = vpack.c.b16 %v764, %v763
    %v920 = vpack.c.b16 %v766, %v765
    %v921 = vpack.c.b16 %v768, %v767
    %v922 = vpack.c.b16 %v770, %v769
    %v923 = vpack.c.b16 %v772, %v771
    %v924 = vpack.c.b16 %v774, %v773
    %v925 = vpack.c.b16 %v776, %v775
    %v926 = vpack.c.b16 %v778, %v777
    %v927 = vpack.c.b16 %v780, %v779
    %v928 = vpack.c.b16 %v782, %v781
    %v929 = vpack.c.b16 %v784, %v783
    %v930 = vpack.c.b16 %v786, %v785
    %v931 = vpack.c.b16 %v788, %v787
    %v932 = vpack.c.b16 %v790, %v789
    %v933 = vpack.c.b16 %v792, %v791
    %v934 = vpack.c.b16 %v794, %v793
    %v935 = vpack.c.b16 %v796, %v795
    %v936 = vpack.c.b16 %v798, %v797
    %v937 = vpack.c.b16 %v800, %v799
    %v938 = vpack.c.b16 %v802, %v801
    %v939 = vpack.c.b16 %v804, %v803
    %v940 = vpack.c.b16 %v806, %v805
    %v941 = vpack.c.b16 %v808, %v807
    %v942 = vpack.c.b16 %v810, %v809
    %v943 = vpack.c.b16 %v812, %v811
    %v944 = vpack.c.b16 %v814, %v813
    %v945 = vpack.c.b16 %v816, %v815
    %v946 = vpack.c.b16 %v818, %v817
    %vm947 = vcmask 64512
    %v949 = vsel %vm947, %v819, 0
    %v952 = vsel %vm947, %v820, 0
    %v955 = vsel %vm947, %v821, 0
    %v958 = vsel %vm947, %v822, 0
    %v961 = vsel %vm947, %v823, 0
    %v964 = vsel %vm947, %v824, 0
    %v967 = vsel %vm947, %v825, 0
    %v970 = vsel %vm947, %v826, 0
    %v973 = vsel %vm947, %v827, 0
    %v976 = vsel %vm947, %v828, 0
    %v979 = vsel %vm947, %v829, 0
    %v982 = vsel %vm947, %v830, 0
    %v985 = vsel %vm947, %v831, 0
    %v988 = vsel %vm947, %v832, 0
    %v991 = vsel %vm947, %v833, 0
    %v994 = vsel %vm947, %v834, 0
    %v997 = vsel %vm947, %v835, 0
    %v1000 = vsel %vm947, %v836, 0
    %v1003 = vsel %vm947, %v837, 0
    %v1006 = vsel %vm947, %v838, 0
    %v1009 = vsel %vm947, %v839, 0
    %v1012 = vsel %vm947, %v840, 0
    %v1015 = vsel %vm947, %v841, 0
    %v1018 = vsel %vm947, %v842, 0
    %v1021 = vsel %vm947, %v843, 0
    %v1024 = vsel %vm947, %v844, 0
    %v1027 = vsel %vm947, %v845, 0
    %v1030 = vsel %vm947, %v846, 0
    %v1033 = vsel %vm947, %v847, 0
    %v1036 = vsel %vm947, %v848, 0
    %v1039 = vsel %vm947, %v849, 0
    %v1042 = vsel %vm947, %v850, 0
    %v1045 = vsel %vm947, %v851, 0
    %v1048 = vsel %vm947, %v852, 0
    %v1051 = vsel %vm947, %v853, 0
    %v1054 = vsel %vm947, %v854, 0
    %v1057 = vsel %vm947, %v855, 0
    %v1060 = vsel %vm947, %v856, 0
    %v1063 = vsel %vm947, %v857, 0
    %v1066 = vsel %vm947, %v858, 0
    %v1069 = vsel %vm947, %v859, 0
    %v1072 = vsel %vm947, %v860, 0
    %v1075 = vsel %vm947, %v861, 0
    %v1078 = vsel %vm947, %v862, 0
    %v1081 = vsel %vm947, %v863, 0
    %v1084 = vsel %vm947, %v864, 0
    %v1087 = vsel %vm947, %v865, 0
    %v1090 = vsel %vm947, %v866, 0
    %v1093 = vsel %vm947, %v867, 0
    %v1096 = vsel %vm947, %v868, 0
    %v1099 = vsel %vm947, %v869, 0
    %v1102 = vsel %vm947, %v870, 0
    %v1105 = vsel %vm947, %v871, 0
    %v1108 = vsel %vm947, %v872, 0
    %v1111 = vsel %vm947, %v873, 0
    %v1114 = vsel %vm947, %v874, 0
    %v1117 = vsel %vm947, %v875, 0
    %v1120 = vsel %vm947, %v876, 0
    %v1123 = vsel %vm947, %v877, 0
    %v1126 = vsel %vm947, %v878, 0
    %v1129 = vsel %vm947, %v879, 0
    %v1132 = vsel %vm947, %v880, 0
    %v1135 = vsel %vm947, %v881, 0
    %v1138 = vsel %vm947, %v882, 0
    %v1141 = vsel %vm947, %v883, 0
    %v1144 = vsel %vm947, %v884, 0
    %v1147 = vsel %vm947, %v885, 0
    %v1150 = vsel %vm947, %v886, 0
    %v1153 = vsel %vm947, %v887, 0
    %v1156 = vsel %vm947, %v888, 0
    %v1159 = vsel %vm947, %v889, 0
    %v1162 = vsel %vm947, %v890, 0
    %v1165 = vsel %vm947, %v891, 0
    %v1168 = vsel %vm947, %v892, 0
    %v1171 = vsel %vm947, %v893, 0
    %v1174 = vsel %vm947, %v894, 0
    %v1177 = vsel %vm947, %v895, 0
    %v1180 = vsel %vm947, %v896, 0
    %v1183 = vsel %vm947, %v897, 0
    %v1186 = vsel %vm947, %v898, 0
    %v1189 = vsel %vm947, %v899, 0
    %v1192 = vsel %vm947, %v900, 0
    %v1195 = vsel %vm947, %v901, 0
    %v1198 = vsel %vm947, %v902, 0
    %v1201 = vsel %vm947, %v903, 0
    %v1204 = vsel %vm947, %v904, 0
    %v1207 = vsel %vm947, %v905, 0
    %v1210 = vsel %vm947, %v906, 0
    %v1213 = vsel %vm947, %v907, 0
    %v1216 = vsel %vm947, %v908, 0
    %v1219 = vsel %vm947, %v909, 0
    %v1222 = vsel %vm947, %v910, 0
    %v1225 = vsel %vm947, %v911, 0
    %v1228 = vsel %vm947, %v912, 0
    %v1231 = vsel %vm947, %v913, 0
    %v1234 = vsel %vm947, %v914, 0
    %v1237 = vsel %vm947, %v915, 0
    %v1240 = vsel %vm947, %v916, 0
    %v1243 = vsel %vm947, %v917, 0
    %v1246 = vsel %vm947, %v918, 0
    %v1249 = vsel %vm947, %v919, 0
    %v1252 = vsel %vm947, %v920, 0
    %v1255 = vsel %vm947, %v921, 0
    %v1258 = vsel %vm947, %v922, 0
    %v1261 = vsel %vm947, %v923, 0
    %v1264 = vsel %vm947, %v924, 0
    %v1267 = vsel %vm947, %v925, 0
    %v1270 = vsel %vm947, %v926, 0
    %v1273 = vsel %vm947, %v927, 0
    %v1276 = vsel %vm947, %v928, 0
    %v1279 = vsel %vm947, %v929, 0
    %v1282 = vsel %vm947, %v930, 0
    %v1285 = vsel %vm947, %v931, 0
    %v1288 = vsel %vm947, %v932, 0
    %v1291 = vsel %vm947, %v933, 0
    %v1294 = vsel %vm947, %v934, 0
    %v1297 = vsel %vm947, %v935, 0
    %v1300 = vsel %vm947, %v936, 0
    %v1303 = vsel %vm947, %v937, 0
    %v1306 = vsel %vm947, %v938, 0
    %v1309 = vsel %vm947, %v939, 0
    %v1312 = vsel %vm947, %v940, 0
    %v1315 = vsel %vm947, %v941, 0
    %v1318 = vsel %vm947, %v942, 0
    %v1321 = vsel %vm947, %v943, 0
    %v1324 = vsel %vm947, %v944, 0
    %v1327 = vsel %vm947, %v945, 0
    %v1330 = vsel %vm947, %v946, 0
    %vm1332 = vcmask 1043456
    %v1334 = vsel %vm1332, %v306, 0
    %1336 = vmatprep.subr.bf16.mxu0 0
    %1337 = vmatpush1.bf16.msra.mxu0 %v1334
    %1338 = vmatprep.subr.bf16.mxu0 0
    %1339 = vmatpush1.bf16.msra.mxu0 0
    %1340 = vmatprep.subr.bf16.mxu0 0
    %1341 = vmatpush1.bf16.msra.mxu0 0
    %1342 = vmatprep.subr.bf16.mxu0 0
    %1343 = vmatpush1.bf16.msra.mxu0 0
    %1344 = vmatprep.subr.bf16.mxu0 0
    %1345 = vmatpush1.bf16.msra.mxu0 0
    %1346 = vmatprep.subr.bf16.mxu0 0
    %1347 = vmatpush1.bf16.msra.mxu0 0
    %1348 = vmatprep.subr.bf16.mxu0 0
    %1349 = vmatpush1.bf16.msra.mxu0 0
    %1350 = vmatprep.subr.bf16.mxu0 0
    %1351 = vmatpush1.bf16.msra.mxu0 0
    %1352 = vmatprep.subr.bf16.mxu0 0
    %1353 = vmatpush1.bf16.msra.mxu0 0
    %1354 = vmatprep.subr.bf16.mxu0 0
    %1355 = vmatpush1.bf16.msra.mxu0 0
    %1356 = vmatprep.subr.bf16.mxu0 0
    %1357 = vmatpush1.bf16.msra.mxu0 0
    %1358 = vmatprep.subr.bf16.mxu0 0
    %1359 = vmatpush1.bf16.msra.mxu0 0
    %1360 = vmatprep.subr.bf16.mxu0 0
    %1361 = vmatpush1.bf16.msra.mxu0 0
    %1362 = vmatprep.subr.bf16.mxu0 0
    %1363 = vmatpush1.bf16.msra.mxu0 0
    %1364 = vmatprep.subr.bf16.mxu0 0
    %1365 = vmatpush1.bf16.msra.mxu0 0
    %1366 = vmatprep.subr.bf16.mxu0 0
    %1367 = vmatpush1.bf16.msra.mxu0 0
    %1368 = vmatprep.mubr.bf16.mxu0 0
    %1369 = vmatmul.mubr.bf16.gmra.mrb[0].mxu0 %v949
    %v1370 = vpop.f32.mrb[0].mxu0
    %v1371 = vadd.f32 0.0, %v1370
    %v1372 = vpop.f32.mrb[0].mxu0
    %v1373 = vpop.f32.mrb[0].mxu0
    %v1374 = vadd.f32 0.0, %v1373
    %v1375 = vpop.f32.mrb[0].mxu0
    %1376 = vmatprep.mubr.bf16.mxu0 0
    %1377 = vmatmul.mubr.bf16.gmra.mrb[0].mxu0 %v952
    %v1378 = vpop.f32.mrb[0].mxu0
    %v1379 = vadd.f32 0.0, %v1378
    %v1380 = vpop.f32.mrb[0].mxu0
    %v1381 = vpop.f32.mrb[0].mxu0
    %v1382 = vadd.f32 0.0, %v1381
    %v1383 = vpop.f32.mrb[0].mxu0
    %1384 = vmatprep.mubr.bf16.mxu0 0
    %1385 = vmatmul.mubr.bf16.gmra.mrb[0].mxu0 %v955
    %v1386 = vpop.f32.mrb[0].mxu0
    %v1387 = vadd.f32 0.0, %v1386
    %v1388 = vpop.f32.mrb[0].mxu0
    %v1389 = vpop.f32.mrb[0].mxu0
    %v1390 = vadd.f32 0.0, %v1389
    %v1391 = vpop.f32.mrb[0].mxu0
    %1392 = vmatprep.mubr.bf16.mxu0 0
    %1393 = vmatmul.mubr.bf16.gmra.mrb[0].mxu0 %v958
    %v1394 = vpop.f32.mrb[0].mxu0
    %v1395 = vadd.f32 0.0, %v1394
    %v1396 = vpop.f32.mrb[0].mxu0
    %v1397 = vpop.f32.mrb[0].mxu0
    %v1398 = vadd.f32 0.0, %v1397
    %v1399 = vpop.f32.mrb[0].mxu0
    %1400 = vmatprep.mubr.bf16.mxu0 0
    %1401 = vmatmul.mubr.bf16.gmra.mrb[0].mxu0 %v961
    %v1402 = vpop.f32.mrb[0].mxu0
    %v1403 = vadd.f32 0.0, %v1402
    %v1404 = vpop.f32.mrb[0].mxu0
    %v1405 = vpop.f32.mrb[0].mxu0
    %v1406 = vadd.f32 0.0, %v1405
    %v1407 = vpop.f32.mrb[0].mxu0
    %1408 = vmatprep.mubr.bf16.mxu0 0
    %1409 = vmatmul.mubr.bf16.gmra.mrb[0].mxu0 %v964
    %v1410 = vpop.f32.mrb[0].mxu0
    %v1411 = vadd.f32 0.0, %v1410
    %v1412 = vpop.f32.mrb[0].mxu0
    %v1413 = vpop.f32.mrb[0].mxu0
    %v1414 = vadd.f32 0.0, %v1413
    %v1415 = vpop.f32.mrb[0].mxu0
    %1416 = vmatprep.mubr.bf16.mxu0 0
    %1417 = vmatmul.mubr.bf16.gmra.mrb[0].mxu0 %v967
    %v1418 = vpop.f32.mrb[0].mxu0
    %v1419 = vadd.f32 0.0, %v1418
    %v1420 = vpop.f32.mrb[0].mxu0
    %v1421 = vpop.f32.mrb[0].mxu0
    %v1422 = vadd.f32 0.0, %v1421
    %v1423 = vpop.f32.mrb[0].mxu0
    %1424 = vmatprep.mubr.bf16.mxu0 0
    %1425 = vmatmul.mubr.bf16.gmra.mrb[0].mxu0 %v970
    %v1426 = vpop.f32.mrb[0].mxu0
    %v1427 = vadd.f32 0.0, %v1426
    %v1428 = vpop.f32.mrb[0].mxu0
    %v1429 = vpop.f32.mrb[0].mxu0
    %v1430 = vadd.f32 0.0, %v1429
    %v1431 = vpop.f32.mrb[0].mxu0
    %1432 = vmatprep.mubr.bf16.mxu0 0
    %1433 = vmatmul.mubr.bf16.gmra.mrb[0].mxu0 %v973
    %v1434 = vpop.f32.mrb[0].mxu0
    %v1435 = vadd.f32 0.0, %v1434
    %v1436 = vpop.f32.mrb[0].mxu0
    %v1437 = vpop.f32.mrb[0].mxu0
    %v1438 = vadd.f32 0.0, %v1437
    %v1439 = vpop.f32.mrb[0].mxu0
    %1440 = vmatprep.mubr.bf16.mxu0 0
    %1441 = vmatmul.mubr.bf16.gmra.mrb[0].mxu0 %v976
    %v1442 = vpop.f32.mrb[0].mxu0
    %v1443 = vadd.f32 0.0, %v1442
    %v1444 = vpop.f32.mrb[0].mxu0
    %v1445 = vpop.f32.mrb[0].mxu0
    %v1446 = vadd.f32 0.0, %v1445
    %v1447 = vpop.f32.mrb[0].mxu0
    %1448 = vmatprep.mubr.bf16.mxu0 0
    %1449 = vmatmul.mubr.bf16.gmra.mrb[0].mxu0 %v979
    %v1450 = vpop.f32.mrb[0].mxu0
    %v1451 = vadd.f32 0.0, %v1450
    %v1452 = vpop.f32.mrb[0].mxu0
    %v1453 = vpop.f32.mrb[0].mxu0
    %v1454 = vadd.f32 0.0, %v1453
    %v1455 = vpop.f32.mrb[0].mxu0
    %1456 = vmatprep.mubr.bf16.mxu0 0
    %1457 = vmatmul.mubr.bf16.gmra.mrb[0].mxu0 %v982
    %v1458 = vpop.f32.mrb[0].mxu0
    %v1459 = vadd.f32 0.0, %v1458
    %v1460 = vpop.f32.mrb[0].mxu0
    %v1461 = vpop.f32.mrb[0].mxu0
    %v1462 = vadd.f32 0.0, %v1461
    %v1463 = vpop.f32.mrb[0].mxu0
    %1464 = vmatprep.mubr.bf16.mxu0 0
    %1465 = vmatmul.mubr.bf16.gmra.mrb[0].mxu0 %v985
    %v1466 = vpop.f32.mrb[0].mxu0
    %v1467 = vadd.f32 0.0, %v1466
    %v1468 = vpop.f32.mrb[0].mxu0
    %v1469 = vpop.f32.mrb[0].mxu0
    %v1470 = vadd.f32 0.0, %v1469
    %v1471 = vpop.f32.mrb[0].mxu0
    %1472 = vmatprep.mubr.bf16.mxu0 0
    %1473 = vmatmul.mubr.bf16.gmra.mrb[0].mxu0 %v988
    %v1474 = vpop.f32.mrb[0].mxu0
    %v1475 = vadd.f32 0.0, %v1474
    %v1476 = vpop.f32.mrb[0].mxu0
    %v1477 = vpop.f32.mrb[0].mxu0
    %v1478 = vadd.f32 0.0, %v1477
    %v1479 = vpop.f32.mrb[0].mxu0
    %1480 = vmatprep.mubr.bf16.mxu0 0
    %1481 = vmatmul.mubr.bf16.gmra.mrb[0].mxu0 %v991
    %v1482 = vpop.f32.mrb[0].mxu0
    %v1483 = vadd.f32 0.0, %v1482
    %v1484 = vpop.f32.mrb[0].mxu0
    %v1485 = vpop.f32.mrb[0].mxu0
    %v1486 = vadd.f32 0.0, %v1485
    %v1487 = vpop.f32.mrb[0].mxu0
    %1488 = vmatprep.mubr.bf16.mxu0 0
    %1489 = vmatmul.mubr.bf16.gmra.mrb[0].mxu0 %v994
    %v1490 = vpop.f32.mrb[0].mxu0
    %v1491 = vadd.f32 0.0, %v1490
    %v1492 = vpop.f32.mrb[0].mxu0
    %v1493 = vpop.f32.mrb[0].mxu0
    %v1494 = vadd.f32 0.0, %v1493
    %v1495 = vpop.f32.mrb[0].mxu0
    %1496 = vmatprep.mubr.bf16.mxu0 0
    %1497 = vmatmul.mubr.bf16.gmra.mrb[0].mxu0 %v997
    %v1498 = vpop.f32.mrb[0].mxu0
    %v1499 = vadd.f32 0.0, %v1498
    %v1500 = vpop.f32.mrb[0].mxu0
    %v1501 = vpop.f32.mrb[0].mxu0
    %v1502 = vadd.f32 0.0, %v1501
    %v1503 = vpop.f32.mrb[0].mxu0
    %1504 = vmatprep.mubr.bf16.mxu0 0
    %1505 = vmatmul.mubr.bf16.gmra.mrb[0].mxu0 %v1000
    %v1506 = vpop.f32.mrb[0].mxu0
    %v1507 = vadd.f32 0.0, %v1506
    %v1508 = vpop.f32.mrb[0].mxu0
    %v1509 = vpop.f32.mrb[0].mxu0
    %v1510 = vadd.f32 0.0, %v1509
    %v1511 = vpop.f32.mrb[0].mxu0
    %1512 = vmatprep.mubr.bf16.mxu0 0
    %1513 = vmatmul.mubr.bf16.gmra.mrb[0].mxu0 %v1003
    %v1514 = vpop.f32.mrb[0].mxu0
    %v1515 = vadd.f32 0.0, %v1514
    %v1516 = vpop.f32.mrb[0].mxu0
    %v1517 = vpop.f32.mrb[0].mxu0
    %v1518 = vadd.f32 0.0, %v1517
    %v1519 = vpop.f32.mrb[0].mxu0
    %1520 = vmatprep.mubr.bf16.mxu0 0
    %1521 = vmatmul.mubr.bf16.gmra.mrb[0].mxu0 %v1006
    %v1522 = vpop.f32.mrb[0].mxu0
    %v1523 = vadd.f32 0.0, %v1522
    %v1524 = vpop.f32.mrb[0].mxu0
    %v1525 = vpop.f32.mrb[0].mxu0
    %v1526 = vadd.f32 0.0, %v1525
    %v1527 = vpop.f32.mrb[0].mxu0
    %1528 = vmatprep.mubr.bf16.mxu0 0
    %1529 = vmatmul.mubr.bf16.gmra.mrb[0].mxu0 %v1009
    %v1530 = vpop.f32.mrb[0].mxu0
    %v1531 = vadd.f32 0.0, %v1530
    %v1532 = vpop.f32.mrb[0].mxu0
    %v1533 = vpop.f32.mrb[0].mxu0
    %v1534 = vadd.f32 0.0, %v1533
    %v1535 = vpop.f32.mrb[0].mxu0
    %1536 = vmatprep.mubr.bf16.mxu0 0
    %1537 = vmatmul.mubr.bf16.gmra.mrb[0].mxu0 %v1012
    %v1538 = vpop.f32.mrb[0].mxu0
    %v1539 = vadd.f32 0.0, %v1538
    %v1540 = vpop.f32.mrb[0].mxu0
    %v1541 = vpop.f32.mrb[0].mxu0
    %v1542 = vadd.f32 0.0, %v1541
    %v1543 = vpop.f32.mrb[0].mxu0
    %1544 = vmatprep.mubr.bf16.mxu0 0
    %1545 = vmatmul.mubr.bf16.gmra.mrb[0].mxu0 %v1015
    %v1546 = vpop.f32.mrb[0].mxu0
    %v1547 = vadd.f32 0.0, %v1546
    %v1548 = vpop.f32.mrb[0].mxu0
    %v1549 = vpop.f32.mrb[0].mxu0
    %v1550 = vadd.f32 0.0, %v1549
    %v1551 = vpop.f32.mrb[0].mxu0
    %1552 = vmatprep.mubr.bf16.mxu0 0
    %1553 = vmatmul.mubr.bf16.gmra.mrb[0].mxu0 %v1018
    %v1554 = vpop.f32.mrb[0].mxu0
    %v1555 = vadd.f32 0.0, %v1554
    %v1556 = vpop.f32.mrb[0].mxu0
    %v1557 = vpop.f32.mrb[0].mxu0
    %v1558 = vadd.f32 0.0, %v1557
    %v1559 = vpop.f32.mrb[0].mxu0
    %1560 = vmatprep.mubr.bf16.mxu0 0
    %1561 = vmatmul.mubr.bf16.gmra.mrb[0].mxu0 %v1021
    %v1562 = vpop.f32.mrb[0].mxu0
    %v1563 = vadd.f32 0.0, %v1562
    %v1564 = vpop.f32.mrb[0].mxu0
    %v1565 = vpop.f32.mrb[0].mxu0
    %v1566 = vadd.f32 0.0, %v1565
    %v1567 = vpop.f32.mrb[0].mxu0
    %1568 = vmatprep.mubr.bf16.mxu0 0
    %1569 = vmatmul.mubr.bf16.gmra.mrb[0].mxu0 %v1024
    %v1570 = vpop.f32.mrb[0].mxu0
    %v1571 = vadd.f32 0.0, %v1570
    %v1572 = vpop.f32.mrb[0].mxu0
    %v1573 = vpop.f32.mrb[0].mxu0
    %v1574 = vadd.f32 0.0, %v1573
    %v1575 = vpop.f32.mrb[0].mxu0
    %1576 = vmatprep.mubr.bf16.mxu0 0
    %1577 = vmatmul.mubr.bf16.gmra.mrb[0].mxu0 %v1027
    %v1578 = vpop.f32.mrb[0].mxu0
    %v1579 = vadd.f32 0.0, %v1578
    %v1580 = vpop.f32.mrb[0].mxu0
    %v1581 = vpop.f32.mrb[0].mxu0
    %v1582 = vadd.f32 0.0, %v1581
    %v1583 = vpop.f32.mrb[0].mxu0
    %1584 = vmatprep.mubr.bf16.mxu0 0
    %1585 = vmatmul.mubr.bf16.gmra.mrb[0].mxu0 %v1030
    %v1586 = vpop.f32.mrb[0].mxu0
    %v1587 = vadd.f32 0.0, %v1586
    %v1588 = vpop.f32.mrb[0].mxu0
    %v1589 = vpop.f32.mrb[0].mxu0
    %v1590 = vadd.f32 0.0, %v1589
    %v1591 = vpop.f32.mrb[0].mxu0
    %1592 = vmatprep.mubr.bf16.mxu0 0
    %1593 = vmatmul.mubr.bf16.gmra.mrb[0].mxu0 %v1033
    %v1594 = vpop.f32.mrb[0].mxu0
    %v1595 = vadd.f32 0.0, %v1594
    %v1596 = vpop.f32.mrb[0].mxu0
    %v1597 = vpop.f32.mrb[0].mxu0
    %v1598 = vadd.f32 0.0, %v1597
    %v1599 = vpop.f32.mrb[0].mxu0
    %1600 = vmatprep.mubr.bf16.mxu0 0
    %1601 = vmatmul.mubr.bf16.gmra.mrb[0].mxu0 %v1036
    %v1602 = vpop.f32.mrb[0].mxu0
    %v1603 = vadd.f32 0.0, %v1602
    %v1604 = vpop.f32.mrb[0].mxu0
    %v1605 = vpop.f32.mrb[0].mxu0
    %v1606 = vadd.f32 0.0, %v1605
    %v1607 = vpop.f32.mrb[0].mxu0
    %1608 = vmatprep.mubr.bf16.mxu0 0
    %1609 = vmatmul.mubr.bf16.gmra.mrb[0].mxu0 %v1039
    %v1610 = vpop.f32.mrb[0].mxu0
    %v1611 = vadd.f32 0.0, %v1610
    %v1612 = vpop.f32.mrb[0].mxu0
    %v1613 = vpop.f32.mrb[0].mxu0
    %v1614 = vadd.f32 0.0, %v1613
    %v1615 = vpop.f32.mrb[0].mxu0
    %1616 = vmatprep.mubr.bf16.mxu0 0
    %1617 = vmatmul.mubr.bf16.gmra.mrb[0].mxu0 %v1042
    %v1618 = vpop.f32.mrb[0].mxu0
    %v1619 = vadd.f32 0.0, %v1618
    %v1620 = vpop.f32.mrb[0].mxu0
    %v1621 = vpop.f32.mrb[0].mxu0
    %v1622 = vadd.f32 0.0, %v1621
    %v1623 = vpop.f32.mrb[0].mxu0
    %1624 = vmatprep.mubr.bf16.mxu0 0
    %1625 = vmatmul.mubr.bf16.gmra.mrb[0].mxu0 %v1045
    %v1626 = vpop.f32.mrb[0].mxu0
    %v1627 = vadd.f32 0.0, %v1626
    %v1628 = vpop.f32.mrb[0].mxu0
    %v1629 = vpop.f32.mrb[0].mxu0
    %v1630 = vadd.f32 0.0, %v1629
    %v1631 = vpop.f32.mrb[0].mxu0
    %1632 = vmatprep.mubr.bf16.mxu0 0
    %1633 = vmatmul.mubr.bf16.gmra.mrb[0].mxu0 %v1048
    %v1634 = vpop.f32.mrb[0].mxu0
    %v1635 = vadd.f32 0.0, %v1634
    %v1636 = vpop.f32.mrb[0].mxu0
    %v1637 = vpop.f32.mrb[0].mxu0
    %v1638 = vadd.f32 0.0, %v1637
    %v1639 = vpop.f32.mrb[0].mxu0
    %1640 = vmatprep.mubr.bf16.mxu0 0
    %1641 = vmatmul.mubr.bf16.gmra.mrb[0].mxu0 %v1051
    %v1642 = vpop.f32.mrb[0].mxu0
    %v1643 = vadd.f32 0.0, %v1642
    %v1644 = vpop.f32.mrb[0].mxu0
    %v1645 = vpop.f32.mrb[0].mxu0
    %v1646 = vadd.f32 0.0, %v1645
    %v1647 = vpop.f32.mrb[0].mxu0
    %1648 = vmatprep.mubr.bf16.mxu0 0
    %1649 = vmatmul.mubr.bf16.gmra.mrb[0].mxu0 %v1054
    %v1650 = vpop.f32.mrb[0].mxu0
    %v1651 = vadd.f32 0.0, %v1650
    %v1652 = vpop.f32.mrb[0].mxu0
    %v1653 = vpop.f32.mrb[0].mxu0
    %v1654 = vadd.f32 0.0, %v1653
    %v1655 = vpop.f32.mrb[0].mxu0
    %1656 = vmatprep.mubr.bf16.mxu0 0
    %1657 = vmatmul.mubr.bf16.gmra.mrb[0].mxu0 %v1057
    %v1658 = vpop.f32.mrb[0].mxu0
    %v1659 = vadd.f32 0.0, %v1658
    %v1660 = vpop.f32.mrb[0].mxu0
    %v1661 = vpop.f32.mrb[0].mxu0
    %v1662 = vadd.f32 0.0, %v1661
    %v1663 = vpop.f32.mrb[0].mxu0
    %1664 = vmatprep.mubr.bf16.mxu0 0
    %1665 = vmatmul.mubr.bf16.gmra.mrb[0].mxu0 %v1060
    %v1666 = vpop.f32.mrb[0].mxu0
    %v1667 = vadd.f32 0.0, %v1666
    %v1668 = vpop.f32.mrb[0].mxu0
    %v1669 = vpop.f32.mrb[0].mxu0
    %v1670 = vadd.f32 0.0, %v1669
    %v1671 = vpop.f32.mrb[0].mxu0
    %1672 = vmatprep.mubr.bf16.mxu0 0
    %1673 = vmatmul.mubr.bf16.gmra.mrb[0].mxu0 %v1063
    %v1674 = vpop.f32.mrb[0].mxu0
    %v1675 = vadd.f32 0.0, %v1674
    %v1676 = vpop.f32.mrb[0].mxu0
    %v1677 = vpop.f32.mrb[0].mxu0
    %v1678 = vadd.f32 0.0, %v1677
    %v1679 = vpop.f32.mrb[0].mxu0
    %1680 = vmatprep.mubr.bf16.mxu0 0
    %1681 = vmatmul.mubr.bf16.gmra.mrb[0].mxu0 %v1066
    %v1682 = vpop.f32.mrb[0].mxu0
    %v1683 = vadd.f32 0.0, %v1682
    %v1684 = vpop.f32.mrb[0].mxu0
    %v1685 = vpop.f32.mrb[0].mxu0
    %v1686 = vadd.f32 0.0, %v1685
    %v1687 = vpop.f32.mrb[0].mxu0
    %1688 = vmatprep.mubr.bf16.mxu0 0
    %1689 = vmatmul.mubr.bf16.gmra.mrb[0].mxu0 %v1069
    %v1690 = vpop.f32.mrb[0].mxu0
    %v1691 = vadd.f32 0.0, %v1690
    %v1692 = vpop.f32.mrb[0].mxu0
    %v1693 = vpop.f32.mrb[0].mxu0
    %v1694 = vadd.f32 0.0, %v1693
    %v1695 = vpop.f32.mrb[0].mxu0
    %1696 = vmatprep.mubr.bf16.mxu0 0
    %1697 = vmatmul.mubr.bf16.gmra.mrb[0].mxu0 %v1072
    %v1698 = vpop.f32.mrb[0].mxu0
    %v1699 = vadd.f32 0.0, %v1698
    %v1700 = vpop.f32.mrb[0].mxu0
    %v1701 = vpop.f32.mrb[0].mxu0
    %v1702 = vadd.f32 0.0, %v1701
    %v1703 = vpop.f32.mrb[0].mxu0
    %1704 = vmatprep.mubr.bf16.mxu0 0
    %1705 = vmatmul.mubr.bf16.gmra.mrb[0].mxu0 %v1075
    %v1706 = vpop.f32.mrb[0].mxu0
    %v1707 = vadd.f32 0.0, %v1706
    %v1708 = vpop.f32.mrb[0].mxu0
    %v1709 = vpop.f32.mrb[0].mxu0
    %v1710 = vadd.f32 0.0, %v1709
    %v1711 = vpop.f32.mrb[0].mxu0
    %1712 = vmatprep.mubr.bf16.mxu0 0
    %1713 = vmatmul.mubr.bf16.gmra.mrb[0].mxu0 %v1078
    %v1714 = vpop.f32.mrb[0].mxu0
    %v1715 = vadd.f32 0.0, %v1714
    %v1716 = vpop.f32.mrb[0].mxu0
    %v1717 = vpop.f32.mrb[0].mxu0
    %v1718 = vadd.f32 0.0, %v1717
    %v1719 = vpop.f32.mrb[0].mxu0
    %1720 = vmatprep.mubr.bf16.mxu0 0
    %1721 = vmatmul.mubr.bf16.gmra.mrb[0].mxu0 %v1081
    %v1722 = vpop.f32.mrb[0].mxu0
    %v1723 = vadd.f32 0.0, %v1722
    %v1724 = vpop.f32.mrb[0].mxu0
    %v1725 = vpop.f32.mrb[0].mxu0
    %v1726 = vadd.f32 0.0, %v1725
    %v1727 = vpop.f32.mrb[0].mxu0
    %1728 = vmatprep.mubr.bf16.mxu0 0
    %1729 = vmatmul.mubr.bf16.gmra.mrb[0].mxu0 %v1084
    %v1730 = vpop.f32.mrb[0].mxu0
    %v1731 = vadd.f32 0.0, %v1730
    %v1732 = vpop.f32.mrb[0].mxu0
    %v1733 = vpop.f32.mrb[0].mxu0
    %v1734 = vadd.f32 0.0, %v1733
    %v1735 = vpop.f32.mrb[0].mxu0
    %1736 = vmatprep.mubr.bf16.mxu0 0
    %1737 = vmatmul.mubr.bf16.gmra.mrb[0].mxu0 %v1087
    %v1738 = vpop.f32.mrb[0].mxu0
    %v1739 = vadd.f32 0.0, %v1738
    %v1740 = vpop.f32.mrb[0].mxu0
    %v1741 = vpop.f32.mrb[0].mxu0
    %v1742 = vadd.f32 0.0, %v1741
    %v1743 = vpop.f32.mrb[0].mxu0
    %1744 = vmatprep.mubr.bf16.mxu0 0
    %1745 = vmatmul.mubr.bf16.gmra.mrb[0].mxu0 %v1090
    %v1746 = vpop.f32.mrb[0].mxu0
    %v1747 = vadd.f32 0.0, %v1746
    %v1748 = vpop.f32.mrb[0].mxu0
    %v1749 = vpop.f32.mrb[0].mxu0
    %v1750 = vadd.f32 0.0, %v1749
    %v1751 = vpop.f32.mrb[0].mxu0
    %1752 = vmatprep.mubr.bf16.mxu0 0
    %1753 = vmatmul.mubr.bf16.gmra.mrb[0].mxu0 %v1093
    %v1754 = vpop.f32.mrb[0].mxu0
    %v1755 = vadd.f32 0.0, %v1754
    %v1756 = vpop.f32.mrb[0].mxu0
    %v1757 = vpop.f32.mrb[0].mxu0
    %v1758 = vadd.f32 0.0, %v1757
    %v1759 = vpop.f32.mrb[0].mxu0
    %1760 = vmatprep.mubr.bf16.mxu0 0
    %1761 = vmatmul.mubr.bf16.gmra.mrb[0].mxu0 %v1096
    %v1762 = vpop.f32.mrb[0].mxu0
    %v1763 = vadd.f32 0.0, %v1762
    %v1764 = vpop.f32.mrb[0].mxu0
    %v1765 = vpop.f32.mrb[0].mxu0
    %v1766 = vadd.f32 0.0, %v1765
    %v1767 = vpop.f32.mrb[0].mxu0
    %1768 = vmatprep.mubr.bf16.mxu0 0
    %1769 = vmatmul.mubr.bf16.gmra.mrb[0].mxu0 %v1099
    %v1770 = vpop.f32.mrb[0].mxu0
    %v1771 = vadd.f32 0.0, %v1770
    %v1772 = vpop.f32.mrb[0].mxu0
    %v1773 = vpop.f32.mrb[0].mxu0
    %v1774 = vadd.f32 0.0, %v1773
    %v1775 = vpop.f32.mrb[0].mxu0
    %1776 = vmatprep.mubr.bf16.mxu0 0
    %1777 = vmatmul.mubr.bf16.gmra.mrb[0].mxu0 %v1102
    %v1778 = vpop.f32.mrb[0].mxu0
    %v1779 = vadd.f32 0.0, %v1778
    %v1780 = vpop.f32.mrb[0].mxu0
    %v1781 = vpop.f32.mrb[0].mxu0
    %v1782 = vadd.f32 0.0, %v1781
    %v1783 = vpop.f32.mrb[0].mxu0
    %1784 = vmatprep.mubr.bf16.mxu0 0
    %1785 = vmatmul.mubr.bf16.gmra.mrb[0].mxu0 %v1105
    %v1786 = vpop.f32.mrb[0].mxu0
    %v1787 = vadd.f32 0.0, %v1786
    %v1788 = vpop.f32.mrb[0].mxu0
    %v1789 = vpop.f32.mrb[0].mxu0
    %v1790 = vadd.f32 0.0, %v1789
    %v1791 = vpop.f32.mrb[0].mxu0
    %1792 = vmatprep.mubr.bf16.mxu0 0
    %1793 = vmatmul.mubr.bf16.gmra.mrb[0].mxu0 %v1108
    %v1794 = vpop.f32.mrb[0].mxu0
    %v1795 = vadd.f32 0.0, %v1794
    %v1796 = vpop.f32.mrb[0].mxu0
    %v1797 = vpop.f32.mrb[0].mxu0
    %v1798 = vadd.f32 0.0, %v1797
    %v1799 = vpop.f32.mrb[0].mxu0
    %1800 = vmatprep.mubr.bf16.mxu0 0
    %1801 = vmatmul.mubr.bf16.gmra.mrb[0].mxu0 %v1111
    %v1802 = vpop.f32.mrb[0].mxu0
    %v1803 = vadd.f32 0.0, %v1802
    %v1804 = vpop.f32.mrb[0].mxu0
    %v1805 = vpop.f32.mrb[0].mxu0
    %v1806 = vadd.f32 0.0, %v1805
    %v1807 = vpop.f32.mrb[0].mxu0
    %1808 = vmatprep.mubr.bf16.mxu0 0
    %1809 = vmatmul.mubr.bf16.gmra.mrb[0].mxu0 %v1114
    %v1810 = vpop.f32.mrb[0].mxu0
    %v1811 = vadd.f32 0.0, %v1810
    %v1812 = vpop.f32.mrb[0].mxu0
    %v1813 = vpop.f32.mrb[0].mxu0
    %v1814 = vadd.f32 0.0, %v1813
    %v1815 = vpop.f32.mrb[0].mxu0
    %1816 = vmatprep.mubr.bf16.mxu0 0
    %1817 = vmatmul.mubr.bf16.gmra.mrb[0].mxu0 %v1117
    %v1818 = vpop.f32.mrb[0].mxu0
    %v1819 = vadd.f32 0.0, %v1818
    %v1820 = vpop.f32.mrb[0].mxu0
    %v1821 = vpop.f32.mrb[0].mxu0
    %v1822 = vadd.f32 0.0, %v1821
    %v1823 = vpop.f32.mrb[0].mxu0
    %1824 = vmatprep.mubr.bf16.mxu0 0
    %1825 = vmatmul.mubr.bf16.gmra.mrb[0].mxu0 %v1120
    %v1826 = vpop.f32.mrb[0].mxu0
    %v1827 = vadd.f32 0.0, %v1826
    %v1828 = vpop.f32.mrb[0].mxu0
    %v1829 = vpop.f32.mrb[0].mxu0
    %v1830 = vadd.f32 0.0, %v1829
    %v1831 = vpop.f32.mrb[0].mxu0
    %1832 = vmatprep.mubr.bf16.mxu0 0
    %1833 = vmatmul.mubr.bf16.gmra.mrb[0].mxu0 %v1123
    %v1834 = vpop.f32.mrb[0].mxu0
    %v1835 = vadd.f32 0.0, %v1834
    %v1836 = vpop.f32.mrb[0].mxu0
    %v1837 = vpop.f32.mrb[0].mxu0
    %v1838 = vadd.f32 0.0, %v1837
    %v1839 = vpop.f32.mrb[0].mxu0
    %1840 = vmatprep.mubr.bf16.mxu0 0
    %1841 = vmatmul.mubr.bf16.gmra.mrb[0].mxu0 %v1126
    %v1842 = vpop.f32.mrb[0].mxu0
    %v1843 = vadd.f32 0.0, %v1842
    %v1844 = vpop.f32.mrb[0].mxu0
    %v1845 = vpop.f32.mrb[0].mxu0
    %v1846 = vadd.f32 0.0, %v1845
    %v1847 = vpop.f32.mrb[0].mxu0
    %1848 = vmatprep.mubr.bf16.mxu0 0
    %1849 = vmatmul.mubr.bf16.gmra.mrb[0].mxu0 %v1129
    %v1850 = vpop.f32.mrb[0].mxu0
    %v1851 = vadd.f32 0.0, %v1850
    %v1852 = vpop.f32.mrb[0].mxu0
    %v1853 = vpop.f32.mrb[0].mxu0
    %v1854 = vadd.f32 0.0, %v1853
    %v1855 = vpop.f32.mrb[0].mxu0
    %1856 = vmatprep.mubr.bf16.mxu0 0
    %1857 = vmatmul.mubr.bf16.gmra.mrb[0].mxu0 %v1132
    %v1858 = vpop.f32.mrb[0].mxu0
    %v1859 = vadd.f32 0.0, %v1858
    %v1860 = vpop.f32.mrb[0].mxu0
    %v1861 = vpop.f32.mrb[0].mxu0
    %v1862 = vadd.f32 0.0, %v1861
    %v1863 = vpop.f32.mrb[0].mxu0
    %1864 = vmatprep.mubr.bf16.mxu0 0
    %1865 = vmatmul.mubr.bf16.gmra.mrb[0].mxu0 %v1135
    %v1866 = vpop.f32.mrb[0].mxu0
    %v1867 = vadd.f32 0.0, %v1866
    %v1868 = vpop.f32.mrb[0].mxu0
    %v1869 = vpop.f32.mrb[0].mxu0
    %v1870 = vadd.f32 0.0, %v1869
    %v1871 = vpop.f32.mrb[0].mxu0
    %1872 = vmatprep.mubr.bf16.mxu0 0
    %1873 = vmatmul.mubr.bf16.gmra.mrb[0].mxu0 %v1138
    %v1874 = vpop.f32.mrb[0].mxu0
    %v1875 = vadd.f32 0.0, %v1874
    %v1876 = vpop.f32.mrb[0].mxu0
    %v1877 = vpop.f32.mrb[0].mxu0
    %v1878 = vadd.f32 0.0, %v1877
    %v1879 = vpop.f32.mrb[0].mxu0
    %1880 = vmatprep.mubr.bf16.mxu0 0
    %1881 = vmatmul.mubr.bf16.gmra.mrb[0].mxu0 %v1141
    %v1882 = vpop.f32.mrb[0].mxu0
    %v1883 = vadd.f32 0.0, %v1882
    %v1884 = vpop.f32.mrb[0].mxu0
    %v1885 = vpop.f32.mrb[0].mxu0
    %v1886 = vadd.f32 0.0, %v1885
    %v1887 = vpop.f32.mrb[0].mxu0
    %1888 = vmatprep.mubr.bf16.mxu0 0
    %1889 = vmatmul.mubr.bf16.gmra.mrb[0].mxu0 %v1144
    %v1890 = vpop.f32.mrb[0].mxu0
    %v1891 = vadd.f32 0.0, %v1890
    %v1892 = vpop.f32.mrb[0].mxu0
    %v1893 = vpop.f32.mrb[0].mxu0
    %v1894 = vadd.f32 0.0, %v1893
    %v1895 = vpop.f32.mrb[0].mxu0
    %1896 = vmatprep.mubr.bf16.mxu0 0
    %1897 = vmatmul.mubr.bf16.gmra.mrb[0].mxu0 %v1147
    %v1898 = vpop.f32.mrb[0].mxu0
    %v1899 = vadd.f32 0.0, %v1898
    %v1900 = vpop.f32.mrb[0].mxu0
    %v1901 = vpop.f32.mrb[0].mxu0
    %v1902 = vadd.f32 0.0, %v1901
    %v1903 = vpop.f32.mrb[0].mxu0
    %1904 = vmatprep.mubr.bf16.mxu0 0
    %1905 = vmatmul.mubr.bf16.gmra.mrb[0].mxu0 %v1150
    %v1906 = vpop.f32.mrb[0].mxu0
    %v1907 = vadd.f32 0.0, %v1906
    %v1908 = vpop.f32.mrb[0].mxu0
    %v1909 = vpop.f32.mrb[0].mxu0
    %v1910 = vadd.f32 0.0, %v1909
    %v1911 = vpop.f32.mrb[0].mxu0
    %1912 = vmatprep.mubr.bf16.mxu0 0
    %1913 = vmatmul.mubr.bf16.gmra.mrb[0].mxu0 %v1153
    %v1914 = vpop.f32.mrb[0].mxu0
    %v1915 = vadd.f32 0.0, %v1914
    %v1916 = vpop.f32.mrb[0].mxu0
    %v1917 = vpop.f32.mrb[0].mxu0
    %v1918 = vadd.f32 0.0, %v1917
    %v1919 = vpop.f32.mrb[0].mxu0
    %1920 = vmatprep.mubr.bf16.mxu0 0
    %1921 = vmatmul.mubr.bf16.gmra.mrb[0].mxu0 %v1156
    %v1922 = vpop.f32.mrb[0].mxu0
    %v1923 = vadd.f32 0.0, %v1922
    %v1924 = vpop.f32.mrb[0].mxu0
    %v1925 = vpop.f32.mrb[0].mxu0
    %v1926 = vadd.f32 0.0, %v1925
    %v1927 = vpop.f32.mrb[0].mxu0
    %1928 = vmatprep.mubr.bf16.mxu0 0
    %1929 = vmatmul.mubr.bf16.gmra.mrb[0].mxu0 %v1159
    %v1930 = vpop.f32.mrb[0].mxu0
    %v1931 = vadd.f32 0.0, %v1930
    %v1932 = vpop.f32.mrb[0].mxu0
    %v1933 = vpop.f32.mrb[0].mxu0
    %v1934 = vadd.f32 0.0, %v1933
    %v1935 = vpop.f32.mrb[0].mxu0
    %1936 = vmatprep.mubr.bf16.mxu0 0
    %1937 = vmatmul.mubr.bf16.gmra.mrb[0].mxu0 %v1162
    %v1938 = vpop.f32.mrb[0].mxu0
    %v1939 = vadd.f32 0.0, %v1938
    %v1940 = vpop.f32.mrb[0].mxu0
    %v1941 = vpop.f32.mrb[0].mxu0
    %v1942 = vadd.f32 0.0, %v1941
    %v1943 = vpop.f32.mrb[0].mxu0
    %1944 = vmatprep.mubr.bf16.mxu0 0
    %1945 = vmatmul.mubr.bf16.gmra.mrb[0].mxu0 %v1165
    %v1946 = vpop.f32.mrb[0].mxu0
    %v1947 = vadd.f32 0.0, %v1946
    %v1948 = vpop.f32.mrb[0].mxu0
    %v1949 = vpop.f32.mrb[0].mxu0
    %v1950 = vadd.f32 0.0, %v1949
    %v1951 = vpop.f32.mrb[0].mxu0
    %1952 = vmatprep.mubr.bf16.mxu0 0
    %1953 = vmatmul.mubr.bf16.gmra.mrb[0].mxu0 %v1168
    %v1954 = vpop.f32.mrb[0].mxu0
    %v1955 = vadd.f32 0.0, %v1954
    %v1956 = vpop.f32.mrb[0].mxu0
    %v1957 = vpop.f32.mrb[0].mxu0
    %v1958 = vadd.f32 0.0, %v1957
    %v1959 = vpop.f32.mrb[0].mxu0
    %1960 = vmatprep.mubr.bf16.mxu0 0
    %1961 = vmatmul.mubr.bf16.gmra.mrb[0].mxu0 %v1171
    %v1962 = vpop.f32.mrb[0].mxu0
    %v1963 = vadd.f32 0.0, %v1962
    %v1964 = vpop.f32.mrb[0].mxu0
    %v1965 = vpop.f32.mrb[0].mxu0
    %v1966 = vadd.f32 0.0, %v1965
    %v1967 = vpop.f32.mrb[0].mxu0
    %1968 = vmatprep.mubr.bf16.mxu0 0
    %1969 = vmatmul.mubr.bf16.gmra.mrb[0].mxu0 %v1174
    %v1970 = vpop.f32.mrb[0].mxu0
    %v1971 = vadd.f32 0.0, %v1970
    %v1972 = vpop.f32.mrb[0].mxu0
    %v1973 = vpop.f32.mrb[0].mxu0
    %v1974 = vadd.f32 0.0, %v1973
    %v1975 = vpop.f32.mrb[0].mxu0
    %1976 = vmatprep.mubr.bf16.mxu0 0
    %1977 = vmatmul.mubr.bf16.gmra.mrb[0].mxu0 %v1177
    %v1978 = vpop.f32.mrb[0].mxu0
    %v1979 = vadd.f32 0.0, %v1978
    %v1980 = vpop.f32.mrb[0].mxu0
    %v1981 = vpop.f32.mrb[0].mxu0
    %v1982 = vadd.f32 0.0, %v1981
    %v1983 = vpop.f32.mrb[0].mxu0
    %1984 = vmatprep.mubr.bf16.mxu0 0
    %1985 = vmatmul.mubr.bf16.gmra.mrb[0].mxu0 %v1180
    %v1986 = vpop.f32.mrb[0].mxu0
    %v1987 = vadd.f32 0.0, %v1986
    %v1988 = vpop.f32.mrb[0].mxu0
    %v1989 = vpop.f32.mrb[0].mxu0
    %v1990 = vadd.f32 0.0, %v1989
    %v1991 = vpop.f32.mrb[0].mxu0
    %1992 = vmatprep.mubr.bf16.mxu0 0
    %1993 = vmatmul.mubr.bf16.gmra.mrb[0].mxu0 %v1183
    %v1994 = vpop.f32.mrb[0].mxu0
    %v1995 = vadd.f32 0.0, %v1994
    %v1996 = vpop.f32.mrb[0].mxu0
    %v1997 = vpop.f32.mrb[0].mxu0
    %v1998 = vadd.f32 0.0, %v1997
    %v1999 = vpop.f32.mrb[0].mxu0
    %2000 = vmatprep.mubr.bf16.mxu0 0
    %2001 = vmatmul.mubr.bf16.gmra.mrb[0].mxu0 %v1186
    %v2002 = vpop.f32.mrb[0].mxu0
    %v2003 = vadd.f32 0.0, %v2002
    %v2004 = vpop.f32.mrb[0].mxu0
    %v2005 = vpop.f32.mrb[0].mxu0
    %v2006 = vadd.f32 0.0, %v2005
    %v2007 = vpop.f32.mrb[0].mxu0
    %2008 = vmatprep.mubr.bf16.mxu0 0
    %2009 = vmatmul.mubr.bf16.gmra.mrb[0].mxu0 %v1189
    %v2010 = vpop.f32.mrb[0].mxu0
    %v2011 = vadd.f32 0.0, %v2010
    %v2012 = vpop.f32.mrb[0].mxu0
    %v2013 = vpop.f32.mrb[0].mxu0
    %v2014 = vadd.f32 0.0, %v2013
    %v2015 = vpop.f32.mrb[0].mxu0
    %2016 = vmatprep.mubr.bf16.mxu0 0
    %2017 = vmatmul.mubr.bf16.gmra.mrb[0].mxu0 %v1192
    %v2018 = vpop.f32.mrb[0].mxu0
    %v2019 = vadd.f32 0.0, %v2018
    %v2020 = vpop.f32.mrb[0].mxu0
    %v2021 = vpop.f32.mrb[0].mxu0
    %v2022 = vadd.f32 0.0, %v2021
    %v2023 = vpop.f32.mrb[0].mxu0
    %2024 = vmatprep.mubr.bf16.mxu0 0
    %2025 = vmatmul.mubr.bf16.gmra.mrb[0].mxu0 %v1195
    %v2026 = vpop.f32.mrb[0].mxu0
    %v2027 = vadd.f32 0.0, %v2026
    %v2028 = vpop.f32.mrb[0].mxu0
    %v2029 = vpop.f32.mrb[0].mxu0
    %v2030 = vadd.f32 0.0, %v2029
    %v2031 = vpop.f32.mrb[0].mxu0
    %2032 = vmatprep.mubr.bf16.mxu0 0
    %2033 = vmatmul.mubr.bf16.gmra.mrb[0].mxu0 %v1198
    %v2034 = vpop.f32.mrb[0].mxu0
    %v2035 = vadd.f32 0.0, %v2034
    %v2036 = vpop.f32.mrb[0].mxu0
    %v2037 = vpop.f32.mrb[0].mxu0
    %v2038 = vadd.f32 0.0, %v2037
    %v2039 = vpop.f32.mrb[0].mxu0
    %2040 = vmatprep.mubr.bf16.mxu0 0
    %2041 = vmatmul.mubr.bf16.gmra.mrb[0].mxu0 %v1201
    %v2042 = vpop.f32.mrb[0].mxu0
    %v2043 = vadd.f32 0.0, %v2042
    %v2044 = vpop.f32.mrb[0].mxu0
    %v2045 = vpop.f32.mrb[0].mxu0
    %v2046 = vadd.f32 0.0, %v2045
    %v2047 = vpop.f32.mrb[0].mxu0
    %2048 = vmatprep.mubr.bf16.mxu0 0
    %2049 = vmatmul.mubr.bf16.gmra.mrb[0].mxu0 %v1204
    %v2050 = vpop.f32.mrb[0].mxu0
    %v2051 = vadd.f32 0.0, %v2050
    %v2052 = vpop.f32.mrb[0].mxu0
    %v2053 = vpop.f32.mrb[0].mxu0
    %v2054 = vadd.f32 0.0, %v2053
    %v2055 = vpop.f32.mrb[0].mxu0
    %2056 = vmatprep.mubr.bf16.mxu0 0
    %2057 = vmatmul.mubr.bf16.gmra.mrb[0].mxu0 %v1207
    %v2058 = vpop.f32.mrb[0].mxu0
    %v2059 = vadd.f32 0.0, %v2058
    %v2060 = vpop.f32.mrb[0].mxu0
    %v2061 = vpop.f32.mrb[0].mxu0
    %v2062 = vadd.f32 0.0, %v2061
    %v2063 = vpop.f32.mrb[0].mxu0
    %2064 = vmatprep.mubr.bf16.mxu0 0
    %2065 = vmatmul.mubr.bf16.gmra.mrb[0].mxu0 %v1210
    %v2066 = vpop.f32.mrb[0].mxu0
    %v2067 = vadd.f32 0.0, %v2066
    %v2068 = vpop.f32.mrb[0].mxu0
    %v2069 = vpop.f32.mrb[0].mxu0
    %v2070 = vadd.f32 0.0, %v2069
    %v2071 = vpop.f32.mrb[0].mxu0
    %2072 = vmatprep.mubr.bf16.mxu0 0
    %2073 = vmatmul.mubr.bf16.gmra.mrb[0].mxu0 %v1213
    %v2074 = vpop.f32.mrb[0].mxu0
    %v2075 = vadd.f32 0.0, %v2074
    %v2076 = vpop.f32.mrb[0].mxu0
    %v2077 = vpop.f32.mrb[0].mxu0
    %v2078 = vadd.f32 0.0, %v2077
    %v2079 = vpop.f32.mrb[0].mxu0
    %2080 = vmatprep.mubr.bf16.mxu0 0
    %2081 = vmatmul.mubr.bf16.gmra.mrb[0].mxu0 %v1216
    %v2082 = vpop.f32.mrb[0].mxu0
    %v2083 = vadd.f32 0.0, %v2082
    %v2084 = vpop.f32.mrb[0].mxu0
    %v2085 = vpop.f32.mrb[0].mxu0
    %v2086 = vadd.f32 0.0, %v2085
    %v2087 = vpop.f32.mrb[0].mxu0
    %2088 = vmatprep.mubr.bf16.mxu0 0
    %2089 = vmatmul.mubr.bf16.gmra.mrb[0].mxu0 %v1219
    %v2090 = vpop.f32.mrb[0].mxu0
    %v2091 = vadd.f32 0.0, %v2090
    %v2092 = vpop.f32.mrb[0].mxu0
    %v2093 = vpop.f32.mrb[0].mxu0
    %v2094 = vadd.f32 0.0, %v2093
    %v2095 = vpop.f32.mrb[0].mxu0
    %2096 = vmatprep.mubr.bf16.mxu0 0
    %2097 = vmatmul.mubr.bf16.gmra.mrb[0].mxu0 %v1222
    %v2098 = vpop.f32.mrb[0].mxu0
    %v2099 = vadd.f32 0.0, %v2098
    %v2100 = vpop.f32.mrb[0].mxu0
    %v2101 = vpop.f32.mrb[0].mxu0
    %v2102 = vadd.f32 0.0, %v2101
    %v2103 = vpop.f32.mrb[0].mxu0
    %2104 = vmatprep.mubr.bf16.mxu0 0
    %2105 = vmatmul.mubr.bf16.gmra.mrb[0].mxu0 %v1225
    %v2106 = vpop.f32.mrb[0].mxu0
    %v2107 = vadd.f32 0.0, %v2106
    %v2108 = vpop.f32.mrb[0].mxu0
    %v2109 = vpop.f32.mrb[0].mxu0
    %v2110 = vadd.f32 0.0, %v2109
    %v2111 = vpop.f32.mrb[0].mxu0
    %2112 = vmatprep.mubr.bf16.mxu0 0
    %2113 = vmatmul.mubr.bf16.gmra.mrb[0].mxu0 %v1228
    %v2114 = vpop.f32.mrb[0].mxu0
    %v2115 = vadd.f32 0.0, %v2114
    %v2116 = vpop.f32.mrb[0].mxu0
    %v2117 = vpop.f32.mrb[0].mxu0
    %v2118 = vadd.f32 0.0, %v2117
    %v2119 = vpop.f32.mrb[0].mxu0
    %2120 = vmatprep.mubr.bf16.mxu0 0
    %2121 = vmatmul.mubr.bf16.gmra.mrb[0].mxu0 %v1231
    %v2122 = vpop.f32.mrb[0].mxu0
    %v2123 = vadd.f32 0.0, %v2122
    %v2124 = vpop.f32.mrb[0].mxu0
    %v2125 = vpop.f32.mrb[0].mxu0
    %v2126 = vadd.f32 0.0, %v2125
    %v2127 = vpop.f32.mrb[0].mxu0
    %2128 = vmatprep.mubr.bf16.mxu0 0
    %2129 = vmatmul.mubr.bf16.gmra.mrb[0].mxu0 %v1234
    %v2130 = vpop.f32.mrb[0].mxu0
    %v2131 = vadd.f32 0.0, %v2130
    %v2132 = vpop.f32.mrb[0].mxu0
    %v2133 = vpop.f32.mrb[0].mxu0
    %v2134 = vadd.f32 0.0, %v2133
    %v2135 = vpop.f32.mrb[0].mxu0
    %2136 = vmatprep.mubr.bf16.mxu0 0
    %2137 = vmatmul.mubr.bf16.gmra.mrb[0].mxu0 %v1237
    %v2138 = vpop.f32.mrb[0].mxu0
    %v2139 = vadd.f32 0.0, %v2138
    %v2140 = vpop.f32.mrb[0].mxu0
    %v2141 = vpop.f32.mrb[0].mxu0
    %v2142 = vadd.f32 0.0, %v2141
    %v2143 = vpop.f32.mrb[0].mxu0
    %2144 = vmatprep.mubr.bf16.mxu0 0
    %2145 = vmatmul.mubr.bf16.gmra.mrb[0].mxu0 %v1240
    %v2146 = vpop.f32.mrb[0].mxu0
    %v2147 = vadd.f32 0.0, %v2146
    %v2148 = vpop.f32.mrb[0].mxu0
    %v2149 = vpop.f32.mrb[0].mxu0
    %v2150 = vadd.f32 0.0, %v2149
    %v2151 = vpop.f32.mrb[0].mxu0
    %2152 = vmatprep.mubr.bf16.mxu0 0
    %2153 = vmatmul.mubr.bf16.gmra.mrb[0].mxu0 %v1243
    %v2154 = vpop.f32.mrb[0].mxu0
    %v2155 = vadd.f32 0.0, %v2154
    %v2156 = vpop.f32.mrb[0].mxu0
    %v2157 = vpop.f32.mrb[0].mxu0
    %v2158 = vadd.f32 0.0, %v2157
    %v2159 = vpop.f32.mrb[0].mxu0
    %2160 = vmatprep.mubr.bf16.mxu0 0
    %2161 = vmatmul.mubr.bf16.gmra.mrb[0].mxu0 %v1246
    %v2162 = vpop.f32.mrb[0].mxu0
    %v2163 = vadd.f32 0.0, %v2162
    %v2164 = vpop.f32.mrb[0].mxu0
    %v2165 = vpop.f32.mrb[0].mxu0
    %v2166 = vadd.f32 0.0, %v2165
    %v2167 = vpop.f32.mrb[0].mxu0
    %2168 = vmatprep.mubr.bf16.mxu0 0
    %2169 = vmatmul.mubr.bf16.gmra.mrb[0].mxu0 %v1249
    %v2170 = vpop.f32.mrb[0].mxu0
    %v2171 = vadd.f32 0.0, %v2170
    %v2172 = vpop.f32.mrb[0].mxu0
    %v2173 = vpop.f32.mrb[0].mxu0
    %v2174 = vadd.f32 0.0, %v2173
    %v2175 = vpop.f32.mrb[0].mxu0
    %2176 = vmatprep.mubr.bf16.mxu0 0
    %2177 = vmatmul.mubr.bf16.gmra.mrb[0].mxu0 %v1252
    %v2178 = vpop.f32.mrb[0].mxu0
    %v2179 = vadd.f32 0.0, %v2178
    %v2180 = vpop.f32.mrb[0].mxu0
    %v2181 = vpop.f32.mrb[0].mxu0
    %v2182 = vadd.f32 0.0, %v2181
    %v2183 = vpop.f32.mrb[0].mxu0
    %2184 = vmatprep.mubr.bf16.mxu0 0
    %2185 = vmatmul.mubr.bf16.gmra.mrb[0].mxu0 %v1255
    %v2186 = vpop.f32.mrb[0].mxu0
    %v2187 = vadd.f32 0.0, %v2186
    %v2188 = vpop.f32.mrb[0].mxu0
    %v2189 = vpop.f32.mrb[0].mxu0
    %v2190 = vadd.f32 0.0, %v2189
    %v2191 = vpop.f32.mrb[0].mxu0
    %2192 = vmatprep.mubr.bf16.mxu0 0
    %2193 = vmatmul.mubr.bf16.gmra.mrb[0].mxu0 %v1258
    %v2194 = vpop.f32.mrb[0].mxu0
    %v2195 = vadd.f32 0.0, %v2194
    %v2196 = vpop.f32.mrb[0].mxu0
    %v2197 = vpop.f32.mrb[0].mxu0
    %v2198 = vadd.f32 0.0, %v2197
    %v2199 = vpop.f32.mrb[0].mxu0
    %2200 = vmatprep.mubr.bf16.mxu0 0
    %2201 = vmatmul.mubr.bf16.gmra.mrb[0].mxu0 %v1261
    %v2202 = vpop.f32.mrb[0].mxu0
    %v2203 = vadd.f32 0.0, %v2202
    %v2204 = vpop.f32.mrb[0].mxu0
    %v2205 = vpop.f32.mrb[0].mxu0
    %v2206 = vadd.f32 0.0, %v2205
    %v2207 = vpop.f32.mrb[0].mxu0
    %2208 = vmatprep.mubr.bf16.mxu0 0
    %2209 = vmatmul.mubr.bf16.gmra.mrb[0].mxu0 %v1264
    %v2210 = vpop.f32.mrb[0].mxu0
    %v2211 = vadd.f32 0.0, %v2210
    %v2212 = vpop.f32.mrb[0].mxu0
    %v2213 = vpop.f32.mrb[0].mxu0
    %v2214 = vadd.f32 0.0, %v2213
    %v2215 = vpop.f32.mrb[0].mxu0
    %2216 = vmatprep.mubr.bf16.mxu0 0
    %2217 = vmatmul.mubr.bf16.gmra.mrb[0].mxu0 %v1267
    %v2218 = vpop.f32.mrb[0].mxu0
    %v2219 = vadd.f32 0.0, %v2218
    %v2220 = vpop.f32.mrb[0].mxu0
    %v2221 = vpop.f32.mrb[0].mxu0
    %v2222 = vadd.f32 0.0, %v2221
    %v2223 = vpop.f32.mrb[0].mxu0
    %2224 = vmatprep.mubr.bf16.mxu0 0
    %2225 = vmatmul.mubr.bf16.gmra.mrb[0].mxu0 %v1270
    %v2226 = vpop.f32.mrb[0].mxu0
    %v2227 = vadd.f32 0.0, %v2226
    %v2228 = vpop.f32.mrb[0].mxu0
    %v2229 = vpop.f32.mrb[0].mxu0
    %v2230 = vadd.f32 0.0, %v2229
    %v2231 = vpop.f32.mrb[0].mxu0
    %2232 = vmatprep.mubr.bf16.mxu0 0
    %2233 = vmatmul.mubr.bf16.gmra.mrb[0].mxu0 %v1273
    %v2234 = vpop.f32.mrb[0].mxu0
    %v2235 = vadd.f32 0.0, %v2234
    %v2236 = vpop.f32.mrb[0].mxu0
    %v2237 = vpop.f32.mrb[0].mxu0
    %v2238 = vadd.f32 0.0, %v2237
    %v2239 = vpop.f32.mrb[0].mxu0
    %2240 = vmatprep.mubr.bf16.mxu0 0
    %2241 = vmatmul.mubr.bf16.gmra.mrb[0].mxu0 %v1276
    %v2242 = vpop.f32.mrb[0].mxu0
    %v2243 = vadd.f32 0.0, %v2242
    %v2244 = vpop.f32.mrb[0].mxu0
    %v2245 = vpop.f32.mrb[0].mxu0
    %v2246 = vadd.f32 0.0, %v2245
    %v2247 = vpop.f32.mrb[0].mxu0
    %2248 = vmatprep.mubr.bf16.mxu0 0
    %2249 = vmatmul.mubr.bf16.gmra.mrb[0].mxu0 %v1279
    %v2250 = vpop.f32.mrb[0].mxu0
    %v2251 = vadd.f32 0.0, %v2250
    %v2252 = vpop.f32.mrb[0].mxu0
    %v2253 = vpop.f32.mrb[0].mxu0
    %v2254 = vadd.f32 0.0, %v2253
    %v2255 = vpop.f32.mrb[0].mxu0
    %2256 = vmatprep.mubr.bf16.mxu0 0
    %2257 = vmatmul.mubr.bf16.gmra.mrb[0].mxu0 %v1282
    %v2258 = vpop.f32.mrb[0].mxu0
    %v2259 = vadd.f32 0.0, %v2258
    %v2260 = vpop.f32.mrb[0].mxu0
    %v2261 = vpop.f32.mrb[0].mxu0
    %v2262 = vadd.f32 0.0, %v2261
    %v2263 = vpop.f32.mrb[0].mxu0
    %2264 = vmatprep.mubr.bf16.mxu0 0
    %2265 = vmatmul.mubr.bf16.gmra.mrb[0].mxu0 %v1285
    %v2266 = vpop.f32.mrb[0].mxu0
    %v2267 = vadd.f32 0.0, %v2266
    %v2268 = vpop.f32.mrb[0].mxu0
    %v2269 = vpop.f32.mrb[0].mxu0
    %v2270 = vadd.f32 0.0, %v2269
    %v2271 = vpop.f32.mrb[0].mxu0
    %2272 = vmatprep.mubr.bf16.mxu0 0
    %2273 = vmatmul.mubr.bf16.gmra.mrb[0].mxu0 %v1288
    %v2274 = vpop.f32.mrb[0].mxu0
    %v2275 = vadd.f32 0.0, %v2274
    %v2276 = vpop.f32.mrb[0].mxu0
    %v2277 = vpop.f32.mrb[0].mxu0
    %v2278 = vadd.f32 0.0, %v2277
    %v2279 = vpop.f32.mrb[0].mxu0
    %2280 = vmatprep.mubr.bf16.mxu0 0
    %2281 = vmatmul.mubr.bf16.gmra.mrb[0].mxu0 %v1291
    %v2282 = vpop.f32.mrb[0].mxu0
    %v2283 = vadd.f32 0.0, %v2282
    %v2284 = vpop.f32.mrb[0].mxu0
    %v2285 = vpop.f32.mrb[0].mxu0
    %v2286 = vadd.f32 0.0, %v2285
    %v2287 = vpop.f32.mrb[0].mxu0
    %2288 = vmatprep.mubr.bf16.mxu0 0
    %2289 = vmatmul.mubr.bf16.gmra.mrb[0].mxu0 %v1294
    %v2290 = vpop.f32.mrb[0].mxu0
    %v2291 = vadd.f32 0.0, %v2290
    %v2292 = vpop.f32.mrb[0].mxu0
    %v2293 = vpop.f32.mrb[0].mxu0
    %v2294 = vadd.f32 0.0, %v2293
    %v2295 = vpop.f32.mrb[0].mxu0
    %2296 = vmatprep.mubr.bf16.mxu0 0
    %2297 = vmatmul.mubr.bf16.gmra.mrb[0].mxu0 %v1297
    %v2298 = vpop.f32.mrb[0].mxu0
    %v2299 = vadd.f32 0.0, %v2298
    %v2300 = vpop.f32.mrb[0].mxu0
    %v2301 = vpop.f32.mrb[0].mxu0
    %v2302 = vadd.f32 0.0, %v2301
    %v2303 = vpop.f32.mrb[0].mxu0
    %2304 = vmatprep.mubr.bf16.mxu0 0
    %2305 = vmatmul.mubr.bf16.gmra.mrb[0].mxu0 %v1300
    %v2306 = vpop.f32.mrb[0].mxu0
    %v2307 = vadd.f32 0.0, %v2306
    %v2308 = vpop.f32.mrb[0].mxu0
    %v2309 = vpop.f32.mrb[0].mxu0
    %v2310 = vadd.f32 0.0, %v2309
    %v2311 = vpop.f32.mrb[0].mxu0
    %2312 = vmatprep.mubr.bf16.mxu0 0
    %2313 = vmatmul.mubr.bf16.gmra.mrb[0].mxu0 %v1303
    %v2314 = vpop.f32.mrb[0].mxu0
    %v2315 = vadd.f32 0.0, %v2314
    %v2316 = vpop.f32.mrb[0].mxu0
    %v2317 = vpop.f32.mrb[0].mxu0
    %v2318 = vadd.f32 0.0, %v2317
    %v2319 = vpop.f32.mrb[0].mxu0
    %2320 = vmatprep.mubr.bf16.mxu0 0
    %2321 = vmatmul.mubr.bf16.gmra.mrb[0].mxu0 %v1306
    %v2322 = vpop.f32.mrb[0].mxu0
    %v2323 = vadd.f32 0.0, %v2322
    %v2324 = vpop.f32.mrb[0].mxu0
    %v2325 = vpop.f32.mrb[0].mxu0
    %v2326 = vadd.f32 0.0, %v2325
    %v2327 = vpop.f32.mrb[0].mxu0
    %2328 = vmatprep.mubr.bf16.mxu0 0
    %2329 = vmatmul.mubr.bf16.gmra.mrb[0].mxu0 %v1309
    %v2330 = vpop.f32.mrb[0].mxu0
    %v2331 = vadd.f32 0.0, %v2330
    %v2332 = vpop.f32.mrb[0].mxu0
    %v2333 = vpop.f32.mrb[0].mxu0
    %v2334 = vadd.f32 0.0, %v2333
    %v2335 = vpop.f32.mrb[0].mxu0
    %2336 = vmatprep.mubr.bf16.mxu0 0
    %2337 = vmatmul.mubr.bf16.gmra.mrb[0].mxu0 %v1312
    %v2338 = vpop.f32.mrb[0].mxu0
    %v2339 = vadd.f32 0.0, %v2338
    %v2340 = vpop.f32.mrb[0].mxu0
    %v2341 = vpop.f32.mrb[0].mxu0
    %v2342 = vadd.f32 0.0, %v2341
    %v2343 = vpop.f32.mrb[0].mxu0
    %2344 = vmatprep.mubr.bf16.mxu0 0
    %2345 = vmatmul.mubr.bf16.gmra.mrb[0].mxu0 %v1315
    %v2346 = vpop.f32.mrb[0].mxu0
    %v2347 = vadd.f32 0.0, %v2346
    %v2348 = vpop.f32.mrb[0].mxu0
    %v2349 = vpop.f32.mrb[0].mxu0
    %v2350 = vadd.f32 0.0, %v2349
    %v2351 = vpop.f32.mrb[0].mxu0
    %2352 = vmatprep.mubr.bf16.mxu0 0
    %2353 = vmatmul.mubr.bf16.gmra.mrb[0].mxu0 %v1318
    %v2354 = vpop.f32.mrb[0].mxu0
    %v2355 = vadd.f32 0.0, %v2354
    %v2356 = vpop.f32.mrb[0].mxu0
    %v2357 = vpop.f32.mrb[0].mxu0
    %v2358 = vadd.f32 0.0, %v2357
    %v2359 = vpop.f32.mrb[0].mxu0
    %2360 = vmatprep.mubr.bf16.mxu0 0
    %2361 = vmatmul.mubr.bf16.gmra.mrb[0].mxu0 %v1321
    %v2362 = vpop.f32.mrb[0].mxu0
    %v2363 = vadd.f32 0.0, %v2362
    %v2364 = vpop.f32.mrb[0].mxu0
    %v2365 = vpop.f32.mrb[0].mxu0
    %v2366 = vadd.f32 0.0, %v2365
    %v2367 = vpop.f32.mrb[0].mxu0
    %2368 = vmatprep.mubr.bf16.mxu0 0
    %2369 = vmatmul.mubr.bf16.gmra.mrb[0].mxu0 %v1324
    %v2370 = vpop.f32.mrb[0].mxu0
    %v2371 = vadd.f32 0.0, %v2370
    %v2372 = vpop.f32.mrb[0].mxu0
    %v2373 = vpop.f32.mrb[0].mxu0
    %v2374 = vadd.f32 0.0, %v2373
    %v2375 = vpop.f32.mrb[0].mxu0
    %2376 = vmatprep.mubr.bf16.mxu0 0
    %2377 = vmatmul.mubr.bf16.gmra.mrb[0].mxu0 %v1327
    %v2378 = vpop.f32.mrb[0].mxu0
    %v2379 = vadd.f32 0.0, %v2378
    %v2380 = vpop.f32.mrb[0].mxu0
    %v2381 = vpop.f32.mrb[0].mxu0
    %v2382 = vadd.f32 0.0, %v2381
    %v2383 = vpop.f32.mrb[0].mxu0
    %2384 = vmatprep.mubr.bf16.mxu0 0
    %2385 = vmatmul.mubr.bf16.gmra.mrb[0].mxu0 %v1330
    %v2386 = vpop.f32.mrb[0].mxu0
    %v2387 = vadd.f32 0.0, %v2386
    %v2388 = vpop.f32.mrb[0].mxu0
    %v2389 = vpop.f32.mrb[0].mxu0
    %v2390 = vadd.f32 0.0, %v2389
    %v2391 = vpop.f32.mrb[0].mxu0
    %2392 = vdwg.mxu0
    %v2393 = vpack.c.bf16 %v1374, %v1371
    %v2394 = vpack.c.bf16 %v1382, %v1379
    %v2395 = vpack.c.bf16 %v1390, %v1387
    %v2396 = vpack.c.bf16 %v1398, %v1395
    %v2397 = vpack.c.bf16 %v1406, %v1403
    %v2398 = vpack.c.bf16 %v1414, %v1411
    %v2399 = vpack.c.bf16 %v1422, %v1419
    %v2400 = vpack.c.bf16 %v1430, %v1427
    %v2401 = vpack.c.bf16 %v1438, %v1435
    %v2402 = vpack.c.bf16 %v1446, %v1443
    %v2403 = vpack.c.bf16 %v1454, %v1451
    %v2404 = vpack.c.bf16 %v1462, %v1459
    %v2405 = vpack.c.bf16 %v1470, %v1467
    %v2406 = vpack.c.bf16 %v1478, %v1475
    %v2407 = vpack.c.bf16 %v1486, %v1483
    %v2408 = vpack.c.bf16 %v1494, %v1491
    %v2409 = vpack.c.bf16 %v1502, %v1499
    %v2410 = vpack.c.bf16 %v1510, %v1507
    %v2411 = vpack.c.bf16 %v1518, %v1515
    %v2412 = vpack.c.bf16 %v1526, %v1523
    %v2413 = vpack.c.bf16 %v1534, %v1531
    %v2414 = vpack.c.bf16 %v1542, %v1539
    %v2415 = vpack.c.bf16 %v1550, %v1547
    %v2416 = vpack.c.bf16 %v1558, %v1555
    %v2417 = vpack.c.bf16 %v1566, %v1563
    %v2418 = vpack.c.bf16 %v1574, %v1571
    %v2419 = vpack.c.bf16 %v1582, %v1579
    %v2420 = vpack.c.bf16 %v1590, %v1587
    %v2421 = vpack.c.bf16 %v1598, %v1595
    %v2422 = vpack.c.bf16 %v1606, %v1603
    %v2423 = vpack.c.bf16 %v1614, %v1611
    %v2424 = vpack.c.bf16 %v1622, %v1619
    %v2425 = vpack.c.bf16 %v1630, %v1627
    %v2426 = vpack.c.bf16 %v1638, %v1635
    %v2427 = vpack.c.bf16 %v1646, %v1643
    %v2428 = vpack.c.bf16 %v1654, %v1651
    %v2429 = vpack.c.bf16 %v1662, %v1659
    %v2430 = vpack.c.bf16 %v1670, %v1667
    %v2431 = vpack.c.bf16 %v1678, %v1675
    %v2432 = vpack.c.bf16 %v1686, %v1683
    %v2433 = vpack.c.bf16 %v1694, %v1691
    %v2434 = vpack.c.bf16 %v1702, %v1699
    %v2435 = vpack.c.bf16 %v1710, %v1707
    %v2436 = vpack.c.bf16 %v1718, %v1715
    %v2437 = vpack.c.bf16 %v1726, %v1723
    %v2438 = vpack.c.bf16 %v1734, %v1731
    %v2439 = vpack.c.bf16 %v1742, %v1739
    %v2440 = vpack.c.bf16 %v1750, %v1747
    %v2441 = vpack.c.bf16 %v1758, %v1755
    %v2442 = vpack.c.bf16 %v1766, %v1763
    %v2443 = vpack.c.bf16 %v1774, %v1771
    %v2444 = vpack.c.bf16 %v1782, %v1779
    %v2445 = vpack.c.bf16 %v1790, %v1787
    %v2446 = vpack.c.bf16 %v1798, %v1795
    %v2447 = vpack.c.bf16 %v1806, %v1803
    %v2448 = vpack.c.bf16 %v1814, %v1811
    %v2449 = vpack.c.bf16 %v1822, %v1819
    %v2450 = vpack.c.bf16 %v1830, %v1827
    %v2451 = vpack.c.bf16 %v1838, %v1835
    %v2452 = vpack.c.bf16 %v1846, %v1843
    %v2453 = vpack.c.bf16 %v1854, %v1851
    %v2454 = vpack.c.bf16 %v1862, %v1859
    %v2455 = vpack.c.bf16 %v1870, %v1867
    %v2456 = vpack.c.bf16 %v1878, %v1875
    %v2457 = vpack.c.bf16 %v1886, %v1883
    %v2458 = vpack.c.bf16 %v1894, %v1891
    %v2459 = vpack.c.bf16 %v1902, %v1899
    %v2460 = vpack.c.bf16 %v1910, %v1907
    %v2461 = vpack.c.bf16 %v1918, %v1915
    %v2462 = vpack.c.bf16 %v1926, %v1923
    %v2463 = vpack.c.bf16 %v1934, %v1931
    %v2464 = vpack.c.bf16 %v1942, %v1939
    %v2465 = vpack.c.bf16 %v1950, %v1947
    %v2466 = vpack.c.bf16 %v1958, %v1955
    %v2467 = vpack.c.bf16 %v1966, %v1963
    %v2468 = vpack.c.bf16 %v1974, %v1971
    %v2469 = vpack.c.bf16 %v1982, %v1979
    %v2470 = vpack.c.bf16 %v1990, %v1987
    %v2471 = vpack.c.bf16 %v1998, %v1995
    %v2472 = vpack.c.bf16 %v2006, %v2003
    %v2473 = vpack.c.bf16 %v2014, %v2011
    %v2474 = vpack.c.bf16 %v2022, %v2019
    %v2475 = vpack.c.bf16 %v2030, %v2027
    %v2476 = vpack.c.bf16 %v2038, %v2035
    %v2477 = vpack.c.bf16 %v2046, %v2043
    %v2478 = vpack.c.bf16 %v2054, %v2051
    %v2479 = vpack.c.bf16 %v2062, %v2059
    %v2480 = vpack.c.bf16 %v2070, %v2067
    %v2481 = vpack.c.bf16 %v2078, %v2075
    %v2482 = vpack.c.bf16 %v2086, %v2083
    %v2483 = vpack.c.bf16 %v2094, %v2091
    %v2484 = vpack.c.bf16 %v2102, %v2099
    %v2485 = vpack.c.bf16 %v2110, %v2107
    %v2486 = vpack.c.bf16 %v2118, %v2115
    %v2487 = vpack.c.bf16 %v2126, %v2123
    %v2488 = vpack.c.bf16 %v2134, %v2131
    %v2489 = vpack.c.bf16 %v2142, %v2139
    %v2490 = vpack.c.bf16 %v2150, %v2147
    %v2491 = vpack.c.bf16 %v2158, %v2155
    %v2492 = vpack.c.bf16 %v2166, %v2163
    %v2493 = vpack.c.bf16 %v2174, %v2171
    %v2494 = vpack.c.bf16 %v2182, %v2179
    %v2495 = vpack.c.bf16 %v2190, %v2187
    %v2496 = vpack.c.bf16 %v2198, %v2195
    %v2497 = vpack.c.bf16 %v2206, %v2203
    %v2498 = vpack.c.bf16 %v2214, %v2211
    %v2499 = vpack.c.bf16 %v2222, %v2219
    %v2500 = vpack.c.bf16 %v2230, %v2227
    %v2501 = vpack.c.bf16 %v2238, %v2235
    %v2502 = vpack.c.bf16 %v2246, %v2243
    %v2503 = vpack.c.bf16 %v2254, %v2251
    %v2504 = vpack.c.bf16 %v2262, %v2259
    %v2505 = vpack.c.bf16 %v2270, %v2267
    %v2506 = vpack.c.bf16 %v2278, %v2275
    %v2507 = vpack.c.bf16 %v2286, %v2283
    %v2508 = vpack.c.bf16 %v2294, %v2291
    %v2509 = vpack.c.bf16 %v2302, %v2299
    %v2510 = vpack.c.bf16 %v2310, %v2307
    %v2511 = vpack.c.bf16 %v2318, %v2315
    %v2512 = vpack.c.bf16 %v2326, %v2323
    %v2513 = vpack.c.bf16 %v2334, %v2331
    %v2514 = vpack.c.bf16 %v2342, %v2339
    %v2515 = vpack.c.bf16 %v2350, %v2347
    %v2516 = vpack.c.bf16 %v2358, %v2355
    %v2517 = vpack.c.bf16 %v2366, %v2363
    %v2518 = vpack.c.bf16 %v2374, %v2371
    %v2519 = vpack.c.bf16 %v2382, %v2379
    %v2520 = vpack.c.bf16 %v2390, %v2387
    %v2521 = vld [vmem:[%s3] sm:$0x1]
    %v2522 = vpack.c.bf16 %v2521, %v2521
    %v2524 = vpack.i.b16 %v2522, %v2522
    %v2526 = vlaneseq
    %v2527 = vshrl.u32 %v2526, 7
    %v2528 = vsub.s32 0, %v2527
    %v2529 = vrot.slane %v2524, %v2528
    %v2530 = vadd.bf16 %v2393, %v2529
    %v2531 = vadd.bf16 %v2394, %v2529
    %v2532 = vadd.bf16 %v2395, %v2529
    %v2533 = vadd.bf16 %v2396, %v2529
    %v2534 = vadd.bf16 %v2397, %v2529
    %v2535 = vadd.bf16 %v2398, %v2529
    %v2536 = vadd.bf16 %v2399, %v2529
    %v2537 = vadd.bf16 %v2400, %v2529
    %v2538 = vadd.bf16 %v2401, %v2529
    %v2539 = vadd.bf16 %v2402, %v2529
    %v2540 = vadd.bf16 %v2403, %v2529
    %v2541 = vadd.bf16 %v2404, %v2529
    %v2542 = vadd.bf16 %v2405, %v2529
    %v2543 = vadd.bf16 %v2406, %v2529
    %v2544 = vadd.bf16 %v2407, %v2529
    %v2545 = vadd.bf16 %v2408, %v2529
    %v2546 = vadd.bf16 %v2409, %v2529
    %v2547 = vadd.bf16 %v2410, %v2529
    %v2548 = vadd.bf16 %v2411, %v2529
    %v2549 = vadd.bf16 %v2412, %v2529
    %v2550 = vadd.bf16 %v2413, %v2529
    %v2551 = vadd.bf16 %v2414, %v2529
    %v2552 = vadd.bf16 %v2415, %v2529
    %v2553 = vadd.bf16 %v2416, %v2529
    %v2554 = vadd.bf16 %v2417, %v2529
    %v2555 = vadd.bf16 %v2418, %v2529
    %v2556 = vadd.bf16 %v2419, %v2529
    %v2557 = vadd.bf16 %v2420, %v2529
    %v2558 = vadd.bf16 %v2421, %v2529
    %v2559 = vadd.bf16 %v2422, %v2529
    %v2560 = vadd.bf16 %v2423, %v2529
    %v2561 = vadd.bf16 %v2424, %v2529
    %v2562 = vadd.bf16 %v2425, %v2529
    %v2563 = vadd.bf16 %v2426, %v2529
    %v2564 = vadd.bf16 %v2427, %v2529
    %v2565 = vadd.bf16 %v2428, %v2529
    %v2566 = vadd.bf16 %v2429, %v2529
    %v2567 = vadd.bf16 %v2430, %v2529
    %v2568 = vadd.bf16 %v2431, %v2529
    %v2569 = vadd.bf16 %v2432, %v2529
    %v2570 = vadd.bf16 %v2433, %v2529
    %v2571 = vadd.bf16 %v2434, %v2529
    %v2572 = vadd.bf16 %v2435, %v2529
    %v2573 = vadd.bf16 %v2436, %v2529
    %v2574 = vadd.bf16 %v2437, %v2529
    %v2575 = vadd.bf16 %v2438, %v2529
    %v2576 = vadd.bf16 %v2439, %v2529
    %v2577 = vadd.bf16 %v2440, %v2529
    %v2578 = vadd.bf16 %v2441, %v2529
    %v2579 = vadd.bf16 %v2442, %v2529
    %v2580 = vadd.bf16 %v2443, %v2529
    %v2581 = vadd.bf16 %v2444, %v2529
    %v2582 = vadd.bf16 %v2445, %v2529
    %v2583 = vadd.bf16 %v2446, %v2529
    %v2584 = vadd.bf16 %v2447, %v2529
    %v2585 = vadd.bf16 %v2448, %v2529
    %v2586 = vadd.bf16 %v2449, %v2529
    %v2587 = vadd.bf16 %v2450, %v2529
    %v2588 = vadd.bf16 %v2451, %v2529
    %v2589 = vadd.bf16 %v2452, %v2529
    %v2590 = vadd.bf16 %v2453, %v2529
    %v2591 = vadd.bf16 %v2454, %v2529
    %v2592 = vadd.bf16 %v2455, %v2529
    %v2593 = vadd.bf16 %v2456, %v2529
    %v2594 = vadd.bf16 %v2457, %v2529
    %v2595 = vadd.bf16 %v2458, %v2529
    %v2596 = vadd.bf16 %v2459, %v2529
    %v2597 = vadd.bf16 %v2460, %v2529
    %v2598 = vadd.bf16 %v2461, %v2529
    %v2599 = vadd.bf16 %v2462, %v2529
    %v2600 = vadd.bf16 %v2463, %v2529
    %v2601 = vadd.bf16 %v2464, %v2529
    %v2602 = vadd.bf16 %v2465, %v2529
    %v2603 = vadd.bf16 %v2466, %v2529
    %v2604 = vadd.bf16 %v2467, %v2529
    %v2605 = vadd.bf16 %v2468, %v2529
    %v2606 = vadd.bf16 %v2469, %v2529
    %v2607 = vadd.bf16 %v2470, %v2529
    %v2608 = vadd.bf16 %v2471, %v2529
    %v2609 = vadd.bf16 %v2472, %v2529
    %v2610 = vadd.bf16 %v2473, %v2529
    %v2611 = vadd.bf16 %v2474, %v2529
    %v2612 = vadd.bf16 %v2475, %v2529
    %v2613 = vadd.bf16 %v2476, %v2529
    %v2614 = vadd.bf16 %v2477, %v2529
    %v2615 = vadd.bf16 %v2478, %v2529
    %v2616 = vadd.bf16 %v2479, %v2529
    %v2617 = vadd.bf16 %v2480, %v2529
    %v2618 = vadd.bf16 %v2481, %v2529
    %v2619 = vadd.bf16 %v2482, %v2529
    %v2620 = vadd.bf16 %v2483, %v2529
    %v2621 = vadd.bf16 %v2484, %v2529
    %v2622 = vadd.bf16 %v2485, %v2529
    %v2623 = vadd.bf16 %v2486, %v2529
    %v2624 = vadd.bf16 %v2487, %v2529
    %v2625 = vadd.bf16 %v2488, %v2529
    %v2626 = vadd.bf16 %v2489, %v2529
    %v2627 = vadd.bf16 %v2490, %v2529
    %v2628 = vadd.bf16 %v2491, %v2529
    %v2629 = vadd.bf16 %v2492, %v2529
    %v2630 = vadd.bf16 %v2493, %v2529
    %v2631 = vadd.bf16 %v2494, %v2529
    %v2632 = vadd.bf16 %v2495, %v2529
    %v2633 = vadd.bf16 %v2496, %v2529
    %v2634 = vadd.bf16 %v2497, %v2529
    %v2635 = vadd.bf16 %v2498, %v2529
    %v2636 = vadd.bf16 %v2499, %v2529
    %v2637 = vadd.bf16 %v2500, %v2529
    %v2638 = vadd.bf16 %v2501, %v2529
    %v2639 = vadd.bf16 %v2502, %v2529
    %v2640 = vadd.bf16 %v2503, %v2529
    %v2641 = vadd.bf16 %v2504, %v2529
    %v2642 = vadd.bf16 %v2505, %v2529
    %v2643 = vadd.bf16 %v2506, %v2529
    %v2644 = vadd.bf16 %v2507, %v2529
    %v2645 = vadd.bf16 %v2508, %v2529
    %v2646 = vadd.bf16 %v2509, %v2529
    %v2647 = vadd.bf16 %v2510, %v2529
    %v2648 = vadd.bf16 %v2511, %v2529
    %v2649 = vadd.bf16 %v2512, %v2529
    %v2650 = vadd.bf16 %v2513, %v2529
    %v2651 = vadd.bf16 %v2514, %v2529
    %v2652 = vadd.bf16 %v2515, %v2529
    %v2653 = vadd.bf16 %v2516, %v2529
    %v2654 = vadd.bf16 %v2517, %v2529
    %v2655 = vadd.bf16 %v2518, %v2529
    %v2656 = vadd.bf16 %v2519, %v2529
    %v2657 = vadd.bf16 %v2520, %v2529
    %v2658 = vmul.bf16 %v2530, 1036860877
    %v2659 = vmul.bf16 %v2531, 1036860877
    %v2660 = vmul.bf16 %v2532, 1036860877
    %v2661 = vmul.bf16 %v2533, 1036860877
    %v2662 = vmul.bf16 %v2534, 1036860877
    %v2663 = vmul.bf16 %v2535, 1036860877
    %v2664 = vmul.bf16 %v2536, 1036860877
    %v2665 = vmul.bf16 %v2537, 1036860877
    %v2666 = vmul.bf16 %v2538, 1036860877
    %v2667 = vmul.bf16 %v2539, 1036860877
    %v2668 = vmul.bf16 %v2540, 1036860877
    %v2669 = vmul.bf16 %v2541, 1036860877
    %v2670 = vmul.bf16 %v2542, 1036860877
    %v2671 = vmul.bf16 %v2543, 1036860877
    %v2672 = vmul.bf16 %v2544, 1036860877
    %v2673 = vmul.bf16 %v2545, 1036860877
    %v2674 = vmul.bf16 %v2546, 1036860877
    %v2675 = vmul.bf16 %v2547, 1036860877
    %v2676 = vmul.bf16 %v2548, 1036860877
    %v2677 = vmul.bf16 %v2549, 1036860877
    %v2678 = vmul.bf16 %v2550, 1036860877
    %v2679 = vmul.bf16 %v2551, 1036860877
    %v2680 = vmul.bf16 %v2552, 1036860877
    %v2681 = vmul.bf16 %v2553, 1036860877
    %v2682 = vmul.bf16 %v2554, 1036860877
    %v2683 = vmul.bf16 %v2555, 1036860877
    %v2684 = vmul.bf16 %v2556, 1036860877
    %v2685 = vmul.bf16 %v2557, 1036860877
    %v2686 = vmul.bf16 %v2558, 1036860877
    %v2687 = vmul.bf16 %v2559, 1036860877
    %v2688 = vmul.bf16 %v2560, 1036860877
    %v2689 = vmul.bf16 %v2561, 1036860877
    %v2690 = vmul.bf16 %v2562, 1036860877
    %v2691 = vmul.bf16 %v2563, 1036860877
    %v2692 = vmul.bf16 %v2564, 1036860877
    %v2693 = vmul.bf16 %v2565, 1036860877
    %v2694 = vmul.bf16 %v2566, 1036860877
    %v2695 = vmul.bf16 %v2567, 1036860877
    %v2696 = vmul.bf16 %v2568, 1036860877
    %v2697 = vmul.bf16 %v2569, 1036860877
    %v2698 = vmul.bf16 %v2570, 1036860877
    %v2699 = vmul.bf16 %v2571, 1036860877
    %v2700 = vmul.bf16 %v2572, 1036860877
    %v2701 = vmul.bf16 %v2573, 1036860877
    %v2702 = vmul.bf16 %v2574, 1036860877
    %v2703 = vmul.bf16 %v2575, 1036860877
    %v2704 = vmul.bf16 %v2576, 1036860877
    %v2705 = vmul.bf16 %v2577, 1036860877
    %v2706 = vmul.bf16 %v2578, 1036860877
    %v2707 = vmul.bf16 %v2579, 1036860877
    %v2708 = vmul.bf16 %v2580, 1036860877
    %v2709 = vmul.bf16 %v2581, 1036860877
    %v2710 = vmul.bf16 %v2582, 1036860877
    %v2711 = vmul.bf16 %v2583, 1036860877
    %v2712 = vmul.bf16 %v2584, 1036860877
    %v2713 = vmul.bf16 %v2585, 1036860877
    %v2714 = vmul.bf16 %v2586, 1036860877
    %v2715 = vmul.bf16 %v2587, 1036860877
    %v2716 = vmul.bf16 %v2588, 1036860877
    %v2717 = vmul.bf16 %v2589, 1036860877
    %v2718 = vmul.bf16 %v2590, 1036860877
    %v2719 = vmul.bf16 %v2591, 1036860877
    %v2720 = vmul.bf16 %v2592, 1036860877
    %v2721 = vmul.bf16 %v2593, 1036860877
    %v2722 = vmul.bf16 %v2594, 1036860877
    %v2723 = vmul.bf16 %v2595, 1036860877
    %v2724 = vmul.bf16 %v2596, 1036860877
    %v2725 = vmul.bf16 %v2597, 1036860877
    %v2726 = vmul.bf16 %v2598, 1036860877
    %v2727 = vmul.bf16 %v2599, 1036860877
    %v2728 = vmul.bf16 %v2600, 1036860877
    %v2729 = vmul.bf16 %v2601, 1036860877
    %v2730 = vmul.bf16 %v2602, 1036860877
    %v2731 = vmul.bf16 %v2603, 1036860877
    %v2732 = vmul.bf16 %v2604, 1036860877
    %v2733 = vmul.bf16 %v2605, 1036860877
    %v2734 = vmul.bf16 %v2606, 1036860877
    %v2735 = vmul.bf16 %v2607, 1036860877
    %v2736 = vmul.bf16 %v2608, 1036860877
    %v2737 = vmul.bf16 %v2609, 1036860877
    %v2738 = vmul.bf16 %v2610, 1036860877
    %v2739 = vmul.bf16 %v2611, 1036860877
    %v2740 = vmul.bf16 %v2612, 1036860877
    %v2741 = vmul.bf16 %v2613, 1036860877
    %v2742 = vmul.bf16 %v2614, 1036860877
    %v2743 = vmul.bf16 %v2615, 1036860877
    %v2744 = vmul.bf16 %v2616, 1036860877
    %v2745 = vmul.bf16 %v2617, 1036860877
    %v2746 = vmul.bf16 %v2618, 1036860877
    %v2747 = vmul.bf16 %v2619, 1036860877
    %v2748 = vmul.bf16 %v2620, 1036860877
    %v2749 = vmul.bf16 %v2621, 1036860877
    %v2750 = vmul.bf16 %v2622, 1036860877
    %v2751 = vmul.bf16 %v2623, 1036860877
    %v2752 = vmul.bf16 %v2624, 1036860877
    %v2753 = vmul.bf16 %v2625, 1036860877
    %v2754 = vmul.bf16 %v2626, 1036860877
    %v2755 = vmul.bf16 %v2627, 1036860877
    %v2756 = vmul.bf16 %v2628, 1036860877
    %v2757 = vmul.bf16 %v2629, 1036860877
    %v2758 = vmul.bf16 %v2630, 1036860877
    %v2759 = vmul.bf16 %v2631, 1036860877
    %v2760 = vmul.bf16 %v2632, 1036860877
    %v2761 = vmul.bf16 %v2633, 1036860877
    %v2762 = vmul.bf16 %v2634, 1036860877
    %v2763 = vmul.bf16 %v2635, 1036860877
    %v2764 = vmul.bf16 %v2636, 1036860877
    %v2765 = vmul.bf16 %v2637, 1036860877
    %v2766 = vmul.bf16 %v2638, 1036860877
    %v2767 = vmul.bf16 %v2639, 1036860877
    %v2768 = vmul.bf16 %v2640, 1036860877
    %v2769 = vmul.bf16 %v2641, 1036860877
    %v2770 = vmul.bf16 %v2642, 1036860877
    %v2771 = vmul.bf16 %v2643, 1036860877
    %v2772 = vmul.bf16 %v2644, 1036860877
    %v2773 = vmul.bf16 %v2645, 1036860877
    %v2774 = vmul.bf16 %v2646, 1036860877
    %v2775 = vmul.bf16 %v2647, 1036860877
    %v2776 = vmul.bf16 %v2648, 1036860877
    %v2777 = vmul.bf16 %v2649, 1036860877
    %v2778 = vmul.bf16 %v2650, 1036860877
    %v2779 = vmul.bf16 %v2651, 1036860877
    %v2780 = vmul.bf16 %v2652, 1036860877
    %v2781 = vmul.bf16 %v2653, 1036860877
    %v2782 = vmul.bf16 %v2654, 1036860877
    %v2783 = vmul.bf16 %v2655, 1036860877
    %v2784 = vmul.bf16 %v2656, 1036860877
    %v2785 = vmul.bf16 %v2657, 1036860877
    %v2786 = vmax.bf16 %v2530, %v2658
    %v2787 = vmax.bf16 %v2531, %v2659
    %v2788 = vmax.bf16 %v2532, %v2660
    %v2789 = vmax.bf16 %v2533, %v2661
    %v2790 = vmax.bf16 %v2534, %v2662
    %v2791 = vmax.bf16 %v2535, %v2663
    %v2792 = vmax.bf16 %v2536, %v2664
    %v2793 = vmax.bf16 %v2537, %v2665
    %v2794 = vmax.bf16 %v2538, %v2666
    %v2795 = vmax.bf16 %v2539, %v2667
    %v2796 = vmax.bf16 %v2540, %v2668
    %v2797 = vmax.bf16 %v2541, %v2669
    %v2798 = vmax.bf16 %v2542, %v2670
    %v2799 = vmax.bf16 %v2543, %v2671
    %v2800 = vmax.bf16 %v2544, %v2672
    %v2801 = vmax.bf16 %v2545, %v2673
    %v2802 = vmax.bf16 %v2546, %v2674
    %v2803 = vmax.bf16 %v2547, %v2675
    %v2804 = vmax.bf16 %v2548, %v2676
    %v2805 = vmax.bf16 %v2549, %v2677
    %v2806 = vmax.bf16 %v2550, %v2678
    %v2807 = vmax.bf16 %v2551, %v2679
    %v2808 = vmax.bf16 %v2552, %v2680
    %v2809 = vmax.bf16 %v2553, %v2681
    %v2810 = vmax.bf16 %v2554, %v2682
    %v2811 = vmax.bf16 %v2555, %v2683
    %v2812 = vmax.bf16 %v2556, %v2684
    %v2813 = vmax.bf16 %v2557, %v2685
    %v2814 = vmax.bf16 %v2558, %v2686
    %v2815 = vmax.bf16 %v2559, %v2687
    %v2816 = vmax.bf16 %v2560, %v2688
    %v2817 = vmax.bf16 %v2561, %v2689
    %v2818 = vmax.bf16 %v2562, %v2690
    %v2819 = vmax.bf16 %v2563, %v2691
    %v2820 = vmax.bf16 %v2564, %v2692
    %v2821 = vmax.bf16 %v2565, %v2693
    %v2822 = vmax.bf16 %v2566, %v2694
    %v2823 = vmax.bf16 %v2567, %v2695
    %v2824 = vmax.bf16 %v2568, %v2696
    %v2825 = vmax.bf16 %v2569, %v2697
    %v2826 = vmax.bf16 %v2570, %v2698
    %v2827 = vmax.bf16 %v2571, %v2699
    %v2828 = vmax.bf16 %v2572, %v2700
    %v2829 = vmax.bf16 %v2573, %v2701
    %v2830 = vmax.bf16 %v2574, %v2702
    %v2831 = vmax.bf16 %v2575, %v2703
    %v2832 = vmax.bf16 %v2576, %v2704
    %v2833 = vmax.bf16 %v2577, %v2705
    %v2834 = vmax.bf16 %v2578, %v2706
    %v2835 = vmax.bf16 %v2579, %v2707
    %v2836 = vmax.bf16 %v2580, %v2708
    %v2837 = vmax.bf16 %v2581, %v2709
    %v2838 = vmax.bf16 %v2582, %v2710
    %v2839 = vmax.bf16 %v2583, %v2711
    %v2840 = vmax.bf16 %v2584, %v2712
    %v2841 = vmax.bf16 %v2585, %v2713
    %v2842 = vmax.bf16 %v2586, %v2714
    %v2843 = vmax.bf16 %v2587, %v2715
    %v2844 = vmax.bf16 %v2588, %v2716
    %v2845 = vmax.bf16 %v2589, %v2717
    %v2846 = vmax.bf16 %v2590, %v2718
    %v2847 = vmax.bf16 %v2591, %v2719
    %v2848 = vmax.bf16 %v2592, %v2720
    %v2849 = vmax.bf16 %v2593, %v2721
    %v2850 = vmax.bf16 %v2594, %v2722
    %v2851 = vmax.bf16 %v2595, %v2723
    %v2852 = vmax.bf16 %v2596, %v2724
    %v2853 = vmax.bf16 %v2597, %v2725
    %v2854 = vmax.bf16 %v2598, %v2726
    %v2855 = vmax.bf16 %v2599, %v2727
    %v2856 = vmax.bf16 %v2600, %v2728
    %v2857 = vmax.bf16 %v2601, %v2729
    %v2858 = vmax.bf16 %v2602, %v2730
    %v2859 = vmax.bf16 %v2603, %v2731
    %v2860 = vmax.bf16 %v2604, %v2732
    %v2861 = vmax.bf16 %v2605, %v2733
    %v2862 = vmax.bf16 %v2606, %v2734
    %v2863 = vmax.bf16 %v2607, %v2735
    %v2864 = vmax.bf16 %v2608, %v2736
    %v2865 = vmax.bf16 %v2609, %v2737
    %v2866 = vmax.bf16 %v2610, %v2738
    %v2867 = vmax.bf16 %v2611, %v2739
    %v2868 = vmax.bf16 %v2612, %v2740
    %v2869 = vmax.bf16 %v2613, %v2741
    %v2870 = vmax.bf16 %v2614, %v2742
    %v2871 = vmax.bf16 %v2615, %v2743
    %v2872 = vmax.bf16 %v2616, %v2744
    %v2873 = vmax.bf16 %v2617, %v2745
    %v2874 = vmax.bf16 %v2618, %v2746
    %v2875 = vmax.bf16 %v2619, %v2747
    %v2876 = vmax.bf16 %v2620, %v2748
    %v2877 = vmax.bf16 %v2621, %v2749
    %v2878 = vmax.bf16 %v2622, %v2750
    %v2879 = vmax.bf16 %v2623, %v2751
    %v2880 = vmax.bf16 %v2624, %v2752
    %v2881 = vmax.bf16 %v2625, %v2753
    %v2882 = vmax.bf16 %v2626, %v2754
    %v2883 = vmax.bf16 %v2627, %v2755
    %v2884 = vmax.bf16 %v2628, %v2756
    %v2885 = vmax.bf16 %v2629, %v2757
    %v2886 = vmax.bf16 %v2630, %v2758
    %v2887 = vmax.bf16 %v2631, %v2759
    %v2888 = vmax.bf16 %v2632, %v2760
    %v2889 = vmax.bf16 %v2633, %v2761
    %v2890 = vmax.bf16 %v2634, %v2762
    %v2891 = vmax.bf16 %v2635, %v2763
    %v2892 = vmax.bf16 %v2636, %v2764
    %v2893 = vmax.bf16 %v2637, %v2765
    %v2894 = vmax.bf16 %v2638, %v2766
    %v2895 = vmax.bf16 %v2639, %v2767
    %v2896 = vmax.bf16 %v2640, %v2768
    %v2897 = vmax.bf16 %v2641, %v2769
    %v2898 = vmax.bf16 %v2642, %v2770
    %v2899 = vmax.bf16 %v2643, %v2771
    %v2900 = vmax.bf16 %v2644, %v2772
    %v2901 = vmax.bf16 %v2645, %v2773
    %v2902 = vmax.bf16 %v2646, %v2774
    %v2903 = vmax.bf16 %v2647, %v2775
    %v2904 = vmax.bf16 %v2648, %v2776
    %v2905 = vmax.bf16 %v2649, %v2777
    %v2906 = vmax.bf16 %v2650, %v2778
    %v2907 = vmax.bf16 %v2651, %v2779
    %v2908 = vmax.bf16 %v2652, %v2780
    %v2909 = vmax.bf16 %v2653, %v2781
    %v2910 = vmax.bf16 %v2654, %v2782
    %v2911 = vmax.bf16 %v2655, %v2783
    %v2912 = vmax.bf16 %v2656, %v2784
    %v2913 = vmax.bf16 %v2657, %v2785
    %v2914 = vld [vmem:[%s4] sm:$0xf]
    %v2915 = vld [vmem:[%s4 + $0x4] sm:$0xf]
    %v2916 = vld [vmem:[%s4 + $0x8] sm:$0xf]
    %v2917 = vld [vmem:[%s4 + $0xc] sm:$0xf]
    %v2918 = vld [vmem:[%s4 + $0x10] sm:$0xf]
    %v2919 = vld [vmem:[%s4 + $0x14] sm:$0xf]
    %v2920 = vld [vmem:[%s4 + $0x18] sm:$0xf]
    %v2921 = vld [vmem:[%s4 + $0x1c] sm:$0xf]
    %v2930 = vunpack.c.l.b16 %v2914
    %v2931 = vunpack.c.l.b16 %v2915
    %v2932 = vunpack.c.l.b16 %v2916
    %v2933 = vunpack.c.l.b16 %v2917
    %v2934 = vunpack.c.l.b16 %v2918
    %v2935 = vunpack.c.l.b16 %v2919
    %v2936 = vunpack.c.l.b16 %v2920
    %v2937 = vunpack.c.l.b16 %v2921
    %v2938 = vpack.c.b16 %v2931, %v2930
    %v2939 = vpack.c.b16 %v2933, %v2932
    %v2940 = vpack.c.b16 %v2935, %v2934
    %v2941 = vpack.c.b16 %v2937, %v2936
    %vm2946 = vcmask 523264
    %v2948 = vsel %vm2946, %v2786, 0
    %v2951 = vsel %vm2946, %v2787, 0
    %v2954 = vsel %vm2946, %v2788, 0
    %v2957 = vsel %vm2946, %v2789, 0
    %v2960 = vsel %vm2946, %v2790, 0
    %v2963 = vsel %vm2946, %v2791, 0
    %v2966 = vsel %vm2946, %v2792, 0
    %v2969 = vsel %vm2946, %v2793, 0
    %v2972 = vsel %vm2946, %v2794, 0
    %v2975 = vsel %vm2946, %v2795, 0
    %v2978 = vsel %vm2946, %v2796, 0
    %v2981 = vsel %vm2946, %v2797, 0
    %v2984 = vsel %vm2946, %v2798, 0
    %v2987 = vsel %vm2946, %v2799, 0
    %v2990 = vsel %vm2946, %v2800, 0
    %v2993 = vsel %vm2946, %v2801, 0
    %v2996 = vsel %vm2946, %v2802, 0
    %v2999 = vsel %vm2946, %v2803, 0
    %v3002 = vsel %vm2946, %v2804, 0
    %v3005 = vsel %vm2946, %v2805, 0
    %v3008 = vsel %vm2946, %v2806, 0
    %v3011 = vsel %vm2946, %v2807, 0
    %v3014 = vsel %vm2946, %v2808, 0
    %v3017 = vsel %vm2946, %v2809, 0
    %v3020 = vsel %vm2946, %v2810, 0
    %v3023 = vsel %vm2946, %v2811, 0
    %v3026 = vsel %vm2946, %v2812, 0
    %v3029 = vsel %vm2946, %v2813, 0
    %v3032 = vsel %vm2946, %v2814, 0
    %v3035 = vsel %vm2946, %v2815, 0
    %v3038 = vsel %vm2946, %v2816, 0
    %v3041 = vsel %vm2946, %v2817, 0
    %v3044 = vsel %vm2946, %v2818, 0
    %v3047 = vsel %vm2946, %v2819, 0
    %v3050 = vsel %vm2946, %v2820, 0
    %v3053 = vsel %vm2946, %v2821, 0
    %v3056 = vsel %vm2946, %v2822, 0
    %v3059 = vsel %vm2946, %v2823, 0
    %v3062 = vsel %vm2946, %v2824, 0
    %v3065 = vsel %vm2946, %v2825, 0
    %v3068 = vsel %vm2946, %v2826, 0
    %v3071 = vsel %vm2946, %v2827, 0
    %v3074 = vsel %vm2946, %v2828, 0
    %v3077 = vsel %vm2946, %v2829, 0
    %v3080 = vsel %vm2946, %v2830, 0
    %v3083 = vsel %vm2946, %v2831, 0
    %v3086 = vsel %vm2946, %v2832, 0
    %v3089 = vsel %vm2946, %v2833, 0
    %v3092 = vsel %vm2946, %v2834, 0
    %v3095 = vsel %vm2946, %v2835, 0
    %v3098 = vsel %vm2946, %v2836, 0
    %v3101 = vsel %vm2946, %v2837, 0
    %v3104 = vsel %vm2946, %v2838, 0
    %v3107 = vsel %vm2946, %v2839, 0
    %v3110 = vsel %vm2946, %v2840, 0
    %v3113 = vsel %vm2946, %v2841, 0
    %v3116 = vsel %vm2946, %v2842, 0
    %v3119 = vsel %vm2946, %v2843, 0
    %v3122 = vsel %vm2946, %v2844, 0
    %v3125 = vsel %vm2946, %v2845, 0
    %v3128 = vsel %vm2946, %v2846, 0
    %v3131 = vsel %vm2946, %v2847, 0
    %v3134 = vsel %vm2946, %v2848, 0
    %v3137 = vsel %vm2946, %v2849, 0
    %v3140 = vsel %vm2946, %v2850, 0
    %v3143 = vsel %vm2946, %v2851, 0
    %v3146 = vsel %vm2946, %v2852, 0
    %v3149 = vsel %vm2946, %v2853, 0
    %v3152 = vsel %vm2946, %v2854, 0
    %v3155 = vsel %vm2946, %v2855, 0
    %v3158 = vsel %vm2946, %v2856, 0
    %v3161 = vsel %vm2946, %v2857, 0
    %v3164 = vsel %vm2946, %v2858, 0
    %v3167 = vsel %vm2946, %v2859, 0
    %v3170 = vsel %vm2946, %v2860, 0
    %v3173 = vsel %vm2946, %v2861, 0
    %v3176 = vsel %vm2946, %v2862, 0
    %v3179 = vsel %vm2946, %v2863, 0
    %v3182 = vsel %vm2946, %v2864, 0
    %v3185 = vsel %vm2946, %v2865, 0
    %v3188 = vsel %vm2946, %v2866, 0
    %v3191 = vsel %vm2946, %v2867, 0
    %v3194 = vsel %vm2946, %v2868, 0
    %v3197 = vsel %vm2946, %v2869, 0
    %v3200 = vsel %vm2946, %v2870, 0
    %v3203 = vsel %vm2946, %v2871, 0
    %v3206 = vsel %vm2946, %v2872, 0
    %v3209 = vsel %vm2946, %v2873, 0
    %v3212 = vsel %vm2946, %v2874, 0
    %v3215 = vsel %vm2946, %v2875, 0
    %v3218 = vsel %vm2946, %v2876, 0
    %v3221 = vsel %vm2946, %v2877, 0
    %v3224 = vsel %vm2946, %v2878, 0
    %v3227 = vsel %vm2946, %v2879, 0
    %v3230 = vsel %vm2946, %v2880, 0
    %v3233 = vsel %vm2946, %v2881, 0
    %v3236 = vsel %vm2946, %v2882, 0
    %v3239 = vsel %vm2946, %v2883, 0
    %v3242 = vsel %vm2946, %v2884, 0
    %v3245 = vsel %vm2946, %v2885, 0
    %v3248 = vsel %vm2946, %v2886, 0
    %v3251 = vsel %vm2946, %v2887, 0
    %v3254 = vsel %vm2946, %v2888, 0
    %v3257 = vsel %vm2946, %v2889, 0
    %v3260 = vsel %vm2946, %v2890, 0
    %v3263 = vsel %vm2946, %v2891, 0
    %v3266 = vsel %vm2946, %v2892, 0
    %v3269 = vsel %vm2946, %v2893, 0
    %v3272 = vsel %vm2946, %v2894, 0
    %v3275 = vsel %vm2946, %v2895, 0
    %v3278 = vsel %vm2946, %v2896, 0
    %v3281 = vsel %vm2946, %v2897, 0
    %v3284 = vsel %vm2946, %v2898, 0
    %v3287 = vsel %vm2946, %v2899, 0
    %v3290 = vsel %vm2946, %v2900, 0
    %v3293 = vsel %vm2946, %v2901, 0
    %v3296 = vsel %vm2946, %v2902, 0
    %v3299 = vsel %vm2946, %v2903, 0
    %v3302 = vsel %vm2946, %v2904, 0
    %v3305 = vsel %vm2946, %v2905, 0
    %v3308 = vsel %vm2946, %v2906, 0
    %v3311 = vsel %vm2946, %v2907, 0
    %v3314 = vsel %vm2946, %v2908, 0
    %v3317 = vsel %vm2946, %v2909, 0
    %v3320 = vsel %vm2946, %v2910, 0
    %v3323 = vsel %vm2946, %v2911, 0
    %v3326 = vsel %vm2946, %v2912, 0
    %v3329 = vsel %vm2946, %v2913, 0
    %3331 = vmatprep.subr.bf16.mxu0 0
    %3332 = vmatpush1.bf16.msra.mxu0 %v2938
    %3333 = vmatprep.subr.bf16.mxu0 0
    %3334 = vmatpush1.bf16.msra.mxu0 %v2939
    %3335 = vmatprep.subr.bf16.mxu0 0
    %3336 = vmatpush1.bf16.msra.mxu0 %v2940
    %3337 = vmatprep.subr.bf16.mxu0 0
    %3338 = vmatpush1.bf16.msra.mxu0 %v2941
    %3339 = vmatprep.subr.bf16.mxu0 0
    %3340 = vmatpush1.bf16.msra.mxu0 0
    %3341 = vmatprep.subr.bf16.mxu0 0
    %3342 = vmatpush1.bf16.msra.mxu0 0
    %3343 = vmatprep.subr.bf16.mxu0 0
    %3344 = vmatpush1.bf16.msra.mxu0 0
    %3345 = vmatprep.subr.bf16.mxu0 0
    %3346 = vmatpush1.bf16.msra.mxu0 0
    %3347 = vmatprep.subr.bf16.mxu0 0
    %3348 = vmatpush1.bf16.msra.mxu0 0
    %3349 = vmatprep.subr.bf16.mxu0 0
    %3350 = vmatpush1.bf16.msra.mxu0 0
    %3351 = vmatprep.subr.bf16.mxu0 0
    %3352 = vmatpush1.bf16.msra.mxu0 0
    %3353 = vmatprep.subr.bf16.mxu0 0
    %3354 = vmatpush1.bf16.msra.mxu0 0
    %3355 = vmatprep.subr.bf16.mxu0 0
    %3356 = vmatpush1.bf16.msra.mxu0 0
    %3357 = vmatprep.subr.bf16.mxu0 0
    %3358 = vmatpush1.bf16.msra.mxu0 0
    %3359 = vmatprep.subr.bf16.mxu0 0
    %3360 = vmatpush1.bf16.msra.mxu0 0
    %3361 = vmatprep.subr.bf16.mxu0 0
    %3362 = vmatpush1.bf16.msra.mxu0 0
    %3363 = vmatprep.mubr.bf16.mxu0 0
    %3364 = vmatmul.mubr.bf16.gmra.mrb[0].mxu0 %v2948
    %v3365 = vpop.f32.mrb[0].mxu0
    %v3366 = vadd.f32 0.0, %v3365
    %v3367 = vpop.f32.mrb[0].mxu0
    %v3368 = vpop.f32.mrb[0].mxu0
    %v3369 = vadd.f32 0.0, %v3368
    %v3370 = vpop.f32.mrb[0].mxu0
    %3371 = vmatprep.mubr.bf16.mxu0 0
    %3372 = vmatmul.mubr.bf16.gmra.mrb[0].mxu0 %v2951
    %v3373 = vpop.f32.mrb[0].mxu0
    %v3374 = vadd.f32 0.0, %v3373
    %v3375 = vpop.f32.mrb[0].mxu0
    %v3376 = vpop.f32.mrb[0].mxu0
    %v3377 = vadd.f32 0.0, %v3376
    %v3378 = vpop.f32.mrb[0].mxu0
    %3379 = vmatprep.mubr.bf16.mxu0 0
    %3380 = vmatmul.mubr.bf16.gmra.mrb[0].mxu0 %v2954
    %v3381 = vpop.f32.mrb[0].mxu0
    %v3382 = vadd.f32 0.0, %v3381
    %v3383 = vpop.f32.mrb[0].mxu0
    %v3384 = vpop.f32.mrb[0].mxu0
    %v3385 = vadd.f32 0.0, %v3384
    %v3386 = vpop.f32.mrb[0].mxu0
    %3387 = vmatprep.mubr.bf16.mxu0 0
    %3388 = vmatmul.mubr.bf16.gmra.mrb[0].mxu0 %v2957
    %v3389 = vpop.f32.mrb[0].mxu0
    %v3390 = vadd.f32 0.0, %v3389
    %v3391 = vpop.f32.mrb[0].mxu0
    %v3392 = vpop.f32.mrb[0].mxu0
    %v3393 = vadd.f32 0.0, %v3392
    %v3394 = vpop.f32.mrb[0].mxu0
    %3395 = vmatprep.mubr.bf16.mxu0 0
    %3396 = vmatmul.mubr.bf16.gmra.mrb[0].mxu0 %v2960
    %v3397 = vpop.f32.mrb[0].mxu0
    %v3398 = vadd.f32 0.0, %v3397
    %v3399 = vpop.f32.mrb[0].mxu0
    %v3400 = vpop.f32.mrb[0].mxu0
    %v3401 = vadd.f32 0.0, %v3400
    %v3402 = vpop.f32.mrb[0].mxu0
    %3403 = vmatprep.mubr.bf16.mxu0 0
    %3404 = vmatmul.mubr.bf16.gmra.mrb[0].mxu0 %v2963
    %v3405 = vpop.f32.mrb[0].mxu0
    %v3406 = vadd.f32 0.0, %v3405
    %v3407 = vpop.f32.mrb[0].mxu0
    %v3408 = vpop.f32.mrb[0].mxu0
    %v3409 = vadd.f32 0.0, %v3408
    %v3410 = vpop.f32.mrb[0].mxu0
    %3411 = vmatprep.mubr.bf16.mxu0 0
    %3412 = vmatmul.mubr.bf16.gmra.mrb[0].mxu0 %v2966
    %v3413 = vpop.f32.mrb[0].mxu0
    %v3414 = vadd.f32 0.0, %v3413
    %v3415 = vpop.f32.mrb[0].mxu0
    %v3416 = vpop.f32.mrb[0].mxu0
    %v3417 = vadd.f32 0.0, %v3416
    %v3418 = vpop.f32.mrb[0].mxu0
    %3419 = vmatprep.mubr.bf16.mxu0 0
    %3420 = vmatmul.mubr.bf16.gmra.mrb[0].mxu0 %v2969
    %v3421 = vpop.f32.mrb[0].mxu0
    %v3422 = vadd.f32 0.0, %v3421
    %v3423 = vpop.f32.mrb[0].mxu0
    %v3424 = vpop.f32.mrb[0].mxu0
    %v3425 = vadd.f32 0.0, %v3424
    %v3426 = vpop.f32.mrb[0].mxu0
    %3427 = vmatprep.mubr.bf16.mxu0 0
    %3428 = vmatmul.mubr.bf16.gmra.mrb[0].mxu0 %v2972
    %v3429 = vpop.f32.mrb[0].mxu0
    %v3430 = vadd.f32 0.0, %v3429
    %v3431 = vpop.f32.mrb[0].mxu0
    %v3432 = vpop.f32.mrb[0].mxu0
    %v3433 = vadd.f32 0.0, %v3432
    %v3434 = vpop.f32.mrb[0].mxu0
    %3435 = vmatprep.mubr.bf16.mxu0 0
    %3436 = vmatmul.mubr.bf16.gmra.mrb[0].mxu0 %v2975
    %v3437 = vpop.f32.mrb[0].mxu0
    %v3438 = vadd.f32 0.0, %v3437
    %v3439 = vpop.f32.mrb[0].mxu0
    %v3440 = vpop.f32.mrb[0].mxu0
    %v3441 = vadd.f32 0.0, %v3440
    %v3442 = vpop.f32.mrb[0].mxu0
    %3443 = vmatprep.mubr.bf16.mxu0 0
    %3444 = vmatmul.mubr.bf16.gmra.mrb[0].mxu0 %v2978
    %v3445 = vpop.f32.mrb[0].mxu0
    %v3446 = vadd.f32 0.0, %v3445
    %v3447 = vpop.f32.mrb[0].mxu0
    %v3448 = vpop.f32.mrb[0].mxu0
    %v3449 = vadd.f32 0.0, %v3448
    %v3450 = vpop.f32.mrb[0].mxu0
    %3451 = vmatprep.mubr.bf16.mxu0 0
    %3452 = vmatmul.mubr.bf16.gmra.mrb[0].mxu0 %v2981
    %v3453 = vpop.f32.mrb[0].mxu0
    %v3454 = vadd.f32 0.0, %v3453
    %v3455 = vpop.f32.mrb[0].mxu0
    %v3456 = vpop.f32.mrb[0].mxu0
    %v3457 = vadd.f32 0.0, %v3456
    %v3458 = vpop.f32.mrb[0].mxu0
    %3459 = vmatprep.mubr.bf16.mxu0 0
    %3460 = vmatmul.mubr.bf16.gmra.mrb[0].mxu0 %v2984
    %v3461 = vpop.f32.mrb[0].mxu0
    %v3462 = vadd.f32 0.0, %v3461
    %v3463 = vpop.f32.mrb[0].mxu0
    %v3464 = vpop.f32.mrb[0].mxu0
    %v3465 = vadd.f32 0.0, %v3464
    %v3466 = vpop.f32.mrb[0].mxu0
    %3467 = vmatprep.mubr.bf16.mxu0 0
    %3468 = vmatmul.mubr.bf16.gmra.mrb[0].mxu0 %v2987
    %v3469 = vpop.f32.mrb[0].mxu0
    %v3470 = vadd.f32 0.0, %v3469
    %v3471 = vpop.f32.mrb[0].mxu0
    %v3472 = vpop.f32.mrb[0].mxu0
    %v3473 = vadd.f32 0.0, %v3472
    %v3474 = vpop.f32.mrb[0].mxu0
    %3475 = vmatprep.mubr.bf16.mxu0 0
    %3476 = vmatmul.mubr.bf16.gmra.mrb[0].mxu0 %v2990
    %v3477 = vpop.f32.mrb[0].mxu0
    %v3478 = vadd.f32 0.0, %v3477
    %v3479 = vpop.f32.mrb[0].mxu0
    %v3480 = vpop.f32.mrb[0].mxu0
    %v3481 = vadd.f32 0.0, %v3480
    %v3482 = vpop.f32.mrb[0].mxu0
    %3483 = vmatprep.mubr.bf16.mxu0 0
    %3484 = vmatmul.mubr.bf16.gmra.mrb[0].mxu0 %v2993
    %v3485 = vpop.f32.mrb[0].mxu0
    %v3486 = vadd.f32 0.0, %v3485
    %v3487 = vpop.f32.mrb[0].mxu0
    %v3488 = vpop.f32.mrb[0].mxu0
    %v3489 = vadd.f32 0.0, %v3488
    %v3490 = vpop.f32.mrb[0].mxu0
    %3491 = vmatprep.mubr.bf16.mxu0 0
    %3492 = vmatmul.mubr.bf16.gmra.mrb[0].mxu0 %v2996
    %v3493 = vpop.f32.mrb[0].mxu0
    %v3494 = vadd.f32 0.0, %v3493
    %v3495 = vpop.f32.mrb[0].mxu0
    %v3496 = vpop.f32.mrb[0].mxu0
    %v3497 = vadd.f32 0.0, %v3496
    %v3498 = vpop.f32.mrb[0].mxu0
    %3499 = vmatprep.mubr.bf16.mxu0 0
    %3500 = vmatmul.mubr.bf16.gmra.mrb[0].mxu0 %v2999
    %v3501 = vpop.f32.mrb[0].mxu0
    %v3502 = vadd.f32 0.0, %v3501
    %v3503 = vpop.f32.mrb[0].mxu0
    %v3504 = vpop.f32.mrb[0].mxu0
    %v3505 = vadd.f32 0.0, %v3504
    %v3506 = vpop.f32.mrb[0].mxu0
    %3507 = vmatprep.mubr.bf16.mxu0 0
    %3508 = vmatmul.mubr.bf16.gmra.mrb[0].mxu0 %v3002
    %v3509 = vpop.f32.mrb[0].mxu0
    %v3510 = vadd.f32 0.0, %v3509
    %v3511 = vpop.f32.mrb[0].mxu0
    %v3512 = vpop.f32.mrb[0].mxu0
    %v3513 = vadd.f32 0.0, %v3512
    %v3514 = vpop.f32.mrb[0].mxu0
    %3515 = vmatprep.mubr.bf16.mxu0 0
    %3516 = vmatmul.mubr.bf16.gmra.mrb[0].mxu0 %v3005
    %v3517 = vpop.f32.mrb[0].mxu0
    %v3518 = vadd.f32 0.0, %v3517
    %v3519 = vpop.f32.mrb[0].mxu0
    %v3520 = vpop.f32.mrb[0].mxu0
    %v3521 = vadd.f32 0.0, %v3520
    %v3522 = vpop.f32.mrb[0].mxu0
    %3523 = vmatprep.mubr.bf16.mxu0 0
    %3524 = vmatmul.mubr.bf16.gmra.mrb[0].mxu0 %v3008
    %v3525 = vpop.f32.mrb[0].mxu0
    %v3526 = vadd.f32 0.0, %v3525
    %v3527 = vpop.f32.mrb[0].mxu0
    %v3528 = vpop.f32.mrb[0].mxu0
    %v3529 = vadd.f32 0.0, %v3528
    %v3530 = vpop.f32.mrb[0].mxu0
    %3531 = vmatprep.mubr.bf16.mxu0 0
    %3532 = vmatmul.mubr.bf16.gmra.mrb[0].mxu0 %v3011
    %v3533 = vpop.f32.mrb[0].mxu0
    %v3534 = vadd.f32 0.0, %v3533
    %v3535 = vpop.f32.mrb[0].mxu0
    %v3536 = vpop.f32.mrb[0].mxu0
    %v3537 = vadd.f32 0.0, %v3536
    %v3538 = vpop.f32.mrb[0].mxu0
    %3539 = vmatprep.mubr.bf16.mxu0 0
    %3540 = vmatmul.mubr.bf16.gmra.mrb[0].mxu0 %v3014
    %v3541 = vpop.f32.mrb[0].mxu0
    %v3542 = vadd.f32 0.0, %v3541
    %v3543 = vpop.f32.mrb[0].mxu0
    %v3544 = vpop.f32.mrb[0].mxu0
    %v3545 = vadd.f32 0.0, %v3544
    %v3546 = vpop.f32.mrb[0].mxu0
    %3547 = vmatprep.mubr.bf16.mxu0 0
    %3548 = vmatmul.mubr.bf16.gmra.mrb[0].mxu0 %v3017
    %v3549 = vpop.f32.mrb[0].mxu0
    %v3550 = vadd.f32 0.0, %v3549
    %v3551 = vpop.f32.mrb[0].mxu0
    %v3552 = vpop.f32.mrb[0].mxu0
    %v3553 = vadd.f32 0.0, %v3552
    %v3554 = vpop.f32.mrb[0].mxu0
    %3555 = vmatprep.mubr.bf16.mxu0 0
    %3556 = vmatmul.mubr.bf16.gmra.mrb[0].mxu0 %v3020
    %v3557 = vpop.f32.mrb[0].mxu0
    %v3558 = vadd.f32 0.0, %v3557
    %v3559 = vpop.f32.mrb[0].mxu0
    %v3560 = vpop.f32.mrb[0].mxu0
    %v3561 = vadd.f32 0.0, %v3560
    %v3562 = vpop.f32.mrb[0].mxu0
    %3563 = vmatprep.mubr.bf16.mxu0 0
    %3564 = vmatmul.mubr.bf16.gmra.mrb[0].mxu0 %v3023
    %v3565 = vpop.f32.mrb[0].mxu0
    %v3566 = vadd.f32 0.0, %v3565
    %v3567 = vpop.f32.mrb[0].mxu0
    %v3568 = vpop.f32.mrb[0].mxu0
    %v3569 = vadd.f32 0.0, %v3568
    %v3570 = vpop.f32.mrb[0].mxu0
    %3571 = vmatprep.mubr.bf16.mxu0 0
    %3572 = vmatmul.mubr.bf16.gmra.mrb[0].mxu0 %v3026
    %v3573 = vpop.f32.mrb[0].mxu0
    %v3574 = vadd.f32 0.0, %v3573
    %v3575 = vpop.f32.mrb[0].mxu0
    %v3576 = vpop.f32.mrb[0].mxu0
    %v3577 = vadd.f32 0.0, %v3576
    %v3578 = vpop.f32.mrb[0].mxu0
    %3579 = vmatprep.mubr.bf16.mxu0 0
    %3580 = vmatmul.mubr.bf16.gmra.mrb[0].mxu0 %v3029
    %v3581 = vpop.f32.mrb[0].mxu0
    %v3582 = vadd.f32 0.0, %v3581
    %v3583 = vpop.f32.mrb[0].mxu0
    %v3584 = vpop.f32.mrb[0].mxu0
    %v3585 = vadd.f32 0.0, %v3584
    %v3586 = vpop.f32.mrb[0].mxu0
    %3587 = vmatprep.mubr.bf16.mxu0 0
    %3588 = vmatmul.mubr.bf16.gmra.mrb[0].mxu0 %v3032
    %v3589 = vpop.f32.mrb[0].mxu0
    %v3590 = vadd.f32 0.0, %v3589
    %v3591 = vpop.f32.mrb[0].mxu0
    %v3592 = vpop.f32.mrb[0].mxu0
    %v3593 = vadd.f32 0.0, %v3592
    %v3594 = vpop.f32.mrb[0].mxu0
    %3595 = vmatprep.mubr.bf16.mxu0 0
    %3596 = vmatmul.mubr.bf16.gmra.mrb[0].mxu0 %v3035
    %v3597 = vpop.f32.mrb[0].mxu0
    %v3598 = vadd.f32 0.0, %v3597
    %v3599 = vpop.f32.mrb[0].mxu0
    %v3600 = vpop.f32.mrb[0].mxu0
    %v3601 = vadd.f32 0.0, %v3600
    %v3602 = vpop.f32.mrb[0].mxu0
    %3603 = vmatprep.mubr.bf16.mxu0 0
    %3604 = vmatmul.mubr.bf16.gmra.mrb[0].mxu0 %v3038
    %v3605 = vpop.f32.mrb[0].mxu0
    %v3606 = vadd.f32 0.0, %v3605
    %v3607 = vpop.f32.mrb[0].mxu0
    %v3608 = vpop.f32.mrb[0].mxu0
    %v3609 = vadd.f32 0.0, %v3608
    %v3610 = vpop.f32.mrb[0].mxu0
    %3611 = vmatprep.mubr.bf16.mxu0 0
    %3612 = vmatmul.mubr.bf16.gmra.mrb[0].mxu0 %v3041
    %v3613 = vpop.f32.mrb[0].mxu0
    %v3614 = vadd.f32 0.0, %v3613
    %v3615 = vpop.f32.mrb[0].mxu0
    %v3616 = vpop.f32.mrb[0].mxu0
    %v3617 = vadd.f32 0.0, %v3616
    %v3618 = vpop.f32.mrb[0].mxu0
    %3619 = vmatprep.mubr.bf16.mxu0 0
    %3620 = vmatmul.mubr.bf16.gmra.mrb[0].mxu0 %v3044
    %v3621 = vpop.f32.mrb[0].mxu0
    %v3622 = vadd.f32 0.0, %v3621
    %v3623 = vpop.f32.mrb[0].mxu0
    %v3624 = vpop.f32.mrb[0].mxu0
    %v3625 = vadd.f32 0.0, %v3624
    %v3626 = vpop.f32.mrb[0].mxu0
    %3627 = vmatprep.mubr.bf16.mxu0 0
    %3628 = vmatmul.mubr.bf16.gmra.mrb[0].mxu0 %v3047
    %v3629 = vpop.f32.mrb[0].mxu0
    %v3630 = vadd.f32 0.0, %v3629
    %v3631 = vpop.f32.mrb[0].mxu0
    %v3632 = vpop.f32.mrb[0].mxu0
    %v3633 = vadd.f32 0.0, %v3632
    %v3634 = vpop.f32.mrb[0].mxu0
    %3635 = vmatprep.mubr.bf16.mxu0 0
    %3636 = vmatmul.mubr.bf16.gmra.mrb[0].mxu0 %v3050
    %v3637 = vpop.f32.mrb[0].mxu0
    %v3638 = vadd.f32 0.0, %v3637
    %v3639 = vpop.f32.mrb[0].mxu0
    %v3640 = vpop.f32.mrb[0].mxu0
    %v3641 = vadd.f32 0.0, %v3640
    %v3642 = vpop.f32.mrb[0].mxu0
    %3643 = vmatprep.mubr.bf16.mxu0 0
    %3644 = vmatmul.mubr.bf16.gmra.mrb[0].mxu0 %v3053
    %v3645 = vpop.f32.mrb[0].mxu0
    %v3646 = vadd.f32 0.0, %v3645
    %v3647 = vpop.f32.mrb[0].mxu0
    %v3648 = vpop.f32.mrb[0].mxu0
    %v3649 = vadd.f32 0.0, %v3648
    %v3650 = vpop.f32.mrb[0].mxu0
    %3651 = vmatprep.mubr.bf16.mxu0 0
    %3652 = vmatmul.mubr.bf16.gmra.mrb[0].mxu0 %v3056
    %v3653 = vpop.f32.mrb[0].mxu0
    %v3654 = vadd.f32 0.0, %v3653
    %v3655 = vpop.f32.mrb[0].mxu0
    %v3656 = vpop.f32.mrb[0].mxu0
    %v3657 = vadd.f32 0.0, %v3656
    %v3658 = vpop.f32.mrb[0].mxu0
    %3659 = vmatprep.mubr.bf16.mxu0 0
    %3660 = vmatmul.mubr.bf16.gmra.mrb[0].mxu0 %v3059
    %v3661 = vpop.f32.mrb[0].mxu0
    %v3662 = vadd.f32 0.0, %v3661
    %v3663 = vpop.f32.mrb[0].mxu0
    %v3664 = vpop.f32.mrb[0].mxu0
    %v3665 = vadd.f32 0.0, %v3664
    %v3666 = vpop.f32.mrb[0].mxu0
    %3667 = vmatprep.mubr.bf16.mxu0 0
    %3668 = vmatmul.mubr.bf16.gmra.mrb[0].mxu0 %v3062
    %v3669 = vpop.f32.mrb[0].mxu0
    %v3670 = vadd.f32 0.0, %v3669
    %v3671 = vpop.f32.mrb[0].mxu0
    %v3672 = vpop.f32.mrb[0].mxu0
    %v3673 = vadd.f32 0.0, %v3672
    %v3674 = vpop.f32.mrb[0].mxu0
    %3675 = vmatprep.mubr.bf16.mxu0 0
    %3676 = vmatmul.mubr.bf16.gmra.mrb[0].mxu0 %v3065
    %v3677 = vpop.f32.mrb[0].mxu0
    %v3678 = vadd.f32 0.0, %v3677
    %v3679 = vpop.f32.mrb[0].mxu0
    %v3680 = vpop.f32.mrb[0].mxu0
    %v3681 = vadd.f32 0.0, %v3680
    %v3682 = vpop.f32.mrb[0].mxu0
    %3683 = vmatprep.mubr.bf16.mxu0 0
    %3684 = vmatmul.mubr.bf16.gmra.mrb[0].mxu0 %v3068
    %v3685 = vpop.f32.mrb[0].mxu0
    %v3686 = vadd.f32 0.0, %v3685
    %v3687 = vpop.f32.mrb[0].mxu0
    %v3688 = vpop.f32.mrb[0].mxu0
    %v3689 = vadd.f32 0.0, %v3688
    %v3690 = vpop.f32.mrb[0].mxu0
    %3691 = vmatprep.mubr.bf16.mxu0 0
    %3692 = vmatmul.mubr.bf16.gmra.mrb[0].mxu0 %v3071
    %v3693 = vpop.f32.mrb[0].mxu0
    %v3694 = vadd.f32 0.0, %v3693
    %v3695 = vpop.f32.mrb[0].mxu0
    %v3696 = vpop.f32.mrb[0].mxu0
    %v3697 = vadd.f32 0.0, %v3696
    %v3698 = vpop.f32.mrb[0].mxu0
    %3699 = vmatprep.mubr.bf16.mxu0 0
    %3700 = vmatmul.mubr.bf16.gmra.mrb[0].mxu0 %v3074
    %v3701 = vpop.f32.mrb[0].mxu0
    %v3702 = vadd.f32 0.0, %v3701
    %v3703 = vpop.f32.mrb[0].mxu0
    %v3704 = vpop.f32.mrb[0].mxu0
    %v3705 = vadd.f32 0.0, %v3704
    %v3706 = vpop.f32.mrb[0].mxu0
    %3707 = vmatprep.mubr.bf16.mxu0 0
    %3708 = vmatmul.mubr.bf16.gmra.mrb[0].mxu0 %v3077
    %v3709 = vpop.f32.mrb[0].mxu0
    %v3710 = vadd.f32 0.0, %v3709
    %v3711 = vpop.f32.mrb[0].mxu0
    %v3712 = vpop.f32.mrb[0].mxu0
    %v3713 = vadd.f32 0.0, %v3712
    %v3714 = vpop.f32.mrb[0].mxu0
    %3715 = vmatprep.mubr.bf16.mxu0 0
    %3716 = vmatmul.mubr.bf16.gmra.mrb[0].mxu0 %v3080
    %v3717 = vpop.f32.mrb[0].mxu0
    %v3718 = vadd.f32 0.0, %v3717
    %v3719 = vpop.f32.mrb[0].mxu0
    %v3720 = vpop.f32.mrb[0].mxu0
    %v3721 = vadd.f32 0.0, %v3720
    %v3722 = vpop.f32.mrb[0].mxu0
    %3723 = vmatprep.mubr.bf16.mxu0 0
    %3724 = vmatmul.mubr.bf16.gmra.mrb[0].mxu0 %v3083
    %v3725 = vpop.f32.mrb[0].mxu0
    %v3726 = vadd.f32 0.0, %v3725
    %v3727 = vpop.f32.mrb[0].mxu0
    %v3728 = vpop.f32.mrb[0].mxu0
    %v3729 = vadd.f32 0.0, %v3728
    %v3730 = vpop.f32.mrb[0].mxu0
    %3731 = vmatprep.mubr.bf16.mxu0 0
    %3732 = vmatmul.mubr.bf16.gmra.mrb[0].mxu0 %v3086
    %v3733 = vpop.f32.mrb[0].mxu0
    %v3734 = vadd.f32 0.0, %v3733
    %v3735 = vpop.f32.mrb[0].mxu0
    %v3736 = vpop.f32.mrb[0].mxu0
    %v3737 = vadd.f32 0.0, %v3736
    %v3738 = vpop.f32.mrb[0].mxu0
    %3739 = vmatprep.mubr.bf16.mxu0 0
    %3740 = vmatmul.mubr.bf16.gmra.mrb[0].mxu0 %v3089
    %v3741 = vpop.f32.mrb[0].mxu0
    %v3742 = vadd.f32 0.0, %v3741
    %v3743 = vpop.f32.mrb[0].mxu0
    %v3744 = vpop.f32.mrb[0].mxu0
    %v3745 = vadd.f32 0.0, %v3744
    %v3746 = vpop.f32.mrb[0].mxu0
    %3747 = vmatprep.mubr.bf16.mxu0 0
    %3748 = vmatmul.mubr.bf16.gmra.mrb[0].mxu0 %v3092
    %v3749 = vpop.f32.mrb[0].mxu0
    %v3750 = vadd.f32 0.0, %v3749
    %v3751 = vpop.f32.mrb[0].mxu0
    %v3752 = vpop.f32.mrb[0].mxu0
    %v3753 = vadd.f32 0.0, %v3752
    %v3754 = vpop.f32.mrb[0].mxu0
    %3755 = vmatprep.mubr.bf16.mxu0 0
    %3756 = vmatmul.mubr.bf16.gmra.mrb[0].mxu0 %v3095
    %v3757 = vpop.f32.mrb[0].mxu0
    %v3758 = vadd.f32 0.0, %v3757
    %v3759 = vpop.f32.mrb[0].mxu0
    %v3760 = vpop.f32.mrb[0].mxu0
    %v3761 = vadd.f32 0.0, %v3760
    %v3762 = vpop.f32.mrb[0].mxu0
    %3763 = vmatprep.mubr.bf16.mxu0 0
    %3764 = vmatmul.mubr.bf16.gmra.mrb[0].mxu0 %v3098
    %v3765 = vpop.f32.mrb[0].mxu0
    %v3766 = vadd.f32 0.0, %v3765
    %v3767 = vpop.f32.mrb[0].mxu0
    %v3768 = vpop.f32.mrb[0].mxu0
    %v3769 = vadd.f32 0.0, %v3768
    %v3770 = vpop.f32.mrb[0].mxu0
    %3771 = vmatprep.mubr.bf16.mxu0 0
    %3772 = vmatmul.mubr.bf16.gmra.mrb[0].mxu0 %v3101
    %v3773 = vpop.f32.mrb[0].mxu0
    %v3774 = vadd.f32 0.0, %v3773
    %v3775 = vpop.f32.mrb[0].mxu0
    %v3776 = vpop.f32.mrb[0].mxu0
    %v3777 = vadd.f32 0.0, %v3776
    %v3778 = vpop.f32.mrb[0].mxu0
    %3779 = vmatprep.mubr.bf16.mxu0 0
    %3780 = vmatmul.mubr.bf16.gmra.mrb[0].mxu0 %v3104
    %v3781 = vpop.f32.mrb[0].mxu0
    %v3782 = vadd.f32 0.0, %v3781
    %v3783 = vpop.f32.mrb[0].mxu0
    %v3784 = vpop.f32.mrb[0].mxu0
    %v3785 = vadd.f32 0.0, %v3784
    %v3786 = vpop.f32.mrb[0].mxu0
    %3787 = vmatprep.mubr.bf16.mxu0 0
    %3788 = vmatmul.mubr.bf16.gmra.mrb[0].mxu0 %v3107
    %v3789 = vpop.f32.mrb[0].mxu0
    %v3790 = vadd.f32 0.0, %v3789
    %v3791 = vpop.f32.mrb[0].mxu0
    %v3792 = vpop.f32.mrb[0].mxu0
    %v3793 = vadd.f32 0.0, %v3792
    %v3794 = vpop.f32.mrb[0].mxu0
    %3795 = vmatprep.mubr.bf16.mxu0 0
    %3796 = vmatmul.mubr.bf16.gmra.mrb[0].mxu0 %v3110
    %v3797 = vpop.f32.mrb[0].mxu0
    %v3798 = vadd.f32 0.0, %v3797
    %v3799 = vpop.f32.mrb[0].mxu0
    %v3800 = vpop.f32.mrb[0].mxu0
    %v3801 = vadd.f32 0.0, %v3800
    %v3802 = vpop.f32.mrb[0].mxu0
    %3803 = vmatprep.mubr.bf16.mxu0 0
    %3804 = vmatmul.mubr.bf16.gmra.mrb[0].mxu0 %v3113
    %v3805 = vpop.f32.mrb[0].mxu0
    %v3806 = vadd.f32 0.0, %v3805
    %v3807 = vpop.f32.mrb[0].mxu0
    %v3808 = vpop.f32.mrb[0].mxu0
    %v3809 = vadd.f32 0.0, %v3808
    %v3810 = vpop.f32.mrb[0].mxu0
    %3811 = vmatprep.mubr.bf16.mxu0 0
    %3812 = vmatmul.mubr.bf16.gmra.mrb[0].mxu0 %v3116
    %v3813 = vpop.f32.mrb[0].mxu0
    %v3814 = vadd.f32 0.0, %v3813
    %v3815 = vpop.f32.mrb[0].mxu0
    %v3816 = vpop.f32.mrb[0].mxu0
    %v3817 = vadd.f32 0.0, %v3816
    %v3818 = vpop.f32.mrb[0].mxu0
    %3819 = vmatprep.mubr.bf16.mxu0 0
    %3820 = vmatmul.mubr.bf16.gmra.mrb[0].mxu0 %v3119
    %v3821 = vpop.f32.mrb[0].mxu0
    %v3822 = vadd.f32 0.0, %v3821
    %v3823 = vpop.f32.mrb[0].mxu0
    %v3824 = vpop.f32.mrb[0].mxu0
    %v3825 = vadd.f32 0.0, %v3824
    %v3826 = vpop.f32.mrb[0].mxu0
    %3827 = vmatprep.mubr.bf16.mxu0 0
    %3828 = vmatmul.mubr.bf16.gmra.mrb[0].mxu0 %v3122
    %v3829 = vpop.f32.mrb[0].mxu0
    %v3830 = vadd.f32 0.0, %v3829
    %v3831 = vpop.f32.mrb[0].mxu0
    %v3832 = vpop.f32.mrb[0].mxu0
    %v3833 = vadd.f32 0.0, %v3832
    %v3834 = vpop.f32.mrb[0].mxu0
    %3835 = vmatprep.mubr.bf16.mxu0 0
    %3836 = vmatmul.mubr.bf16.gmra.mrb[0].mxu0 %v3125
    %v3837 = vpop.f32.mrb[0].mxu0
    %v3838 = vadd.f32 0.0, %v3837
    %v3839 = vpop.f32.mrb[0].mxu0
    %v3840 = vpop.f32.mrb[0].mxu0
    %v3841 = vadd.f32 0.0, %v3840
    %v3842 = vpop.f32.mrb[0].mxu0
    %3843 = vmatprep.mubr.bf16.mxu0 0
    %3844 = vmatmul.mubr.bf16.gmra.mrb[0].mxu0 %v3128
    %v3845 = vpop.f32.mrb[0].mxu0
    %v3846 = vadd.f32 0.0, %v3845
    %v3847 = vpop.f32.mrb[0].mxu0
    %v3848 = vpop.f32.mrb[0].mxu0
    %v3849 = vadd.f32 0.0, %v3848
    %v3850 = vpop.f32.mrb[0].mxu0
    %3851 = vmatprep.mubr.bf16.mxu0 0
    %3852 = vmatmul.mubr.bf16.gmra.mrb[0].mxu0 %v3131
    %v3853 = vpop.f32.mrb[0].mxu0
    %v3854 = vadd.f32 0.0, %v3853
    %v3855 = vpop.f32.mrb[0].mxu0
    %v3856 = vpop.f32.mrb[0].mxu0
    %v3857 = vadd.f32 0.0, %v3856
    %v3858 = vpop.f32.mrb[0].mxu0
    %3859 = vmatprep.mubr.bf16.mxu0 0
    %3860 = vmatmul.mubr.bf16.gmra.mrb[0].mxu0 %v3134
    %v3861 = vpop.f32.mrb[0].mxu0
    %v3862 = vadd.f32 0.0, %v3861
    %v3863 = vpop.f32.mrb[0].mxu0
    %v3864 = vpop.f32.mrb[0].mxu0
    %v3865 = vadd.f32 0.0, %v3864
    %v3866 = vpop.f32.mrb[0].mxu0
    %3867 = vmatprep.mubr.bf16.mxu0 0
    %3868 = vmatmul.mubr.bf16.gmra.mrb[0].mxu0 %v3137
    %v3869 = vpop.f32.mrb[0].mxu0
    %v3870 = vadd.f32 0.0, %v3869
    %v3871 = vpop.f32.mrb[0].mxu0
    %v3872 = vpop.f32.mrb[0].mxu0
    %v3873 = vadd.f32 0.0, %v3872
    %v3874 = vpop.f32.mrb[0].mxu0
    %3875 = vmatprep.mubr.bf16.mxu0 0
    %3876 = vmatmul.mubr.bf16.gmra.mrb[0].mxu0 %v3140
    %v3877 = vpop.f32.mrb[0].mxu0
    %v3878 = vadd.f32 0.0, %v3877
    %v3879 = vpop.f32.mrb[0].mxu0
    %v3880 = vpop.f32.mrb[0].mxu0
    %v3881 = vadd.f32 0.0, %v3880
    %v3882 = vpop.f32.mrb[0].mxu0
    %3883 = vmatprep.mubr.bf16.mxu0 0
    %3884 = vmatmul.mubr.bf16.gmra.mrb[0].mxu0 %v3143
    %v3885 = vpop.f32.mrb[0].mxu0
    %v3886 = vadd.f32 0.0, %v3885
    %v3887 = vpop.f32.mrb[0].mxu0
    %v3888 = vpop.f32.mrb[0].mxu0
    %v3889 = vadd.f32 0.0, %v3888
    %v3890 = vpop.f32.mrb[0].mxu0
    %3891 = vmatprep.mubr.bf16.mxu0 0
    %3892 = vmatmul.mubr.bf16.gmra.mrb[0].mxu0 %v3146
    %v3893 = vpop.f32.mrb[0].mxu0
    %v3894 = vadd.f32 0.0, %v3893
    %v3895 = vpop.f32.mrb[0].mxu0
    %v3896 = vpop.f32.mrb[0].mxu0
    %v3897 = vadd.f32 0.0, %v3896
    %v3898 = vpop.f32.mrb[0].mxu0
    %3899 = vmatprep.mubr.bf16.mxu0 0
    %3900 = vmatmul.mubr.bf16.gmra.mrb[0].mxu0 %v3149
    %v3901 = vpop.f32.mrb[0].mxu0
    %v3902 = vadd.f32 0.0, %v3901
    %v3903 = vpop.f32.mrb[0].mxu0
    %v3904 = vpop.f32.mrb[0].mxu0
    %v3905 = vadd.f32 0.0, %v3904
    %v3906 = vpop.f32.mrb[0].mxu0
    %3907 = vmatprep.mubr.bf16.mxu0 0
    %3908 = vmatmul.mubr.bf16.gmra.mrb[0].mxu0 %v3152
    %v3909 = vpop.f32.mrb[0].mxu0
    %v3910 = vadd.f32 0.0, %v3909
    %v3911 = vpop.f32.mrb[0].mxu0
    %v3912 = vpop.f32.mrb[0].mxu0
    %v3913 = vadd.f32 0.0, %v3912
    %v3914 = vpop.f32.mrb[0].mxu0
    %3915 = vmatprep.mubr.bf16.mxu0 0
    %3916 = vmatmul.mubr.bf16.gmra.mrb[0].mxu0 %v3155
    %v3917 = vpop.f32.mrb[0].mxu0
    %v3918 = vadd.f32 0.0, %v3917
    %v3919 = vpop.f32.mrb[0].mxu0
    %v3920 = vpop.f32.mrb[0].mxu0
    %v3921 = vadd.f32 0.0, %v3920
    %v3922 = vpop.f32.mrb[0].mxu0
    %3923 = vmatprep.mubr.bf16.mxu0 0
    %3924 = vmatmul.mubr.bf16.gmra.mrb[0].mxu0 %v3158
    %v3925 = vpop.f32.mrb[0].mxu0
    %v3926 = vadd.f32 0.0, %v3925
    %v3927 = vpop.f32.mrb[0].mxu0
    %v3928 = vpop.f32.mrb[0].mxu0
    %v3929 = vadd.f32 0.0, %v3928
    %v3930 = vpop.f32.mrb[0].mxu0
    %3931 = vmatprep.mubr.bf16.mxu0 0
    %3932 = vmatmul.mubr.bf16.gmra.mrb[0].mxu0 %v3161
    %v3933 = vpop.f32.mrb[0].mxu0
    %v3934 = vadd.f32 0.0, %v3933
    %v3935 = vpop.f32.mrb[0].mxu0
    %v3936 = vpop.f32.mrb[0].mxu0
    %v3937 = vadd.f32 0.0, %v3936
    %v3938 = vpop.f32.mrb[0].mxu0
    %3939 = vmatprep.mubr.bf16.mxu0 0
    %3940 = vmatmul.mubr.bf16.gmra.mrb[0].mxu0 %v3164
    %v3941 = vpop.f32.mrb[0].mxu0
    %v3942 = vadd.f32 0.0, %v3941
    %v3943 = vpop.f32.mrb[0].mxu0
    %v3944 = vpop.f32.mrb[0].mxu0
    %v3945 = vadd.f32 0.0, %v3944
    %v3946 = vpop.f32.mrb[0].mxu0
    %3947 = vmatprep.mubr.bf16.mxu0 0
    %3948 = vmatmul.mubr.bf16.gmra.mrb[0].mxu0 %v3167
    %v3949 = vpop.f32.mrb[0].mxu0
    %v3950 = vadd.f32 0.0, %v3949
    %v3951 = vpop.f32.mrb[0].mxu0
    %v3952 = vpop.f32.mrb[0].mxu0
    %v3953 = vadd.f32 0.0, %v3952
    %v3954 = vpop.f32.mrb[0].mxu0
    %3955 = vmatprep.mubr.bf16.mxu0 0
    %3956 = vmatmul.mubr.bf16.gmra.mrb[0].mxu0 %v3170
    %v3957 = vpop.f32.mrb[0].mxu0
    %v3958 = vadd.f32 0.0, %v3957
    %v3959 = vpop.f32.mrb[0].mxu0
    %v3960 = vpop.f32.mrb[0].mxu0
    %v3961 = vadd.f32 0.0, %v3960
    %v3962 = vpop.f32.mrb[0].mxu0
    %3963 = vmatprep.mubr.bf16.mxu0 0
    %3964 = vmatmul.mubr.bf16.gmra.mrb[0].mxu0 %v3173
    %v3965 = vpop.f32.mrb[0].mxu0
    %v3966 = vadd.f32 0.0, %v3965
    %v3967 = vpop.f32.mrb[0].mxu0
    %v3968 = vpop.f32.mrb[0].mxu0
    %v3969 = vadd.f32 0.0, %v3968
    %v3970 = vpop.f32.mrb[0].mxu0
    %3971 = vmatprep.mubr.bf16.mxu0 0
    %3972 = vmatmul.mubr.bf16.gmra.mrb[0].mxu0 %v3176
    %v3973 = vpop.f32.mrb[0].mxu0
    %v3974 = vadd.f32 0.0, %v3973
    %v3975 = vpop.f32.mrb[0].mxu0
    %v3976 = vpop.f32.mrb[0].mxu0
    %v3977 = vadd.f32 0.0, %v3976
    %v3978 = vpop.f32.mrb[0].mxu0
    %3979 = vmatprep.mubr.bf16.mxu0 0
    %3980 = vmatmul.mubr.bf16.gmra.mrb[0].mxu0 %v3179
    %v3981 = vpop.f32.mrb[0].mxu0
    %v3982 = vadd.f32 0.0, %v3981
    %v3983 = vpop.f32.mrb[0].mxu0
    %v3984 = vpop.f32.mrb[0].mxu0
    %v3985 = vadd.f32 0.0, %v3984
    %v3986 = vpop.f32.mrb[0].mxu0
    %3987 = vmatprep.mubr.bf16.mxu0 0
    %3988 = vmatmul.mubr.bf16.gmra.mrb[0].mxu0 %v3182
    %v3989 = vpop.f32.mrb[0].mxu0
    %v3990 = vadd.f32 0.0, %v3989
    %v3991 = vpop.f32.mrb[0].mxu0
    %v3992 = vpop.f32.mrb[0].mxu0
    %v3993 = vadd.f32 0.0, %v3992
    %v3994 = vpop.f32.mrb[0].mxu0
    %3995 = vmatprep.mubr.bf16.mxu0 0
    %3996 = vmatmul.mubr.bf16.gmra.mrb[0].mxu0 %v3185
    %v3997 = vpop.f32.mrb[0].mxu0
    %v3998 = vadd.f32 0.0, %v3997
    %v3999 = vpop.f32.mrb[0].mxu0
    %v4000 = vpop.f32.mrb[0].mxu0
    %v4001 = vadd.f32 0.0, %v4000
    %v4002 = vpop.f32.mrb[0].mxu0
    %4003 = vmatprep.mubr.bf16.mxu0 0
    %4004 = vmatmul.mubr.bf16.gmra.mrb[0].mxu0 %v3188
    %v4005 = vpop.f32.mrb[0].mxu0
    %v4006 = vadd.f32 0.0, %v4005
    %v4007 = vpop.f32.mrb[0].mxu0
    %v4008 = vpop.f32.mrb[0].mxu0
    %v4009 = vadd.f32 0.0, %v4008
    %v4010 = vpop.f32.mrb[0].mxu0
    %4011 = vmatprep.mubr.bf16.mxu0 0
    %4012 = vmatmul.mubr.bf16.gmra.mrb[0].mxu0 %v3191
    %v4013 = vpop.f32.mrb[0].mxu0
    %v4014 = vadd.f32 0.0, %v4013
    %v4015 = vpop.f32.mrb[0].mxu0
    %v4016 = vpop.f32.mrb[0].mxu0
    %v4017 = vadd.f32 0.0, %v4016
    %v4018 = vpop.f32.mrb[0].mxu0
    %4019 = vmatprep.mubr.bf16.mxu0 0
    %4020 = vmatmul.mubr.bf16.gmra.mrb[0].mxu0 %v3194
    %v4021 = vpop.f32.mrb[0].mxu0
    %v4022 = vadd.f32 0.0, %v4021
    %v4023 = vpop.f32.mrb[0].mxu0
    %v4024 = vpop.f32.mrb[0].mxu0
    %v4025 = vadd.f32 0.0, %v4024
    %v4026 = vpop.f32.mrb[0].mxu0
    %4027 = vmatprep.mubr.bf16.mxu0 0
    %4028 = vmatmul.mubr.bf16.gmra.mrb[0].mxu0 %v3197
    %v4029 = vpop.f32.mrb[0].mxu0
    %v4030 = vadd.f32 0.0, %v4029
    %v4031 = vpop.f32.mrb[0].mxu0
    %v4032 = vpop.f32.mrb[0].mxu0
    %v4033 = vadd.f32 0.0, %v4032
    %v4034 = vpop.f32.mrb[0].mxu0
    %4035 = vmatprep.mubr.bf16.mxu0 0
    %4036 = vmatmul.mubr.bf16.gmra.mrb[0].mxu0 %v3200
    %v4037 = vpop.f32.mrb[0].mxu0
    %v4038 = vadd.f32 0.0, %v4037
    %v4039 = vpop.f32.mrb[0].mxu0
    %v4040 = vpop.f32.mrb[0].mxu0
    %v4041 = vadd.f32 0.0, %v4040
    %v4042 = vpop.f32.mrb[0].mxu0
    %4043 = vmatprep.mubr.bf16.mxu0 0
    %4044 = vmatmul.mubr.bf16.gmra.mrb[0].mxu0 %v3203
    %v4045 = vpop.f32.mrb[0].mxu0
    %v4046 = vadd.f32 0.0, %v4045
    %v4047 = vpop.f32.mrb[0].mxu0
    %v4048 = vpop.f32.mrb[0].mxu0
    %v4049 = vadd.f32 0.0, %v4048
    %v4050 = vpop.f32.mrb[0].mxu0
    %4051 = vmatprep.mubr.bf16.mxu0 0
    %4052 = vmatmul.mubr.bf16.gmra.mrb[0].mxu0 %v3206
    %v4053 = vpop.f32.mrb[0].mxu0
    %v4054 = vadd.f32 0.0, %v4053
    %v4055 = vpop.f32.mrb[0].mxu0
    %v4056 = vpop.f32.mrb[0].mxu0
    %v4057 = vadd.f32 0.0, %v4056
    %v4058 = vpop.f32.mrb[0].mxu0
    %4059 = vmatprep.mubr.bf16.mxu0 0
    %4060 = vmatmul.mubr.bf16.gmra.mrb[0].mxu0 %v3209
    %v4061 = vpop.f32.mrb[0].mxu0
    %v4062 = vadd.f32 0.0, %v4061
    %v4063 = vpop.f32.mrb[0].mxu0
    %v4064 = vpop.f32.mrb[0].mxu0
    %v4065 = vadd.f32 0.0, %v4064
    %v4066 = vpop.f32.mrb[0].mxu0
    %4067 = vmatprep.mubr.bf16.mxu0 0
    %4068 = vmatmul.mubr.bf16.gmra.mrb[0].mxu0 %v3212
    %v4069 = vpop.f32.mrb[0].mxu0
    %v4070 = vadd.f32 0.0, %v4069
    %v4071 = vpop.f32.mrb[0].mxu0
    %v4072 = vpop.f32.mrb[0].mxu0
    %v4073 = vadd.f32 0.0, %v4072
    %v4074 = vpop.f32.mrb[0].mxu0
    %4075 = vmatprep.mubr.bf16.mxu0 0
    %4076 = vmatmul.mubr.bf16.gmra.mrb[0].mxu0 %v3215
    %v4077 = vpop.f32.mrb[0].mxu0
    %v4078 = vadd.f32 0.0, %v4077
    %v4079 = vpop.f32.mrb[0].mxu0
    %v4080 = vpop.f32.mrb[0].mxu0
    %v4081 = vadd.f32 0.0, %v4080
    %v4082 = vpop.f32.mrb[0].mxu0
    %4083 = vmatprep.mubr.bf16.mxu0 0
    %4084 = vmatmul.mubr.bf16.gmra.mrb[0].mxu0 %v3218
    %v4085 = vpop.f32.mrb[0].mxu0
    %v4086 = vadd.f32 0.0, %v4085
    %v4087 = vpop.f32.mrb[0].mxu0
    %v4088 = vpop.f32.mrb[0].mxu0
    %v4089 = vadd.f32 0.0, %v4088
    %v4090 = vpop.f32.mrb[0].mxu0
    %4091 = vmatprep.mubr.bf16.mxu0 0
    %4092 = vmatmul.mubr.bf16.gmra.mrb[0].mxu0 %v3221
    %v4093 = vpop.f32.mrb[0].mxu0
    %v4094 = vadd.f32 0.0, %v4093
    %v4095 = vpop.f32.mrb[0].mxu0
    %v4096 = vpop.f32.mrb[0].mxu0
    %v4097 = vadd.f32 0.0, %v4096
    %v4098 = vpop.f32.mrb[0].mxu0
    %4099 = vmatprep.mubr.bf16.mxu0 0
    %4100 = vmatmul.mubr.bf16.gmra.mrb[0].mxu0 %v3224
    %v4101 = vpop.f32.mrb[0].mxu0
    %v4102 = vadd.f32 0.0, %v4101
    %v4103 = vpop.f32.mrb[0].mxu0
    %v4104 = vpop.f32.mrb[0].mxu0
    %v4105 = vadd.f32 0.0, %v4104
    %v4106 = vpop.f32.mrb[0].mxu0
    %4107 = vmatprep.mubr.bf16.mxu0 0
    %4108 = vmatmul.mubr.bf16.gmra.mrb[0].mxu0 %v3227
    %v4109 = vpop.f32.mrb[0].mxu0
    %v4110 = vadd.f32 0.0, %v4109
    %v4111 = vpop.f32.mrb[0].mxu0
    %v4112 = vpop.f32.mrb[0].mxu0
    %v4113 = vadd.f32 0.0, %v4112
    %v4114 = vpop.f32.mrb[0].mxu0
    %4115 = vmatprep.mubr.bf16.mxu0 0
    %4116 = vmatmul.mubr.bf16.gmra.mrb[0].mxu0 %v3230
    %v4117 = vpop.f32.mrb[0].mxu0
    %v4118 = vadd.f32 0.0, %v4117
    %v4119 = vpop.f32.mrb[0].mxu0
    %v4120 = vpop.f32.mrb[0].mxu0
    %v4121 = vadd.f32 0.0, %v4120
    %v4122 = vpop.f32.mrb[0].mxu0
    %4123 = vmatprep.mubr.bf16.mxu0 0
    %4124 = vmatmul.mubr.bf16.gmra.mrb[0].mxu0 %v3233
    %v4125 = vpop.f32.mrb[0].mxu0
    %v4126 = vadd.f32 0.0, %v4125
    %v4127 = vpop.f32.mrb[0].mxu0
    %v4128 = vpop.f32.mrb[0].mxu0
    %v4129 = vadd.f32 0.0, %v4128
    %v4130 = vpop.f32.mrb[0].mxu0
    %4131 = vmatprep.mubr.bf16.mxu0 0
    %4132 = vmatmul.mubr.bf16.gmra.mrb[0].mxu0 %v3236
    %v4133 = vpop.f32.mrb[0].mxu0
    %v4134 = vadd.f32 0.0, %v4133
    %v4135 = vpop.f32.mrb[0].mxu0
    %v4136 = vpop.f32.mrb[0].mxu0
    %v4137 = vadd.f32 0.0, %v4136
    %v4138 = vpop.f32.mrb[0].mxu0
    %4139 = vmatprep.mubr.bf16.mxu0 0
    %4140 = vmatmul.mubr.bf16.gmra.mrb[0].mxu0 %v3239
    %v4141 = vpop.f32.mrb[0].mxu0
    %v4142 = vadd.f32 0.0, %v4141
    %v4143 = vpop.f32.mrb[0].mxu0
    %v4144 = vpop.f32.mrb[0].mxu0
    %v4145 = vadd.f32 0.0, %v4144
    %v4146 = vpop.f32.mrb[0].mxu0
    %4147 = vmatprep.mubr.bf16.mxu0 0
    %4148 = vmatmul.mubr.bf16.gmra.mrb[0].mxu0 %v3242
    %v4149 = vpop.f32.mrb[0].mxu0
    %v4150 = vadd.f32 0.0, %v4149
    %v4151 = vpop.f32.mrb[0].mxu0
    %v4152 = vpop.f32.mrb[0].mxu0
    %v4153 = vadd.f32 0.0, %v4152
    %v4154 = vpop.f32.mrb[0].mxu0
    %4155 = vmatprep.mubr.bf16.mxu0 0
    %4156 = vmatmul.mubr.bf16.gmra.mrb[0].mxu0 %v3245
    %v4157 = vpop.f32.mrb[0].mxu0
    %v4158 = vadd.f32 0.0, %v4157
    %v4159 = vpop.f32.mrb[0].mxu0
    %v4160 = vpop.f32.mrb[0].mxu0
    %v4161 = vadd.f32 0.0, %v4160
    %v4162 = vpop.f32.mrb[0].mxu0
    %4163 = vmatprep.mubr.bf16.mxu0 0
    %4164 = vmatmul.mubr.bf16.gmra.mrb[0].mxu0 %v3248
    %v4165 = vpop.f32.mrb[0].mxu0
    %v4166 = vadd.f32 0.0, %v4165
    %v4167 = vpop.f32.mrb[0].mxu0
    %v4168 = vpop.f32.mrb[0].mxu0
    %v4169 = vadd.f32 0.0, %v4168
    %v4170 = vpop.f32.mrb[0].mxu0
    %4171 = vmatprep.mubr.bf16.mxu0 0
    %4172 = vmatmul.mubr.bf16.gmra.mrb[0].mxu0 %v3251
    %v4173 = vpop.f32.mrb[0].mxu0
    %v4174 = vadd.f32 0.0, %v4173
    %v4175 = vpop.f32.mrb[0].mxu0
    %v4176 = vpop.f32.mrb[0].mxu0
    %v4177 = vadd.f32 0.0, %v4176
    %v4178 = vpop.f32.mrb[0].mxu0
    %4179 = vmatprep.mubr.bf16.mxu0 0
    %4180 = vmatmul.mubr.bf16.gmra.mrb[0].mxu0 %v3254
    %v4181 = vpop.f32.mrb[0].mxu0
    %v4182 = vadd.f32 0.0, %v4181
    %v4183 = vpop.f32.mrb[0].mxu0
    %v4184 = vpop.f32.mrb[0].mxu0
    %v4185 = vadd.f32 0.0, %v4184
    %v4186 = vpop.f32.mrb[0].mxu0
    %4187 = vmatprep.mubr.bf16.mxu0 0
    %4188 = vmatmul.mubr.bf16.gmra.mrb[0].mxu0 %v3257
    %v4189 = vpop.f32.mrb[0].mxu0
    %v4190 = vadd.f32 0.0, %v4189
    %v4191 = vpop.f32.mrb[0].mxu0
    %v4192 = vpop.f32.mrb[0].mxu0
    %v4193 = vadd.f32 0.0, %v4192
    %v4194 = vpop.f32.mrb[0].mxu0
    %4195 = vmatprep.mubr.bf16.mxu0 0
    %4196 = vmatmul.mubr.bf16.gmra.mrb[0].mxu0 %v3260
    %v4197 = vpop.f32.mrb[0].mxu0
    %v4198 = vadd.f32 0.0, %v4197
    %v4199 = vpop.f32.mrb[0].mxu0
    %v4200 = vpop.f32.mrb[0].mxu0
    %v4201 = vadd.f32 0.0, %v4200
    %v4202 = vpop.f32.mrb[0].mxu0
    %4203 = vmatprep.mubr.bf16.mxu0 0
    %4204 = vmatmul.mubr.bf16.gmra.mrb[0].mxu0 %v3263
    %v4205 = vpop.f32.mrb[0].mxu0
    %v4206 = vadd.f32 0.0, %v4205
    %v4207 = vpop.f32.mrb[0].mxu0
    %v4208 = vpop.f32.mrb[0].mxu0
    %v4209 = vadd.f32 0.0, %v4208
    %v4210 = vpop.f32.mrb[0].mxu0
    %4211 = vmatprep.mubr.bf16.mxu0 0
    %4212 = vmatmul.mubr.bf16.gmra.mrb[0].mxu0 %v3266
    %v4213 = vpop.f32.mrb[0].mxu0
    %v4214 = vadd.f32 0.0, %v4213
    %v4215 = vpop.f32.mrb[0].mxu0
    %v4216 = vpop.f32.mrb[0].mxu0
    %v4217 = vadd.f32 0.0, %v4216
    %v4218 = vpop.f32.mrb[0].mxu0
    %4219 = vmatprep.mubr.bf16.mxu0 0
    %4220 = vmatmul.mubr.bf16.gmra.mrb[0].mxu0 %v3269
    %v4221 = vpop.f32.mrb[0].mxu0
    %v4222 = vadd.f32 0.0, %v4221
    %v4223 = vpop.f32.mrb[0].mxu0
    %v4224 = vpop.f32.mrb[0].mxu0
    %v4225 = vadd.f32 0.0, %v4224
    %v4226 = vpop.f32.mrb[0].mxu0
    %4227 = vmatprep.mubr.bf16.mxu0 0
    %4228 = vmatmul.mubr.bf16.gmra.mrb[0].mxu0 %v3272
    %v4229 = vpop.f32.mrb[0].mxu0
    %v4230 = vadd.f32 0.0, %v4229
    %v4231 = vpop.f32.mrb[0].mxu0
    %v4232 = vpop.f32.mrb[0].mxu0
    %v4233 = vadd.f32 0.0, %v4232
    %v4234 = vpop.f32.mrb[0].mxu0
    %4235 = vmatprep.mubr.bf16.mxu0 0
    %4236 = vmatmul.mubr.bf16.gmra.mrb[0].mxu0 %v3275
    %v4237 = vpop.f32.mrb[0].mxu0
    %v4238 = vadd.f32 0.0, %v4237
    %v4239 = vpop.f32.mrb[0].mxu0
    %v4240 = vpop.f32.mrb[0].mxu0
    %v4241 = vadd.f32 0.0, %v4240
    %v4242 = vpop.f32.mrb[0].mxu0
    %4243 = vmatprep.mubr.bf16.mxu0 0
    %4244 = vmatmul.mubr.bf16.gmra.mrb[0].mxu0 %v3278
    %v4245 = vpop.f32.mrb[0].mxu0
    %v4246 = vadd.f32 0.0, %v4245
    %v4247 = vpop.f32.mrb[0].mxu0
    %v4248 = vpop.f32.mrb[0].mxu0
    %v4249 = vadd.f32 0.0, %v4248
    %v4250 = vpop.f32.mrb[0].mxu0
    %4251 = vmatprep.mubr.bf16.mxu0 0
    %4252 = vmatmul.mubr.bf16.gmra.mrb[0].mxu0 %v3281
    %v4253 = vpop.f32.mrb[0].mxu0
    %v4254 = vadd.f32 0.0, %v4253
    %v4255 = vpop.f32.mrb[0].mxu0
    %v4256 = vpop.f32.mrb[0].mxu0
    %v4257 = vadd.f32 0.0, %v4256
    %v4258 = vpop.f32.mrb[0].mxu0
    %4259 = vmatprep.mubr.bf16.mxu0 0
    %4260 = vmatmul.mubr.bf16.gmra.mrb[0].mxu0 %v3284
    %v4261 = vpop.f32.mrb[0].mxu0
    %v4262 = vadd.f32 0.0, %v4261
    %v4263 = vpop.f32.mrb[0].mxu0
    %v4264 = vpop.f32.mrb[0].mxu0
    %v4265 = vadd.f32 0.0, %v4264
    %v4266 = vpop.f32.mrb[0].mxu0
    %4267 = vmatprep.mubr.bf16.mxu0 0
    %4268 = vmatmul.mubr.bf16.gmra.mrb[0].mxu0 %v3287
    %v4269 = vpop.f32.mrb[0].mxu0
    %v4270 = vadd.f32 0.0, %v4269
    %v4271 = vpop.f32.mrb[0].mxu0
    %v4272 = vpop.f32.mrb[0].mxu0
    %v4273 = vadd.f32 0.0, %v4272
    %v4274 = vpop.f32.mrb[0].mxu0
    %4275 = vmatprep.mubr.bf16.mxu0 0
    %4276 = vmatmul.mubr.bf16.gmra.mrb[0].mxu0 %v3290
    %v4277 = vpop.f32.mrb[0].mxu0
    %v4278 = vadd.f32 0.0, %v4277
    %v4279 = vpop.f32.mrb[0].mxu0
    %v4280 = vpop.f32.mrb[0].mxu0
    %v4281 = vadd.f32 0.0, %v4280
    %v4282 = vpop.f32.mrb[0].mxu0
    %4283 = vmatprep.mubr.bf16.mxu0 0
    %4284 = vmatmul.mubr.bf16.gmra.mrb[0].mxu0 %v3293
    %v4285 = vpop.f32.mrb[0].mxu0
    %v4286 = vadd.f32 0.0, %v4285
    %v4287 = vpop.f32.mrb[0].mxu0
    %v4288 = vpop.f32.mrb[0].mxu0
    %v4289 = vadd.f32 0.0, %v4288
    %v4290 = vpop.f32.mrb[0].mxu0
    %4291 = vmatprep.mubr.bf16.mxu0 0
    %4292 = vmatmul.mubr.bf16.gmra.mrb[0].mxu0 %v3296
    %v4293 = vpop.f32.mrb[0].mxu0
    %v4294 = vadd.f32 0.0, %v4293
    %v4295 = vpop.f32.mrb[0].mxu0
    %v4296 = vpop.f32.mrb[0].mxu0
    %v4297 = vadd.f32 0.0, %v4296
    %v4298 = vpop.f32.mrb[0].mxu0
    %4299 = vmatprep.mubr.bf16.mxu0 0
    %4300 = vmatmul.mubr.bf16.gmra.mrb[0].mxu0 %v3299
    %v4301 = vpop.f32.mrb[0].mxu0
    %v4302 = vadd.f32 0.0, %v4301
    %v4303 = vpop.f32.mrb[0].mxu0
    %v4304 = vpop.f32.mrb[0].mxu0
    %v4305 = vadd.f32 0.0, %v4304
    %v4306 = vpop.f32.mrb[0].mxu0
    %4307 = vmatprep.mubr.bf16.mxu0 0
    %4308 = vmatmul.mubr.bf16.gmra.mrb[0].mxu0 %v3302
    %v4309 = vpop.f32.mrb[0].mxu0
    %v4310 = vadd.f32 0.0, %v4309
    %v4311 = vpop.f32.mrb[0].mxu0
    %v4312 = vpop.f32.mrb[0].mxu0
    %v4313 = vadd.f32 0.0, %v4312
    %v4314 = vpop.f32.mrb[0].mxu0
    %4315 = vmatprep.mubr.bf16.mxu0 0
    %4316 = vmatmul.mubr.bf16.gmra.mrb[0].mxu0 %v3305
    %v4317 = vpop.f32.mrb[0].mxu0
    %v4318 = vadd.f32 0.0, %v4317
    %v4319 = vpop.f32.mrb[0].mxu0
    %v4320 = vpop.f32.mrb[0].mxu0
    %v4321 = vadd.f32 0.0, %v4320
    %v4322 = vpop.f32.mrb[0].mxu0
    %4323 = vmatprep.mubr.bf16.mxu0 0
    %4324 = vmatmul.mubr.bf16.gmra.mrb[0].mxu0 %v3308
    %v4325 = vpop.f32.mrb[0].mxu0
    %v4326 = vadd.f32 0.0, %v4325
    %v4327 = vpop.f32.mrb[0].mxu0
    %v4328 = vpop.f32.mrb[0].mxu0
    %v4329 = vadd.f32 0.0, %v4328
    %v4330 = vpop.f32.mrb[0].mxu0
    %4331 = vmatprep.mubr.bf16.mxu0 0
    %4332 = vmatmul.mubr.bf16.gmra.mrb[0].mxu0 %v3311
    %v4333 = vpop.f32.mrb[0].mxu0
    %v4334 = vadd.f32 0.0, %v4333
    %v4335 = vpop.f32.mrb[0].mxu0
    %v4336 = vpop.f32.mrb[0].mxu0
    %v4337 = vadd.f32 0.0, %v4336
    %v4338 = vpop.f32.mrb[0].mxu0
    %4339 = vmatprep.mubr.bf16.mxu0 0
    %4340 = vmatmul.mubr.bf16.gmra.mrb[0].mxu0 %v3314
    %v4341 = vpop.f32.mrb[0].mxu0
    %v4342 = vadd.f32 0.0, %v4341
    %v4343 = vpop.f32.mrb[0].mxu0
    %v4344 = vpop.f32.mrb[0].mxu0
    %v4345 = vadd.f32 0.0, %v4344
    %v4346 = vpop.f32.mrb[0].mxu0
    %4347 = vmatprep.mubr.bf16.mxu0 0
    %4348 = vmatmul.mubr.bf16.gmra.mrb[0].mxu0 %v3317
    %v4349 = vpop.f32.mrb[0].mxu0
    %v4350 = vadd.f32 0.0, %v4349
    %v4351 = vpop.f32.mrb[0].mxu0
    %v4352 = vpop.f32.mrb[0].mxu0
    %v4353 = vadd.f32 0.0, %v4352
    %v4354 = vpop.f32.mrb[0].mxu0
    %4355 = vmatprep.mubr.bf16.mxu0 0
    %4356 = vmatmul.mubr.bf16.gmra.mrb[0].mxu0 %v3320
    %v4357 = vpop.f32.mrb[0].mxu0
    %v4358 = vadd.f32 0.0, %v4357
    %v4359 = vpop.f32.mrb[0].mxu0
    %v4360 = vpop.f32.mrb[0].mxu0
    %v4361 = vadd.f32 0.0, %v4360
    %v4362 = vpop.f32.mrb[0].mxu0
    %4363 = vmatprep.mubr.bf16.mxu0 0
    %4364 = vmatmul.mubr.bf16.gmra.mrb[0].mxu0 %v3323
    %v4365 = vpop.f32.mrb[0].mxu0
    %v4366 = vadd.f32 0.0, %v4365
    %v4367 = vpop.f32.mrb[0].mxu0
    %v4368 = vpop.f32.mrb[0].mxu0
    %v4369 = vadd.f32 0.0, %v4368
    %v4370 = vpop.f32.mrb[0].mxu0
    %4371 = vmatprep.mubr.bf16.mxu0 0
    %4372 = vmatmul.mubr.bf16.gmra.mrb[0].mxu0 %v3326
    %v4373 = vpop.f32.mrb[0].mxu0
    %v4374 = vadd.f32 0.0, %v4373
    %v4375 = vpop.f32.mrb[0].mxu0
    %v4376 = vpop.f32.mrb[0].mxu0
    %v4377 = vadd.f32 0.0, %v4376
    %v4378 = vpop.f32.mrb[0].mxu0
    %4379 = vmatprep.mubr.bf16.mxu0 0
    %4380 = vmatmul.mubr.bf16.gmra.mrb[0].mxu0 %v3329
    %v4381 = vpop.f32.mrb[0].mxu0
    %v4382 = vadd.f32 0.0, %v4381
    %v4383 = vpop.f32.mrb[0].mxu0
    %v4384 = vpop.f32.mrb[0].mxu0
    %v4385 = vadd.f32 0.0, %v4384
    %v4386 = vpop.f32.mrb[0].mxu0
    %4387 = vdwg.mxu0
    %v4388 = vpack.c.bf16 %v3369, %v3366
    %v4389 = vpack.c.bf16 %v3377, %v3374
    %v4390 = vpack.c.bf16 %v3385, %v3382
    %v4391 = vpack.c.bf16 %v3393, %v3390
    %v4392 = vpack.c.bf16 %v3401, %v3398
    %v4393 = vpack.c.bf16 %v3409, %v3406
    %v4394 = vpack.c.bf16 %v3417, %v3414
    %v4395 = vpack.c.bf16 %v3425, %v3422
    %v4396 = vpack.c.bf16 %v3433, %v3430
    %v4397 = vpack.c.bf16 %v3441, %v3438
    %v4398 = vpack.c.bf16 %v3449, %v3446
    %v4399 = vpack.c.bf16 %v3457, %v3454
    %v4400 = vpack.c.bf16 %v3465, %v3462
    %v4401 = vpack.c.bf16 %v3473, %v3470
    %v4402 = vpack.c.bf16 %v3481, %v3478
    %v4403 = vpack.c.bf16 %v3489, %v3486
    %v4404 = vpack.c.bf16 %v3497, %v3494
    %v4405 = vpack.c.bf16 %v3505, %v3502
    %v4406 = vpack.c.bf16 %v3513, %v3510
    %v4407 = vpack.c.bf16 %v3521, %v3518
    %v4408 = vpack.c.bf16 %v3529, %v3526
    %v4409 = vpack.c.bf16 %v3537, %v3534
    %v4410 = vpack.c.bf16 %v3545, %v3542
    %v4411 = vpack.c.bf16 %v3553, %v3550
    %v4412 = vpack.c.bf16 %v3561, %v3558
    %v4413 = vpack.c.bf16 %v3569, %v3566
    %v4414 = vpack.c.bf16 %v3577, %v3574
    %v4415 = vpack.c.bf16 %v3585, %v3582
    %v4416 = vpack.c.bf16 %v3593, %v3590
    %v4417 = vpack.c.bf16 %v3601, %v3598
    %v4418 = vpack.c.bf16 %v3609, %v3606
    %v4419 = vpack.c.bf16 %v3617, %v3614
    %v4420 = vpack.c.bf16 %v3625, %v3622
    %v4421 = vpack.c.bf16 %v3633, %v3630
    %v4422 = vpack.c.bf16 %v3641, %v3638
    %v4423 = vpack.c.bf16 %v3649, %v3646
    %v4424 = vpack.c.bf16 %v3657, %v3654
    %v4425 = vpack.c.bf16 %v3665, %v3662
    %v4426 = vpack.c.bf16 %v3673, %v3670
    %v4427 = vpack.c.bf16 %v3681, %v3678
    %v4428 = vpack.c.bf16 %v3689, %v3686
    %v4429 = vpack.c.bf16 %v3697, %v3694
    %v4430 = vpack.c.bf16 %v3705, %v3702
    %v4431 = vpack.c.bf16 %v3713, %v3710
    %v4432 = vpack.c.bf16 %v3721, %v3718
    %v4433 = vpack.c.bf16 %v3729, %v3726
    %v4434 = vpack.c.bf16 %v3737, %v3734
    %v4435 = vpack.c.bf16 %v3745, %v3742
    %v4436 = vpack.c.bf16 %v3753, %v3750
    %v4437 = vpack.c.bf16 %v3761, %v3758
    %v4438 = vpack.c.bf16 %v3769, %v3766
    %v4439 = vpack.c.bf16 %v3777, %v3774
    %v4440 = vpack.c.bf16 %v3785, %v3782
    %v4441 = vpack.c.bf16 %v3793, %v3790
    %v4442 = vpack.c.bf16 %v3801, %v3798
    %v4443 = vpack.c.bf16 %v3809, %v3806
    %v4444 = vpack.c.bf16 %v3817, %v3814
    %v4445 = vpack.c.bf16 %v3825, %v3822
    %v4446 = vpack.c.bf16 %v3833, %v3830
    %v4447 = vpack.c.bf16 %v3841, %v3838
    %v4448 = vpack.c.bf16 %v3849, %v3846
    %v4449 = vpack.c.bf16 %v3857, %v3854
    %v4450 = vpack.c.bf16 %v3865, %v3862
    %v4451 = vpack.c.bf16 %v3873, %v3870
    %v4452 = vpack.c.bf16 %v3881, %v3878
    %v4453 = vpack.c.bf16 %v3889, %v3886
    %v4454 = vpack.c.bf16 %v3897, %v3894
    %v4455 = vpack.c.bf16 %v3905, %v3902
    %v4456 = vpack.c.bf16 %v3913, %v3910
    %v4457 = vpack.c.bf16 %v3921, %v3918
    %v4458 = vpack.c.bf16 %v3929, %v3926
    %v4459 = vpack.c.bf16 %v3937, %v3934
    %v4460 = vpack.c.bf16 %v3945, %v3942
    %v4461 = vpack.c.bf16 %v3953, %v3950
    %v4462 = vpack.c.bf16 %v3961, %v3958
    %v4463 = vpack.c.bf16 %v3969, %v3966
    %v4464 = vpack.c.bf16 %v3977, %v3974
    %v4465 = vpack.c.bf16 %v3985, %v3982
    %v4466 = vpack.c.bf16 %v3993, %v3990
    %v4467 = vpack.c.bf16 %v4001, %v3998
    %v4468 = vpack.c.bf16 %v4009, %v4006
    %v4469 = vpack.c.bf16 %v4017, %v4014
    %v4470 = vpack.c.bf16 %v4025, %v4022
    %v4471 = vpack.c.bf16 %v4033, %v4030
    %v4472 = vpack.c.bf16 %v4041, %v4038
    %v4473 = vpack.c.bf16 %v4049, %v4046
    %v4474 = vpack.c.bf16 %v4057, %v4054
    %v4475 = vpack.c.bf16 %v4065, %v4062
    %v4476 = vpack.c.bf16 %v4073, %v4070
    %v4477 = vpack.c.bf16 %v4081, %v4078
    %v4478 = vpack.c.bf16 %v4089, %v4086
    %v4479 = vpack.c.bf16 %v4097, %v4094
    %v4480 = vpack.c.bf16 %v4105, %v4102
    %v4481 = vpack.c.bf16 %v4113, %v4110
    %v4482 = vpack.c.bf16 %v4121, %v4118
    %v4483 = vpack.c.bf16 %v4129, %v4126
    %v4484 = vpack.c.bf16 %v4137, %v4134
    %v4485 = vpack.c.bf16 %v4145, %v4142
    %v4486 = vpack.c.bf16 %v4153, %v4150
    %v4487 = vpack.c.bf16 %v4161, %v4158
    %v4488 = vpack.c.bf16 %v4169, %v4166
    %v4489 = vpack.c.bf16 %v4177, %v4174
    %v4490 = vpack.c.bf16 %v4185, %v4182
    %v4491 = vpack.c.bf16 %v4193, %v4190
    %v4492 = vpack.c.bf16 %v4201, %v4198
    %v4493 = vpack.c.bf16 %v4209, %v4206
    %v4494 = vpack.c.bf16 %v4217, %v4214
    %v4495 = vpack.c.bf16 %v4225, %v4222
    %v4496 = vpack.c.bf16 %v4233, %v4230
    %v4497 = vpack.c.bf16 %v4241, %v4238
    %v4498 = vpack.c.bf16 %v4249, %v4246
    %v4499 = vpack.c.bf16 %v4257, %v4254
    %v4500 = vpack.c.bf16 %v4265, %v4262
    %v4501 = vpack.c.bf16 %v4273, %v4270
    %v4502 = vpack.c.bf16 %v4281, %v4278
    %v4503 = vpack.c.bf16 %v4289, %v4286
    %v4504 = vpack.c.bf16 %v4297, %v4294
    %v4505 = vpack.c.bf16 %v4305, %v4302
    %v4506 = vpack.c.bf16 %v4313, %v4310
    %v4507 = vpack.c.bf16 %v4321, %v4318
    %v4508 = vpack.c.bf16 %v4329, %v4326
    %v4509 = vpack.c.bf16 %v4337, %v4334
    %v4510 = vpack.c.bf16 %v4345, %v4342
    %v4511 = vpack.c.bf16 %v4353, %v4350
    %v4512 = vpack.c.bf16 %v4361, %v4358
    %v4513 = vpack.c.bf16 %v4369, %v4366
    %v4514 = vpack.c.bf16 %v4377, %v4374
    %v4515 = vpack.c.bf16 %v4385, %v4382
    %v4516 = vld [vmem:[%s5] sm:$0x1]
    %v4517 = vpack.c.bf16 %v4516, %v4516
    %v4519 = vpack.i.b16 %v4517, %v4517
    %v4521 = vlaneseq
    %v4522 = vshrl.u32 %v4521, 7
    %v4523 = vsub.s32 0, %v4522
    %v4524 = vrot.slane %v4519, %v4523
    %v4525 = vadd.bf16 %v4388, %v4524
    %v4526 = vadd.bf16 %v4389, %v4524
    %v4527 = vadd.bf16 %v4390, %v4524
    %v4528 = vadd.bf16 %v4391, %v4524
    %v4529 = vadd.bf16 %v4392, %v4524
    %v4530 = vadd.bf16 %v4393, %v4524
    %v4531 = vadd.bf16 %v4394, %v4524
    %v4532 = vadd.bf16 %v4395, %v4524
    %v4533 = vadd.bf16 %v4396, %v4524
    %v4534 = vadd.bf16 %v4397, %v4524
    %v4535 = vadd.bf16 %v4398, %v4524
    %v4536 = vadd.bf16 %v4399, %v4524
    %v4537 = vadd.bf16 %v4400, %v4524
    %v4538 = vadd.bf16 %v4401, %v4524
    %v4539 = vadd.bf16 %v4402, %v4524
    %v4540 = vadd.bf16 %v4403, %v4524
    %v4541 = vadd.bf16 %v4404, %v4524
    %v4542 = vadd.bf16 %v4405, %v4524
    %v4543 = vadd.bf16 %v4406, %v4524
    %v4544 = vadd.bf16 %v4407, %v4524
    %v4545 = vadd.bf16 %v4408, %v4524
    %v4546 = vadd.bf16 %v4409, %v4524
    %v4547 = vadd.bf16 %v4410, %v4524
    %v4548 = vadd.bf16 %v4411, %v4524
    %v4549 = vadd.bf16 %v4412, %v4524
    %v4550 = vadd.bf16 %v4413, %v4524
    %v4551 = vadd.bf16 %v4414, %v4524
    %v4552 = vadd.bf16 %v4415, %v4524
    %v4553 = vadd.bf16 %v4416, %v4524
    %v4554 = vadd.bf16 %v4417, %v4524
    %v4555 = vadd.bf16 %v4418, %v4524
    %v4556 = vadd.bf16 %v4419, %v4524
    %v4557 = vadd.bf16 %v4420, %v4524
    %v4558 = vadd.bf16 %v4421, %v4524
    %v4559 = vadd.bf16 %v4422, %v4524
    %v4560 = vadd.bf16 %v4423, %v4524
    %v4561 = vadd.bf16 %v4424, %v4524
    %v4562 = vadd.bf16 %v4425, %v4524
    %v4563 = vadd.bf16 %v4426, %v4524
    %v4564 = vadd.bf16 %v4427, %v4524
    %v4565 = vadd.bf16 %v4428, %v4524
    %v4566 = vadd.bf16 %v4429, %v4524
    %v4567 = vadd.bf16 %v4430, %v4524
    %v4568 = vadd.bf16 %v4431, %v4524
    %v4569 = vadd.bf16 %v4432, %v4524
    %v4570 = vadd.bf16 %v4433, %v4524
    %v4571 = vadd.bf16 %v4434, %v4524
    %v4572 = vadd.bf16 %v4435, %v4524
    %v4573 = vadd.bf16 %v4436, %v4524
    %v4574 = vadd.bf16 %v4437, %v4524
    %v4575 = vadd.bf16 %v4438, %v4524
    %v4576 = vadd.bf16 %v4439, %v4524
    %v4577 = vadd.bf16 %v4440, %v4524
    %v4578 = vadd.bf16 %v4441, %v4524
    %v4579 = vadd.bf16 %v4442, %v4524
    %v4580 = vadd.bf16 %v4443, %v4524
    %v4581 = vadd.bf16 %v4444, %v4524
    %v4582 = vadd.bf16 %v4445, %v4524
    %v4583 = vadd.bf16 %v4446, %v4524
    %v4584 = vadd.bf16 %v4447, %v4524
    %v4585 = vadd.bf16 %v4448, %v4524
    %v4586 = vadd.bf16 %v4449, %v4524
    %v4587 = vadd.bf16 %v4450, %v4524
    %v4588 = vadd.bf16 %v4451, %v4524
    %v4589 = vadd.bf16 %v4452, %v4524
    %v4590 = vadd.bf16 %v4453, %v4524
    %v4591 = vadd.bf16 %v4454, %v4524
    %v4592 = vadd.bf16 %v4455, %v4524
    %v4593 = vadd.bf16 %v4456, %v4524
    %v4594 = vadd.bf16 %v4457, %v4524
    %v4595 = vadd.bf16 %v4458, %v4524
    %v4596 = vadd.bf16 %v4459, %v4524
    %v4597 = vadd.bf16 %v4460, %v4524
    %v4598 = vadd.bf16 %v4461, %v4524
    %v4599 = vadd.bf16 %v4462, %v4524
    %v4600 = vadd.bf16 %v4463, %v4524
    %v4601 = vadd.bf16 %v4464, %v4524
    %v4602 = vadd.bf16 %v4465, %v4524
    %v4603 = vadd.bf16 %v4466, %v4524
    %v4604 = vadd.bf16 %v4467, %v4524
    %v4605 = vadd.bf16 %v4468, %v4524
    %v4606 = vadd.bf16 %v4469, %v4524
    %v4607 = vadd.bf16 %v4470, %v4524
    %v4608 = vadd.bf16 %v4471, %v4524
    %v4609 = vadd.bf16 %v4472, %v4524
    %v4610 = vadd.bf16 %v4473, %v4524
    %v4611 = vadd.bf16 %v4474, %v4524
    %v4612 = vadd.bf16 %v4475, %v4524
    %v4613 = vadd.bf16 %v4476, %v4524
    %v4614 = vadd.bf16 %v4477, %v4524
    %v4615 = vadd.bf16 %v4478, %v4524
    %v4616 = vadd.bf16 %v4479, %v4524
    %v4617 = vadd.bf16 %v4480, %v4524
    %v4618 = vadd.bf16 %v4481, %v4524
    %v4619 = vadd.bf16 %v4482, %v4524
    %v4620 = vadd.bf16 %v4483, %v4524
    %v4621 = vadd.bf16 %v4484, %v4524
    %v4622 = vadd.bf16 %v4485, %v4524
    %v4623 = vadd.bf16 %v4486, %v4524
    %v4624 = vadd.bf16 %v4487, %v4524
    %v4625 = vadd.bf16 %v4488, %v4524
    %v4626 = vadd.bf16 %v4489, %v4524
    %v4627 = vadd.bf16 %v4490, %v4524
    %v4628 = vadd.bf16 %v4491, %v4524
    %v4629 = vadd.bf16 %v4492, %v4524
    %v4630 = vadd.bf16 %v4493, %v4524
    %v4631 = vadd.bf16 %v4494, %v4524
    %v4632 = vadd.bf16 %v4495, %v4524
    %v4633 = vadd.bf16 %v4496, %v4524
    %v4634 = vadd.bf16 %v4497, %v4524
    %v4635 = vadd.bf16 %v4498, %v4524
    %v4636 = vadd.bf16 %v4499, %v4524
    %v4637 = vadd.bf16 %v4500, %v4524
    %v4638 = vadd.bf16 %v4501, %v4524
    %v4639 = vadd.bf16 %v4502, %v4524
    %v4640 = vadd.bf16 %v4503, %v4524
    %v4641 = vadd.bf16 %v4504, %v4524
    %v4642 = vadd.bf16 %v4505, %v4524
    %v4643 = vadd.bf16 %v4506, %v4524
    %v4644 = vadd.bf16 %v4507, %v4524
    %v4645 = vadd.bf16 %v4508, %v4524
    %v4646 = vadd.bf16 %v4509, %v4524
    %v4647 = vadd.bf16 %v4510, %v4524
    %v4648 = vadd.bf16 %v4511, %v4524
    %v4649 = vadd.bf16 %v4512, %v4524
    %v4650 = vadd.bf16 %v4513, %v4524
    %v4651 = vadd.bf16 %v4514, %v4524
    %v4652 = vadd.bf16 %v4515, %v4524
    %v4653 = vmul.bf16 %v4525, 1036860877
    %v4654 = vmul.bf16 %v4526, 1036860877
    %v4655 = vmul.bf16 %v4527, 1036860877
    %v4656 = vmul.bf16 %v4528, 1036860877
    %v4657 = vmul.bf16 %v4529, 1036860877
    %v4658 = vmul.bf16 %v4530, 1036860877
    %v4659 = vmul.bf16 %v4531, 1036860877
    %v4660 = vmul.bf16 %v4532, 1036860877
    %v4661 = vmul.bf16 %v4533, 1036860877
    %v4662 = vmul.bf16 %v4534, 1036860877
    %v4663 = vmul.bf16 %v4535, 1036860877
    %v4664 = vmul.bf16 %v4536, 1036860877
    %v4665 = vmul.bf16 %v4537, 1036860877
    %v4666 = vmul.bf16 %v4538, 1036860877
    %v4667 = vmul.bf16 %v4539, 1036860877
    %v4668 = vmul.bf16 %v4540, 1036860877
    %v4669 = vmul.bf16 %v4541, 1036860877
    %v4670 = vmul.bf16 %v4542, 1036860877
    %v4671 = vmul.bf16 %v4543, 1036860877
    %v4672 = vmul.bf16 %v4544, 1036860877
    %v4673 = vmul.bf16 %v4545, 1036860877
    %v4674 = vmul.bf16 %v4546, 1036860877
    %v4675 = vmul.bf16 %v4547, 1036860877
    %v4676 = vmul.bf16 %v4548, 1036860877
    %v4677 = vmul.bf16 %v4549, 1036860877
    %v4678 = vmul.bf16 %v4550, 1036860877
    %v4679 = vmul.bf16 %v4551, 1036860877
    %v4680 = vmul.bf16 %v4552, 1036860877
    %v4681 = vmul.bf16 %v4553, 1036860877
    %v4682 = vmul.bf16 %v4554, 1036860877
    %v4683 = vmul.bf16 %v4555, 1036860877
    %v4684 = vmul.bf16 %v4556, 1036860877
    %v4685 = vmul.bf16 %v4557, 1036860877
    %v4686 = vmul.bf16 %v4558, 1036860877
    %v4687 = vmul.bf16 %v4559, 1036860877
    %v4688 = vmul.bf16 %v4560, 1036860877
    %v4689 = vmul.bf16 %v4561, 1036860877
    %v4690 = vmul.bf16 %v4562, 1036860877
    %v4691 = vmul.bf16 %v4563, 1036860877
    %v4692 = vmul.bf16 %v4564, 1036860877
    %v4693 = vmul.bf16 %v4565, 1036860877
    %v4694 = vmul.bf16 %v4566, 1036860877
    %v4695 = vmul.bf16 %v4567, 1036860877
    %v4696 = vmul.bf16 %v4568, 1036860877
    %v4697 = vmul.bf16 %v4569, 1036860877
    %v4698 = vmul.bf16 %v4570, 1036860877
    %v4699 = vmul.bf16 %v4571, 1036860877
    %v4700 = vmul.bf16 %v4572, 1036860877
    %v4701 = vmul.bf16 %v4573, 1036860877
    %v4702 = vmul.bf16 %v4574, 1036860877
    %v4703 = vmul.bf16 %v4575, 1036860877
    %v4704 = vmul.bf16 %v4576, 1036860877
    %v4705 = vmul.bf16 %v4577, 1036860877
    %v4706 = vmul.bf16 %v4578, 1036860877
    %v4707 = vmul.bf16 %v4579, 1036860877
    %v4708 = vmul.bf16 %v4580, 1036860877
    %v4709 = vmul.bf16 %v4581, 1036860877
    %v4710 = vmul.bf16 %v4582, 1036860877
    %v4711 = vmul.bf16 %v4583, 1036860877
    %v4712 = vmul.bf16 %v4584, 1036860877
    %v4713 = vmul.bf16 %v4585, 1036860877
    %v4714 = vmul.bf16 %v4586, 1036860877
    %v4715 = vmul.bf16 %v4587, 1036860877
    %v4716 = vmul.bf16 %v4588, 1036860877
    %v4717 = vmul.bf16 %v4589, 1036860877
    %v4718 = vmul.bf16 %v4590, 1036860877
    %v4719 = vmul.bf16 %v4591, 1036860877
    %v4720 = vmul.bf16 %v4592, 1036860877
    %v4721 = vmul.bf16 %v4593, 1036860877
    %v4722 = vmul.bf16 %v4594, 1036860877
    %v4723 = vmul.bf16 %v4595, 1036860877
    %v4724 = vmul.bf16 %v4596, 1036860877
    %v4725 = vmul.bf16 %v4597, 1036860877
    %v4726 = vmul.bf16 %v4598, 1036860877
    %v4727 = vmul.bf16 %v4599, 1036860877
    %v4728 = vmul.bf16 %v4600, 1036860877
    %v4729 = vmul.bf16 %v4601, 1036860877
    %v4730 = vmul.bf16 %v4602, 1036860877
    %v4731 = vmul.bf16 %v4603, 1036860877
    %v4732 = vmul.bf16 %v4604, 1036860877
    %v4733 = vmul.bf16 %v4605, 1036860877
    %v4734 = vmul.bf16 %v4606, 1036860877
    %v4735 = vmul.bf16 %v4607, 1036860877
    %v4736 = vmul.bf16 %v4608, 1036860877
    %v4737 = vmul.bf16 %v4609, 1036860877
    %v4738 = vmul.bf16 %v4610, 1036860877
    %v4739 = vmul.bf16 %v4611, 1036860877
    %v4740 = vmul.bf16 %v4612, 1036860877
    %v4741 = vmul.bf16 %v4613, 1036860877
    %v4742 = vmul.bf16 %v4614, 1036860877
    %v4743 = vmul.bf16 %v4615, 1036860877
    %v4744 = vmul.bf16 %v4616, 1036860877
    %v4745 = vmul.bf16 %v4617, 1036860877
    %v4746 = vmul.bf16 %v4618, 1036860877
    %v4747 = vmul.bf16 %v4619, 1036860877
    %v4748 = vmul.bf16 %v4620, 1036860877
    %v4749 = vmul.bf16 %v4621, 1036860877
    %v4750 = vmul.bf16 %v4622, 1036860877
    %v4751 = vmul.bf16 %v4623, 1036860877
    %v4752 = vmul.bf16 %v4624, 1036860877
    %v4753 = vmul.bf16 %v4625, 1036860877
    %v4754 = vmul.bf16 %v4626, 1036860877
    %v4755 = vmul.bf16 %v4627, 1036860877
    %v4756 = vmul.bf16 %v4628, 1036860877
    %v4757 = vmul.bf16 %v4629, 1036860877
    %v4758 = vmul.bf16 %v4630, 1036860877
    %v4759 = vmul.bf16 %v4631, 1036860877
    %v4760 = vmul.bf16 %v4632, 1036860877
    %v4761 = vmul.bf16 %v4633, 1036860877
    %v4762 = vmul.bf16 %v4634, 1036860877
    %v4763 = vmul.bf16 %v4635, 1036860877
    %v4764 = vmul.bf16 %v4636, 1036860877
    %v4765 = vmul.bf16 %v4637, 1036860877
    %v4766 = vmul.bf16 %v4638, 1036860877
    %v4767 = vmul.bf16 %v4639, 1036860877
    %v4768 = vmul.bf16 %v4640, 1036860877
    %v4769 = vmul.bf16 %v4641, 1036860877
    %v4770 = vmul.bf16 %v4642, 1036860877
    %v4771 = vmul.bf16 %v4643, 1036860877
    %v4772 = vmul.bf16 %v4644, 1036860877
    %v4773 = vmul.bf16 %v4645, 1036860877
    %v4774 = vmul.bf16 %v4646, 1036860877
    %v4775 = vmul.bf16 %v4647, 1036860877
    %v4776 = vmul.bf16 %v4648, 1036860877
    %v4777 = vmul.bf16 %v4649, 1036860877
    %v4778 = vmul.bf16 %v4650, 1036860877
    %v4779 = vmul.bf16 %v4651, 1036860877
    %v4780 = vmul.bf16 %v4652, 1036860877
    %v4781 = vmax.bf16 %v4525, %v4653
    %v4782 = vmax.bf16 %v4526, %v4654
    %v4783 = vmax.bf16 %v4527, %v4655
    %v4784 = vmax.bf16 %v4528, %v4656
    %v4785 = vmax.bf16 %v4529, %v4657
    %v4786 = vmax.bf16 %v4530, %v4658
    %v4787 = vmax.bf16 %v4531, %v4659
    %v4788 = vmax.bf16 %v4532, %v4660
    %v4789 = vmax.bf16 %v4533, %v4661
    %v4790 = vmax.bf16 %v4534, %v4662
    %v4791 = vmax.bf16 %v4535, %v4663
    %v4792 = vmax.bf16 %v4536, %v4664
    %v4793 = vmax.bf16 %v4537, %v4665
    %v4794 = vmax.bf16 %v4538, %v4666
    %v4795 = vmax.bf16 %v4539, %v4667
    %v4796 = vmax.bf16 %v4540, %v4668
    %v4797 = vmax.bf16 %v4541, %v4669
    %v4798 = vmax.bf16 %v4542, %v4670
    %v4799 = vmax.bf16 %v4543, %v4671
    %v4800 = vmax.bf16 %v4544, %v4672
    %v4801 = vmax.bf16 %v4545, %v4673
    %v4802 = vmax.bf16 %v4546, %v4674
    %v4803 = vmax.bf16 %v4547, %v4675
    %v4804 = vmax.bf16 %v4548, %v4676
    %v4805 = vmax.bf16 %v4549, %v4677
    %v4806 = vmax.bf16 %v4550, %v4678
    %v4807 = vmax.bf16 %v4551, %v4679
    %v4808 = vmax.bf16 %v4552, %v4680
    %v4809 = vmax.bf16 %v4553, %v4681
    %v4810 = vmax.bf16 %v4554, %v4682
    %v4811 = vmax.bf16 %v4555, %v4683
    %v4812 = vmax.bf16 %v4556, %v4684
    %v4813 = vmax.bf16 %v4557, %v4685
    %v4814 = vmax.bf16 %v4558, %v4686
    %v4815 = vmax.bf16 %v4559, %v4687
    %v4816 = vmax.bf16 %v4560, %v4688
    %v4817 = vmax.bf16 %v4561, %v4689
    %v4818 = vmax.bf16 %v4562, %v4690
    %v4819 = vmax.bf16 %v4563, %v4691
    %v4820 = vmax.bf16 %v4564, %v4692
    %v4821 = vmax.bf16 %v4565, %v4693
    %v4822 = vmax.bf16 %v4566, %v4694
    %v4823 = vmax.bf16 %v4567, %v4695
    %v4824 = vmax.bf16 %v4568, %v4696
    %v4825 = vmax.bf16 %v4569, %v4697
    %v4826 = vmax.bf16 %v4570, %v4698
    %v4827 = vmax.bf16 %v4571, %v4699
    %v4828 = vmax.bf16 %v4572, %v4700
    %v4829 = vmax.bf16 %v4573, %v4701
    %v4830 = vmax.bf16 %v4574, %v4702
    %v4831 = vmax.bf16 %v4575, %v4703
    %v4832 = vmax.bf16 %v4576, %v4704
    %v4833 = vmax.bf16 %v4577, %v4705
    %v4834 = vmax.bf16 %v4578, %v4706
    %v4835 = vmax.bf16 %v4579, %v4707
    %v4836 = vmax.bf16 %v4580, %v4708
    %v4837 = vmax.bf16 %v4581, %v4709
    %v4838 = vmax.bf16 %v4582, %v4710
    %v4839 = vmax.bf16 %v4583, %v4711
    %v4840 = vmax.bf16 %v4584, %v4712
    %v4841 = vmax.bf16 %v4585, %v4713
    %v4842 = vmax.bf16 %v4586, %v4714
    %v4843 = vmax.bf16 %v4587, %v4715
    %v4844 = vmax.bf16 %v4588, %v4716
    %v4845 = vmax.bf16 %v4589, %v4717
    %v4846 = vmax.bf16 %v4590, %v4718
    %v4847 = vmax.bf16 %v4591, %v4719
    %v4848 = vmax.bf16 %v4592, %v4720
    %v4849 = vmax.bf16 %v4593, %v4721
    %v4850 = vmax.bf16 %v4594, %v4722
    %v4851 = vmax.bf16 %v4595, %v4723
    %v4852 = vmax.bf16 %v4596, %v4724
    %v4853 = vmax.bf16 %v4597, %v4725
    %v4854 = vmax.bf16 %v4598, %v4726
    %v4855 = vmax.bf16 %v4599, %v4727
    %v4856 = vmax.bf16 %v4600, %v4728
    %v4857 = vmax.bf16 %v4601, %v4729
    %v4858 = vmax.bf16 %v4602, %v4730
    %v4859 = vmax.bf16 %v4603, %v4731
    %v4860 = vmax.bf16 %v4604, %v4732
    %v4861 = vmax.bf16 %v4605, %v4733
    %v4862 = vmax.bf16 %v4606, %v4734
    %v4863 = vmax.bf16 %v4607, %v4735
    %v4864 = vmax.bf16 %v4608, %v4736
    %v4865 = vmax.bf16 %v4609, %v4737
    %v4866 = vmax.bf16 %v4610, %v4738
    %v4867 = vmax.bf16 %v4611, %v4739
    %v4868 = vmax.bf16 %v4612, %v4740
    %v4869 = vmax.bf16 %v4613, %v4741
    %v4870 = vmax.bf16 %v4614, %v4742
    %v4871 = vmax.bf16 %v4615, %v4743
    %v4872 = vmax.bf16 %v4616, %v4744
    %v4873 = vmax.bf16 %v4617, %v4745
    %v4874 = vmax.bf16 %v4618, %v4746
    %v4875 = vmax.bf16 %v4619, %v4747
    %v4876 = vmax.bf16 %v4620, %v4748
    %v4877 = vmax.bf16 %v4621, %v4749
    %v4878 = vmax.bf16 %v4622, %v4750
    %v4879 = vmax.bf16 %v4623, %v4751
    %v4880 = vmax.bf16 %v4624, %v4752
    %v4881 = vmax.bf16 %v4625, %v4753
    %v4882 = vmax.bf16 %v4626, %v4754
    %v4883 = vmax.bf16 %v4627, %v4755
    %v4884 = vmax.bf16 %v4628, %v4756
    %v4885 = vmax.bf16 %v4629, %v4757
    %v4886 = vmax.bf16 %v4630, %v4758
    %v4887 = vmax.bf16 %v4631, %v4759
    %v4888 = vmax.bf16 %v4632, %v4760
    %v4889 = vmax.bf16 %v4633, %v4761
    %v4890 = vmax.bf16 %v4634, %v4762
    %v4891 = vmax.bf16 %v4635, %v4763
    %v4892 = vmax.bf16 %v4636, %v4764
    %v4893 = vmax.bf16 %v4637, %v4765
    %v4894 = vmax.bf16 %v4638, %v4766
    %v4895 = vmax.bf16 %v4639, %v4767
    %v4896 = vmax.bf16 %v4640, %v4768
    %v4897 = vmax.bf16 %v4641, %v4769
    %v4898 = vmax.bf16 %v4642, %v4770
    %v4899 = vmax.bf16 %v4643, %v4771
    %v4900 = vmax.bf16 %v4644, %v4772
    %v4901 = vmax.bf16 %v4645, %v4773
    %v4902 = vmax.bf16 %v4646, %v4774
    %v4903 = vmax.bf16 %v4647, %v4775
    %v4904 = vmax.bf16 %v4648, %v4776
    %v4905 = vmax.bf16 %v4649, %v4777
    %v4906 = vmax.bf16 %v4650, %v4778
    %v4907 = vmax.bf16 %v4651, %v4779
    %v4908 = vmax.bf16 %v4652, %v4780
    %v4909 = vld [vmem:[%s6] sm:$0xf]
    %v4910 = vld [vmem:[%s6 + $0x4] sm:$0xf]
    %v4911 = vld [vmem:[%s6 + $0x8] sm:$0xf]
    %v4912 = vld [vmem:[%s6 + $0xc] sm:$0xf]
    %v4913 = vld [vmem:[%s6 + $0x10] sm:$0xf]
    %v4914 = vld [vmem:[%s6 + $0x14] sm:$0xf]
    %v4915 = vld [vmem:[%s6 + $0x18] sm:$0xf]
    %v4916 = vld [vmem:[%s6 + $0x1c] sm:$0xf]
    %v4917 = vld [vmem:[%s6 + $0x20] sm:$0xf]
    %v4918 = vld [vmem:[%s6 + $0x24] sm:$0xf]
    %v4919 = vld [vmem:[%s6 + $0x28] sm:$0xf]
    %v4920 = vld [vmem:[%s6 + $0x2c] sm:$0xf]
    %v4921 = vld [vmem:[%s6 + $0x30] sm:$0xf]
    %v4922 = vld [vmem:[%s6 + $0x34] sm:$0xf]
    %v4923 = vld [vmem:[%s6 + $0x38] sm:$0xf]
    %v4924 = vld [vmem:[%s6 + $0x3c] sm:$0xf]
    %v4941 = vunpack.c.l.b16 %v4909
    %v4942 = vunpack.c.l.b16 %v4910
    %v4943 = vunpack.c.l.b16 %v4911
    %v4944 = vunpack.c.l.b16 %v4912
    %v4945 = vunpack.c.l.b16 %v4913
    %v4946 = vunpack.c.l.b16 %v4914
    %v4947 = vunpack.c.l.b16 %v4915
    %v4948 = vunpack.c.l.b16 %v4916
    %v4949 = vunpack.c.l.b16 %v4917
    %v4950 = vunpack.c.l.b16 %v4918
    %v4951 = vunpack.c.l.b16 %v4919
    %v4952 = vunpack.c.l.b16 %v4920
    %v4953 = vunpack.c.l.b16 %v4921
    %v4954 = vunpack.c.l.b16 %v4922
    %v4955 = vunpack.c.l.b16 %v4923
    %v4956 = vunpack.c.l.b16 %v4924
    %v4957 = vpack.c.b16 %v4942, %v4941
    %v4958 = vpack.c.b16 %v4944, %v4943
    %v4959 = vpack.c.b16 %v4946, %v4945
    %v4960 = vpack.c.b16 %v4948, %v4947
    %v4961 = vpack.c.b16 %v4950, %v4949
    %v4962 = vpack.c.b16 %v4952, %v4951
    %v4963 = vpack.c.b16 %v4954, %v4953
    %v4964 = vpack.c.b16 %v4956, %v4955
    %4973 = vmatprep.subr.bf16.mxu0 0
    %4974 = vmatpush1.bf16.msra.mxu0 %v4957
    %4975 = vmatprep.subr.bf16.mxu0 0
    %4976 = vmatpush1.bf16.msra.mxu0 %v4958
    %4977 = vmatprep.subr.bf16.mxu0 0
    %4978 = vmatpush1.bf16.msra.mxu0 %v4959
    %4979 = vmatprep.subr.bf16.mxu0 0
    %4980 = vmatpush1.bf16.msra.mxu0 %v4960
    %4981 = vmatprep.subr.bf16.mxu0 0
    %4982 = vmatpush1.bf16.msra.mxu0 %v4961
    %4983 = vmatprep.subr.bf16.mxu0 0
    %4984 = vmatpush1.bf16.msra.mxu0 %v4962
    %4985 = vmatprep.subr.bf16.mxu0 0
    %4986 = vmatpush1.bf16.msra.mxu0 %v4963
    %4987 = vmatprep.subr.bf16.mxu0 0
    %4988 = vmatpush1.bf16.msra.mxu0 %v4964
    %4989 = vmatprep.subr.bf16.mxu0 0
    %4990 = vmatpush1.bf16.msra.mxu0 0
    %4991 = vmatprep.subr.bf16.mxu0 0
    %4992 = vmatpush1.bf16.msra.mxu0 0
    %4993 = vmatprep.subr.bf16.mxu0 0
    %4994 = vmatpush1.bf16.msra.mxu0 0
    %4995 = vmatprep.subr.bf16.mxu0 0
    %4996 = vmatpush1.bf16.msra.mxu0 0
    %4997 = vmatprep.subr.bf16.mxu0 0
    %4998 = vmatpush1.bf16.msra.mxu0 0
    %4999 = vmatprep.subr.bf16.mxu0 0
    %5000 = vmatpush1.bf16.msra.mxu0 0
    %5001 = vmatprep.subr.bf16.mxu0 0
    %5002 = vmatpush1.bf16.msra.mxu0 0
    %5003 = vmatprep.subr.bf16.mxu0 0
    %5004 = vmatpush1.bf16.msra.mxu0 0
    %5005 = vmatprep.mubr.bf16.mxu0 0
    %5006 = vmatmul.mubr.bf16.gmra.mrb[0].mxu0 %v4781
    %v5007 = vpop.f32.mrb[0].mxu0
    %v5008 = vadd.f32 0.0, %v5007
    %v5009 = vpop.f32.mrb[0].mxu0
    %v5010 = vpop.f32.mrb[0].mxu0
    %v5011 = vadd.f32 0.0, %v5010
    %v5012 = vpop.f32.mrb[0].mxu0
    %5013 = vmatprep.mubr.bf16.mxu0 0
    %5014 = vmatmul.mubr.bf16.gmra.mrb[0].mxu0 %v4782
    %v5015 = vpop.f32.mrb[0].mxu0
    %v5016 = vadd.f32 0.0, %v5015
    %v5017 = vpop.f32.mrb[0].mxu0
    %v5018 = vpop.f32.mrb[0].mxu0
    %v5019 = vadd.f32 0.0, %v5018
    %v5020 = vpop.f32.mrb[0].mxu0
    %5021 = vmatprep.mubr.bf16.mxu0 0
    %5022 = vmatmul.mubr.bf16.gmra.mrb[0].mxu0 %v4783
    %v5023 = vpop.f32.mrb[0].mxu0
    %v5024 = vadd.f32 0.0, %v5023
    %v5025 = vpop.f32.mrb[0].mxu0
    %v5026 = vpop.f32.mrb[0].mxu0
    %v5027 = vadd.f32 0.0, %v5026
    %v5028 = vpop.f32.mrb[0].mxu0
    %5029 = vmatprep.mubr.bf16.mxu0 0
    %5030 = vmatmul.mubr.bf16.gmra.mrb[0].mxu0 %v4784
    %v5031 = vpop.f32.mrb[0].mxu0
    %v5032 = vadd.f32 0.0, %v5031
    %v5033 = vpop.f32.mrb[0].mxu0
    %v5034 = vpop.f32.mrb[0].mxu0
    %v5035 = vadd.f32 0.0, %v5034
    %v5036 = vpop.f32.mrb[0].mxu0
    %5037 = vmatprep.mubr.bf16.mxu0 0
    %5038 = vmatmul.mubr.bf16.gmra.mrb[0].mxu0 %v4785
    %v5039 = vpop.f32.mrb[0].mxu0
    %v5040 = vadd.f32 0.0, %v5039
    %v5041 = vpop.f32.mrb[0].mxu0
    %v5042 = vpop.f32.mrb[0].mxu0
    %v5043 = vadd.f32 0.0, %v5042
    %v5044 = vpop.f32.mrb[0].mxu0
    %5045 = vmatprep.mubr.bf16.mxu0 0
    %5046 = vmatmul.mubr.bf16.gmra.mrb[0].mxu0 %v4786
    %v5047 = vpop.f32.mrb[0].mxu0
    %v5048 = vadd.f32 0.0, %v5047
    %v5049 = vpop.f32.mrb[0].mxu0
    %v5050 = vpop.f32.mrb[0].mxu0
    %v5051 = vadd.f32 0.0, %v5050
    %v5052 = vpop.f32.mrb[0].mxu0
    %5053 = vmatprep.mubr.bf16.mxu0 0
    %5054 = vmatmul.mubr.bf16.gmra.mrb[0].mxu0 %v4787
    %v5055 = vpop.f32.mrb[0].mxu0
    %v5056 = vadd.f32 0.0, %v5055
    %v5057 = vpop.f32.mrb[0].mxu0
    %v5058 = vpop.f32.mrb[0].mxu0
    %v5059 = vadd.f32 0.0, %v5058
    %v5060 = vpop.f32.mrb[0].mxu0
    %5061 = vmatprep.mubr.bf16.mxu0 0
    %5062 = vmatmul.mubr.bf16.gmra.mrb[0].mxu0 %v4788
    %v5063 = vpop.f32.mrb[0].mxu0
    %v5064 = vadd.f32 0.0, %v5063
    %v5065 = vpop.f32.mrb[0].mxu0
    %v5066 = vpop.f32.mrb[0].mxu0
    %v5067 = vadd.f32 0.0, %v5066
    %v5068 = vpop.f32.mrb[0].mxu0
    %5069 = vmatprep.mubr.bf16.mxu0 0
    %5070 = vmatmul.mubr.bf16.gmra.mrb[0].mxu0 %v4789
    %v5071 = vpop.f32.mrb[0].mxu0
    %v5072 = vadd.f32 0.0, %v5071
    %v5073 = vpop.f32.mrb[0].mxu0
    %v5074 = vpop.f32.mrb[0].mxu0
    %v5075 = vadd.f32 0.0, %v5074
    %v5076 = vpop.f32.mrb[0].mxu0
    %5077 = vmatprep.mubr.bf16.mxu0 0
    %5078 = vmatmul.mubr.bf16.gmra.mrb[0].mxu0 %v4790
    %v5079 = vpop.f32.mrb[0].mxu0
    %v5080 = vadd.f32 0.0, %v5079
    %v5081 = vpop.f32.mrb[0].mxu0
    %v5082 = vpop.f32.mrb[0].mxu0
    %v5083 = vadd.f32 0.0, %v5082
    %v5084 = vpop.f32.mrb[0].mxu0
    %5085 = vmatprep.mubr.bf16.mxu0 0
    %5086 = vmatmul.mubr.bf16.gmra.mrb[0].mxu0 %v4791
    %v5087 = vpop.f32.mrb[0].mxu0
    %v5088 = vadd.f32 0.0, %v5087
    %v5089 = vpop.f32.mrb[0].mxu0
    %v5090 = vpop.f32.mrb[0].mxu0
    %v5091 = vadd.f32 0.0, %v5090
    %v5092 = vpop.f32.mrb[0].mxu0
    %5093 = vmatprep.mubr.bf16.mxu0 0
    %5094 = vmatmul.mubr.bf16.gmra.mrb[0].mxu0 %v4792
    %v5095 = vpop.f32.mrb[0].mxu0
    %v5096 = vadd.f32 0.0, %v5095
    %v5097 = vpop.f32.mrb[0].mxu0
    %v5098 = vpop.f32.mrb[0].mxu0
    %v5099 = vadd.f32 0.0, %v5098
    %v5100 = vpop.f32.mrb[0].mxu0
    %5101 = vmatprep.mubr.bf16.mxu0 0
    %5102 = vmatmul.mubr.bf16.gmra.mrb[0].mxu0 %v4793
    %v5103 = vpop.f32.mrb[0].mxu0
    %v5104 = vadd.f32 0.0, %v5103
    %v5105 = vpop.f32.mrb[0].mxu0
    %v5106 = vpop.f32.mrb[0].mxu0
    %v5107 = vadd.f32 0.0, %v5106
    %v5108 = vpop.f32.mrb[0].mxu0
    %5109 = vmatprep.mubr.bf16.mxu0 0
    %5110 = vmatmul.mubr.bf16.gmra.mrb[0].mxu0 %v4794
    %v5111 = vpop.f32.mrb[0].mxu0
    %v5112 = vadd.f32 0.0, %v5111
    %v5113 = vpop.f32.mrb[0].mxu0
    %v5114 = vpop.f32.mrb[0].mxu0
    %v5115 = vadd.f32 0.0, %v5114
    %v5116 = vpop.f32.mrb[0].mxu0
    %5117 = vmatprep.mubr.bf16.mxu0 0
    %5118 = vmatmul.mubr.bf16.gmra.mrb[0].mxu0 %v4795
    %v5119 = vpop.f32.mrb[0].mxu0
    %v5120 = vadd.f32 0.0, %v5119
    %v5121 = vpop.f32.mrb[0].mxu0
    %v5122 = vpop.f32.mrb[0].mxu0
    %v5123 = vadd.f32 0.0, %v5122
    %v5124 = vpop.f32.mrb[0].mxu0
    %5125 = vmatprep.mubr.bf16.mxu0 0
    %5126 = vmatmul.mubr.bf16.gmra.mrb[0].mxu0 %v4796
    %v5127 = vpop.f32.mrb[0].mxu0
    %v5128 = vadd.f32 0.0, %v5127
    %v5129 = vpop.f32.mrb[0].mxu0
    %v5130 = vpop.f32.mrb[0].mxu0
    %v5131 = vadd.f32 0.0, %v5130
    %v5132 = vpop.f32.mrb[0].mxu0
    %5133 = vmatprep.mubr.bf16.mxu0 0
    %5134 = vmatmul.mubr.bf16.gmra.mrb[0].mxu0 %v4797
    %v5135 = vpop.f32.mrb[0].mxu0
    %v5136 = vadd.f32 0.0, %v5135
    %v5137 = vpop.f32.mrb[0].mxu0
    %v5138 = vpop.f32.mrb[0].mxu0
    %v5139 = vadd.f32 0.0, %v5138
    %v5140 = vpop.f32.mrb[0].mxu0
    %5141 = vmatprep.mubr.bf16.mxu0 0
    %5142 = vmatmul.mubr.bf16.gmra.mrb[0].mxu0 %v4798
    %v5143 = vpop.f32.mrb[0].mxu0
    %v5144 = vadd.f32 0.0, %v5143
    %v5145 = vpop.f32.mrb[0].mxu0
    %v5146 = vpop.f32.mrb[0].mxu0
    %v5147 = vadd.f32 0.0, %v5146
    %v5148 = vpop.f32.mrb[0].mxu0
    %5149 = vmatprep.mubr.bf16.mxu0 0
    %5150 = vmatmul.mubr.bf16.gmra.mrb[0].mxu0 %v4799
    %v5151 = vpop.f32.mrb[0].mxu0
    %v5152 = vadd.f32 0.0, %v5151
    %v5153 = vpop.f32.mrb[0].mxu0
    %v5154 = vpop.f32.mrb[0].mxu0
    %v5155 = vadd.f32 0.0, %v5154
    %v5156 = vpop.f32.mrb[0].mxu0
    %5157 = vmatprep.mubr.bf16.mxu0 0
    %5158 = vmatmul.mubr.bf16.gmra.mrb[0].mxu0 %v4800
    %v5159 = vpop.f32.mrb[0].mxu0
    %v5160 = vadd.f32 0.0, %v5159
    %v5161 = vpop.f32.mrb[0].mxu0
    %v5162 = vpop.f32.mrb[0].mxu0
    %v5163 = vadd.f32 0.0, %v5162
    %v5164 = vpop.f32.mrb[0].mxu0
    %5165 = vmatprep.mubr.bf16.mxu0 0
    %5166 = vmatmul.mubr.bf16.gmra.mrb[0].mxu0 %v4801
    %v5167 = vpop.f32.mrb[0].mxu0
    %v5168 = vadd.f32 0.0, %v5167
    %v5169 = vpop.f32.mrb[0].mxu0
    %v5170 = vpop.f32.mrb[0].mxu0
    %v5171 = vadd.f32 0.0, %v5170
    %v5172 = vpop.f32.mrb[0].mxu0
    %5173 = vmatprep.mubr.bf16.mxu0 0
    %5174 = vmatmul.mubr.bf16.gmra.mrb[0].mxu0 %v4802
    %v5175 = vpop.f32.mrb[0].mxu0
    %v5176 = vadd.f32 0.0, %v5175
    %v5177 = vpop.f32.mrb[0].mxu0
    %v5178 = vpop.f32.mrb[0].mxu0
    %v5179 = vadd.f32 0.0, %v5178
    %v5180 = vpop.f32.mrb[0].mxu0
    %5181 = vmatprep.mubr.bf16.mxu0 0
    %5182 = vmatmul.mubr.bf16.gmra.mrb[0].mxu0 %v4803
    %v5183 = vpop.f32.mrb[0].mxu0
    %v5184 = vadd.f32 0.0, %v5183
    %v5185 = vpop.f32.mrb[0].mxu0
    %v5186 = vpop.f32.mrb[0].mxu0
    %v5187 = vadd.f32 0.0, %v5186
    %v5188 = vpop.f32.mrb[0].mxu0
    %5189 = vmatprep.mubr.bf16.mxu0 0
    %5190 = vmatmul.mubr.bf16.gmra.mrb[0].mxu0 %v4804
    %v5191 = vpop.f32.mrb[0].mxu0
    %v5192 = vadd.f32 0.0, %v5191
    %v5193 = vpop.f32.mrb[0].mxu0
    %v5194 = vpop.f32.mrb[0].mxu0
    %v5195 = vadd.f32 0.0, %v5194
    %v5196 = vpop.f32.mrb[0].mxu0
    %5197 = vmatprep.mubr.bf16.mxu0 0
    %5198 = vmatmul.mubr.bf16.gmra.mrb[0].mxu0 %v4805
    %v5199 = vpop.f32.mrb[0].mxu0
    %v5200 = vadd.f32 0.0, %v5199
    %v5201 = vpop.f32.mrb[0].mxu0
    %v5202 = vpop.f32.mrb[0].mxu0
    %v5203 = vadd.f32 0.0, %v5202
    %v5204 = vpop.f32.mrb[0].mxu0
    %5205 = vmatprep.mubr.bf16.mxu0 0
    %5206 = vmatmul.mubr.bf16.gmra.mrb[0].mxu0 %v4806
    %v5207 = vpop.f32.mrb[0].mxu0
    %v5208 = vadd.f32 0.0, %v5207
    %v5209 = vpop.f32.mrb[0].mxu0
    %v5210 = vpop.f32.mrb[0].mxu0
    %v5211 = vadd.f32 0.0, %v5210
    %v5212 = vpop.f32.mrb[0].mxu0
    %5213 = vmatprep.mubr.bf16.mxu0 0
    %5214 = vmatmul.mubr.bf16.gmra.mrb[0].mxu0 %v4807
    %v5215 = vpop.f32.mrb[0].mxu0
    %v5216 = vadd.f32 0.0, %v5215
    %v5217 = vpop.f32.mrb[0].mxu0
    %v5218 = vpop.f32.mrb[0].mxu0
    %v5219 = vadd.f32 0.0, %v5218
    %v5220 = vpop.f32.mrb[0].mxu0
    %5221 = vmatprep.mubr.bf16.mxu0 0
    %5222 = vmatmul.mubr.bf16.gmra.mrb[0].mxu0 %v4808
    %v5223 = vpop.f32.mrb[0].mxu0
    %v5224 = vadd.f32 0.0, %v5223
    %v5225 = vpop.f32.mrb[0].mxu0
    %v5226 = vpop.f32.mrb[0].mxu0
    %v5227 = vadd.f32 0.0, %v5226
    %v5228 = vpop.f32.mrb[0].mxu0
    %5229 = vmatprep.mubr.bf16.mxu0 0
    %5230 = vmatmul.mubr.bf16.gmra.mrb[0].mxu0 %v4809
    %v5231 = vpop.f32.mrb[0].mxu0
    %v5232 = vadd.f32 0.0, %v5231
    %v5233 = vpop.f32.mrb[0].mxu0
    %v5234 = vpop.f32.mrb[0].mxu0
    %v5235 = vadd.f32 0.0, %v5234
    %v5236 = vpop.f32.mrb[0].mxu0
    %5237 = vmatprep.mubr.bf16.mxu0 0
    %5238 = vmatmul.mubr.bf16.gmra.mrb[0].mxu0 %v4810
    %v5239 = vpop.f32.mrb[0].mxu0
    %v5240 = vadd.f32 0.0, %v5239
    %v5241 = vpop.f32.mrb[0].mxu0
    %v5242 = vpop.f32.mrb[0].mxu0
    %v5243 = vadd.f32 0.0, %v5242
    %v5244 = vpop.f32.mrb[0].mxu0
    %5245 = vmatprep.mubr.bf16.mxu0 0
    %5246 = vmatmul.mubr.bf16.gmra.mrb[0].mxu0 %v4811
    %v5247 = vpop.f32.mrb[0].mxu0
    %v5248 = vadd.f32 0.0, %v5247
    %v5249 = vpop.f32.mrb[0].mxu0
    %v5250 = vpop.f32.mrb[0].mxu0
    %v5251 = vadd.f32 0.0, %v5250
    %v5252 = vpop.f32.mrb[0].mxu0
    %5253 = vmatprep.mubr.bf16.mxu0 0
    %5254 = vmatmul.mubr.bf16.gmra.mrb[0].mxu0 %v4812
    %v5255 = vpop.f32.mrb[0].mxu0
    %v5256 = vadd.f32 0.0, %v5255
    %v5257 = vpop.f32.mrb[0].mxu0
    %v5258 = vpop.f32.mrb[0].mxu0
    %v5259 = vadd.f32 0.0, %v5258
    %v5260 = vpop.f32.mrb[0].mxu0
    %5261 = vmatprep.mubr.bf16.mxu0 0
    %5262 = vmatmul.mubr.bf16.gmra.mrb[0].mxu0 %v4813
    %v5263 = vpop.f32.mrb[0].mxu0
    %v5264 = vadd.f32 0.0, %v5263
    %v5265 = vpop.f32.mrb[0].mxu0
    %v5266 = vpop.f32.mrb[0].mxu0
    %v5267 = vadd.f32 0.0, %v5266
    %v5268 = vpop.f32.mrb[0].mxu0
    %5269 = vmatprep.mubr.bf16.mxu0 0
    %5270 = vmatmul.mubr.bf16.gmra.mrb[0].mxu0 %v4814
    %v5271 = vpop.f32.mrb[0].mxu0
    %v5272 = vadd.f32 0.0, %v5271
    %v5273 = vpop.f32.mrb[0].mxu0
    %v5274 = vpop.f32.mrb[0].mxu0
    %v5275 = vadd.f32 0.0, %v5274
    %v5276 = vpop.f32.mrb[0].mxu0
    %5277 = vmatprep.mubr.bf16.mxu0 0
    %5278 = vmatmul.mubr.bf16.gmra.mrb[0].mxu0 %v4815
    %v5279 = vpop.f32.mrb[0].mxu0
    %v5280 = vadd.f32 0.0, %v5279
    %v5281 = vpop.f32.mrb[0].mxu0
    %v5282 = vpop.f32.mrb[0].mxu0
    %v5283 = vadd.f32 0.0, %v5282
    %v5284 = vpop.f32.mrb[0].mxu0
    %5285 = vmatprep.mubr.bf16.mxu0 0
    %5286 = vmatmul.mubr.bf16.gmra.mrb[0].mxu0 %v4816
    %v5287 = vpop.f32.mrb[0].mxu0
    %v5288 = vadd.f32 0.0, %v5287
    %v5289 = vpop.f32.mrb[0].mxu0
    %v5290 = vpop.f32.mrb[0].mxu0
    %v5291 = vadd.f32 0.0, %v5290
    %v5292 = vpop.f32.mrb[0].mxu0
    %5293 = vmatprep.mubr.bf16.mxu0 0
    %5294 = vmatmul.mubr.bf16.gmra.mrb[0].mxu0 %v4817
    %v5295 = vpop.f32.mrb[0].mxu0
    %v5296 = vadd.f32 0.0, %v5295
    %v5297 = vpop.f32.mrb[0].mxu0
    %v5298 = vpop.f32.mrb[0].mxu0
    %v5299 = vadd.f32 0.0, %v5298
    %v5300 = vpop.f32.mrb[0].mxu0
    %5301 = vmatprep.mubr.bf16.mxu0 0
    %5302 = vmatmul.mubr.bf16.gmra.mrb[0].mxu0 %v4818
    %v5303 = vpop.f32.mrb[0].mxu0
    %v5304 = vadd.f32 0.0, %v5303
    %v5305 = vpop.f32.mrb[0].mxu0
    %v5306 = vpop.f32.mrb[0].mxu0
    %v5307 = vadd.f32 0.0, %v5306
    %v5308 = vpop.f32.mrb[0].mxu0
    %5309 = vmatprep.mubr.bf16.mxu0 0
    %5310 = vmatmul.mubr.bf16.gmra.mrb[0].mxu0 %v4819
    %v5311 = vpop.f32.mrb[0].mxu0
    %v5312 = vadd.f32 0.0, %v5311
    %v5313 = vpop.f32.mrb[0].mxu0
    %v5314 = vpop.f32.mrb[0].mxu0
    %v5315 = vadd.f32 0.0, %v5314
    %v5316 = vpop.f32.mrb[0].mxu0
    %5317 = vmatprep.mubr.bf16.mxu0 0
    %5318 = vmatmul.mubr.bf16.gmra.mrb[0].mxu0 %v4820
    %v5319 = vpop.f32.mrb[0].mxu0
    %v5320 = vadd.f32 0.0, %v5319
    %v5321 = vpop.f32.mrb[0].mxu0
    %v5322 = vpop.f32.mrb[0].mxu0
    %v5323 = vadd.f32 0.0, %v5322
    %v5324 = vpop.f32.mrb[0].mxu0
    %5325 = vmatprep.mubr.bf16.mxu0 0
    %5326 = vmatmul.mubr.bf16.gmra.mrb[0].mxu0 %v4821
    %v5327 = vpop.f32.mrb[0].mxu0
    %v5328 = vadd.f32 0.0, %v5327
    %v5329 = vpop.f32.mrb[0].mxu0
    %v5330 = vpop.f32.mrb[0].mxu0
    %v5331 = vadd.f32 0.0, %v5330
    %v5332 = vpop.f32.mrb[0].mxu0
    %5333 = vmatprep.mubr.bf16.mxu0 0
    %5334 = vmatmul.mubr.bf16.gmra.mrb[0].mxu0 %v4822
    %v5335 = vpop.f32.mrb[0].mxu0
    %v5336 = vadd.f32 0.0, %v5335
    %v5337 = vpop.f32.mrb[0].mxu0
    %v5338 = vpop.f32.mrb[0].mxu0
    %v5339 = vadd.f32 0.0, %v5338
    %v5340 = vpop.f32.mrb[0].mxu0
    %5341 = vmatprep.mubr.bf16.mxu0 0
    %5342 = vmatmul.mubr.bf16.gmra.mrb[0].mxu0 %v4823
    %v5343 = vpop.f32.mrb[0].mxu0
    %v5344 = vadd.f32 0.0, %v5343
    %v5345 = vpop.f32.mrb[0].mxu0
    %v5346 = vpop.f32.mrb[0].mxu0
    %v5347 = vadd.f32 0.0, %v5346
    %v5348 = vpop.f32.mrb[0].mxu0
    %5349 = vmatprep.mubr.bf16.mxu0 0
    %5350 = vmatmul.mubr.bf16.gmra.mrb[0].mxu0 %v4824
    %v5351 = vpop.f32.mrb[0].mxu0
    %v5352 = vadd.f32 0.0, %v5351
    %v5353 = vpop.f32.mrb[0].mxu0
    %v5354 = vpop.f32.mrb[0].mxu0
    %v5355 = vadd.f32 0.0, %v5354
    %v5356 = vpop.f32.mrb[0].mxu0
    %5357 = vmatprep.mubr.bf16.mxu0 0
    %5358 = vmatmul.mubr.bf16.gmra.mrb[0].mxu0 %v4825
    %v5359 = vpop.f32.mrb[0].mxu0
    %v5360 = vadd.f32 0.0, %v5359
    %v5361 = vpop.f32.mrb[0].mxu0
    %v5362 = vpop.f32.mrb[0].mxu0
    %v5363 = vadd.f32 0.0, %v5362
    %v5364 = vpop.f32.mrb[0].mxu0
    %5365 = vmatprep.mubr.bf16.mxu0 0
    %5366 = vmatmul.mubr.bf16.gmra.mrb[0].mxu0 %v4826
    %v5367 = vpop.f32.mrb[0].mxu0
    %v5368 = vadd.f32 0.0, %v5367
    %v5369 = vpop.f32.mrb[0].mxu0
    %v5370 = vpop.f32.mrb[0].mxu0
    %v5371 = vadd.f32 0.0, %v5370
    %v5372 = vpop.f32.mrb[0].mxu0
    %5373 = vmatprep.mubr.bf16.mxu0 0
    %5374 = vmatmul.mubr.bf16.gmra.mrb[0].mxu0 %v4827
    %v5375 = vpop.f32.mrb[0].mxu0
    %v5376 = vadd.f32 0.0, %v5375
    %v5377 = vpop.f32.mrb[0].mxu0
    %v5378 = vpop.f32.mrb[0].mxu0
    %v5379 = vadd.f32 0.0, %v5378
    %v5380 = vpop.f32.mrb[0].mxu0
    %5381 = vmatprep.mubr.bf16.mxu0 0
    %5382 = vmatmul.mubr.bf16.gmra.mrb[0].mxu0 %v4828
    %v5383 = vpop.f32.mrb[0].mxu0
    %v5384 = vadd.f32 0.0, %v5383
    %v5385 = vpop.f32.mrb[0].mxu0
    %v5386 = vpop.f32.mrb[0].mxu0
    %v5387 = vadd.f32 0.0, %v5386
    %v5388 = vpop.f32.mrb[0].mxu0
    %5389 = vmatprep.mubr.bf16.mxu0 0
    %5390 = vmatmul.mubr.bf16.gmra.mrb[0].mxu0 %v4829
    %v5391 = vpop.f32.mrb[0].mxu0
    %v5392 = vadd.f32 0.0, %v5391
    %v5393 = vpop.f32.mrb[0].mxu0
    %v5394 = vpop.f32.mrb[0].mxu0
    %v5395 = vadd.f32 0.0, %v5394
    %v5396 = vpop.f32.mrb[0].mxu0
    %5397 = vmatprep.mubr.bf16.mxu0 0
    %5398 = vmatmul.mubr.bf16.gmra.mrb[0].mxu0 %v4830
    %v5399 = vpop.f32.mrb[0].mxu0
    %v5400 = vadd.f32 0.0, %v5399
    %v5401 = vpop.f32.mrb[0].mxu0
    %v5402 = vpop.f32.mrb[0].mxu0
    %v5403 = vadd.f32 0.0, %v5402
    %v5404 = vpop.f32.mrb[0].mxu0
    %5405 = vmatprep.mubr.bf16.mxu0 0
    %5406 = vmatmul.mubr.bf16.gmra.mrb[0].mxu0 %v4831
    %v5407 = vpop.f32.mrb[0].mxu0
    %v5408 = vadd.f32 0.0, %v5407
    %v5409 = vpop.f32.mrb[0].mxu0
    %v5410 = vpop.f32.mrb[0].mxu0
    %v5411 = vadd.f32 0.0, %v5410
    %v5412 = vpop.f32.mrb[0].mxu0
    %5413 = vmatprep.mubr.bf16.mxu0 0
    %5414 = vmatmul.mubr.bf16.gmra.mrb[0].mxu0 %v4832
    %v5415 = vpop.f32.mrb[0].mxu0
    %v5416 = vadd.f32 0.0, %v5415
    %v5417 = vpop.f32.mrb[0].mxu0
    %v5418 = vpop.f32.mrb[0].mxu0
    %v5419 = vadd.f32 0.0, %v5418
    %v5420 = vpop.f32.mrb[0].mxu0
    %5421 = vmatprep.mubr.bf16.mxu0 0
    %5422 = vmatmul.mubr.bf16.gmra.mrb[0].mxu0 %v4833
    %v5423 = vpop.f32.mrb[0].mxu0
    %v5424 = vadd.f32 0.0, %v5423
    %v5425 = vpop.f32.mrb[0].mxu0
    %v5426 = vpop.f32.mrb[0].mxu0
    %v5427 = vadd.f32 0.0, %v5426
    %v5428 = vpop.f32.mrb[0].mxu0
    %5429 = vmatprep.mubr.bf16.mxu0 0
    %5430 = vmatmul.mubr.bf16.gmra.mrb[0].mxu0 %v4834
    %v5431 = vpop.f32.mrb[0].mxu0
    %v5432 = vadd.f32 0.0, %v5431
    %v5433 = vpop.f32.mrb[0].mxu0
    %v5434 = vpop.f32.mrb[0].mxu0
    %v5435 = vadd.f32 0.0, %v5434
    %v5436 = vpop.f32.mrb[0].mxu0
    %5437 = vmatprep.mubr.bf16.mxu0 0
    %5438 = vmatmul.mubr.bf16.gmra.mrb[0].mxu0 %v4835
    %v5439 = vpop.f32.mrb[0].mxu0
    %v5440 = vadd.f32 0.0, %v5439
    %v5441 = vpop.f32.mrb[0].mxu0
    %v5442 = vpop.f32.mrb[0].mxu0
    %v5443 = vadd.f32 0.0, %v5442
    %v5444 = vpop.f32.mrb[0].mxu0
    %5445 = vmatprep.mubr.bf16.mxu0 0
    %5446 = vmatmul.mubr.bf16.gmra.mrb[0].mxu0 %v4836
    %v5447 = vpop.f32.mrb[0].mxu0
    %v5448 = vadd.f32 0.0, %v5447
    %v5449 = vpop.f32.mrb[0].mxu0
    %v5450 = vpop.f32.mrb[0].mxu0
    %v5451 = vadd.f32 0.0, %v5450
    %v5452 = vpop.f32.mrb[0].mxu0
    %5453 = vmatprep.mubr.bf16.mxu0 0
    %5454 = vmatmul.mubr.bf16.gmra.mrb[0].mxu0 %v4837
    %v5455 = vpop.f32.mrb[0].mxu0
    %v5456 = vadd.f32 0.0, %v5455
    %v5457 = vpop.f32.mrb[0].mxu0
    %v5458 = vpop.f32.mrb[0].mxu0
    %v5459 = vadd.f32 0.0, %v5458
    %v5460 = vpop.f32.mrb[0].mxu0
    %5461 = vmatprep.mubr.bf16.mxu0 0
    %5462 = vmatmul.mubr.bf16.gmra.mrb[0].mxu0 %v4838
    %v5463 = vpop.f32.mrb[0].mxu0
    %v5464 = vadd.f32 0.0, %v5463
    %v5465 = vpop.f32.mrb[0].mxu0
    %v5466 = vpop.f32.mrb[0].mxu0
    %v5467 = vadd.f32 0.0, %v5466
    %v5468 = vpop.f32.mrb[0].mxu0
    %5469 = vmatprep.mubr.bf16.mxu0 0
    %5470 = vmatmul.mubr.bf16.gmra.mrb[0].mxu0 %v4839
    %v5471 = vpop.f32.mrb[0].mxu0
    %v5472 = vadd.f32 0.0, %v5471
    %v5473 = vpop.f32.mrb[0].mxu0
    %v5474 = vpop.f32.mrb[0].mxu0
    %v5475 = vadd.f32 0.0, %v5474
    %v5476 = vpop.f32.mrb[0].mxu0
    %5477 = vmatprep.mubr.bf16.mxu0 0
    %5478 = vmatmul.mubr.bf16.gmra.mrb[0].mxu0 %v4840
    %v5479 = vpop.f32.mrb[0].mxu0
    %v5480 = vadd.f32 0.0, %v5479
    %v5481 = vpop.f32.mrb[0].mxu0
    %v5482 = vpop.f32.mrb[0].mxu0
    %v5483 = vadd.f32 0.0, %v5482
    %v5484 = vpop.f32.mrb[0].mxu0
    %5485 = vmatprep.mubr.bf16.mxu0 0
    %5486 = vmatmul.mubr.bf16.gmra.mrb[0].mxu0 %v4841
    %v5487 = vpop.f32.mrb[0].mxu0
    %v5488 = vadd.f32 0.0, %v5487
    %v5489 = vpop.f32.mrb[0].mxu0
    %v5490 = vpop.f32.mrb[0].mxu0
    %v5491 = vadd.f32 0.0, %v5490
    %v5492 = vpop.f32.mrb[0].mxu0
    %5493 = vmatprep.mubr.bf16.mxu0 0
    %5494 = vmatmul.mubr.bf16.gmra.mrb[0].mxu0 %v4842
    %v5495 = vpop.f32.mrb[0].mxu0
    %v5496 = vadd.f32 0.0, %v5495
    %v5497 = vpop.f32.mrb[0].mxu0
    %v5498 = vpop.f32.mrb[0].mxu0
    %v5499 = vadd.f32 0.0, %v5498
    %v5500 = vpop.f32.mrb[0].mxu0
    %5501 = vmatprep.mubr.bf16.mxu0 0
    %5502 = vmatmul.mubr.bf16.gmra.mrb[0].mxu0 %v4843
    %v5503 = vpop.f32.mrb[0].mxu0
    %v5504 = vadd.f32 0.0, %v5503
    %v5505 = vpop.f32.mrb[0].mxu0
    %v5506 = vpop.f32.mrb[0].mxu0
    %v5507 = vadd.f32 0.0, %v5506
    %v5508 = vpop.f32.mrb[0].mxu0
    %5509 = vmatprep.mubr.bf16.mxu0 0
    %5510 = vmatmul.mubr.bf16.gmra.mrb[0].mxu0 %v4844
    %v5511 = vpop.f32.mrb[0].mxu0
    %v5512 = vadd.f32 0.0, %v5511
    %v5513 = vpop.f32.mrb[0].mxu0
    %v5514 = vpop.f32.mrb[0].mxu0
    %v5515 = vadd.f32 0.0, %v5514
    %v5516 = vpop.f32.mrb[0].mxu0
    %5517 = vmatprep.mubr.bf16.mxu0 0
    %5518 = vmatmul.mubr.bf16.gmra.mrb[0].mxu0 %v4845
    %v5519 = vpop.f32.mrb[0].mxu0
    %v5520 = vadd.f32 0.0, %v5519
    %v5521 = vpop.f32.mrb[0].mxu0
    %v5522 = vpop.f32.mrb[0].mxu0
    %v5523 = vadd.f32 0.0, %v5522
    %v5524 = vpop.f32.mrb[0].mxu0
    %5525 = vmatprep.mubr.bf16.mxu0 0
    %5526 = vmatmul.mubr.bf16.gmra.mrb[0].mxu0 %v4846
    %v5527 = vpop.f32.mrb[0].mxu0
    %v5528 = vadd.f32 0.0, %v5527
    %v5529 = vpop.f32.mrb[0].mxu0
    %v5530 = vpop.f32.mrb[0].mxu0
    %v5531 = vadd.f32 0.0, %v5530
    %v5532 = vpop.f32.mrb[0].mxu0
    %5533 = vmatprep.mubr.bf16.mxu0 0
    %5534 = vmatmul.mubr.bf16.gmra.mrb[0].mxu0 %v4847
    %v5535 = vpop.f32.mrb[0].mxu0
    %v5536 = vadd.f32 0.0, %v5535
    %v5537 = vpop.f32.mrb[0].mxu0
    %v5538 = vpop.f32.mrb[0].mxu0
    %v5539 = vadd.f32 0.0, %v5538
    %v5540 = vpop.f32.mrb[0].mxu0
    %5541 = vmatprep.mubr.bf16.mxu0 0
    %5542 = vmatmul.mubr.bf16.gmra.mrb[0].mxu0 %v4848
    %v5543 = vpop.f32.mrb[0].mxu0
    %v5544 = vadd.f32 0.0, %v5543
    %v5545 = vpop.f32.mrb[0].mxu0
    %v5546 = vpop.f32.mrb[0].mxu0
    %v5547 = vadd.f32 0.0, %v5546
    %v5548 = vpop.f32.mrb[0].mxu0
    %5549 = vmatprep.mubr.bf16.mxu0 0
    %5550 = vmatmul.mubr.bf16.gmra.mrb[0].mxu0 %v4849
    %v5551 = vpop.f32.mrb[0].mxu0
    %v5552 = vadd.f32 0.0, %v5551
    %v5553 = vpop.f32.mrb[0].mxu0
    %v5554 = vpop.f32.mrb[0].mxu0
    %v5555 = vadd.f32 0.0, %v5554
    %v5556 = vpop.f32.mrb[0].mxu0
    %5557 = vmatprep.mubr.bf16.mxu0 0
    %5558 = vmatmul.mubr.bf16.gmra.mrb[0].mxu0 %v4850
    %v5559 = vpop.f32.mrb[0].mxu0
    %v5560 = vadd.f32 0.0, %v5559
    %v5561 = vpop.f32.mrb[0].mxu0
    %v5562 = vpop.f32.mrb[0].mxu0
    %v5563 = vadd.f32 0.0, %v5562
    %v5564 = vpop.f32.mrb[0].mxu0
    %5565 = vmatprep.mubr.bf16.mxu0 0
    %5566 = vmatmul.mubr.bf16.gmra.mrb[0].mxu0 %v4851
    %v5567 = vpop.f32.mrb[0].mxu0
    %v5568 = vadd.f32 0.0, %v5567
    %v5569 = vpop.f32.mrb[0].mxu0
    %v5570 = vpop.f32.mrb[0].mxu0
    %v5571 = vadd.f32 0.0, %v5570
    %v5572 = vpop.f32.mrb[0].mxu0
    %5573 = vmatprep.mubr.bf16.mxu0 0
    %5574 = vmatmul.mubr.bf16.gmra.mrb[0].mxu0 %v4852
    %v5575 = vpop.f32.mrb[0].mxu0
    %v5576 = vadd.f32 0.0, %v5575
    %v5577 = vpop.f32.mrb[0].mxu0
    %v5578 = vpop.f32.mrb[0].mxu0
    %v5579 = vadd.f32 0.0, %v5578
    %v5580 = vpop.f32.mrb[0].mxu0
    %5581 = vmatprep.mubr.bf16.mxu0 0
    %5582 = vmatmul.mubr.bf16.gmra.mrb[0].mxu0 %v4853
    %v5583 = vpop.f32.mrb[0].mxu0
    %v5584 = vadd.f32 0.0, %v5583
    %v5585 = vpop.f32.mrb[0].mxu0
    %v5586 = vpop.f32.mrb[0].mxu0
    %v5587 = vadd.f32 0.0, %v5586
    %v5588 = vpop.f32.mrb[0].mxu0
    %5589 = vmatprep.mubr.bf16.mxu0 0
    %5590 = vmatmul.mubr.bf16.gmra.mrb[0].mxu0 %v4854
    %v5591 = vpop.f32.mrb[0].mxu0
    %v5592 = vadd.f32 0.0, %v5591
    %v5593 = vpop.f32.mrb[0].mxu0
    %v5594 = vpop.f32.mrb[0].mxu0
    %v5595 = vadd.f32 0.0, %v5594
    %v5596 = vpop.f32.mrb[0].mxu0
    %5597 = vmatprep.mubr.bf16.mxu0 0
    %5598 = vmatmul.mubr.bf16.gmra.mrb[0].mxu0 %v4855
    %v5599 = vpop.f32.mrb[0].mxu0
    %v5600 = vadd.f32 0.0, %v5599
    %v5601 = vpop.f32.mrb[0].mxu0
    %v5602 = vpop.f32.mrb[0].mxu0
    %v5603 = vadd.f32 0.0, %v5602
    %v5604 = vpop.f32.mrb[0].mxu0
    %5605 = vmatprep.mubr.bf16.mxu0 0
    %5606 = vmatmul.mubr.bf16.gmra.mrb[0].mxu0 %v4856
    %v5607 = vpop.f32.mrb[0].mxu0
    %v5608 = vadd.f32 0.0, %v5607
    %v5609 = vpop.f32.mrb[0].mxu0
    %v5610 = vpop.f32.mrb[0].mxu0
    %v5611 = vadd.f32 0.0, %v5610
    %v5612 = vpop.f32.mrb[0].mxu0
    %5613 = vmatprep.mubr.bf16.mxu0 0
    %5614 = vmatmul.mubr.bf16.gmra.mrb[0].mxu0 %v4857
    %v5615 = vpop.f32.mrb[0].mxu0
    %v5616 = vadd.f32 0.0, %v5615
    %v5617 = vpop.f32.mrb[0].mxu0
    %v5618 = vpop.f32.mrb[0].mxu0
    %v5619 = vadd.f32 0.0, %v5618
    %v5620 = vpop.f32.mrb[0].mxu0
    %5621 = vmatprep.mubr.bf16.mxu0 0
    %5622 = vmatmul.mubr.bf16.gmra.mrb[0].mxu0 %v4858
    %v5623 = vpop.f32.mrb[0].mxu0
    %v5624 = vadd.f32 0.0, %v5623
    %v5625 = vpop.f32.mrb[0].mxu0
    %v5626 = vpop.f32.mrb[0].mxu0
    %v5627 = vadd.f32 0.0, %v5626
    %v5628 = vpop.f32.mrb[0].mxu0
    %5629 = vmatprep.mubr.bf16.mxu0 0
    %5630 = vmatmul.mubr.bf16.gmra.mrb[0].mxu0 %v4859
    %v5631 = vpop.f32.mrb[0].mxu0
    %v5632 = vadd.f32 0.0, %v5631
    %v5633 = vpop.f32.mrb[0].mxu0
    %v5634 = vpop.f32.mrb[0].mxu0
    %v5635 = vadd.f32 0.0, %v5634
    %v5636 = vpop.f32.mrb[0].mxu0
    %5637 = vmatprep.mubr.bf16.mxu0 0
    %5638 = vmatmul.mubr.bf16.gmra.mrb[0].mxu0 %v4860
    %v5639 = vpop.f32.mrb[0].mxu0
    %v5640 = vadd.f32 0.0, %v5639
    %v5641 = vpop.f32.mrb[0].mxu0
    %v5642 = vpop.f32.mrb[0].mxu0
    %v5643 = vadd.f32 0.0, %v5642
    %v5644 = vpop.f32.mrb[0].mxu0
    %5645 = vmatprep.mubr.bf16.mxu0 0
    %5646 = vmatmul.mubr.bf16.gmra.mrb[0].mxu0 %v4861
    %v5647 = vpop.f32.mrb[0].mxu0
    %v5648 = vadd.f32 0.0, %v5647
    %v5649 = vpop.f32.mrb[0].mxu0
    %v5650 = vpop.f32.mrb[0].mxu0
    %v5651 = vadd.f32 0.0, %v5650
    %v5652 = vpop.f32.mrb[0].mxu0
    %5653 = vmatprep.mubr.bf16.mxu0 0
    %5654 = vmatmul.mubr.bf16.gmra.mrb[0].mxu0 %v4862
    %v5655 = vpop.f32.mrb[0].mxu0
    %v5656 = vadd.f32 0.0, %v5655
    %v5657 = vpop.f32.mrb[0].mxu0
    %v5658 = vpop.f32.mrb[0].mxu0
    %v5659 = vadd.f32 0.0, %v5658
    %v5660 = vpop.f32.mrb[0].mxu0
    %5661 = vmatprep.mubr.bf16.mxu0 0
    %5662 = vmatmul.mubr.bf16.gmra.mrb[0].mxu0 %v4863
    %v5663 = vpop.f32.mrb[0].mxu0
    %v5664 = vadd.f32 0.0, %v5663
    %v5665 = vpop.f32.mrb[0].mxu0
    %v5666 = vpop.f32.mrb[0].mxu0
    %v5667 = vadd.f32 0.0, %v5666
    %v5668 = vpop.f32.mrb[0].mxu0
    %5669 = vmatprep.mubr.bf16.mxu0 0
    %5670 = vmatmul.mubr.bf16.gmra.mrb[0].mxu0 %v4864
    %v5671 = vpop.f32.mrb[0].mxu0
    %v5672 = vadd.f32 0.0, %v5671
    %v5673 = vpop.f32.mrb[0].mxu0
    %v5674 = vpop.f32.mrb[0].mxu0
    %v5675 = vadd.f32 0.0, %v5674
    %v5676 = vpop.f32.mrb[0].mxu0
    %5677 = vmatprep.mubr.bf16.mxu0 0
    %5678 = vmatmul.mubr.bf16.gmra.mrb[0].mxu0 %v4865
    %v5679 = vpop.f32.mrb[0].mxu0
    %v5680 = vadd.f32 0.0, %v5679
    %v5681 = vpop.f32.mrb[0].mxu0
    %v5682 = vpop.f32.mrb[0].mxu0
    %v5683 = vadd.f32 0.0, %v5682
    %v5684 = vpop.f32.mrb[0].mxu0
    %5685 = vmatprep.mubr.bf16.mxu0 0
    %5686 = vmatmul.mubr.bf16.gmra.mrb[0].mxu0 %v4866
    %v5687 = vpop.f32.mrb[0].mxu0
    %v5688 = vadd.f32 0.0, %v5687
    %v5689 = vpop.f32.mrb[0].mxu0
    %v5690 = vpop.f32.mrb[0].mxu0
    %v5691 = vadd.f32 0.0, %v5690
    %v5692 = vpop.f32.mrb[0].mxu0
    %5693 = vmatprep.mubr.bf16.mxu0 0
    %5694 = vmatmul.mubr.bf16.gmra.mrb[0].mxu0 %v4867
    %v5695 = vpop.f32.mrb[0].mxu0
    %v5696 = vadd.f32 0.0, %v5695
    %v5697 = vpop.f32.mrb[0].mxu0
    %v5698 = vpop.f32.mrb[0].mxu0
    %v5699 = vadd.f32 0.0, %v5698
    %v5700 = vpop.f32.mrb[0].mxu0
    %5701 = vmatprep.mubr.bf16.mxu0 0
    %5702 = vmatmul.mubr.bf16.gmra.mrb[0].mxu0 %v4868
    %v5703 = vpop.f32.mrb[0].mxu0
    %v5704 = vadd.f32 0.0, %v5703
    %v5705 = vpop.f32.mrb[0].mxu0
    %v5706 = vpop.f32.mrb[0].mxu0
    %v5707 = vadd.f32 0.0, %v5706
    %v5708 = vpop.f32.mrb[0].mxu0
    %5709 = vmatprep.mubr.bf16.mxu0 0
    %5710 = vmatmul.mubr.bf16.gmra.mrb[0].mxu0 %v4869
    %v5711 = vpop.f32.mrb[0].mxu0
    %v5712 = vadd.f32 0.0, %v5711
    %v5713 = vpop.f32.mrb[0].mxu0
    %v5714 = vpop.f32.mrb[0].mxu0
    %v5715 = vadd.f32 0.0, %v5714
    %v5716 = vpop.f32.mrb[0].mxu0
    %5717 = vmatprep.mubr.bf16.mxu0 0
    %5718 = vmatmul.mubr.bf16.gmra.mrb[0].mxu0 %v4870
    %v5719 = vpop.f32.mrb[0].mxu0
    %v5720 = vadd.f32 0.0, %v5719
    %v5721 = vpop.f32.mrb[0].mxu0
    %v5722 = vpop.f32.mrb[0].mxu0
    %v5723 = vadd.f32 0.0, %v5722
    %v5724 = vpop.f32.mrb[0].mxu0
    %5725 = vmatprep.mubr.bf16.mxu0 0
    %5726 = vmatmul.mubr.bf16.gmra.mrb[0].mxu0 %v4871
    %v5727 = vpop.f32.mrb[0].mxu0
    %v5728 = vadd.f32 0.0, %v5727
    %v5729 = vpop.f32.mrb[0].mxu0
    %v5730 = vpop.f32.mrb[0].mxu0
    %v5731 = vadd.f32 0.0, %v5730
    %v5732 = vpop.f32.mrb[0].mxu0
    %5733 = vmatprep.mubr.bf16.mxu0 0
    %5734 = vmatmul.mubr.bf16.gmra.mrb[0].mxu0 %v4872
    %v5735 = vpop.f32.mrb[0].mxu0
    %v5736 = vadd.f32 0.0, %v5735
    %v5737 = vpop.f32.mrb[0].mxu0
    %v5738 = vpop.f32.mrb[0].mxu0
    %v5739 = vadd.f32 0.0, %v5738
    %v5740 = vpop.f32.mrb[0].mxu0
    %5741 = vmatprep.mubr.bf16.mxu0 0
    %5742 = vmatmul.mubr.bf16.gmra.mrb[0].mxu0 %v4873
    %v5743 = vpop.f32.mrb[0].mxu0
    %v5744 = vadd.f32 0.0, %v5743
    %v5745 = vpop.f32.mrb[0].mxu0
    %v5746 = vpop.f32.mrb[0].mxu0
    %v5747 = vadd.f32 0.0, %v5746
    %v5748 = vpop.f32.mrb[0].mxu0
    %5749 = vmatprep.mubr.bf16.mxu0 0
    %5750 = vmatmul.mubr.bf16.gmra.mrb[0].mxu0 %v4874
    %v5751 = vpop.f32.mrb[0].mxu0
    %v5752 = vadd.f32 0.0, %v5751
    %v5753 = vpop.f32.mrb[0].mxu0
    %v5754 = vpop.f32.mrb[0].mxu0
    %v5755 = vadd.f32 0.0, %v5754
    %v5756 = vpop.f32.mrb[0].mxu0
    %5757 = vmatprep.mubr.bf16.mxu0 0
    %5758 = vmatmul.mubr.bf16.gmra.mrb[0].mxu0 %v4875
    %v5759 = vpop.f32.mrb[0].mxu0
    %v5760 = vadd.f32 0.0, %v5759
    %v5761 = vpop.f32.mrb[0].mxu0
    %v5762 = vpop.f32.mrb[0].mxu0
    %v5763 = vadd.f32 0.0, %v5762
    %v5764 = vpop.f32.mrb[0].mxu0
    %5765 = vmatprep.mubr.bf16.mxu0 0
    %5766 = vmatmul.mubr.bf16.gmra.mrb[0].mxu0 %v4876
    %v5767 = vpop.f32.mrb[0].mxu0
    %v5768 = vadd.f32 0.0, %v5767
    %v5769 = vpop.f32.mrb[0].mxu0
    %v5770 = vpop.f32.mrb[0].mxu0
    %v5771 = vadd.f32 0.0, %v5770
    %v5772 = vpop.f32.mrb[0].mxu0
    %5773 = vmatprep.mubr.bf16.mxu0 0
    %5774 = vmatmul.mubr.bf16.gmra.mrb[0].mxu0 %v4877
    %v5775 = vpop.f32.mrb[0].mxu0
    %v5776 = vadd.f32 0.0, %v5775
    %v5777 = vpop.f32.mrb[0].mxu0
    %v5778 = vpop.f32.mrb[0].mxu0
    %v5779 = vadd.f32 0.0, %v5778
    %v5780 = vpop.f32.mrb[0].mxu0
    %5781 = vmatprep.mubr.bf16.mxu0 0
    %5782 = vmatmul.mubr.bf16.gmra.mrb[0].mxu0 %v4878
    %v5783 = vpop.f32.mrb[0].mxu0
    %v5784 = vadd.f32 0.0, %v5783
    %v5785 = vpop.f32.mrb[0].mxu0
    %v5786 = vpop.f32.mrb[0].mxu0
    %v5787 = vadd.f32 0.0, %v5786
    %v5788 = vpop.f32.mrb[0].mxu0
    %5789 = vmatprep.mubr.bf16.mxu0 0
    %5790 = vmatmul.mubr.bf16.gmra.mrb[0].mxu0 %v4879
    %v5791 = vpop.f32.mrb[0].mxu0
    %v5792 = vadd.f32 0.0, %v5791
    %v5793 = vpop.f32.mrb[0].mxu0
    %v5794 = vpop.f32.mrb[0].mxu0
    %v5795 = vadd.f32 0.0, %v5794
    %v5796 = vpop.f32.mrb[0].mxu0
    %5797 = vmatprep.mubr.bf16.mxu0 0
    %5798 = vmatmul.mubr.bf16.gmra.mrb[0].mxu0 %v4880
    %v5799 = vpop.f32.mrb[0].mxu0
    %v5800 = vadd.f32 0.0, %v5799
    %v5801 = vpop.f32.mrb[0].mxu0
    %v5802 = vpop.f32.mrb[0].mxu0
    %v5803 = vadd.f32 0.0, %v5802
    %v5804 = vpop.f32.mrb[0].mxu0
    %5805 = vmatprep.mubr.bf16.mxu0 0
    %5806 = vmatmul.mubr.bf16.gmra.mrb[0].mxu0 %v4881
    %v5807 = vpop.f32.mrb[0].mxu0
    %v5808 = vadd.f32 0.0, %v5807
    %v5809 = vpop.f32.mrb[0].mxu0
    %v5810 = vpop.f32.mrb[0].mxu0
    %v5811 = vadd.f32 0.0, %v5810
    %v5812 = vpop.f32.mrb[0].mxu0
    %5813 = vmatprep.mubr.bf16.mxu0 0
    %5814 = vmatmul.mubr.bf16.gmra.mrb[0].mxu0 %v4882
    %v5815 = vpop.f32.mrb[0].mxu0
    %v5816 = vadd.f32 0.0, %v5815
    %v5817 = vpop.f32.mrb[0].mxu0
    %v5818 = vpop.f32.mrb[0].mxu0
    %v5819 = vadd.f32 0.0, %v5818
    %v5820 = vpop.f32.mrb[0].mxu0
    %5821 = vmatprep.mubr.bf16.mxu0 0
    %5822 = vmatmul.mubr.bf16.gmra.mrb[0].mxu0 %v4883
    %v5823 = vpop.f32.mrb[0].mxu0
    %v5824 = vadd.f32 0.0, %v5823
    %v5825 = vpop.f32.mrb[0].mxu0
    %v5826 = vpop.f32.mrb[0].mxu0
    %v5827 = vadd.f32 0.0, %v5826
    %v5828 = vpop.f32.mrb[0].mxu0
    %5829 = vmatprep.mubr.bf16.mxu0 0
    %5830 = vmatmul.mubr.bf16.gmra.mrb[0].mxu0 %v4884
    %v5831 = vpop.f32.mrb[0].mxu0
    %v5832 = vadd.f32 0.0, %v5831
    %v5833 = vpop.f32.mrb[0].mxu0
    %v5834 = vpop.f32.mrb[0].mxu0
    %v5835 = vadd.f32 0.0, %v5834
    %v5836 = vpop.f32.mrb[0].mxu0
    %5837 = vmatprep.mubr.bf16.mxu0 0
    %5838 = vmatmul.mubr.bf16.gmra.mrb[0].mxu0 %v4885
    %v5839 = vpop.f32.mrb[0].mxu0
    %v5840 = vadd.f32 0.0, %v5839
    %v5841 = vpop.f32.mrb[0].mxu0
    %v5842 = vpop.f32.mrb[0].mxu0
    %v5843 = vadd.f32 0.0, %v5842
    %v5844 = vpop.f32.mrb[0].mxu0
    %5845 = vmatprep.mubr.bf16.mxu0 0
    %5846 = vmatmul.mubr.bf16.gmra.mrb[0].mxu0 %v4886
    %v5847 = vpop.f32.mrb[0].mxu0
    %v5848 = vadd.f32 0.0, %v5847
    %v5849 = vpop.f32.mrb[0].mxu0
    %v5850 = vpop.f32.mrb[0].mxu0
    %v5851 = vadd.f32 0.0, %v5850
    %v5852 = vpop.f32.mrb[0].mxu0
    %5853 = vmatprep.mubr.bf16.mxu0 0
    %5854 = vmatmul.mubr.bf16.gmra.mrb[0].mxu0 %v4887
    %v5855 = vpop.f32.mrb[0].mxu0
    %v5856 = vadd.f32 0.0, %v5855
    %v5857 = vpop.f32.mrb[0].mxu0
    %v5858 = vpop.f32.mrb[0].mxu0
    %v5859 = vadd.f32 0.0, %v5858
    %v5860 = vpop.f32.mrb[0].mxu0
    %5861 = vmatprep.mubr.bf16.mxu0 0
    %5862 = vmatmul.mubr.bf16.gmra.mrb[0].mxu0 %v4888
    %v5863 = vpop.f32.mrb[0].mxu0
    %v5864 = vadd.f32 0.0, %v5863
    %v5865 = vpop.f32.mrb[0].mxu0
    %v5866 = vpop.f32.mrb[0].mxu0
    %v5867 = vadd.f32 0.0, %v5866
    %v5868 = vpop.f32.mrb[0].mxu0
    %5869 = vmatprep.mubr.bf16.mxu0 0
    %5870 = vmatmul.mubr.bf16.gmra.mrb[0].mxu0 %v4889
    %v5871 = vpop.f32.mrb[0].mxu0
    %v5872 = vadd.f32 0.0, %v5871
    %v5873 = vpop.f32.mrb[0].mxu0
    %v5874 = vpop.f32.mrb[0].mxu0
    %v5875 = vadd.f32 0.0, %v5874
    %v5876 = vpop.f32.mrb[0].mxu0
    %5877 = vmatprep.mubr.bf16.mxu0 0
    %5878 = vmatmul.mubr.bf16.gmra.mrb[0].mxu0 %v4890
    %v5879 = vpop.f32.mrb[0].mxu0
    %v5880 = vadd.f32 0.0, %v5879
    %v5881 = vpop.f32.mrb[0].mxu0
    %v5882 = vpop.f32.mrb[0].mxu0
    %v5883 = vadd.f32 0.0, %v5882
    %v5884 = vpop.f32.mrb[0].mxu0
    %5885 = vmatprep.mubr.bf16.mxu0 0
    %5886 = vmatmul.mubr.bf16.gmra.mrb[0].mxu0 %v4891
    %v5887 = vpop.f32.mrb[0].mxu0
    %v5888 = vadd.f32 0.0, %v5887
    %v5889 = vpop.f32.mrb[0].mxu0
    %v5890 = vpop.f32.mrb[0].mxu0
    %v5891 = vadd.f32 0.0, %v5890
    %v5892 = vpop.f32.mrb[0].mxu0
    %5893 = vmatprep.mubr.bf16.mxu0 0
    %5894 = vmatmul.mubr.bf16.gmra.mrb[0].mxu0 %v4892
    %v5895 = vpop.f32.mrb[0].mxu0
    %v5896 = vadd.f32 0.0, %v5895
    %v5897 = vpop.f32.mrb[0].mxu0
    %v5898 = vpop.f32.mrb[0].mxu0
    %v5899 = vadd.f32 0.0, %v5898
    %v5900 = vpop.f32.mrb[0].mxu0
    %5901 = vmatprep.mubr.bf16.mxu0 0
    %5902 = vmatmul.mubr.bf16.gmra.mrb[0].mxu0 %v4893
    %v5903 = vpop.f32.mrb[0].mxu0
    %v5904 = vadd.f32 0.0, %v5903
    %v5905 = vpop.f32.mrb[0].mxu0
    %v5906 = vpop.f32.mrb[0].mxu0
    %v5907 = vadd.f32 0.0, %v5906
    %v5908 = vpop.f32.mrb[0].mxu0
    %5909 = vmatprep.mubr.bf16.mxu0 0
    %5910 = vmatmul.mubr.bf16.gmra.mrb[0].mxu0 %v4894
    %v5911 = vpop.f32.mrb[0].mxu0
    %v5912 = vadd.f32 0.0, %v5911
    %v5913 = vpop.f32.mrb[0].mxu0
    %v5914 = vpop.f32.mrb[0].mxu0
    %v5915 = vadd.f32 0.0, %v5914
    %v5916 = vpop.f32.mrb[0].mxu0
    %5917 = vmatprep.mubr.bf16.mxu0 0
    %5918 = vmatmul.mubr.bf16.gmra.mrb[0].mxu0 %v4895
    %v5919 = vpop.f32.mrb[0].mxu0
    %v5920 = vadd.f32 0.0, %v5919
    %v5921 = vpop.f32.mrb[0].mxu0
    %v5922 = vpop.f32.mrb[0].mxu0
    %v5923 = vadd.f32 0.0, %v5922
    %v5924 = vpop.f32.mrb[0].mxu0
    %5925 = vmatprep.mubr.bf16.mxu0 0
    %5926 = vmatmul.mubr.bf16.gmra.mrb[0].mxu0 %v4896
    %v5927 = vpop.f32.mrb[0].mxu0
    %v5928 = vadd.f32 0.0, %v5927
    %v5929 = vpop.f32.mrb[0].mxu0
    %v5930 = vpop.f32.mrb[0].mxu0
    %v5931 = vadd.f32 0.0, %v5930
    %v5932 = vpop.f32.mrb[0].mxu0
    %5933 = vmatprep.mubr.bf16.mxu0 0
    %5934 = vmatmul.mubr.bf16.gmra.mrb[0].mxu0 %v4897
    %v5935 = vpop.f32.mrb[0].mxu0
    %v5936 = vadd.f32 0.0, %v5935
    %v5937 = vpop.f32.mrb[0].mxu0
    %v5938 = vpop.f32.mrb[0].mxu0
    %v5939 = vadd.f32 0.0, %v5938
    %v5940 = vpop.f32.mrb[0].mxu0
    %5941 = vmatprep.mubr.bf16.mxu0 0
    %5942 = vmatmul.mubr.bf16.gmra.mrb[0].mxu0 %v4898
    %v5943 = vpop.f32.mrb[0].mxu0
    %v5944 = vadd.f32 0.0, %v5943
    %v5945 = vpop.f32.mrb[0].mxu0
    %v5946 = vpop.f32.mrb[0].mxu0
    %v5947 = vadd.f32 0.0, %v5946
    %v5948 = vpop.f32.mrb[0].mxu0
    %5949 = vmatprep.mubr.bf16.mxu0 0
    %5950 = vmatmul.mubr.bf16.gmra.mrb[0].mxu0 %v4899
    %v5951 = vpop.f32.mrb[0].mxu0
    %v5952 = vadd.f32 0.0, %v5951
    %v5953 = vpop.f32.mrb[0].mxu0
    %v5954 = vpop.f32.mrb[0].mxu0
    %v5955 = vadd.f32 0.0, %v5954
    %v5956 = vpop.f32.mrb[0].mxu0
    %5957 = vmatprep.mubr.bf16.mxu0 0
    %5958 = vmatmul.mubr.bf16.gmra.mrb[0].mxu0 %v4900
    %v5959 = vpop.f32.mrb[0].mxu0
    %v5960 = vadd.f32 0.0, %v5959
    %v5961 = vpop.f32.mrb[0].mxu0
    %v5962 = vpop.f32.mrb[0].mxu0
    %v5963 = vadd.f32 0.0, %v5962
    %v5964 = vpop.f32.mrb[0].mxu0
    %5965 = vmatprep.mubr.bf16.mxu0 0
    %5966 = vmatmul.mubr.bf16.gmra.mrb[0].mxu0 %v4901
    %v5967 = vpop.f32.mrb[0].mxu0
    %v5968 = vadd.f32 0.0, %v5967
    %v5969 = vpop.f32.mrb[0].mxu0
    %v5970 = vpop.f32.mrb[0].mxu0
    %v5971 = vadd.f32 0.0, %v5970
    %v5972 = vpop.f32.mrb[0].mxu0
    %5973 = vmatprep.mubr.bf16.mxu0 0
    %5974 = vmatmul.mubr.bf16.gmra.mrb[0].mxu0 %v4902
    %v5975 = vpop.f32.mrb[0].mxu0
    %v5976 = vadd.f32 0.0, %v5975
    %v5977 = vpop.f32.mrb[0].mxu0
    %v5978 = vpop.f32.mrb[0].mxu0
    %v5979 = vadd.f32 0.0, %v5978
    %v5980 = vpop.f32.mrb[0].mxu0
    %5981 = vmatprep.mubr.bf16.mxu0 0
    %5982 = vmatmul.mubr.bf16.gmra.mrb[0].mxu0 %v4903
    %v5983 = vpop.f32.mrb[0].mxu0
    %v5984 = vadd.f32 0.0, %v5983
    %v5985 = vpop.f32.mrb[0].mxu0
    %v5986 = vpop.f32.mrb[0].mxu0
    %v5987 = vadd.f32 0.0, %v5986
    %v5988 = vpop.f32.mrb[0].mxu0
    %5989 = vmatprep.mubr.bf16.mxu0 0
    %5990 = vmatmul.mubr.bf16.gmra.mrb[0].mxu0 %v4904
    %v5991 = vpop.f32.mrb[0].mxu0
    %v5992 = vadd.f32 0.0, %v5991
    %v5993 = vpop.f32.mrb[0].mxu0
    %v5994 = vpop.f32.mrb[0].mxu0
    %v5995 = vadd.f32 0.0, %v5994
    %v5996 = vpop.f32.mrb[0].mxu0
    %5997 = vmatprep.mubr.bf16.mxu0 0
    %5998 = vmatmul.mubr.bf16.gmra.mrb[0].mxu0 %v4905
    %v5999 = vpop.f32.mrb[0].mxu0
    %v6000 = vadd.f32 0.0, %v5999
    %v6001 = vpop.f32.mrb[0].mxu0
    %v6002 = vpop.f32.mrb[0].mxu0
    %v6003 = vadd.f32 0.0, %v6002
    %v6004 = vpop.f32.mrb[0].mxu0
    %6005 = vmatprep.mubr.bf16.mxu0 0
    %6006 = vmatmul.mubr.bf16.gmra.mrb[0].mxu0 %v4906
    %v6007 = vpop.f32.mrb[0].mxu0
    %v6008 = vadd.f32 0.0, %v6007
    %v6009 = vpop.f32.mrb[0].mxu0
    %v6010 = vpop.f32.mrb[0].mxu0
    %v6011 = vadd.f32 0.0, %v6010
    %v6012 = vpop.f32.mrb[0].mxu0
    %6013 = vmatprep.mubr.bf16.mxu0 0
    %6014 = vmatmul.mubr.bf16.gmra.mrb[0].mxu0 %v4907
    %v6015 = vpop.f32.mrb[0].mxu0
    %v6016 = vadd.f32 0.0, %v6015
    %v6017 = vpop.f32.mrb[0].mxu0
    %v6018 = vpop.f32.mrb[0].mxu0
    %v6019 = vadd.f32 0.0, %v6018
    %v6020 = vpop.f32.mrb[0].mxu0
    %6021 = vmatprep.mubr.bf16.mxu0 0
    %6022 = vmatmul.mubr.bf16.gmra.mrb[0].mxu0 %v4908
    %v6023 = vpop.f32.mrb[0].mxu0
    %v6024 = vadd.f32 0.0, %v6023
    %v6025 = vpop.f32.mrb[0].mxu0
    %v6026 = vpop.f32.mrb[0].mxu0
    %v6027 = vadd.f32 0.0, %v6026
    %v6028 = vpop.f32.mrb[0].mxu0
    %6029 = vdwg.mxu0
    %v6030 = vpack.c.bf16 %v5011, %v5008
    %v6031 = vpack.c.bf16 %v5019, %v5016
    %v6032 = vpack.c.bf16 %v5027, %v5024
    %v6033 = vpack.c.bf16 %v5035, %v5032
    %v6034 = vpack.c.bf16 %v5043, %v5040
    %v6035 = vpack.c.bf16 %v5051, %v5048
    %v6036 = vpack.c.bf16 %v5059, %v5056
    %v6037 = vpack.c.bf16 %v5067, %v5064
    %v6038 = vpack.c.bf16 %v5075, %v5072
    %v6039 = vpack.c.bf16 %v5083, %v5080
    %v6040 = vpack.c.bf16 %v5091, %v5088
    %v6041 = vpack.c.bf16 %v5099, %v5096
    %v6042 = vpack.c.bf16 %v5107, %v5104
    %v6043 = vpack.c.bf16 %v5115, %v5112
    %v6044 = vpack.c.bf16 %v5123, %v5120
    %v6045 = vpack.c.bf16 %v5131, %v5128
    %v6046 = vpack.c.bf16 %v5139, %v5136
    %v6047 = vpack.c.bf16 %v5147, %v5144
    %v6048 = vpack.c.bf16 %v5155, %v5152
    %v6049 = vpack.c.bf16 %v5163, %v5160
    %v6050 = vpack.c.bf16 %v5171, %v5168
    %v6051 = vpack.c.bf16 %v5179, %v5176
    %v6052 = vpack.c.bf16 %v5187, %v5184
    %v6053 = vpack.c.bf16 %v5195, %v5192
    %v6054 = vpack.c.bf16 %v5203, %v5200
    %v6055 = vpack.c.bf16 %v5211, %v5208
    %v6056 = vpack.c.bf16 %v5219, %v5216
    %v6057 = vpack.c.bf16 %v5227, %v5224
    %v6058 = vpack.c.bf16 %v5235, %v5232
    %v6059 = vpack.c.bf16 %v5243, %v5240
    %v6060 = vpack.c.bf16 %v5251, %v5248
    %v6061 = vpack.c.bf16 %v5259, %v5256
    %v6062 = vpack.c.bf16 %v5267, %v5264
    %v6063 = vpack.c.bf16 %v5275, %v5272
    %v6064 = vpack.c.bf16 %v5283, %v5280
    %v6065 = vpack.c.bf16 %v5291, %v5288
    %v6066 = vpack.c.bf16 %v5299, %v5296
    %v6067 = vpack.c.bf16 %v5307, %v5304
    %v6068 = vpack.c.bf16 %v5315, %v5312
    %v6069 = vpack.c.bf16 %v5323, %v5320
    %v6070 = vpack.c.bf16 %v5331, %v5328
    %v6071 = vpack.c.bf16 %v5339, %v5336
    %v6072 = vpack.c.bf16 %v5347, %v5344
    %v6073 = vpack.c.bf16 %v5355, %v5352
    %v6074 = vpack.c.bf16 %v5363, %v5360
    %v6075 = vpack.c.bf16 %v5371, %v5368
    %v6076 = vpack.c.bf16 %v5379, %v5376
    %v6077 = vpack.c.bf16 %v5387, %v5384
    %v6078 = vpack.c.bf16 %v5395, %v5392
    %v6079 = vpack.c.bf16 %v5403, %v5400
    %v6080 = vpack.c.bf16 %v5411, %v5408
    %v6081 = vpack.c.bf16 %v5419, %v5416
    %v6082 = vpack.c.bf16 %v5427, %v5424
    %v6083 = vpack.c.bf16 %v5435, %v5432
    %v6084 = vpack.c.bf16 %v5443, %v5440
    %v6085 = vpack.c.bf16 %v5451, %v5448
    %v6086 = vpack.c.bf16 %v5459, %v5456
    %v6087 = vpack.c.bf16 %v5467, %v5464
    %v6088 = vpack.c.bf16 %v5475, %v5472
    %v6089 = vpack.c.bf16 %v5483, %v5480
    %v6090 = vpack.c.bf16 %v5491, %v5488
    %v6091 = vpack.c.bf16 %v5499, %v5496
    %v6092 = vpack.c.bf16 %v5507, %v5504
    %v6093 = vpack.c.bf16 %v5515, %v5512
    %v6094 = vpack.c.bf16 %v5523, %v5520
    %v6095 = vpack.c.bf16 %v5531, %v5528
    %v6096 = vpack.c.bf16 %v5539, %v5536
    %v6097 = vpack.c.bf16 %v5547, %v5544
    %v6098 = vpack.c.bf16 %v5555, %v5552
    %v6099 = vpack.c.bf16 %v5563, %v5560
    %v6100 = vpack.c.bf16 %v5571, %v5568
    %v6101 = vpack.c.bf16 %v5579, %v5576
    %v6102 = vpack.c.bf16 %v5587, %v5584
    %v6103 = vpack.c.bf16 %v5595, %v5592
    %v6104 = vpack.c.bf16 %v5603, %v5600
    %v6105 = vpack.c.bf16 %v5611, %v5608
    %v6106 = vpack.c.bf16 %v5619, %v5616
    %v6107 = vpack.c.bf16 %v5627, %v5624
    %v6108 = vpack.c.bf16 %v5635, %v5632
    %v6109 = vpack.c.bf16 %v5643, %v5640
    %v6110 = vpack.c.bf16 %v5651, %v5648
    %v6111 = vpack.c.bf16 %v5659, %v5656
    %v6112 = vpack.c.bf16 %v5667, %v5664
    %v6113 = vpack.c.bf16 %v5675, %v5672
    %v6114 = vpack.c.bf16 %v5683, %v5680
    %v6115 = vpack.c.bf16 %v5691, %v5688
    %v6116 = vpack.c.bf16 %v5699, %v5696
    %v6117 = vpack.c.bf16 %v5707, %v5704
    %v6118 = vpack.c.bf16 %v5715, %v5712
    %v6119 = vpack.c.bf16 %v5723, %v5720
    %v6120 = vpack.c.bf16 %v5731, %v5728
    %v6121 = vpack.c.bf16 %v5739, %v5736
    %v6122 = vpack.c.bf16 %v5747, %v5744
    %v6123 = vpack.c.bf16 %v5755, %v5752
    %v6124 = vpack.c.bf16 %v5763, %v5760
    %v6125 = vpack.c.bf16 %v5771, %v5768
    %v6126 = vpack.c.bf16 %v5779, %v5776
    %v6127 = vpack.c.bf16 %v5787, %v5784
    %v6128 = vpack.c.bf16 %v5795, %v5792
    %v6129 = vpack.c.bf16 %v5803, %v5800
    %v6130 = vpack.c.bf16 %v5811, %v5808
    %v6131 = vpack.c.bf16 %v5819, %v5816
    %v6132 = vpack.c.bf16 %v5827, %v5824
    %v6133 = vpack.c.bf16 %v5835, %v5832
    %v6134 = vpack.c.bf16 %v5843, %v5840
    %v6135 = vpack.c.bf16 %v5851, %v5848
    %v6136 = vpack.c.bf16 %v5859, %v5856
    %v6137 = vpack.c.bf16 %v5867, %v5864
    %v6138 = vpack.c.bf16 %v5875, %v5872
    %v6139 = vpack.c.bf16 %v5883, %v5880
    %v6140 = vpack.c.bf16 %v5891, %v5888
    %v6141 = vpack.c.bf16 %v5899, %v5896
    %v6142 = vpack.c.bf16 %v5907, %v5904
    %v6143 = vpack.c.bf16 %v5915, %v5912
    %v6144 = vpack.c.bf16 %v5923, %v5920
    %v6145 = vpack.c.bf16 %v5931, %v5928
    %v6146 = vpack.c.bf16 %v5939, %v5936
    %v6147 = vpack.c.bf16 %v5947, %v5944
    %v6148 = vpack.c.bf16 %v5955, %v5952
    %v6149 = vpack.c.bf16 %v5963, %v5960
    %v6150 = vpack.c.bf16 %v5971, %v5968
    %v6151 = vpack.c.bf16 %v5979, %v5976
    %v6152 = vpack.c.bf16 %v5987, %v5984
    %v6153 = vpack.c.bf16 %v5995, %v5992
    %v6154 = vpack.c.bf16 %v6003, %v6000
    %v6155 = vpack.c.bf16 %v6011, %v6008
    %v6156 = vpack.c.bf16 %v6019, %v6016
    %v6157 = vpack.c.bf16 %v6027, %v6024
    %v6158 = vld [vmem:[%s7] sm:$0x1]
    %v6159 = vpack.c.bf16 %v6158, %v6158
    %v6161 = vpack.i.b16 %v6159, %v6159
    %v6163 = vlaneseq
    %v6164 = vshrl.u32 %v6163, 7
    %v6165 = vsub.s32 0, %v6164
    %v6166 = vrot.slane %v6161, %v6165
    %v6167 = vadd.bf16 %v6030, %v6166
    %v6168 = vadd.bf16 %v6031, %v6166
    %v6169 = vadd.bf16 %v6032, %v6166
    %v6170 = vadd.bf16 %v6033, %v6166
    %v6171 = vadd.bf16 %v6034, %v6166
    %v6172 = vadd.bf16 %v6035, %v6166
    %v6173 = vadd.bf16 %v6036, %v6166
    %v6174 = vadd.bf16 %v6037, %v6166
    %v6175 = vadd.bf16 %v6038, %v6166
    %v6176 = vadd.bf16 %v6039, %v6166
    %v6177 = vadd.bf16 %v6040, %v6166
    %v6178 = vadd.bf16 %v6041, %v6166
    %v6179 = vadd.bf16 %v6042, %v6166
    %v6180 = vadd.bf16 %v6043, %v6166
    %v6181 = vadd.bf16 %v6044, %v6166
    %v6182 = vadd.bf16 %v6045, %v6166
    %v6183 = vadd.bf16 %v6046, %v6166
    %v6184 = vadd.bf16 %v6047, %v6166
    %v6185 = vadd.bf16 %v6048, %v6166
    %v6186 = vadd.bf16 %v6049, %v6166
    %v6187 = vadd.bf16 %v6050, %v6166
    %v6188 = vadd.bf16 %v6051, %v6166
    %v6189 = vadd.bf16 %v6052, %v6166
    %v6190 = vadd.bf16 %v6053, %v6166
    %v6191 = vadd.bf16 %v6054, %v6166
    %v6192 = vadd.bf16 %v6055, %v6166
    %v6193 = vadd.bf16 %v6056, %v6166
    %v6194 = vadd.bf16 %v6057, %v6166
    %v6195 = vadd.bf16 %v6058, %v6166
    %v6196 = vadd.bf16 %v6059, %v6166
    %v6197 = vadd.bf16 %v6060, %v6166
    %v6198 = vadd.bf16 %v6061, %v6166
    %v6199 = vadd.bf16 %v6062, %v6166
    %v6200 = vadd.bf16 %v6063, %v6166
    %v6201 = vadd.bf16 %v6064, %v6166
    %v6202 = vadd.bf16 %v6065, %v6166
    %v6203 = vadd.bf16 %v6066, %v6166
    %v6204 = vadd.bf16 %v6067, %v6166
    %v6205 = vadd.bf16 %v6068, %v6166
    %v6206 = vadd.bf16 %v6069, %v6166
    %v6207 = vadd.bf16 %v6070, %v6166
    %v6208 = vadd.bf16 %v6071, %v6166
    %v6209 = vadd.bf16 %v6072, %v6166
    %v6210 = vadd.bf16 %v6073, %v6166
    %v6211 = vadd.bf16 %v6074, %v6166
    %v6212 = vadd.bf16 %v6075, %v6166
    %v6213 = vadd.bf16 %v6076, %v6166
    %v6214 = vadd.bf16 %v6077, %v6166
    %v6215 = vadd.bf16 %v6078, %v6166
    %v6216 = vadd.bf16 %v6079, %v6166
    %v6217 = vadd.bf16 %v6080, %v6166
    %v6218 = vadd.bf16 %v6081, %v6166
    %v6219 = vadd.bf16 %v6082, %v6166
    %v6220 = vadd.bf16 %v6083, %v6166
    %v6221 = vadd.bf16 %v6084, %v6166
    %v6222 = vadd.bf16 %v6085, %v6166
    %v6223 = vadd.bf16 %v6086, %v6166
    %v6224 = vadd.bf16 %v6087, %v6166
    %v6225 = vadd.bf16 %v6088, %v6166
    %v6226 = vadd.bf16 %v6089, %v6166
    %v6227 = vadd.bf16 %v6090, %v6166
    %v6228 = vadd.bf16 %v6091, %v6166
    %v6229 = vadd.bf16 %v6092, %v6166
    %v6230 = vadd.bf16 %v6093, %v6166
    %v6231 = vadd.bf16 %v6094, %v6166
    %v6232 = vadd.bf16 %v6095, %v6166
    %v6233 = vadd.bf16 %v6096, %v6166
    %v6234 = vadd.bf16 %v6097, %v6166
    %v6235 = vadd.bf16 %v6098, %v6166
    %v6236 = vadd.bf16 %v6099, %v6166
    %v6237 = vadd.bf16 %v6100, %v6166
    %v6238 = vadd.bf16 %v6101, %v6166
    %v6239 = vadd.bf16 %v6102, %v6166
    %v6240 = vadd.bf16 %v6103, %v6166
    %v6241 = vadd.bf16 %v6104, %v6166
    %v6242 = vadd.bf16 %v6105, %v6166
    %v6243 = vadd.bf16 %v6106, %v6166
    %v6244 = vadd.bf16 %v6107, %v6166
    %v6245 = vadd.bf16 %v6108, %v6166
    %v6246 = vadd.bf16 %v6109, %v6166
    %v6247 = vadd.bf16 %v6110, %v6166
    %v6248 = vadd.bf16 %v6111, %v6166
    %v6249 = vadd.bf16 %v6112, %v6166
    %v6250 = vadd.bf16 %v6113, %v6166
    %v6251 = vadd.bf16 %v6114, %v6166
    %v6252 = vadd.bf16 %v6115, %v6166
    %v6253 = vadd.bf16 %v6116, %v6166
    %v6254 = vadd.bf16 %v6117, %v6166
    %v6255 = vadd.bf16 %v6118, %v6166
    %v6256 = vadd.bf16 %v6119, %v6166
    %v6257 = vadd.bf16 %v6120, %v6166
    %v6258 = vadd.bf16 %v6121, %v6166
    %v6259 = vadd.bf16 %v6122, %v6166
    %v6260 = vadd.bf16 %v6123, %v6166
    %v6261 = vadd.bf16 %v6124, %v6166
    %v6262 = vadd.bf16 %v6125, %v6166
    %v6263 = vadd.bf16 %v6126, %v6166
    %v6264 = vadd.bf16 %v6127, %v6166
    %v6265 = vadd.bf16 %v6128, %v6166
    %v6266 = vadd.bf16 %v6129, %v6166
    %v6267 = vadd.bf16 %v6130, %v6166
    %v6268 = vadd.bf16 %v6131, %v6166
    %v6269 = vadd.bf16 %v6132, %v6166
    %v6270 = vadd.bf16 %v6133, %v6166
    %v6271 = vadd.bf16 %v6134, %v6166
    %v6272 = vadd.bf16 %v6135, %v6166
    %v6273 = vadd.bf16 %v6136, %v6166
    %v6274 = vadd.bf16 %v6137, %v6166
    %v6275 = vadd.bf16 %v6138, %v6166
    %v6276 = vadd.bf16 %v6139, %v6166
    %v6277 = vadd.bf16 %v6140, %v6166
    %v6278 = vadd.bf16 %v6141, %v6166
    %v6279 = vadd.bf16 %v6142, %v6166
    %v6280 = vadd.bf16 %v6143, %v6166
    %v6281 = vadd.bf16 %v6144, %v6166
    %v6282 = vadd.bf16 %v6145, %v6166
    %v6283 = vadd.bf16 %v6146, %v6166
    %v6284 = vadd.bf16 %v6147, %v6166
    %v6285 = vadd.bf16 %v6148, %v6166
    %v6286 = vadd.bf16 %v6149, %v6166
    %v6287 = vadd.bf16 %v6150, %v6166
    %v6288 = vadd.bf16 %v6151, %v6166
    %v6289 = vadd.bf16 %v6152, %v6166
    %v6290 = vadd.bf16 %v6153, %v6166
    %v6291 = vadd.bf16 %v6154, %v6166
    %v6292 = vadd.bf16 %v6155, %v6166
    %v6293 = vadd.bf16 %v6156, %v6166
    %v6294 = vadd.bf16 %v6157, %v6166
    %v6295 = vmul.bf16 %v6167, 1036860877
    %v6296 = vmul.bf16 %v6168, 1036860877
    %v6297 = vmul.bf16 %v6169, 1036860877
    %v6298 = vmul.bf16 %v6170, 1036860877
    %v6299 = vmul.bf16 %v6171, 1036860877
    %v6300 = vmul.bf16 %v6172, 1036860877
    %v6301 = vmul.bf16 %v6173, 1036860877
    %v6302 = vmul.bf16 %v6174, 1036860877
    %v6303 = vmul.bf16 %v6175, 1036860877
    %v6304 = vmul.bf16 %v6176, 1036860877
    %v6305 = vmul.bf16 %v6177, 1036860877
    %v6306 = vmul.bf16 %v6178, 1036860877
    %v6307 = vmul.bf16 %v6179, 1036860877
    %v6308 = vmul.bf16 %v6180, 1036860877
    %v6309 = vmul.bf16 %v6181, 1036860877
    %v6310 = vmul.bf16 %v6182, 1036860877
    %v6311 = vmul.bf16 %v6183, 1036860877
    %v6312 = vmul.bf16 %v6184, 1036860877
    %v6313 = vmul.bf16 %v6185, 1036860877
    %v6314 = vmul.bf16 %v6186, 1036860877
    %v6315 = vmul.bf16 %v6187, 1036860877
    %v6316 = vmul.bf16 %v6188, 1036860877
    %v6317 = vmul.bf16 %v6189, 1036860877
    %v6318 = vmul.bf16 %v6190, 1036860877
    %v6319 = vmul.bf16 %v6191, 1036860877
    %v6320 = vmul.bf16 %v6192, 1036860877
    %v6321 = vmul.bf16 %v6193, 1036860877
    %v6322 = vmul.bf16 %v6194, 1036860877
    %v6323 = vmul.bf16 %v6195, 1036860877
    %v6324 = vmul.bf16 %v6196, 1036860877
    %v6325 = vmul.bf16 %v6197, 1036860877
    %v6326 = vmul.bf16 %v6198, 1036860877
    %v6327 = vmul.bf16 %v6199, 1036860877
    %v6328 = vmul.bf16 %v6200, 1036860877
    %v6329 = vmul.bf16 %v6201, 1036860877
    %v6330 = vmul.bf16 %v6202, 1036860877
    %v6331 = vmul.bf16 %v6203, 1036860877
    %v6332 = vmul.bf16 %v6204, 1036860877
    %v6333 = vmul.bf16 %v6205, 1036860877
    %v6334 = vmul.bf16 %v6206, 1036860877
    %v6335 = vmul.bf16 %v6207, 1036860877
    %v6336 = vmul.bf16 %v6208, 1036860877
    %v6337 = vmul.bf16 %v6209, 1036860877
    %v6338 = vmul.bf16 %v6210, 1036860877
    %v6339 = vmul.bf16 %v6211, 1036860877
    %v6340 = vmul.bf16 %v6212, 1036860877
    %v6341 = vmul.bf16 %v6213, 1036860877
    %v6342 = vmul.bf16 %v6214, 1036860877
    %v6343 = vmul.bf16 %v6215, 1036860877
    %v6344 = vmul.bf16 %v6216, 1036860877
    %v6345 = vmul.bf16 %v6217, 1036860877
    %v6346 = vmul.bf16 %v6218, 1036860877
    %v6347 = vmul.bf16 %v6219, 1036860877
    %v6348 = vmul.bf16 %v6220, 1036860877
    %v6349 = vmul.bf16 %v6221, 1036860877
    %v6350 = vmul.bf16 %v6222, 1036860877
    %v6351 = vmul.bf16 %v6223, 1036860877
    %v6352 = vmul.bf16 %v6224, 1036860877
    %v6353 = vmul.bf16 %v6225, 1036860877
    %v6354 = vmul.bf16 %v6226, 1036860877
    %v6355 = vmul.bf16 %v6227, 1036860877
    %v6356 = vmul.bf16 %v6228, 1036860877
    %v6357 = vmul.bf16 %v6229, 1036860877
    %v6358 = vmul.bf16 %v6230, 1036860877
    %v6359 = vmul.bf16 %v6231, 1036860877
    %v6360 = vmul.bf16 %v6232, 1036860877
    %v6361 = vmul.bf16 %v6233, 1036860877
    %v6362 = vmul.bf16 %v6234, 1036860877
    %v6363 = vmul.bf16 %v6235, 1036860877
    %v6364 = vmul.bf16 %v6236, 1036860877
    %v6365 = vmul.bf16 %v6237, 1036860877
    %v6366 = vmul.bf16 %v6238, 1036860877
    %v6367 = vmul.bf16 %v6239, 1036860877
    %v6368 = vmul.bf16 %v6240, 1036860877
    %v6369 = vmul.bf16 %v6241, 1036860877
    %v6370 = vmul.bf16 %v6242, 1036860877
    %v6371 = vmul.bf16 %v6243, 1036860877
    %v6372 = vmul.bf16 %v6244, 1036860877
    %v6373 = vmul.bf16 %v6245, 1036860877
    %v6374 = vmul.bf16 %v6246, 1036860877
    %v6375 = vmul.bf16 %v6247, 1036860877
    %v6376 = vmul.bf16 %v6248, 1036860877
    %v6377 = vmul.bf16 %v6249, 1036860877
    %v6378 = vmul.bf16 %v6250, 1036860877
    %v6379 = vmul.bf16 %v6251, 1036860877
    %v6380 = vmul.bf16 %v6252, 1036860877
    %v6381 = vmul.bf16 %v6253, 1036860877
    %v6382 = vmul.bf16 %v6254, 1036860877
    %v6383 = vmul.bf16 %v6255, 1036860877
    %v6384 = vmul.bf16 %v6256, 1036860877
    %v6385 = vmul.bf16 %v6257, 1036860877
    %v6386 = vmul.bf16 %v6258, 1036860877
    %v6387 = vmul.bf16 %v6259, 1036860877
    %v6388 = vmul.bf16 %v6260, 1036860877
    %v6389 = vmul.bf16 %v6261, 1036860877
    %v6390 = vmul.bf16 %v6262, 1036860877
    %v6391 = vmul.bf16 %v6263, 1036860877
    %v6392 = vmul.bf16 %v6264, 1036860877
    %v6393 = vmul.bf16 %v6265, 1036860877
    %v6394 = vmul.bf16 %v6266, 1036860877
    %v6395 = vmul.bf16 %v6267, 1036860877
    %v6396 = vmul.bf16 %v6268, 1036860877
    %v6397 = vmul.bf16 %v6269, 1036860877
    %v6398 = vmul.bf16 %v6270, 1036860877
    %v6399 = vmul.bf16 %v6271, 1036860877
    %v6400 = vmul.bf16 %v6272, 1036860877
    %v6401 = vmul.bf16 %v6273, 1036860877
    %v6402 = vmul.bf16 %v6274, 1036860877
    %v6403 = vmul.bf16 %v6275, 1036860877
    %v6404 = vmul.bf16 %v6276, 1036860877
    %v6405 = vmul.bf16 %v6277, 1036860877
    %v6406 = vmul.bf16 %v6278, 1036860877
    %v6407 = vmul.bf16 %v6279, 1036860877
    %v6408 = vmul.bf16 %v6280, 1036860877
    %v6409 = vmul.bf16 %v6281, 1036860877
    %v6410 = vmul.bf16 %v6282, 1036860877
    %v6411 = vmul.bf16 %v6283, 1036860877
    %v6412 = vmul.bf16 %v6284, 1036860877
    %v6413 = vmul.bf16 %v6285, 1036860877
    %v6414 = vmul.bf16 %v6286, 1036860877
    %v6415 = vmul.bf16 %v6287, 1036860877
    %v6416 = vmul.bf16 %v6288, 1036860877
    %v6417 = vmul.bf16 %v6289, 1036860877
    %v6418 = vmul.bf16 %v6290, 1036860877
    %v6419 = vmul.bf16 %v6291, 1036860877
    %v6420 = vmul.bf16 %v6292, 1036860877
    %v6421 = vmul.bf16 %v6293, 1036860877
    %v6422 = vmul.bf16 %v6294, 1036860877
    %v6423 = vmax.bf16 %v6167, %v6295
    %v6424 = vmax.bf16 %v6168, %v6296
    %v6425 = vmax.bf16 %v6169, %v6297
    %v6426 = vmax.bf16 %v6170, %v6298
    %v6427 = vmax.bf16 %v6171, %v6299
    %v6428 = vmax.bf16 %v6172, %v6300
    %v6429 = vmax.bf16 %v6173, %v6301
    %v6430 = vmax.bf16 %v6174, %v6302
    %v6431 = vmax.bf16 %v6175, %v6303
    %v6432 = vmax.bf16 %v6176, %v6304
    %v6433 = vmax.bf16 %v6177, %v6305
    %v6434 = vmax.bf16 %v6178, %v6306
    %v6435 = vmax.bf16 %v6179, %v6307
    %v6436 = vmax.bf16 %v6180, %v6308
    %v6437 = vmax.bf16 %v6181, %v6309
    %v6438 = vmax.bf16 %v6182, %v6310
    %v6439 = vmax.bf16 %v6183, %v6311
    %v6440 = vmax.bf16 %v6184, %v6312
    %v6441 = vmax.bf16 %v6185, %v6313
    %v6442 = vmax.bf16 %v6186, %v6314
    %v6443 = vmax.bf16 %v6187, %v6315
    %v6444 = vmax.bf16 %v6188, %v6316
    %v6445 = vmax.bf16 %v6189, %v6317
    %v6446 = vmax.bf16 %v6190, %v6318
    %v6447 = vmax.bf16 %v6191, %v6319
    %v6448 = vmax.bf16 %v6192, %v6320
    %v6449 = vmax.bf16 %v6193, %v6321
    %v6450 = vmax.bf16 %v6194, %v6322
    %v6451 = vmax.bf16 %v6195, %v6323
    %v6452 = vmax.bf16 %v6196, %v6324
    %v6453 = vmax.bf16 %v6197, %v6325
    %v6454 = vmax.bf16 %v6198, %v6326
    %v6455 = vmax.bf16 %v6199, %v6327
    %v6456 = vmax.bf16 %v6200, %v6328
    %v6457 = vmax.bf16 %v6201, %v6329
    %v6458 = vmax.bf16 %v6202, %v6330
    %v6459 = vmax.bf16 %v6203, %v6331
    %v6460 = vmax.bf16 %v6204, %v6332
    %v6461 = vmax.bf16 %v6205, %v6333
    %v6462 = vmax.bf16 %v6206, %v6334
    %v6463 = vmax.bf16 %v6207, %v6335
    %v6464 = vmax.bf16 %v6208, %v6336
    %v6465 = vmax.bf16 %v6209, %v6337
    %v6466 = vmax.bf16 %v6210, %v6338
    %v6467 = vmax.bf16 %v6211, %v6339
    %v6468 = vmax.bf16 %v6212, %v6340
    %v6469 = vmax.bf16 %v6213, %v6341
    %v6470 = vmax.bf16 %v6214, %v6342
    %v6471 = vmax.bf16 %v6215, %v6343
    %v6472 = vmax.bf16 %v6216, %v6344
    %v6473 = vmax.bf16 %v6217, %v6345
    %v6474 = vmax.bf16 %v6218, %v6346
    %v6475 = vmax.bf16 %v6219, %v6347
    %v6476 = vmax.bf16 %v6220, %v6348
    %v6477 = vmax.bf16 %v6221, %v6349
    %v6478 = vmax.bf16 %v6222, %v6350
    %v6479 = vmax.bf16 %v6223, %v6351
    %v6480 = vmax.bf16 %v6224, %v6352
    %v6481 = vmax.bf16 %v6225, %v6353
    %v6482 = vmax.bf16 %v6226, %v6354
    %v6483 = vmax.bf16 %v6227, %v6355
    %v6484 = vmax.bf16 %v6228, %v6356
    %v6485 = vmax.bf16 %v6229, %v6357
    %v6486 = vmax.bf16 %v6230, %v6358
    %v6487 = vmax.bf16 %v6231, %v6359
    %v6488 = vmax.bf16 %v6232, %v6360
    %v6489 = vmax.bf16 %v6233, %v6361
    %v6490 = vmax.bf16 %v6234, %v6362
    %v6491 = vmax.bf16 %v6235, %v6363
    %v6492 = vmax.bf16 %v6236, %v6364
    %v6493 = vmax.bf16 %v6237, %v6365
    %v6494 = vmax.bf16 %v6238, %v6366
    %v6495 = vmax.bf16 %v6239, %v6367
    %v6496 = vmax.bf16 %v6240, %v6368
    %v6497 = vmax.bf16 %v6241, %v6369
    %v6498 = vmax.bf16 %v6242, %v6370
    %v6499 = vmax.bf16 %v6243, %v6371
    %v6500 = vmax.bf16 %v6244, %v6372
    %v6501 = vmax.bf16 %v6245, %v6373
    %v6502 = vmax.bf16 %v6246, %v6374
    %v6503 = vmax.bf16 %v6247, %v6375
    %v6504 = vmax.bf16 %v6248, %v6376
    %v6505 = vmax.bf16 %v6249, %v6377
    %v6506 = vmax.bf16 %v6250, %v6378
    %v6507 = vmax.bf16 %v6251, %v6379
    %v6508 = vmax.bf16 %v6252, %v6380
    %v6509 = vmax.bf16 %v6253, %v6381
    %v6510 = vmax.bf16 %v6254, %v6382
    %v6511 = vmax.bf16 %v6255, %v6383
    %v6512 = vmax.bf16 %v6256, %v6384
    %v6513 = vmax.bf16 %v6257, %v6385
    %v6514 = vmax.bf16 %v6258, %v6386
    %v6515 = vmax.bf16 %v6259, %v6387
    %v6516 = vmax.bf16 %v6260, %v6388
    %v6517 = vmax.bf16 %v6261, %v6389
    %v6518 = vmax.bf16 %v6262, %v6390
    %v6519 = vmax.bf16 %v6263, %v6391
    %v6520 = vmax.bf16 %v6264, %v6392
    %v6521 = vmax.bf16 %v6265, %v6393
    %v6522 = vmax.bf16 %v6266, %v6394
    %v6523 = vmax.bf16 %v6267, %v6395
    %v6524 = vmax.bf16 %v6268, %v6396
    %v6525 = vmax.bf16 %v6269, %v6397
    %v6526 = vmax.bf16 %v6270, %v6398
    %v6527 = vmax.bf16 %v6271, %v6399
    %v6528 = vmax.bf16 %v6272, %v6400
    %v6529 = vmax.bf16 %v6273, %v6401
    %v6530 = vmax.bf16 %v6274, %v6402
    %v6531 = vmax.bf16 %v6275, %v6403
    %v6532 = vmax.bf16 %v6276, %v6404
    %v6533 = vmax.bf16 %v6277, %v6405
    %v6534 = vmax.bf16 %v6278, %v6406
    %v6535 = vmax.bf16 %v6279, %v6407
    %v6536 = vmax.bf16 %v6280, %v6408
    %v6537 = vmax.bf16 %v6281, %v6409
    %v6538 = vmax.bf16 %v6282, %v6410
    %v6539 = vmax.bf16 %v6283, %v6411
    %v6540 = vmax.bf16 %v6284, %v6412
    %v6541 = vmax.bf16 %v6285, %v6413
    %v6542 = vmax.bf16 %v6286, %v6414
    %v6543 = vmax.bf16 %v6287, %v6415
    %v6544 = vmax.bf16 %v6288, %v6416
    %v6545 = vmax.bf16 %v6289, %v6417
    %v6546 = vmax.bf16 %v6290, %v6418
    %v6547 = vmax.bf16 %v6291, %v6419
    %v6548 = vmax.bf16 %v6292, %v6420
    %v6549 = vmax.bf16 %v6293, %v6421
    %v6550 = vmax.bf16 %v6294, %v6422
    %v6551 = vld [vmem:[%s8] sm:$0xff]
    %v6552 = vld [vmem:[%s8 + $0x8] sm:$0xff]
    %v6553 = vld [vmem:[%s8 + $0x10] sm:$0xff]
    %v6554 = vld [vmem:[%s8 + $0x18] sm:$0xff]
    %v6555 = vld [vmem:[%s8 + $0x20] sm:$0xff]
    %v6556 = vld [vmem:[%s8 + $0x28] sm:$0xff]
    %v6557 = vld [vmem:[%s8 + $0x30] sm:$0xff]
    %v6558 = vld [vmem:[%s8 + $0x38] sm:$0xff]
    %v6559 = vld [vmem:[%s8 + $0x40] sm:$0xff]
    %v6560 = vld [vmem:[%s8 + $0x48] sm:$0xff]
    %v6561 = vld [vmem:[%s8 + $0x50] sm:$0xff]
    %v6562 = vld [vmem:[%s8 + $0x58] sm:$0xff]
    %v6563 = vld [vmem:[%s8 + $0x60] sm:$0xff]
    %v6564 = vld [vmem:[%s8 + $0x68] sm:$0xff]
    %v6565 = vld [vmem:[%s8 + $0x70] sm:$0xff]
    %v6566 = vld [vmem:[%s8 + $0x78] sm:$0xff]
    %v6583 = vunpack.c.l.b16 %v6551
    %v6584 = vunpack.c.h.b16 %v6551
    %v6585 = vunpack.c.l.b16 %v6552
    %v6586 = vunpack.c.h.b16 %v6552
    %v6587 = vunpack.c.l.b16 %v6553
    %v6588 = vunpack.c.h.b16 %v6553
    %v6589 = vunpack.c.l.b16 %v6554
    %v6590 = vunpack.c.h.b16 %v6554
    %v6591 = vunpack.c.l.b16 %v6555
    %v6592 = vunpack.c.h.b16 %v6555
    %v6593 = vunpack.c.l.b16 %v6556
    %v6594 = vunpack.c.h.b16 %v6556
    %v6595 = vunpack.c.l.b16 %v6557
    %v6596 = vunpack.c.h.b16 %v6557
    %v6597 = vunpack.c.l.b16 %v6558
    %v6598 = vunpack.c.h.b16 %v6558
    %v6599 = vunpack.c.l.b16 %v6559
    %v6600 = vunpack.c.h.b16 %v6559
    %v6601 = vunpack.c.l.b16 %v6560
    %v6602 = vunpack.c.h.b16 %v6560
    %v6603 = vunpack.c.l.b16 %v6561
    %v6604 = vunpack.c.h.b16 %v6561
    %v6605 = vunpack.c.l.b16 %v6562
    %v6606 = vunpack.c.h.b16 %v6562
    %v6607 = vunpack.c.l.b16 %v6563
    %v6608 = vunpack.c.h.b16 %v6563
    %v6609 = vunpack.c.l.b16 %v6564
    %v6610 = vunpack.c.h.b16 %v6564
    %v6611 = vunpack.c.l.b16 %v6565
    %v6612 = vunpack.c.h.b16 %v6565
    %v6613 = vunpack.c.l.b16 %v6566
    %v6614 = vunpack.c.h.b16 %v6566
    %v6615 = vpack.c.b16 %v6585, %v6583
    %v6616 = vpack.c.b16 %v6586, %v6584
    %v6617 = vpack.c.b16 %v6589, %v6587
    %v6618 = vpack.c.b16 %v6590, %v6588
    %v6619 = vpack.c.b16 %v6593, %v6591
    %v6620 = vpack.c.b16 %v6594, %v6592
    %v6621 = vpack.c.b16 %v6597, %v6595
    %v6622 = vpack.c.b16 %v6598, %v6596
    %v6623 = vpack.c.b16 %v6601, %v6599
    %v6624 = vpack.c.b16 %v6602, %v6600
    %v6625 = vpack.c.b16 %v6605, %v6603
    %v6626 = vpack.c.b16 %v6606, %v6604
    %v6627 = vpack.c.b16 %v6609, %v6607
    %v6628 = vpack.c.b16 %v6610, %v6608
    %v6629 = vpack.c.b16 %v6613, %v6611
    %v6630 = vpack.c.b16 %v6614, %v6612
    %6647 = vmatprep.subr.bf16.mxu0 %v6616
    %6648 = vmatpush1.bf16.msra.mxu0 %v6615
    %6649 = vmatprep.subr.bf16.mxu0 %v6618
    %6650 = vmatpush1.bf16.msra.mxu0 %v6617
    %6651 = vmatprep.subr.bf16.mxu0 %v6620
    %6652 = vmatpush1.bf16.msra.mxu0 %v6619
    %6653 = vmatprep.subr.bf16.mxu0 %v6622
    %6654 = vmatpush1.bf16.msra.mxu0 %v6621
    %6655 = vmatprep.subr.bf16.mxu0 %v6624
    %6656 = vmatpush1.bf16.msra.mxu0 %v6623
    %6657 = vmatprep.subr.bf16.mxu0 %v6626
    %6658 = vmatpush1.bf16.msra.mxu0 %v6625
    %6659 = vmatprep.subr.bf16.mxu0 %v6628
    %6660 = vmatpush1.bf16.msra.mxu0 %v6627
    %6661 = vmatprep.subr.bf16.mxu0 %v6630
    %6662 = vmatpush1.bf16.msra.mxu0 %v6629
    %6663 = vmatprep.subr.bf16.mxu0 0
    %6664 = vmatpush1.bf16.msra.mxu0 0
    %6665 = vmatprep.subr.bf16.mxu0 0
    %6666 = vmatpush1.bf16.msra.mxu0 0
    %6667 = vmatprep.subr.bf16.mxu0 0
    %6668 = vmatpush1.bf16.msra.mxu0 0
    %6669 = vmatprep.subr.bf16.mxu0 0
    %6670 = vmatpush1.bf16.msra.mxu0 0
    %6671 = vmatprep.subr.bf16.mxu0 0
    %6672 = vmatpush1.bf16.msra.mxu0 0
    %6673 = vmatprep.subr.bf16.mxu0 0
    %6674 = vmatpush1.bf16.msra.mxu0 0
    %6675 = vmatprep.subr.bf16.mxu0 0
    %6676 = vmatpush1.bf16.msra.mxu0 0
    %6677 = vmatprep.subr.bf16.mxu0 0
    %6678 = vmatpush1.bf16.msra.mxu0 0
    %6679 = vmatprep.mubr.bf16.mxu0 0
    %6680 = vmatmul.mubr.bf16.gmra.mrb[0].mxu0 %v6423
    %v6681 = vpop.f32.mrb[0].mxu0
    %v6682 = vadd.f32 0.0, %v6681
    %v6683 = vpop.f32.mrb[0].mxu0
    %v6684 = vadd.f32 0.0, %v6683
    %v6685 = vpop.f32.mrb[0].mxu0
    %v6686 = vadd.f32 0.0, %v6685
    %v6687 = vpop.f32.mrb[0].mxu0
    %v6688 = vadd.f32 0.0, %v6687
    %6689 = vmatprep.mubr.bf16.mxu0 0
    %6690 = vmatmul.mubr.bf16.gmra.mrb[0].mxu0 %v6424
    %v6691 = vpop.f32.mrb[0].mxu0
    %v6692 = vadd.f32 0.0, %v6691
    %v6693 = vpop.f32.mrb[0].mxu0
    %v6694 = vadd.f32 0.0, %v6693
    %v6695 = vpop.f32.mrb[0].mxu0
    %v6696 = vadd.f32 0.0, %v6695
    %v6697 = vpop.f32.mrb[0].mxu0
    %v6698 = vadd.f32 0.0, %v6697
    %6699 = vmatprep.mubr.bf16.mxu0 0
    %6700 = vmatmul.mubr.bf16.gmra.mrb[0].mxu0 %v6425
    %v6701 = vpop.f32.mrb[0].mxu0
    %v6702 = vadd.f32 0.0, %v6701
    %v6703 = vpop.f32.mrb[0].mxu0
    %v6704 = vadd.f32 0.0, %v6703
    %v6705 = vpop.f32.mrb[0].mxu0
    %v6706 = vadd.f32 0.0, %v6705
    %v6707 = vpop.f32.mrb[0].mxu0
    %v6708 = vadd.f32 0.0, %v6707
    %6709 = vmatprep.mubr.bf16.mxu0 0
    %6710 = vmatmul.mubr.bf16.gmra.mrb[0].mxu0 %v6426
    %v6711 = vpop.f32.mrb[0].mxu0
    %v6712 = vadd.f32 0.0, %v6711
    %v6713 = vpop.f32.mrb[0].mxu0
    %v6714 = vadd.f32 0.0, %v6713
    %v6715 = vpop.f32.mrb[0].mxu0
    %v6716 = vadd.f32 0.0, %v6715
    %v6717 = vpop.f32.mrb[0].mxu0
    %v6718 = vadd.f32 0.0, %v6717
    %6719 = vmatprep.mubr.bf16.mxu0 0
    %6720 = vmatmul.mubr.bf16.gmra.mrb[0].mxu0 %v6427
    %v6721 = vpop.f32.mrb[0].mxu0
    %v6722 = vadd.f32 0.0, %v6721
    %v6723 = vpop.f32.mrb[0].mxu0
    %v6724 = vadd.f32 0.0, %v6723
    %v6725 = vpop.f32.mrb[0].mxu0
    %v6726 = vadd.f32 0.0, %v6725
    %v6727 = vpop.f32.mrb[0].mxu0
    %v6728 = vadd.f32 0.0, %v6727
    %6729 = vmatprep.mubr.bf16.mxu0 0
    %6730 = vmatmul.mubr.bf16.gmra.mrb[0].mxu0 %v6428
    %v6731 = vpop.f32.mrb[0].mxu0
    %v6732 = vadd.f32 0.0, %v6731
    %v6733 = vpop.f32.mrb[0].mxu0
    %v6734 = vadd.f32 0.0, %v6733
    %v6735 = vpop.f32.mrb[0].mxu0
    %v6736 = vadd.f32 0.0, %v6735
    %v6737 = vpop.f32.mrb[0].mxu0
    %v6738 = vadd.f32 0.0, %v6737
    %6739 = vmatprep.mubr.bf16.mxu0 0
    %6740 = vmatmul.mubr.bf16.gmra.mrb[0].mxu0 %v6429
    %v6741 = vpop.f32.mrb[0].mxu0
    %v6742 = vadd.f32 0.0, %v6741
    %v6743 = vpop.f32.mrb[0].mxu0
    %v6744 = vadd.f32 0.0, %v6743
    %v6745 = vpop.f32.mrb[0].mxu0
    %v6746 = vadd.f32 0.0, %v6745
    %v6747 = vpop.f32.mrb[0].mxu0
    %v6748 = vadd.f32 0.0, %v6747
    %6749 = vmatprep.mubr.bf16.mxu0 0
    %6750 = vmatmul.mubr.bf16.gmra.mrb[0].mxu0 %v6430
    %v6751 = vpop.f32.mrb[0].mxu0
    %v6752 = vadd.f32 0.0, %v6751
    %v6753 = vpop.f32.mrb[0].mxu0
    %v6754 = vadd.f32 0.0, %v6753
    %v6755 = vpop.f32.mrb[0].mxu0
    %v6756 = vadd.f32 0.0, %v6755
    %v6757 = vpop.f32.mrb[0].mxu0
    %v6758 = vadd.f32 0.0, %v6757
    %6759 = vmatprep.mubr.bf16.mxu0 0
    %6760 = vmatmul.mubr.bf16.gmra.mrb[0].mxu0 %v6431
    %v6761 = vpop.f32.mrb[0].mxu0
    %v6762 = vadd.f32 0.0, %v6761
    %v6763 = vpop.f32.mrb[0].mxu0
    %v6764 = vadd.f32 0.0, %v6763
    %v6765 = vpop.f32.mrb[0].mxu0
    %v6766 = vadd.f32 0.0, %v6765
    %v6767 = vpop.f32.mrb[0].mxu0
    %v6768 = vadd.f32 0.0, %v6767
    %6769 = vmatprep.mubr.bf16.mxu0 0
    %6770 = vmatmul.mubr.bf16.gmra.mrb[0].mxu0 %v6432
    %v6771 = vpop.f32.mrb[0].mxu0
    %v6772 = vadd.f32 0.0, %v6771
    %v6773 = vpop.f32.mrb[0].mxu0
    %v6774 = vadd.f32 0.0, %v6773
    %v6775 = vpop.f32.mrb[0].mxu0
    %v6776 = vadd.f32 0.0, %v6775
    %v6777 = vpop.f32.mrb[0].mxu0
    %v6778 = vadd.f32 0.0, %v6777
    %6779 = vmatprep.mubr.bf16.mxu0 0
    %6780 = vmatmul.mubr.bf16.gmra.mrb[0].mxu0 %v6433
    %v6781 = vpop.f32.mrb[0].mxu0
    %v6782 = vadd.f32 0.0, %v6781
    %v6783 = vpop.f32.mrb[0].mxu0
    %v6784 = vadd.f32 0.0, %v6783
    %v6785 = vpop.f32.mrb[0].mxu0
    %v6786 = vadd.f32 0.0, %v6785
    %v6787 = vpop.f32.mrb[0].mxu0
    %v6788 = vadd.f32 0.0, %v6787
    %6789 = vmatprep.mubr.bf16.mxu0 0
    %6790 = vmatmul.mubr.bf16.gmra.mrb[0].mxu0 %v6434
    %v6791 = vpop.f32.mrb[0].mxu0
    %v6792 = vadd.f32 0.0, %v6791
    %v6793 = vpop.f32.mrb[0].mxu0
    %v6794 = vadd.f32 0.0, %v6793
    %v6795 = vpop.f32.mrb[0].mxu0
    %v6796 = vadd.f32 0.0, %v6795
    %v6797 = vpop.f32.mrb[0].mxu0
    %v6798 = vadd.f32 0.0, %v6797
    %6799 = vmatprep.mubr.bf16.mxu0 0
    %6800 = vmatmul.mubr.bf16.gmra.mrb[0].mxu0 %v6435
    %v6801 = vpop.f32.mrb[0].mxu0
    %v6802 = vadd.f32 0.0, %v6801
    %v6803 = vpop.f32.mrb[0].mxu0
    %v6804 = vadd.f32 0.0, %v6803
    %v6805 = vpop.f32.mrb[0].mxu0
    %v6806 = vadd.f32 0.0, %v6805
    %v6807 = vpop.f32.mrb[0].mxu0
    %v6808 = vadd.f32 0.0, %v6807
    %6809 = vmatprep.mubr.bf16.mxu0 0
    %6810 = vmatmul.mubr.bf16.gmra.mrb[0].mxu0 %v6436
    %v6811 = vpop.f32.mrb[0].mxu0
    %v6812 = vadd.f32 0.0, %v6811
    %v6813 = vpop.f32.mrb[0].mxu0
    %v6814 = vadd.f32 0.0, %v6813
    %v6815 = vpop.f32.mrb[0].mxu0
    %v6816 = vadd.f32 0.0, %v6815
    %v6817 = vpop.f32.mrb[0].mxu0
    %v6818 = vadd.f32 0.0, %v6817
    %6819 = vmatprep.mubr.bf16.mxu0 0
    %6820 = vmatmul.mubr.bf16.gmra.mrb[0].mxu0 %v6437
    %v6821 = vpop.f32.mrb[0].mxu0
    %v6822 = vadd.f32 0.0, %v6821
    %v6823 = vpop.f32.mrb[0].mxu0
    %v6824 = vadd.f32 0.0, %v6823
    %v6825 = vpop.f32.mrb[0].mxu0
    %v6826 = vadd.f32 0.0, %v6825
    %v6827 = vpop.f32.mrb[0].mxu0
    %v6828 = vadd.f32 0.0, %v6827
    %6829 = vmatprep.mubr.bf16.mxu0 0
    %6830 = vmatmul.mubr.bf16.gmra.mrb[0].mxu0 %v6438
    %v6831 = vpop.f32.mrb[0].mxu0
    %v6832 = vadd.f32 0.0, %v6831
    %v6833 = vpop.f32.mrb[0].mxu0
    %v6834 = vadd.f32 0.0, %v6833
    %v6835 = vpop.f32.mrb[0].mxu0
    %v6836 = vadd.f32 0.0, %v6835
    %v6837 = vpop.f32.mrb[0].mxu0
    %v6838 = vadd.f32 0.0, %v6837
    %6839 = vmatprep.mubr.bf16.mxu0 0
    %6840 = vmatmul.mubr.bf16.gmra.mrb[0].mxu0 %v6439
    %v6841 = vpop.f32.mrb[0].mxu0
    %v6842 = vadd.f32 0.0, %v6841
    %v6843 = vpop.f32.mrb[0].mxu0
    %v6844 = vadd.f32 0.0, %v6843
    %v6845 = vpop.f32.mrb[0].mxu0
    %v6846 = vadd.f32 0.0, %v6845
    %v6847 = vpop.f32.mrb[0].mxu0
    %v6848 = vadd.f32 0.0, %v6847
    %6849 = vmatprep.mubr.bf16.mxu0 0
    %6850 = vmatmul.mubr.bf16.gmra.mrb[0].mxu0 %v6440
    %v6851 = vpop.f32.mrb[0].mxu0
    %v6852 = vadd.f32 0.0, %v6851
    %v6853 = vpop.f32.mrb[0].mxu0
    %v6854 = vadd.f32 0.0, %v6853
    %v6855 = vpop.f32.mrb[0].mxu0
    %v6856 = vadd.f32 0.0, %v6855
    %v6857 = vpop.f32.mrb[0].mxu0
    %v6858 = vadd.f32 0.0, %v6857
    %6859 = vmatprep.mubr.bf16.mxu0 0
    %6860 = vmatmul.mubr.bf16.gmra.mrb[0].mxu0 %v6441
    %v6861 = vpop.f32.mrb[0].mxu0
    %v6862 = vadd.f32 0.0, %v6861
    %v6863 = vpop.f32.mrb[0].mxu0
    %v6864 = vadd.f32 0.0, %v6863
    %v6865 = vpop.f32.mrb[0].mxu0
    %v6866 = vadd.f32 0.0, %v6865
    %v6867 = vpop.f32.mrb[0].mxu0
    %v6868 = vadd.f32 0.0, %v6867
    %6869 = vmatprep.mubr.bf16.mxu0 0
    %6870 = vmatmul.mubr.bf16.gmra.mrb[0].mxu0 %v6442
    %v6871 = vpop.f32.mrb[0].mxu0
    %v6872 = vadd.f32 0.0, %v6871
    %v6873 = vpop.f32.mrb[0].mxu0
    %v6874 = vadd.f32 0.0, %v6873
    %v6875 = vpop.f32.mrb[0].mxu0
    %v6876 = vadd.f32 0.0, %v6875
    %v6877 = vpop.f32.mrb[0].mxu0
    %v6878 = vadd.f32 0.0, %v6877
    %6879 = vmatprep.mubr.bf16.mxu0 0
    %6880 = vmatmul.mubr.bf16.gmra.mrb[0].mxu0 %v6443
    %v6881 = vpop.f32.mrb[0].mxu0
    %v6882 = vadd.f32 0.0, %v6881
    %v6883 = vpop.f32.mrb[0].mxu0
    %v6884 = vadd.f32 0.0, %v6883
    %v6885 = vpop.f32.mrb[0].mxu0
    %v6886 = vadd.f32 0.0, %v6885
    %v6887 = vpop.f32.mrb[0].mxu0
    %v6888 = vadd.f32 0.0, %v6887
    %6889 = vmatprep.mubr.bf16.mxu0 0
    %6890 = vmatmul.mubr.bf16.gmra.mrb[0].mxu0 %v6444
    %v6891 = vpop.f32.mrb[0].mxu0
    %v6892 = vadd.f32 0.0, %v6891
    %v6893 = vpop.f32.mrb[0].mxu0
    %v6894 = vadd.f32 0.0, %v6893
    %v6895 = vpop.f32.mrb[0].mxu0
    %v6896 = vadd.f32 0.0, %v6895
    %v6897 = vpop.f32.mrb[0].mxu0
    %v6898 = vadd.f32 0.0, %v6897
    %6899 = vmatprep.mubr.bf16.mxu0 0
    %6900 = vmatmul.mubr.bf16.gmra.mrb[0].mxu0 %v6445
    %v6901 = vpop.f32.mrb[0].mxu0
    %v6902 = vadd.f32 0.0, %v6901
    %v6903 = vpop.f32.mrb[0].mxu0
    %v6904 = vadd.f32 0.0, %v6903
    %v6905 = vpop.f32.mrb[0].mxu0
    %v6906 = vadd.f32 0.0, %v6905
    %v6907 = vpop.f32.mrb[0].mxu0
    %v6908 = vadd.f32 0.0, %v6907
    %6909 = vmatprep.mubr.bf16.mxu0 0
    %6910 = vmatmul.mubr.bf16.gmra.mrb[0].mxu0 %v6446
    %v6911 = vpop.f32.mrb[0].mxu0
    %v6912 = vadd.f32 0.0, %v6911
    %v6913 = vpop.f32.mrb[0].mxu0
    %v6914 = vadd.f32 0.0, %v6913
    %v6915 = vpop.f32.mrb[0].mxu0
    %v6916 = vadd.f32 0.0, %v6915
    %v6917 = vpop.f32.mrb[0].mxu0
    %v6918 = vadd.f32 0.0, %v6917
    %6919 = vmatprep.mubr.bf16.mxu0 0
    %6920 = vmatmul.mubr.bf16.gmra.mrb[0].mxu0 %v6447
    %v6921 = vpop.f32.mrb[0].mxu0
    %v6922 = vadd.f32 0.0, %v6921
    %v6923 = vpop.f32.mrb[0].mxu0
    %v6924 = vadd.f32 0.0, %v6923
    %v6925 = vpop.f32.mrb[0].mxu0
    %v6926 = vadd.f32 0.0, %v6925
    %v6927 = vpop.f32.mrb[0].mxu0
    %v6928 = vadd.f32 0.0, %v6927
    %6929 = vmatprep.mubr.bf16.mxu0 0
    %6930 = vmatmul.mubr.bf16.gmra.mrb[0].mxu0 %v6448
    %v6931 = vpop.f32.mrb[0].mxu0
    %v6932 = vadd.f32 0.0, %v6931
    %v6933 = vpop.f32.mrb[0].mxu0
    %v6934 = vadd.f32 0.0, %v6933
    %v6935 = vpop.f32.mrb[0].mxu0
    %v6936 = vadd.f32 0.0, %v6935
    %v6937 = vpop.f32.mrb[0].mxu0
    %v6938 = vadd.f32 0.0, %v6937
    %6939 = vmatprep.mubr.bf16.mxu0 0
    %6940 = vmatmul.mubr.bf16.gmra.mrb[0].mxu0 %v6449
    %v6941 = vpop.f32.mrb[0].mxu0
    %v6942 = vadd.f32 0.0, %v6941
    %v6943 = vpop.f32.mrb[0].mxu0
    %v6944 = vadd.f32 0.0, %v6943
    %v6945 = vpop.f32.mrb[0].mxu0
    %v6946 = vadd.f32 0.0, %v6945
    %v6947 = vpop.f32.mrb[0].mxu0
    %v6948 = vadd.f32 0.0, %v6947
    %6949 = vmatprep.mubr.bf16.mxu0 0
    %6950 = vmatmul.mubr.bf16.gmra.mrb[0].mxu0 %v6450
    %v6951 = vpop.f32.mrb[0].mxu0
    %v6952 = vadd.f32 0.0, %v6951
    %v6953 = vpop.f32.mrb[0].mxu0
    %v6954 = vadd.f32 0.0, %v6953
    %v6955 = vpop.f32.mrb[0].mxu0
    %v6956 = vadd.f32 0.0, %v6955
    %v6957 = vpop.f32.mrb[0].mxu0
    %v6958 = vadd.f32 0.0, %v6957
    %6959 = vmatprep.mubr.bf16.mxu0 0
    %6960 = vmatmul.mubr.bf16.gmra.mrb[0].mxu0 %v6451
    %v6961 = vpop.f32.mrb[0].mxu0
    %v6962 = vadd.f32 0.0, %v6961
    %v6963 = vpop.f32.mrb[0].mxu0
    %v6964 = vadd.f32 0.0, %v6963
    %v6965 = vpop.f32.mrb[0].mxu0
    %v6966 = vadd.f32 0.0, %v6965
    %v6967 = vpop.f32.mrb[0].mxu0
    %v6968 = vadd.f32 0.0, %v6967
    %6969 = vmatprep.mubr.bf16.mxu0 0
    %6970 = vmatmul.mubr.bf16.gmra.mrb[0].mxu0 %v6452
    %v6971 = vpop.f32.mrb[0].mxu0
    %v6972 = vadd.f32 0.0, %v6971
    %v6973 = vpop.f32.mrb[0].mxu0
    %v6974 = vadd.f32 0.0, %v6973
    %v6975 = vpop.f32.mrb[0].mxu0
    %v6976 = vadd.f32 0.0, %v6975
    %v6977 = vpop.f32.mrb[0].mxu0
    %v6978 = vadd.f32 0.0, %v6977
    %6979 = vmatprep.mubr.bf16.mxu0 0
    %6980 = vmatmul.mubr.bf16.gmra.mrb[0].mxu0 %v6453
    %v6981 = vpop.f32.mrb[0].mxu0
    %v6982 = vadd.f32 0.0, %v6981
    %v6983 = vpop.f32.mrb[0].mxu0
    %v6984 = vadd.f32 0.0, %v6983
    %v6985 = vpop.f32.mrb[0].mxu0
    %v6986 = vadd.f32 0.0, %v6985
    %v6987 = vpop.f32.mrb[0].mxu0
    %v6988 = vadd.f32 0.0, %v6987
    %6989 = vmatprep.mubr.bf16.mxu0 0
    %6990 = vmatmul.mubr.bf16.gmra.mrb[0].mxu0 %v6454
    %v6991 = vpop.f32.mrb[0].mxu0
    %v6992 = vadd.f32 0.0, %v6991
    %v6993 = vpop.f32.mrb[0].mxu0
    %v6994 = vadd.f32 0.0, %v6993
    %v6995 = vpop.f32.mrb[0].mxu0
    %v6996 = vadd.f32 0.0, %v6995
    %v6997 = vpop.f32.mrb[0].mxu0
    %v6998 = vadd.f32 0.0, %v6997
    %6999 = vmatprep.mubr.bf16.mxu0 0
    %7000 = vmatmul.mubr.bf16.gmra.mrb[0].mxu0 %v6455
    %v7001 = vpop.f32.mrb[0].mxu0
    %v7002 = vadd.f32 0.0, %v7001
    %v7003 = vpop.f32.mrb[0].mxu0
    %v7004 = vadd.f32 0.0, %v7003
    %v7005 = vpop.f32.mrb[0].mxu0
    %v7006 = vadd.f32 0.0, %v7005
    %v7007 = vpop.f32.mrb[0].mxu0
    %v7008 = vadd.f32 0.0, %v7007
    %7009 = vmatprep.mubr.bf16.mxu0 0
    %7010 = vmatmul.mubr.bf16.gmra.mrb[0].mxu0 %v6456
    %v7011 = vpop.f32.mrb[0].mxu0
    %v7012 = vadd.f32 0.0, %v7011
    %v7013 = vpop.f32.mrb[0].mxu0
    %v7014 = vadd.f32 0.0, %v7013
    %v7015 = vpop.f32.mrb[0].mxu0
    %v7016 = vadd.f32 0.0, %v7015
    %v7017 = vpop.f32.mrb[0].mxu0
    %v7018 = vadd.f32 0.0, %v7017
    %7019 = vmatprep.mubr.bf16.mxu0 0
    %7020 = vmatmul.mubr.bf16.gmra.mrb[0].mxu0 %v6457
    %v7021 = vpop.f32.mrb[0].mxu0
    %v7022 = vadd.f32 0.0, %v7021
    %v7023 = vpop.f32.mrb[0].mxu0
    %v7024 = vadd.f32 0.0, %v7023
    %v7025 = vpop.f32.mrb[0].mxu0
    %v7026 = vadd.f32 0.0, %v7025
    %v7027 = vpop.f32.mrb[0].mxu0
    %v7028 = vadd.f32 0.0, %v7027
    %7029 = vmatprep.mubr.bf16.mxu0 0
    %7030 = vmatmul.mubr.bf16.gmra.mrb[0].mxu0 %v6458
    %v7031 = vpop.f32.mrb[0].mxu0
    %v7032 = vadd.f32 0.0, %v7031
    %v7033 = vpop.f32.mrb[0].mxu0
    %v7034 = vadd.f32 0.0, %v7033
    %v7035 = vpop.f32.mrb[0].mxu0
    %v7036 = vadd.f32 0.0, %v7035
    %v7037 = vpop.f32.mrb[0].mxu0
    %v7038 = vadd.f32 0.0, %v7037
    %7039 = vmatprep.mubr.bf16.mxu0 0
    %7040 = vmatmul.mubr.bf16.gmra.mrb[0].mxu0 %v6459
    %v7041 = vpop.f32.mrb[0].mxu0
    %v7042 = vadd.f32 0.0, %v7041
    %v7043 = vpop.f32.mrb[0].mxu0
    %v7044 = vadd.f32 0.0, %v7043
    %v7045 = vpop.f32.mrb[0].mxu0
    %v7046 = vadd.f32 0.0, %v7045
    %v7047 = vpop.f32.mrb[0].mxu0
    %v7048 = vadd.f32 0.0, %v7047
    %7049 = vmatprep.mubr.bf16.mxu0 0
    %7050 = vmatmul.mubr.bf16.gmra.mrb[0].mxu0 %v6460
    %v7051 = vpop.f32.mrb[0].mxu0
    %v7052 = vadd.f32 0.0, %v7051
    %v7053 = vpop.f32.mrb[0].mxu0
    %v7054 = vadd.f32 0.0, %v7053
    %v7055 = vpop.f32.mrb[0].mxu0
    %v7056 = vadd.f32 0.0, %v7055
    %v7057 = vpop.f32.mrb[0].mxu0
    %v7058 = vadd.f32 0.0, %v7057
    %7059 = vmatprep.mubr.bf16.mxu0 0
    %7060 = vmatmul.mubr.bf16.gmra.mrb[0].mxu0 %v6461
    %v7061 = vpop.f32.mrb[0].mxu0
    %v7062 = vadd.f32 0.0, %v7061
    %v7063 = vpop.f32.mrb[0].mxu0
    %v7064 = vadd.f32 0.0, %v7063
    %v7065 = vpop.f32.mrb[0].mxu0
    %v7066 = vadd.f32 0.0, %v7065
    %v7067 = vpop.f32.mrb[0].mxu0
    %v7068 = vadd.f32 0.0, %v7067
    %7069 = vmatprep.mubr.bf16.mxu0 0
    %7070 = vmatmul.mubr.bf16.gmra.mrb[0].mxu0 %v6462
    %v7071 = vpop.f32.mrb[0].mxu0
    %v7072 = vadd.f32 0.0, %v7071
    %v7073 = vpop.f32.mrb[0].mxu0
    %v7074 = vadd.f32 0.0, %v7073
    %v7075 = vpop.f32.mrb[0].mxu0
    %v7076 = vadd.f32 0.0, %v7075
    %v7077 = vpop.f32.mrb[0].mxu0
    %v7078 = vadd.f32 0.0, %v7077
    %7079 = vmatprep.mubr.bf16.mxu0 0
    %7080 = vmatmul.mubr.bf16.gmra.mrb[0].mxu0 %v6463
    %v7081 = vpop.f32.mrb[0].mxu0
    %v7082 = vadd.f32 0.0, %v7081
    %v7083 = vpop.f32.mrb[0].mxu0
    %v7084 = vadd.f32 0.0, %v7083
    %v7085 = vpop.f32.mrb[0].mxu0
    %v7086 = vadd.f32 0.0, %v7085
    %v7087 = vpop.f32.mrb[0].mxu0
    %v7088 = vadd.f32 0.0, %v7087
    %7089 = vmatprep.mubr.bf16.mxu0 0
    %7090 = vmatmul.mubr.bf16.gmra.mrb[0].mxu0 %v6464
    %v7091 = vpop.f32.mrb[0].mxu0
    %v7092 = vadd.f32 0.0, %v7091
    %v7093 = vpop.f32.mrb[0].mxu0
    %v7094 = vadd.f32 0.0, %v7093
    %v7095 = vpop.f32.mrb[0].mxu0
    %v7096 = vadd.f32 0.0, %v7095
    %v7097 = vpop.f32.mrb[0].mxu0
    %v7098 = vadd.f32 0.0, %v7097
    %7099 = vmatprep.mubr.bf16.mxu0 0
    %7100 = vmatmul.mubr.bf16.gmra.mrb[0].mxu0 %v6465
    %v7101 = vpop.f32.mrb[0].mxu0
    %v7102 = vadd.f32 0.0, %v7101
    %v7103 = vpop.f32.mrb[0].mxu0
    %v7104 = vadd.f32 0.0, %v7103
    %v7105 = vpop.f32.mrb[0].mxu0
    %v7106 = vadd.f32 0.0, %v7105
    %v7107 = vpop.f32.mrb[0].mxu0
    %v7108 = vadd.f32 0.0, %v7107
    %7109 = vmatprep.mubr.bf16.mxu0 0
    %7110 = vmatmul.mubr.bf16.gmra.mrb[0].mxu0 %v6466
    %v7111 = vpop.f32.mrb[0].mxu0
    %v7112 = vadd.f32 0.0, %v7111
    %v7113 = vpop.f32.mrb[0].mxu0
    %v7114 = vadd.f32 0.0, %v7113
    %v7115 = vpop.f32.mrb[0].mxu0
    %v7116 = vadd.f32 0.0, %v7115
    %v7117 = vpop.f32.mrb[0].mxu0
    %v7118 = vadd.f32 0.0, %v7117
    %7119 = vmatprep.mubr.bf16.mxu0 0
    %7120 = vmatmul.mubr.bf16.gmra.mrb[0].mxu0 %v6467
    %v7121 = vpop.f32.mrb[0].mxu0
    %v7122 = vadd.f32 0.0, %v7121
    %v7123 = vpop.f32.mrb[0].mxu0
    %v7124 = vadd.f32 0.0, %v7123
    %v7125 = vpop.f32.mrb[0].mxu0
    %v7126 = vadd.f32 0.0, %v7125
    %v7127 = vpop.f32.mrb[0].mxu0
    %v7128 = vadd.f32 0.0, %v7127
    %7129 = vmatprep.mubr.bf16.mxu0 0
    %7130 = vmatmul.mubr.bf16.gmra.mrb[0].mxu0 %v6468
    %v7131 = vpop.f32.mrb[0].mxu0
    %v7132 = vadd.f32 0.0, %v7131
    %v7133 = vpop.f32.mrb[0].mxu0
    %v7134 = vadd.f32 0.0, %v7133
    %v7135 = vpop.f32.mrb[0].mxu0
    %v7136 = vadd.f32 0.0, %v7135
    %v7137 = vpop.f32.mrb[0].mxu0
    %v7138 = vadd.f32 0.0, %v7137
    %7139 = vmatprep.mubr.bf16.mxu0 0
    %7140 = vmatmul.mubr.bf16.gmra.mrb[0].mxu0 %v6469
    %v7141 = vpop.f32.mrb[0].mxu0
    %v7142 = vadd.f32 0.0, %v7141
    %v7143 = vpop.f32.mrb[0].mxu0
    %v7144 = vadd.f32 0.0, %v7143
    %v7145 = vpop.f32.mrb[0].mxu0
    %v7146 = vadd.f32 0.0, %v7145
    %v7147 = vpop.f32.mrb[0].mxu0
    %v7148 = vadd.f32 0.0, %v7147
    %7149 = vmatprep.mubr.bf16.mxu0 0
    %7150 = vmatmul.mubr.bf16.gmra.mrb[0].mxu0 %v6470
    %v7151 = vpop.f32.mrb[0].mxu0
    %v7152 = vadd.f32 0.0, %v7151
    %v7153 = vpop.f32.mrb[0].mxu0
    %v7154 = vadd.f32 0.0, %v7153
    %v7155 = vpop.f32.mrb[0].mxu0
    %v7156 = vadd.f32 0.0, %v7155
    %v7157 = vpop.f32.mrb[0].mxu0
    %v7158 = vadd.f32 0.0, %v7157
    %7159 = vmatprep.mubr.bf16.mxu0 0
    %7160 = vmatmul.mubr.bf16.gmra.mrb[0].mxu0 %v6471
    %v7161 = vpop.f32.mrb[0].mxu0
    %v7162 = vadd.f32 0.0, %v7161
    %v7163 = vpop.f32.mrb[0].mxu0
    %v7164 = vadd.f32 0.0, %v7163
    %v7165 = vpop.f32.mrb[0].mxu0
    %v7166 = vadd.f32 0.0, %v7165
    %v7167 = vpop.f32.mrb[0].mxu0
    %v7168 = vadd.f32 0.0, %v7167
    %7169 = vmatprep.mubr.bf16.mxu0 0
    %7170 = vmatmul.mubr.bf16.gmra.mrb[0].mxu0 %v6472
    %v7171 = vpop.f32.mrb[0].mxu0
    %v7172 = vadd.f32 0.0, %v7171
    %v7173 = vpop.f32.mrb[0].mxu0
    %v7174 = vadd.f32 0.0, %v7173
    %v7175 = vpop.f32.mrb[0].mxu0
    %v7176 = vadd.f32 0.0, %v7175
    %v7177 = vpop.f32.mrb[0].mxu0
    %v7178 = vadd.f32 0.0, %v7177
    %7179 = vmatprep.mubr.bf16.mxu0 0
    %7180 = vmatmul.mubr.bf16.gmra.mrb[0].mxu0 %v6473
    %v7181 = vpop.f32.mrb[0].mxu0
    %v7182 = vadd.f32 0.0, %v7181
    %v7183 = vpop.f32.mrb[0].mxu0
    %v7184 = vadd.f32 0.0, %v7183
    %v7185 = vpop.f32.mrb[0].mxu0
    %v7186 = vadd.f32 0.0, %v7185
    %v7187 = vpop.f32.mrb[0].mxu0
    %v7188 = vadd.f32 0.0, %v7187
    %7189 = vmatprep.mubr.bf16.mxu0 0
    %7190 = vmatmul.mubr.bf16.gmra.mrb[0].mxu0 %v6474
    %v7191 = vpop.f32.mrb[0].mxu0
    %v7192 = vadd.f32 0.0, %v7191
    %v7193 = vpop.f32.mrb[0].mxu0
    %v7194 = vadd.f32 0.0, %v7193
    %v7195 = vpop.f32.mrb[0].mxu0
    %v7196 = vadd.f32 0.0, %v7195
    %v7197 = vpop.f32.mrb[0].mxu0
    %v7198 = vadd.f32 0.0, %v7197
    %7199 = vmatprep.mubr.bf16.mxu0 0
    %7200 = vmatmul.mubr.bf16.gmra.mrb[0].mxu0 %v6475
    %v7201 = vpop.f32.mrb[0].mxu0
    %v7202 = vadd.f32 0.0, %v7201
    %v7203 = vpop.f32.mrb[0].mxu0
    %v7204 = vadd.f32 0.0, %v7203
    %v7205 = vpop.f32.mrb[0].mxu0
    %v7206 = vadd.f32 0.0, %v7205
    %v7207 = vpop.f32.mrb[0].mxu0
    %v7208 = vadd.f32 0.0, %v7207
    %7209 = vmatprep.mubr.bf16.mxu0 0
    %7210 = vmatmul.mubr.bf16.gmra.mrb[0].mxu0 %v6476
    %v7211 = vpop.f32.mrb[0].mxu0
    %v7212 = vadd.f32 0.0, %v7211
    %v7213 = vpop.f32.mrb[0].mxu0
    %v7214 = vadd.f32 0.0, %v7213
    %v7215 = vpop.f32.mrb[0].mxu0
    %v7216 = vadd.f32 0.0, %v7215
    %v7217 = vpop.f32.mrb[0].mxu0
    %v7218 = vadd.f32 0.0, %v7217
    %7219 = vmatprep.mubr.bf16.mxu0 0
    %7220 = vmatmul.mubr.bf16.gmra.mrb[0].mxu0 %v6477
    %v7221 = vpop.f32.mrb[0].mxu0
    %v7222 = vadd.f32 0.0, %v7221
    %v7223 = vpop.f32.mrb[0].mxu0
    %v7224 = vadd.f32 0.0, %v7223
    %v7225 = vpop.f32.mrb[0].mxu0
    %v7226 = vadd.f32 0.0, %v7225
    %v7227 = vpop.f32.mrb[0].mxu0
    %v7228 = vadd.f32 0.0, %v7227
    %7229 = vmatprep.mubr.bf16.mxu0 0
    %7230 = vmatmul.mubr.bf16.gmra.mrb[0].mxu0 %v6478
    %v7231 = vpop.f32.mrb[0].mxu0
    %v7232 = vadd.f32 0.0, %v7231
    %v7233 = vpop.f32.mrb[0].mxu0
    %v7234 = vadd.f32 0.0, %v7233
    %v7235 = vpop.f32.mrb[0].mxu0
    %v7236 = vadd.f32 0.0, %v7235
    %v7237 = vpop.f32.mrb[0].mxu0
    %v7238 = vadd.f32 0.0, %v7237
    %7239 = vmatprep.mubr.bf16.mxu0 0
    %7240 = vmatmul.mubr.bf16.gmra.mrb[0].mxu0 %v6479
    %v7241 = vpop.f32.mrb[0].mxu0
    %v7242 = vadd.f32 0.0, %v7241
    %v7243 = vpop.f32.mrb[0].mxu0
    %v7244 = vadd.f32 0.0, %v7243
    %v7245 = vpop.f32.mrb[0].mxu0
    %v7246 = vadd.f32 0.0, %v7245
    %v7247 = vpop.f32.mrb[0].mxu0
    %v7248 = vadd.f32 0.0, %v7247
    %7249 = vmatprep.mubr.bf16.mxu0 0
    %7250 = vmatmul.mubr.bf16.gmra.mrb[0].mxu0 %v6480
    %v7251 = vpop.f32.mrb[0].mxu0
    %v7252 = vadd.f32 0.0, %v7251
    %v7253 = vpop.f32.mrb[0].mxu0
    %v7254 = vadd.f32 0.0, %v7253
    %v7255 = vpop.f32.mrb[0].mxu0
    %v7256 = vadd.f32 0.0, %v7255
    %v7257 = vpop.f32.mrb[0].mxu0
    %v7258 = vadd.f32 0.0, %v7257
    %7259 = vmatprep.mubr.bf16.mxu0 0
    %7260 = vmatmul.mubr.bf16.gmra.mrb[0].mxu0 %v6481
    %v7261 = vpop.f32.mrb[0].mxu0
    %v7262 = vadd.f32 0.0, %v7261
    %v7263 = vpop.f32.mrb[0].mxu0
    %v7264 = vadd.f32 0.0, %v7263
    %v7265 = vpop.f32.mrb[0].mxu0
    %v7266 = vadd.f32 0.0, %v7265
    %v7267 = vpop.f32.mrb[0].mxu0
    %v7268 = vadd.f32 0.0, %v7267
    %7269 = vmatprep.mubr.bf16.mxu0 0
    %7270 = vmatmul.mubr.bf16.gmra.mrb[0].mxu0 %v6482
    %v7271 = vpop.f32.mrb[0].mxu0
    %v7272 = vadd.f32 0.0, %v7271
    %v7273 = vpop.f32.mrb[0].mxu0
    %v7274 = vadd.f32 0.0, %v7273
    %v7275 = vpop.f32.mrb[0].mxu0
    %v7276 = vadd.f32 0.0, %v7275
    %v7277 = vpop.f32.mrb[0].mxu0
    %v7278 = vadd.f32 0.0, %v7277
    %7279 = vmatprep.mubr.bf16.mxu0 0
    %7280 = vmatmul.mubr.bf16.gmra.mrb[0].mxu0 %v6483
    %v7281 = vpop.f32.mrb[0].mxu0
    %v7282 = vadd.f32 0.0, %v7281
    %v7283 = vpop.f32.mrb[0].mxu0
    %v7284 = vadd.f32 0.0, %v7283
    %v7285 = vpop.f32.mrb[0].mxu0
    %v7286 = vadd.f32 0.0, %v7285
    %v7287 = vpop.f32.mrb[0].mxu0
    %v7288 = vadd.f32 0.0, %v7287
    %7289 = vmatprep.mubr.bf16.mxu0 0
    %7290 = vmatmul.mubr.bf16.gmra.mrb[0].mxu0 %v6484
    %v7291 = vpop.f32.mrb[0].mxu0
    %v7292 = vadd.f32 0.0, %v7291
    %v7293 = vpop.f32.mrb[0].mxu0
    %v7294 = vadd.f32 0.0, %v7293
    %v7295 = vpop.f32.mrb[0].mxu0
    %v7296 = vadd.f32 0.0, %v7295
    %v7297 = vpop.f32.mrb[0].mxu0
    %v7298 = vadd.f32 0.0, %v7297
    %7299 = vmatprep.mubr.bf16.mxu0 0
    %7300 = vmatmul.mubr.bf16.gmra.mrb[0].mxu0 %v6485
    %v7301 = vpop.f32.mrb[0].mxu0
    %v7302 = vadd.f32 0.0, %v7301
    %v7303 = vpop.f32.mrb[0].mxu0
    %v7304 = vadd.f32 0.0, %v7303
    %v7305 = vpop.f32.mrb[0].mxu0
    %v7306 = vadd.f32 0.0, %v7305
    %v7307 = vpop.f32.mrb[0].mxu0
    %v7308 = vadd.f32 0.0, %v7307
    %7309 = vmatprep.mubr.bf16.mxu0 0
    %7310 = vmatmul.mubr.bf16.gmra.mrb[0].mxu0 %v6486
    %v7311 = vpop.f32.mrb[0].mxu0
    %v7312 = vadd.f32 0.0, %v7311
    %v7313 = vpop.f32.mrb[0].mxu0
    %v7314 = vadd.f32 0.0, %v7313
    %v7315 = vpop.f32.mrb[0].mxu0
    %v7316 = vadd.f32 0.0, %v7315
    %v7317 = vpop.f32.mrb[0].mxu0
    %v7318 = vadd.f32 0.0, %v7317
    %7319 = vmatprep.mubr.bf16.mxu0 0
    %7320 = vmatmul.mubr.bf16.gmra.mrb[0].mxu0 %v6487
    %v7321 = vpop.f32.mrb[0].mxu0
    %v7322 = vadd.f32 0.0, %v7321
    %v7323 = vpop.f32.mrb[0].mxu0
    %v7324 = vadd.f32 0.0, %v7323
    %v7325 = vpop.f32.mrb[0].mxu0
    %v7326 = vadd.f32 0.0, %v7325
    %v7327 = vpop.f32.mrb[0].mxu0
    %v7328 = vadd.f32 0.0, %v7327
    %7329 = vmatprep.mubr.bf16.mxu0 0
    %7330 = vmatmul.mubr.bf16.gmra.mrb[0].mxu0 %v6488
    %v7331 = vpop.f32.mrb[0].mxu0
    %v7332 = vadd.f32 0.0, %v7331
    %v7333 = vpop.f32.mrb[0].mxu0
    %v7334 = vadd.f32 0.0, %v7333
    %v7335 = vpop.f32.mrb[0].mxu0
    %v7336 = vadd.f32 0.0, %v7335
    %v7337 = vpop.f32.mrb[0].mxu0
    %v7338 = vadd.f32 0.0, %v7337
    %7339 = vmatprep.mubr.bf16.mxu0 0
    %7340 = vmatmul.mubr.bf16.gmra.mrb[0].mxu0 %v6489
    %v7341 = vpop.f32.mrb[0].mxu0
    %v7342 = vadd.f32 0.0, %v7341
    %v7343 = vpop.f32.mrb[0].mxu0
    %v7344 = vadd.f32 0.0, %v7343
    %v7345 = vpop.f32.mrb[0].mxu0
    %v7346 = vadd.f32 0.0, %v7345
    %v7347 = vpop.f32.mrb[0].mxu0
    %v7348 = vadd.f32 0.0, %v7347
    %7349 = vmatprep.mubr.bf16.mxu0 0
    %7350 = vmatmul.mubr.bf16.gmra.mrb[0].mxu0 %v6490
    %v7351 = vpop.f32.mrb[0].mxu0
    %v7352 = vadd.f32 0.0, %v7351
    %v7353 = vpop.f32.mrb[0].mxu0
    %v7354 = vadd.f32 0.0, %v7353
    %v7355 = vpop.f32.mrb[0].mxu0
    %v7356 = vadd.f32 0.0, %v7355
    %v7357 = vpop.f32.mrb[0].mxu0
    %v7358 = vadd.f32 0.0, %v7357
    %7359 = vmatprep.mubr.bf16.mxu0 0
    %7360 = vmatmul.mubr.bf16.gmra.mrb[0].mxu0 %v6491
    %v7361 = vpop.f32.mrb[0].mxu0
    %v7362 = vadd.f32 0.0, %v7361
    %v7363 = vpop.f32.mrb[0].mxu0
    %v7364 = vadd.f32 0.0, %v7363
    %v7365 = vpop.f32.mrb[0].mxu0
    %v7366 = vadd.f32 0.0, %v7365
    %v7367 = vpop.f32.mrb[0].mxu0
    %v7368 = vadd.f32 0.0, %v7367
    %7369 = vmatprep.mubr.bf16.mxu0 0
    %7370 = vmatmul.mubr.bf16.gmra.mrb[0].mxu0 %v6492
    %v7371 = vpop.f32.mrb[0].mxu0
    %v7372 = vadd.f32 0.0, %v7371
    %v7373 = vpop.f32.mrb[0].mxu0
    %v7374 = vadd.f32 0.0, %v7373
    %v7375 = vpop.f32.mrb[0].mxu0
    %v7376 = vadd.f32 0.0, %v7375
    %v7377 = vpop.f32.mrb[0].mxu0
    %v7378 = vadd.f32 0.0, %v7377
    %7379 = vmatprep.mubr.bf16.mxu0 0
    %7380 = vmatmul.mubr.bf16.gmra.mrb[0].mxu0 %v6493
    %v7381 = vpop.f32.mrb[0].mxu0
    %v7382 = vadd.f32 0.0, %v7381
    %v7383 = vpop.f32.mrb[0].mxu0
    %v7384 = vadd.f32 0.0, %v7383
    %v7385 = vpop.f32.mrb[0].mxu0
    %v7386 = vadd.f32 0.0, %v7385
    %v7387 = vpop.f32.mrb[0].mxu0
    %v7388 = vadd.f32 0.0, %v7387
    %7389 = vmatprep.mubr.bf16.mxu0 0
    %7390 = vmatmul.mubr.bf16.gmra.mrb[0].mxu0 %v6494
    %v7391 = vpop.f32.mrb[0].mxu0
    %v7392 = vadd.f32 0.0, %v7391
    %v7393 = vpop.f32.mrb[0].mxu0
    %v7394 = vadd.f32 0.0, %v7393
    %v7395 = vpop.f32.mrb[0].mxu0
    %v7396 = vadd.f32 0.0, %v7395
    %v7397 = vpop.f32.mrb[0].mxu0
    %v7398 = vadd.f32 0.0, %v7397
    %7399 = vmatprep.mubr.bf16.mxu0 0
    %7400 = vmatmul.mubr.bf16.gmra.mrb[0].mxu0 %v6495
    %v7401 = vpop.f32.mrb[0].mxu0
    %v7402 = vadd.f32 0.0, %v7401
    %v7403 = vpop.f32.mrb[0].mxu0
    %v7404 = vadd.f32 0.0, %v7403
    %v7405 = vpop.f32.mrb[0].mxu0
    %v7406 = vadd.f32 0.0, %v7405
    %v7407 = vpop.f32.mrb[0].mxu0
    %v7408 = vadd.f32 0.0, %v7407
    %7409 = vmatprep.mubr.bf16.mxu0 0
    %7410 = vmatmul.mubr.bf16.gmra.mrb[0].mxu0 %v6496
    %v7411 = vpop.f32.mrb[0].mxu0
    %v7412 = vadd.f32 0.0, %v7411
    %v7413 = vpop.f32.mrb[0].mxu0
    %v7414 = vadd.f32 0.0, %v7413
    %v7415 = vpop.f32.mrb[0].mxu0
    %v7416 = vadd.f32 0.0, %v7415
    %v7417 = vpop.f32.mrb[0].mxu0
    %v7418 = vadd.f32 0.0, %v7417
    %7419 = vmatprep.mubr.bf16.mxu0 0
    %7420 = vmatmul.mubr.bf16.gmra.mrb[0].mxu0 %v6497
    %v7421 = vpop.f32.mrb[0].mxu0
    %v7422 = vadd.f32 0.0, %v7421
    %v7423 = vpop.f32.mrb[0].mxu0
    %v7424 = vadd.f32 0.0, %v7423
    %v7425 = vpop.f32.mrb[0].mxu0
    %v7426 = vadd.f32 0.0, %v7425
    %v7427 = vpop.f32.mrb[0].mxu0
    %v7428 = vadd.f32 0.0, %v7427
    %7429 = vmatprep.mubr.bf16.mxu0 0
    %7430 = vmatmul.mubr.bf16.gmra.mrb[0].mxu0 %v6498
    %v7431 = vpop.f32.mrb[0].mxu0
    %v7432 = vadd.f32 0.0, %v7431
    %v7433 = vpop.f32.mrb[0].mxu0
    %v7434 = vadd.f32 0.0, %v7433
    %v7435 = vpop.f32.mrb[0].mxu0
    %v7436 = vadd.f32 0.0, %v7435
    %v7437 = vpop.f32.mrb[0].mxu0
    %v7438 = vadd.f32 0.0, %v7437
    %7439 = vmatprep.mubr.bf16.mxu0 0
    %7440 = vmatmul.mubr.bf16.gmra.mrb[0].mxu0 %v6499
    %v7441 = vpop.f32.mrb[0].mxu0
    %v7442 = vadd.f32 0.0, %v7441
    %v7443 = vpop.f32.mrb[0].mxu0
    %v7444 = vadd.f32 0.0, %v7443
    %v7445 = vpop.f32.mrb[0].mxu0
    %v7446 = vadd.f32 0.0, %v7445
    %v7447 = vpop.f32.mrb[0].mxu0
    %v7448 = vadd.f32 0.0, %v7447
    %7449 = vmatprep.mubr.bf16.mxu0 0
    %7450 = vmatmul.mubr.bf16.gmra.mrb[0].mxu0 %v6500
    %v7451 = vpop.f32.mrb[0].mxu0
    %v7452 = vadd.f32 0.0, %v7451
    %v7453 = vpop.f32.mrb[0].mxu0
    %v7454 = vadd.f32 0.0, %v7453
    %v7455 = vpop.f32.mrb[0].mxu0
    %v7456 = vadd.f32 0.0, %v7455
    %v7457 = vpop.f32.mrb[0].mxu0
    %v7458 = vadd.f32 0.0, %v7457
    %7459 = vmatprep.mubr.bf16.mxu0 0
    %7460 = vmatmul.mubr.bf16.gmra.mrb[0].mxu0 %v6501
    %v7461 = vpop.f32.mrb[0].mxu0
    %v7462 = vadd.f32 0.0, %v7461
    %v7463 = vpop.f32.mrb[0].mxu0
    %v7464 = vadd.f32 0.0, %v7463
    %v7465 = vpop.f32.mrb[0].mxu0
    %v7466 = vadd.f32 0.0, %v7465
    %v7467 = vpop.f32.mrb[0].mxu0
    %v7468 = vadd.f32 0.0, %v7467
    %7469 = vmatprep.mubr.bf16.mxu0 0
    %7470 = vmatmul.mubr.bf16.gmra.mrb[0].mxu0 %v6502
    %v7471 = vpop.f32.mrb[0].mxu0
    %v7472 = vadd.f32 0.0, %v7471
    %v7473 = vpop.f32.mrb[0].mxu0
    %v7474 = vadd.f32 0.0, %v7473
    %v7475 = vpop.f32.mrb[0].mxu0
    %v7476 = vadd.f32 0.0, %v7475
    %v7477 = vpop.f32.mrb[0].mxu0
    %v7478 = vadd.f32 0.0, %v7477
    %7479 = vmatprep.mubr.bf16.mxu0 0
    %7480 = vmatmul.mubr.bf16.gmra.mrb[0].mxu0 %v6503
    %v7481 = vpop.f32.mrb[0].mxu0
    %v7482 = vadd.f32 0.0, %v7481
    %v7483 = vpop.f32.mrb[0].mxu0
    %v7484 = vadd.f32 0.0, %v7483
    %v7485 = vpop.f32.mrb[0].mxu0
    %v7486 = vadd.f32 0.0, %v7485
    %v7487 = vpop.f32.mrb[0].mxu0
    %v7488 = vadd.f32 0.0, %v7487
    %7489 = vmatprep.mubr.bf16.mxu0 0
    %7490 = vmatmul.mubr.bf16.gmra.mrb[0].mxu0 %v6504
    %v7491 = vpop.f32.mrb[0].mxu0
    %v7492 = vadd.f32 0.0, %v7491
    %v7493 = vpop.f32.mrb[0].mxu0
    %v7494 = vadd.f32 0.0, %v7493
    %v7495 = vpop.f32.mrb[0].mxu0
    %v7496 = vadd.f32 0.0, %v7495
    %v7497 = vpop.f32.mrb[0].mxu0
    %v7498 = vadd.f32 0.0, %v7497
    %7499 = vmatprep.mubr.bf16.mxu0 0
    %7500 = vmatmul.mubr.bf16.gmra.mrb[0].mxu0 %v6505
    %v7501 = vpop.f32.mrb[0].mxu0
    %v7502 = vadd.f32 0.0, %v7501
    %v7503 = vpop.f32.mrb[0].mxu0
    %v7504 = vadd.f32 0.0, %v7503
    %v7505 = vpop.f32.mrb[0].mxu0
    %v7506 = vadd.f32 0.0, %v7505
    %v7507 = vpop.f32.mrb[0].mxu0
    %v7508 = vadd.f32 0.0, %v7507
    %7509 = vmatprep.mubr.bf16.mxu0 0
    %7510 = vmatmul.mubr.bf16.gmra.mrb[0].mxu0 %v6506
    %v7511 = vpop.f32.mrb[0].mxu0
    %v7512 = vadd.f32 0.0, %v7511
    %v7513 = vpop.f32.mrb[0].mxu0
    %v7514 = vadd.f32 0.0, %v7513
    %v7515 = vpop.f32.mrb[0].mxu0
    %v7516 = vadd.f32 0.0, %v7515
    %v7517 = vpop.f32.mrb[0].mxu0
    %v7518 = vadd.f32 0.0, %v7517
    %7519 = vmatprep.mubr.bf16.mxu0 0
    %7520 = vmatmul.mubr.bf16.gmra.mrb[0].mxu0 %v6507
    %v7521 = vpop.f32.mrb[0].mxu0
    %v7522 = vadd.f32 0.0, %v7521
    %v7523 = vpop.f32.mrb[0].mxu0
    %v7524 = vadd.f32 0.0, %v7523
    %v7525 = vpop.f32.mrb[0].mxu0
    %v7526 = vadd.f32 0.0, %v7525
    %v7527 = vpop.f32.mrb[0].mxu0
    %v7528 = vadd.f32 0.0, %v7527
    %7529 = vmatprep.mubr.bf16.mxu0 0
    %7530 = vmatmul.mubr.bf16.gmra.mrb[0].mxu0 %v6508
    %v7531 = vpop.f32.mrb[0].mxu0
    %v7532 = vadd.f32 0.0, %v7531
    %v7533 = vpop.f32.mrb[0].mxu0
    %v7534 = vadd.f32 0.0, %v7533
    %v7535 = vpop.f32.mrb[0].mxu0
    %v7536 = vadd.f32 0.0, %v7535
    %v7537 = vpop.f32.mrb[0].mxu0
    %v7538 = vadd.f32 0.0, %v7537
    %7539 = vmatprep.mubr.bf16.mxu0 0
    %7540 = vmatmul.mubr.bf16.gmra.mrb[0].mxu0 %v6509
    %v7541 = vpop.f32.mrb[0].mxu0
    %v7542 = vadd.f32 0.0, %v7541
    %v7543 = vpop.f32.mrb[0].mxu0
    %v7544 = vadd.f32 0.0, %v7543
    %v7545 = vpop.f32.mrb[0].mxu0
    %v7546 = vadd.f32 0.0, %v7545
    %v7547 = vpop.f32.mrb[0].mxu0
    %v7548 = vadd.f32 0.0, %v7547
    %7549 = vmatprep.mubr.bf16.mxu0 0
    %7550 = vmatmul.mubr.bf16.gmra.mrb[0].mxu0 %v6510
    %v7551 = vpop.f32.mrb[0].mxu0
    %v7552 = vadd.f32 0.0, %v7551
    %v7553 = vpop.f32.mrb[0].mxu0
    %v7554 = vadd.f32 0.0, %v7553
    %v7555 = vpop.f32.mrb[0].mxu0
    %v7556 = vadd.f32 0.0, %v7555
    %v7557 = vpop.f32.mrb[0].mxu0
    %v7558 = vadd.f32 0.0, %v7557
    %7559 = vmatprep.mubr.bf16.mxu0 0
    %7560 = vmatmul.mubr.bf16.gmra.mrb[0].mxu0 %v6511
    %v7561 = vpop.f32.mrb[0].mxu0
    %v7562 = vadd.f32 0.0, %v7561
    %v7563 = vpop.f32.mrb[0].mxu0
    %v7564 = vadd.f32 0.0, %v7563
    %v7565 = vpop.f32.mrb[0].mxu0
    %v7566 = vadd.f32 0.0, %v7565
    %v7567 = vpop.f32.mrb[0].mxu0
    %v7568 = vadd.f32 0.0, %v7567
    %7569 = vmatprep.mubr.bf16.mxu0 0
    %7570 = vmatmul.mubr.bf16.gmra.mrb[0].mxu0 %v6512
    %v7571 = vpop.f32.mrb[0].mxu0
    %v7572 = vadd.f32 0.0, %v7571
    %v7573 = vpop.f32.mrb[0].mxu0
    %v7574 = vadd.f32 0.0, %v7573
    %v7575 = vpop.f32.mrb[0].mxu0
    %v7576 = vadd.f32 0.0, %v7575
    %v7577 = vpop.f32.mrb[0].mxu0
    %v7578 = vadd.f32 0.0, %v7577
    %7579 = vmatprep.mubr.bf16.mxu0 0
    %7580 = vmatmul.mubr.bf16.gmra.mrb[0].mxu0 %v6513
    %v7581 = vpop.f32.mrb[0].mxu0
    %v7582 = vadd.f32 0.0, %v7581
    %v7583 = vpop.f32.mrb[0].mxu0
    %v7584 = vadd.f32 0.0, %v7583
    %v7585 = vpop.f32.mrb[0].mxu0
    %v7586 = vadd.f32 0.0, %v7585
    %v7587 = vpop.f32.mrb[0].mxu0
    %v7588 = vadd.f32 0.0, %v7587
    %7589 = vmatprep.mubr.bf16.mxu0 0
    %7590 = vmatmul.mubr.bf16.gmra.mrb[0].mxu0 %v6514
    %v7591 = vpop.f32.mrb[0].mxu0
    %v7592 = vadd.f32 0.0, %v7591
    %v7593 = vpop.f32.mrb[0].mxu0
    %v7594 = vadd.f32 0.0, %v7593
    %v7595 = vpop.f32.mrb[0].mxu0
    %v7596 = vadd.f32 0.0, %v7595
    %v7597 = vpop.f32.mrb[0].mxu0
    %v7598 = vadd.f32 0.0, %v7597
    %7599 = vmatprep.mubr.bf16.mxu0 0
    %7600 = vmatmul.mubr.bf16.gmra.mrb[0].mxu0 %v6515
    %v7601 = vpop.f32.mrb[0].mxu0
    %v7602 = vadd.f32 0.0, %v7601
    %v7603 = vpop.f32.mrb[0].mxu0
    %v7604 = vadd.f32 0.0, %v7603
    %v7605 = vpop.f32.mrb[0].mxu0
    %v7606 = vadd.f32 0.0, %v7605
    %v7607 = vpop.f32.mrb[0].mxu0
    %v7608 = vadd.f32 0.0, %v7607
    %7609 = vmatprep.mubr.bf16.mxu0 0
    %7610 = vmatmul.mubr.bf16.gmra.mrb[0].mxu0 %v6516
    %v7611 = vpop.f32.mrb[0].mxu0
    %v7612 = vadd.f32 0.0, %v7611
    %v7613 = vpop.f32.mrb[0].mxu0
    %v7614 = vadd.f32 0.0, %v7613
    %v7615 = vpop.f32.mrb[0].mxu0
    %v7616 = vadd.f32 0.0, %v7615
    %v7617 = vpop.f32.mrb[0].mxu0
    %v7618 = vadd.f32 0.0, %v7617
    %7619 = vmatprep.mubr.bf16.mxu0 0
    %7620 = vmatmul.mubr.bf16.gmra.mrb[0].mxu0 %v6517
    %v7621 = vpop.f32.mrb[0].mxu0
    %v7622 = vadd.f32 0.0, %v7621
    %v7623 = vpop.f32.mrb[0].mxu0
    %v7624 = vadd.f32 0.0, %v7623
    %v7625 = vpop.f32.mrb[0].mxu0
    %v7626 = vadd.f32 0.0, %v7625
    %v7627 = vpop.f32.mrb[0].mxu0
    %v7628 = vadd.f32 0.0, %v7627
    %7629 = vmatprep.mubr.bf16.mxu0 0
    %7630 = vmatmul.mubr.bf16.gmra.mrb[0].mxu0 %v6518
    %v7631 = vpop.f32.mrb[0].mxu0
    %v7632 = vadd.f32 0.0, %v7631
    %v7633 = vpop.f32.mrb[0].mxu0
    %v7634 = vadd.f32 0.0, %v7633
    %v7635 = vpop.f32.mrb[0].mxu0
    %v7636 = vadd.f32 0.0, %v7635
    %v7637 = vpop.f32.mrb[0].mxu0
    %v7638 = vadd.f32 0.0, %v7637
    %7639 = vmatprep.mubr.bf16.mxu0 0
    %7640 = vmatmul.mubr.bf16.gmra.mrb[0].mxu0 %v6519
    %v7641 = vpop.f32.mrb[0].mxu0
    %v7642 = vadd.f32 0.0, %v7641
    %v7643 = vpop.f32.mrb[0].mxu0
    %v7644 = vadd.f32 0.0, %v7643
    %v7645 = vpop.f32.mrb[0].mxu0
    %v7646 = vadd.f32 0.0, %v7645
    %v7647 = vpop.f32.mrb[0].mxu0
    %v7648 = vadd.f32 0.0, %v7647
    %7649 = vmatprep.mubr.bf16.mxu0 0
    %7650 = vmatmul.mubr.bf16.gmra.mrb[0].mxu0 %v6520
    %v7651 = vpop.f32.mrb[0].mxu0
    %v7652 = vadd.f32 0.0, %v7651
    %v7653 = vpop.f32.mrb[0].mxu0
    %v7654 = vadd.f32 0.0, %v7653
    %v7655 = vpop.f32.mrb[0].mxu0
    %v7656 = vadd.f32 0.0, %v7655
    %v7657 = vpop.f32.mrb[0].mxu0
    %v7658 = vadd.f32 0.0, %v7657
    %7659 = vmatprep.mubr.bf16.mxu0 0
    %7660 = vmatmul.mubr.bf16.gmra.mrb[0].mxu0 %v6521
    %v7661 = vpop.f32.mrb[0].mxu0
    %v7662 = vadd.f32 0.0, %v7661
    %v7663 = vpop.f32.mrb[0].mxu0
    %v7664 = vadd.f32 0.0, %v7663
    %v7665 = vpop.f32.mrb[0].mxu0
    %v7666 = vadd.f32 0.0, %v7665
    %v7667 = vpop.f32.mrb[0].mxu0
    %v7668 = vadd.f32 0.0, %v7667
    %7669 = vmatprep.mubr.bf16.mxu0 0
    %7670 = vmatmul.mubr.bf16.gmra.mrb[0].mxu0 %v6522
    %v7671 = vpop.f32.mrb[0].mxu0
    %v7672 = vadd.f32 0.0, %v7671
    %v7673 = vpop.f32.mrb[0].mxu0
    %v7674 = vadd.f32 0.0, %v7673
    %v7675 = vpop.f32.mrb[0].mxu0
    %v7676 = vadd.f32 0.0, %v7675
    %v7677 = vpop.f32.mrb[0].mxu0
    %v7678 = vadd.f32 0.0, %v7677
    %7679 = vmatprep.mubr.bf16.mxu0 0
    %7680 = vmatmul.mubr.bf16.gmra.mrb[0].mxu0 %v6523
    %v7681 = vpop.f32.mrb[0].mxu0
    %v7682 = vadd.f32 0.0, %v7681
    %v7683 = vpop.f32.mrb[0].mxu0
    %v7684 = vadd.f32 0.0, %v7683
    %v7685 = vpop.f32.mrb[0].mxu0
    %v7686 = vadd.f32 0.0, %v7685
    %v7687 = vpop.f32.mrb[0].mxu0
    %v7688 = vadd.f32 0.0, %v7687
    %7689 = vmatprep.mubr.bf16.mxu0 0
    %7690 = vmatmul.mubr.bf16.gmra.mrb[0].mxu0 %v6524
    %v7691 = vpop.f32.mrb[0].mxu0
    %v7692 = vadd.f32 0.0, %v7691
    %v7693 = vpop.f32.mrb[0].mxu0
    %v7694 = vadd.f32 0.0, %v7693
    %v7695 = vpop.f32.mrb[0].mxu0
    %v7696 = vadd.f32 0.0, %v7695
    %v7697 = vpop.f32.mrb[0].mxu0
    %v7698 = vadd.f32 0.0, %v7697
    %7699 = vmatprep.mubr.bf16.mxu0 0
    %7700 = vmatmul.mubr.bf16.gmra.mrb[0].mxu0 %v6525
    %v7701 = vpop.f32.mrb[0].mxu0
    %v7702 = vadd.f32 0.0, %v7701
    %v7703 = vpop.f32.mrb[0].mxu0
    %v7704 = vadd.f32 0.0, %v7703
    %v7705 = vpop.f32.mrb[0].mxu0
    %v7706 = vadd.f32 0.0, %v7705
    %v7707 = vpop.f32.mrb[0].mxu0
    %v7708 = vadd.f32 0.0, %v7707
    %7709 = vmatprep.mubr.bf16.mxu0 0
    %7710 = vmatmul.mubr.bf16.gmra.mrb[0].mxu0 %v6526
    %v7711 = vpop.f32.mrb[0].mxu0
    %v7712 = vadd.f32 0.0, %v7711
    %v7713 = vpop.f32.mrb[0].mxu0
    %v7714 = vadd.f32 0.0, %v7713
    %v7715 = vpop.f32.mrb[0].mxu0
    %v7716 = vadd.f32 0.0, %v7715
    %v7717 = vpop.f32.mrb[0].mxu0
    %v7718 = vadd.f32 0.0, %v7717
    %7719 = vmatprep.mubr.bf16.mxu0 0
    %7720 = vmatmul.mubr.bf16.gmra.mrb[0].mxu0 %v6527
    %v7721 = vpop.f32.mrb[0].mxu0
    %v7722 = vadd.f32 0.0, %v7721
    %v7723 = vpop.f32.mrb[0].mxu0
    %v7724 = vadd.f32 0.0, %v7723
    %v7725 = vpop.f32.mrb[0].mxu0
    %v7726 = vadd.f32 0.0, %v7725
    %v7727 = vpop.f32.mrb[0].mxu0
    %v7728 = vadd.f32 0.0, %v7727
    %7729 = vmatprep.mubr.bf16.mxu0 0
    %7730 = vmatmul.mubr.bf16.gmra.mrb[0].mxu0 %v6528
    %v7731 = vpop.f32.mrb[0].mxu0
    %v7732 = vadd.f32 0.0, %v7731
    %v7733 = vpop.f32.mrb[0].mxu0
    %v7734 = vadd.f32 0.0, %v7733
    %v7735 = vpop.f32.mrb[0].mxu0
    %v7736 = vadd.f32 0.0, %v7735
    %v7737 = vpop.f32.mrb[0].mxu0
    %v7738 = vadd.f32 0.0, %v7737
    %7739 = vmatprep.mubr.bf16.mxu0 0
    %7740 = vmatmul.mubr.bf16.gmra.mrb[0].mxu0 %v6529
    %v7741 = vpop.f32.mrb[0].mxu0
    %v7742 = vadd.f32 0.0, %v7741
    %v7743 = vpop.f32.mrb[0].mxu0
    %v7744 = vadd.f32 0.0, %v7743
    %v7745 = vpop.f32.mrb[0].mxu0
    %v7746 = vadd.f32 0.0, %v7745
    %v7747 = vpop.f32.mrb[0].mxu0
    %v7748 = vadd.f32 0.0, %v7747
    %7749 = vmatprep.mubr.bf16.mxu0 0
    %7750 = vmatmul.mubr.bf16.gmra.mrb[0].mxu0 %v6530
    %v7751 = vpop.f32.mrb[0].mxu0
    %v7752 = vadd.f32 0.0, %v7751
    %v7753 = vpop.f32.mrb[0].mxu0
    %v7754 = vadd.f32 0.0, %v7753
    %v7755 = vpop.f32.mrb[0].mxu0
    %v7756 = vadd.f32 0.0, %v7755
    %v7757 = vpop.f32.mrb[0].mxu0
    %v7758 = vadd.f32 0.0, %v7757
    %7759 = vmatprep.mubr.bf16.mxu0 0
    %7760 = vmatmul.mubr.bf16.gmra.mrb[0].mxu0 %v6531
    %v7761 = vpop.f32.mrb[0].mxu0
    %v7762 = vadd.f32 0.0, %v7761
    %v7763 = vpop.f32.mrb[0].mxu0
    %v7764 = vadd.f32 0.0, %v7763
    %v7765 = vpop.f32.mrb[0].mxu0
    %v7766 = vadd.f32 0.0, %v7765
    %v7767 = vpop.f32.mrb[0].mxu0
    %v7768 = vadd.f32 0.0, %v7767
    %7769 = vmatprep.mubr.bf16.mxu0 0
    %7770 = vmatmul.mubr.bf16.gmra.mrb[0].mxu0 %v6532
    %v7771 = vpop.f32.mrb[0].mxu0
    %v7772 = vadd.f32 0.0, %v7771
    %v7773 = vpop.f32.mrb[0].mxu0
    %v7774 = vadd.f32 0.0, %v7773
    %v7775 = vpop.f32.mrb[0].mxu0
    %v7776 = vadd.f32 0.0, %v7775
    %v7777 = vpop.f32.mrb[0].mxu0
    %v7778 = vadd.f32 0.0, %v7777
    %7779 = vmatprep.mubr.bf16.mxu0 0
    %7780 = vmatmul.mubr.bf16.gmra.mrb[0].mxu0 %v6533
    %v7781 = vpop.f32.mrb[0].mxu0
    %v7782 = vadd.f32 0.0, %v7781
    %v7783 = vpop.f32.mrb[0].mxu0
    %v7784 = vadd.f32 0.0, %v7783
    %v7785 = vpop.f32.mrb[0].mxu0
    %v7786 = vadd.f32 0.0, %v7785
    %v7787 = vpop.f32.mrb[0].mxu0
    %v7788 = vadd.f32 0.0, %v7787
    %7789 = vmatprep.mubr.bf16.mxu0 0
    %7790 = vmatmul.mubr.bf16.gmra.mrb[0].mxu0 %v6534
    %v7791 = vpop.f32.mrb[0].mxu0
    %v7792 = vadd.f32 0.0, %v7791
    %v7793 = vpop.f32.mrb[0].mxu0
    %v7794 = vadd.f32 0.0, %v7793
    %v7795 = vpop.f32.mrb[0].mxu0
    %v7796 = vadd.f32 0.0, %v7795
    %v7797 = vpop.f32.mrb[0].mxu0
    %v7798 = vadd.f32 0.0, %v7797
    %7799 = vmatprep.mubr.bf16.mxu0 0
    %7800 = vmatmul.mubr.bf16.gmra.mrb[0].mxu0 %v6535
    %v7801 = vpop.f32.mrb[0].mxu0
    %v7802 = vadd.f32 0.0, %v7801
    %v7803 = vpop.f32.mrb[0].mxu0
    %v7804 = vadd.f32 0.0, %v7803
    %v7805 = vpop.f32.mrb[0].mxu0
    %v7806 = vadd.f32 0.0, %v7805
    %v7807 = vpop.f32.mrb[0].mxu0
    %v7808 = vadd.f32 0.0, %v7807
    %7809 = vmatprep.mubr.bf16.mxu0 0
    %7810 = vmatmul.mubr.bf16.gmra.mrb[0].mxu0 %v6536
    %v7811 = vpop.f32.mrb[0].mxu0
    %v7812 = vadd.f32 0.0, %v7811
    %v7813 = vpop.f32.mrb[0].mxu0
    %v7814 = vadd.f32 0.0, %v7813
    %v7815 = vpop.f32.mrb[0].mxu0
    %v7816 = vadd.f32 0.0, %v7815
    %v7817 = vpop.f32.mrb[0].mxu0
    %v7818 = vadd.f32 0.0, %v7817
    %7819 = vmatprep.mubr.bf16.mxu0 0
    %7820 = vmatmul.mubr.bf16.gmra.mrb[0].mxu0 %v6537
    %v7821 = vpop.f32.mrb[0].mxu0
    %v7822 = vadd.f32 0.0, %v7821
    %v7823 = vpop.f32.mrb[0].mxu0
    %v7824 = vadd.f32 0.0, %v7823
    %v7825 = vpop.f32.mrb[0].mxu0
    %v7826 = vadd.f32 0.0, %v7825
    %v7827 = vpop.f32.mrb[0].mxu0
    %v7828 = vadd.f32 0.0, %v7827
    %7829 = vmatprep.mubr.bf16.mxu0 0
    %7830 = vmatmul.mubr.bf16.gmra.mrb[0].mxu0 %v6538
    %v7831 = vpop.f32.mrb[0].mxu0
    %v7832 = vadd.f32 0.0, %v7831
    %v7833 = vpop.f32.mrb[0].mxu0
    %v7834 = vadd.f32 0.0, %v7833
    %v7835 = vpop.f32.mrb[0].mxu0
    %v7836 = vadd.f32 0.0, %v7835
    %v7837 = vpop.f32.mrb[0].mxu0
    %v7838 = vadd.f32 0.0, %v7837
    %7839 = vmatprep.mubr.bf16.mxu0 0
    %7840 = vmatmul.mubr.bf16.gmra.mrb[0].mxu0 %v6539
    %v7841 = vpop.f32.mrb[0].mxu0
    %v7842 = vadd.f32 0.0, %v7841
    %v7843 = vpop.f32.mrb[0].mxu0
    %v7844 = vadd.f32 0.0, %v7843
    %v7845 = vpop.f32.mrb[0].mxu0
    %v7846 = vadd.f32 0.0, %v7845
    %v7847 = vpop.f32.mrb[0].mxu0
    %v7848 = vadd.f32 0.0, %v7847
    %7849 = vmatprep.mubr.bf16.mxu0 0
    %7850 = vmatmul.mubr.bf16.gmra.mrb[0].mxu0 %v6540
    %v7851 = vpop.f32.mrb[0].mxu0
    %v7852 = vadd.f32 0.0, %v7851
    %v7853 = vpop.f32.mrb[0].mxu0
    %v7854 = vadd.f32 0.0, %v7853
    %v7855 = vpop.f32.mrb[0].mxu0
    %v7856 = vadd.f32 0.0, %v7855
    %v7857 = vpop.f32.mrb[0].mxu0
    %v7858 = vadd.f32 0.0, %v7857
    %7859 = vmatprep.mubr.bf16.mxu0 0
    %7860 = vmatmul.mubr.bf16.gmra.mrb[0].mxu0 %v6541
    %v7861 = vpop.f32.mrb[0].mxu0
    %v7862 = vadd.f32 0.0, %v7861
    %v7863 = vpop.f32.mrb[0].mxu0
    %v7864 = vadd.f32 0.0, %v7863
    %v7865 = vpop.f32.mrb[0].mxu0
    %v7866 = vadd.f32 0.0, %v7865
    %v7867 = vpop.f32.mrb[0].mxu0
    %v7868 = vadd.f32 0.0, %v7867
    %7869 = vmatprep.mubr.bf16.mxu0 0
    %7870 = vmatmul.mubr.bf16.gmra.mrb[0].mxu0 %v6542
    %v7871 = vpop.f32.mrb[0].mxu0
    %v7872 = vadd.f32 0.0, %v7871
    %v7873 = vpop.f32.mrb[0].mxu0
    %v7874 = vadd.f32 0.0, %v7873
    %v7875 = vpop.f32.mrb[0].mxu0
    %v7876 = vadd.f32 0.0, %v7875
    %v7877 = vpop.f32.mrb[0].mxu0
    %v7878 = vadd.f32 0.0, %v7877
    %7879 = vmatprep.mubr.bf16.mxu0 0
    %7880 = vmatmul.mubr.bf16.gmra.mrb[0].mxu0 %v6543
    %v7881 = vpop.f32.mrb[0].mxu0
    %v7882 = vadd.f32 0.0, %v7881
    %v7883 = vpop.f32.mrb[0].mxu0
    %v7884 = vadd.f32 0.0, %v7883
    %v7885 = vpop.f32.mrb[0].mxu0
    %v7886 = vadd.f32 0.0, %v7885
    %v7887 = vpop.f32.mrb[0].mxu0
    %v7888 = vadd.f32 0.0, %v7887
    %7889 = vmatprep.mubr.bf16.mxu0 0
    %7890 = vmatmul.mubr.bf16.gmra.mrb[0].mxu0 %v6544
    %v7891 = vpop.f32.mrb[0].mxu0
    %v7892 = vadd.f32 0.0, %v7891
    %v7893 = vpop.f32.mrb[0].mxu0
    %v7894 = vadd.f32 0.0, %v7893
    %v7895 = vpop.f32.mrb[0].mxu0
    %v7896 = vadd.f32 0.0, %v7895
    %v7897 = vpop.f32.mrb[0].mxu0
    %v7898 = vadd.f32 0.0, %v7897
    %7899 = vmatprep.mubr.bf16.mxu0 0
    %7900 = vmatmul.mubr.bf16.gmra.mrb[0].mxu0 %v6545
    %v7901 = vpop.f32.mrb[0].mxu0
    %v7902 = vadd.f32 0.0, %v7901
    %v7903 = vpop.f32.mrb[0].mxu0
    %v7904 = vadd.f32 0.0, %v7903
    %v7905 = vpop.f32.mrb[0].mxu0
    %v7906 = vadd.f32 0.0, %v7905
    %v7907 = vpop.f32.mrb[0].mxu0
    %v7908 = vadd.f32 0.0, %v7907
    %7909 = vmatprep.mubr.bf16.mxu0 0
    %7910 = vmatmul.mubr.bf16.gmra.mrb[0].mxu0 %v6546
    %v7911 = vpop.f32.mrb[0].mxu0
    %v7912 = vadd.f32 0.0, %v7911
    %v7913 = vpop.f32.mrb[0].mxu0
    %v7914 = vadd.f32 0.0, %v7913
    %v7915 = vpop.f32.mrb[0].mxu0
    %v7916 = vadd.f32 0.0, %v7915
    %v7917 = vpop.f32.mrb[0].mxu0
    %v7918 = vadd.f32 0.0, %v7917
    %7919 = vmatprep.mubr.bf16.mxu0 0
    %7920 = vmatmul.mubr.bf16.gmra.mrb[0].mxu0 %v6547
    %v7921 = vpop.f32.mrb[0].mxu0
    %v7922 = vadd.f32 0.0, %v7921
    %v7923 = vpop.f32.mrb[0].mxu0
    %v7924 = vadd.f32 0.0, %v7923
    %v7925 = vpop.f32.mrb[0].mxu0
    %v7926 = vadd.f32 0.0, %v7925
    %v7927 = vpop.f32.mrb[0].mxu0
    %v7928 = vadd.f32 0.0, %v7927
    %7929 = vmatprep.mubr.bf16.mxu0 0
    %7930 = vmatmul.mubr.bf16.gmra.mrb[0].mxu0 %v6548
    %v7931 = vpop.f32.mrb[0].mxu0
    %v7932 = vadd.f32 0.0, %v7931
    %v7933 = vpop.f32.mrb[0].mxu0
    %v7934 = vadd.f32 0.0, %v7933
    %v7935 = vpop.f32.mrb[0].mxu0
    %v7936 = vadd.f32 0.0, %v7935
    %v7937 = vpop.f32.mrb[0].mxu0
    %v7938 = vadd.f32 0.0, %v7937
    %7939 = vmatprep.mubr.bf16.mxu0 0
    %7940 = vmatmul.mubr.bf16.gmra.mrb[0].mxu0 %v6549
    %v7941 = vpop.f32.mrb[0].mxu0
    %v7942 = vadd.f32 0.0, %v7941
    %v7943 = vpop.f32.mrb[0].mxu0
    %v7944 = vadd.f32 0.0, %v7943
    %v7945 = vpop.f32.mrb[0].mxu0
    %v7946 = vadd.f32 0.0, %v7945
    %v7947 = vpop.f32.mrb[0].mxu0
    %v7948 = vadd.f32 0.0, %v7947
    %7949 = vmatprep.mubr.bf16.mxu0 0
    %7950 = vmatmul.mubr.bf16.gmra.mrb[0].mxu0 %v6550
    %v7951 = vpop.f32.mrb[0].mxu0
    %v7952 = vadd.f32 0.0, %v7951
    %v7953 = vpop.f32.mrb[0].mxu0
    %v7954 = vadd.f32 0.0, %v7953
    %v7955 = vpop.f32.mrb[0].mxu0
    %v7956 = vadd.f32 0.0, %v7955
    %v7957 = vpop.f32.mrb[0].mxu0
    %v7958 = vadd.f32 0.0, %v7957
    %7959 = vdwg.mxu0
    %v7960 = vpack.c.bf16 %v6686, %v6682
    %v7961 = vpack.c.bf16 %v6688, %v6684
    %v7962 = vpack.c.bf16 %v6696, %v6692
    %v7963 = vpack.c.bf16 %v6698, %v6694
    %v7964 = vpack.c.bf16 %v6706, %v6702
    %v7965 = vpack.c.bf16 %v6708, %v6704
    %v7966 = vpack.c.bf16 %v6716, %v6712
    %v7967 = vpack.c.bf16 %v6718, %v6714
    %v7968 = vpack.c.bf16 %v6726, %v6722
    %v7969 = vpack.c.bf16 %v6728, %v6724
    %v7970 = vpack.c.bf16 %v6736, %v6732
    %v7971 = vpack.c.bf16 %v6738, %v6734
    %v7972 = vpack.c.bf16 %v6746, %v6742
    %v7973 = vpack.c.bf16 %v6748, %v6744
    %v7974 = vpack.c.bf16 %v6756, %v6752
    %v7975 = vpack.c.bf16 %v6758, %v6754
    %v7976 = vpack.c.bf16 %v6766, %v6762
    %v7977 = vpack.c.bf16 %v6768, %v6764
    %v7978 = vpack.c.bf16 %v6776, %v6772
    %v7979 = vpack.c.bf16 %v6778, %v6774
    %v7980 = vpack.c.bf16 %v6786, %v6782
    %v7981 = vpack.c.bf16 %v6788, %v6784
    %v7982 = vpack.c.bf16 %v6796, %v6792
    %v7983 = vpack.c.bf16 %v6798, %v6794
    %v7984 = vpack.c.bf16 %v6806, %v6802
    %v7985 = vpack.c.bf16 %v6808, %v6804
    %v7986 = vpack.c.bf16 %v6816, %v6812
    %v7987 = vpack.c.bf16 %v6818, %v6814
    %v7988 = vpack.c.bf16 %v6826, %v6822
    %v7989 = vpack.c.bf16 %v6828, %v6824
    %v7990 = vpack.c.bf16 %v6836, %v6832
    %v7991 = vpack.c.bf16 %v6838, %v6834
    %v7992 = vpack.c.bf16 %v6846, %v6842
    %v7993 = vpack.c.bf16 %v6848, %v6844
    %v7994 = vpack.c.bf16 %v6856, %v6852
    %v7995 = vpack.c.bf16 %v6858, %v6854
    %v7996 = vpack.c.bf16 %v6866, %v6862
    %v7997 = vpack.c.bf16 %v6868, %v6864
    %v7998 = vpack.c.bf16 %v6876, %v6872
    %v7999 = vpack.c.bf16 %v6878, %v6874
    %v8000 = vpack.c.bf16 %v6886, %v6882
    %v8001 = vpack.c.bf16 %v6888, %v6884
    %v8002 = vpack.c.bf16 %v6896, %v6892
    %v8003 = vpack.c.bf16 %v6898, %v6894
    %v8004 = vpack.c.bf16 %v6906, %v6902
    %v8005 = vpack.c.bf16 %v6908, %v6904
    %v8006 = vpack.c.bf16 %v6916, %v6912
    %v8007 = vpack.c.bf16 %v6918, %v6914
    %v8008 = vpack.c.bf16 %v6926, %v6922
    %v8009 = vpack.c.bf16 %v6928, %v6924
    %v8010 = vpack.c.bf16 %v6936, %v6932
    %v8011 = vpack.c.bf16 %v6938, %v6934
    %v8012 = vpack.c.bf16 %v6946, %v6942
    %v8013 = vpack.c.bf16 %v6948, %v6944
    %v8014 = vpack.c.bf16 %v6956, %v6952
    %v8015 = vpack.c.bf16 %v6958, %v6954
    %v8016 = vpack.c.bf16 %v6966, %v6962
    %v8017 = vpack.c.bf16 %v6968, %v6964
    %v8018 = vpack.c.bf16 %v6976, %v6972
    %v8019 = vpack.c.bf16 %v6978, %v6974
    %v8020 = vpack.c.bf16 %v6986, %v6982
    %v8021 = vpack.c.bf16 %v6988, %v6984
    %v8022 = vpack.c.bf16 %v6996, %v6992
    %v8023 = vpack.c.bf16 %v6998, %v6994
    %v8024 = vpack.c.bf16 %v7006, %v7002
    %v8025 = vpack.c.bf16 %v7008, %v7004
    %v8026 = vpack.c.bf16 %v7016, %v7012
    %v8027 = vpack.c.bf16 %v7018, %v7014
    %v8028 = vpack.c.bf16 %v7026, %v7022
    %v8029 = vpack.c.bf16 %v7028, %v7024
    %v8030 = vpack.c.bf16 %v7036, %v7032
    %v8031 = vpack.c.bf16 %v7038, %v7034
    %v8032 = vpack.c.bf16 %v7046, %v7042
    %v8033 = vpack.c.bf16 %v7048, %v7044
    %v8034 = vpack.c.bf16 %v7056, %v7052
    %v8035 = vpack.c.bf16 %v7058, %v7054
    %v8036 = vpack.c.bf16 %v7066, %v7062
    %v8037 = vpack.c.bf16 %v7068, %v7064
    %v8038 = vpack.c.bf16 %v7076, %v7072
    %v8039 = vpack.c.bf16 %v7078, %v7074
    %v8040 = vpack.c.bf16 %v7086, %v7082
    %v8041 = vpack.c.bf16 %v7088, %v7084
    %v8042 = vpack.c.bf16 %v7096, %v7092
    %v8043 = vpack.c.bf16 %v7098, %v7094
    %v8044 = vpack.c.bf16 %v7106, %v7102
    %v8045 = vpack.c.bf16 %v7108, %v7104
    %v8046 = vpack.c.bf16 %v7116, %v7112
    %v8047 = vpack.c.bf16 %v7118, %v7114
    %v8048 = vpack.c.bf16 %v7126, %v7122
    %v8049 = vpack.c.bf16 %v7128, %v7124
    %v8050 = vpack.c.bf16 %v7136, %v7132
    %v8051 = vpack.c.bf16 %v7138, %v7134
    %v8052 = vpack.c.bf16 %v7146, %v7142
    %v8053 = vpack.c.bf16 %v7148, %v7144
    %v8054 = vpack.c.bf16 %v7156, %v7152
    %v8055 = vpack.c.bf16 %v7158, %v7154
    %v8056 = vpack.c.bf16 %v7166, %v7162
    %v8057 = vpack.c.bf16 %v7168, %v7164
    %v8058 = vpack.c.bf16 %v7176, %v7172
    %v8059 = vpack.c.bf16 %v7178, %v7174
    %v8060 = vpack.c.bf16 %v7186, %v7182
    %v8061 = vpack.c.bf16 %v7188, %v7184
    %v8062 = vpack.c.bf16 %v7196, %v7192
    %v8063 = vpack.c.bf16 %v7198, %v7194
    %v8064 = vpack.c.bf16 %v7206, %v7202
    %v8065 = vpack.c.bf16 %v7208, %v7204
    %v8066 = vpack.c.bf16 %v7216, %v7212
    %v8067 = vpack.c.bf16 %v7218, %v7214
    %v8068 = vpack.c.bf16 %v7226, %v7222
    %v8069 = vpack.c.bf16 %v7228, %v7224
    %v8070 = vpack.c.bf16 %v7236, %v7232
    %v8071 = vpack.c.bf16 %v7238, %v7234
    %v8072 = vpack.c.bf16 %v7246, %v7242
    %v8073 = vpack.c.bf16 %v7248, %v7244
    %v8074 = vpack.c.bf16 %v7256, %v7252
    %v8075 = vpack.c.bf16 %v7258, %v7254
    %v8076 = vpack.c.bf16 %v7266, %v7262
    %v8077 = vpack.c.bf16 %v7268, %v7264
    %v8078 = vpack.c.bf16 %v7276, %v7272
    %v8079 = vpack.c.bf16 %v7278, %v7274
    %v8080 = vpack.c.bf16 %v7286, %v7282
    %v8081 = vpack.c.bf16 %v7288, %v7284
    %v8082 = vpack.c.bf16 %v7296, %v7292
    %v8083 = vpack.c.bf16 %v7298, %v7294
    %v8084 = vpack.c.bf16 %v7306, %v7302
    %v8085 = vpack.c.bf16 %v7308, %v7304
    %v8086 = vpack.c.bf16 %v7316, %v7312
    %v8087 = vpack.c.bf16 %v7318, %v7314
    %v8088 = vpack.c.bf16 %v7326, %v7322
    %v8089 = vpack.c.bf16 %v7328, %v7324
    %v8090 = vpack.c.bf16 %v7336, %v7332
    %v8091 = vpack.c.bf16 %v7338, %v7334
    %v8092 = vpack.c.bf16 %v7346, %v7342
    %v8093 = vpack.c.bf16 %v7348, %v7344
    %v8094 = vpack.c.bf16 %v7356, %v7352
    %v8095 = vpack.c.bf16 %v7358, %v7354
    %v8096 = vpack.c.bf16 %v7366, %v7362
    %v8097 = vpack.c.bf16 %v7368, %v7364
    %v8098 = vpack.c.bf16 %v7376, %v7372
    %v8099 = vpack.c.bf16 %v7378, %v7374
    %v8100 = vpack.c.bf16 %v7386, %v7382
    %v8101 = vpack.c.bf16 %v7388, %v7384
    %v8102 = vpack.c.bf16 %v7396, %v7392
    %v8103 = vpack.c.bf16 %v7398, %v7394
    %v8104 = vpack.c.bf16 %v7406, %v7402
    %v8105 = vpack.c.bf16 %v7408, %v7404
    %v8106 = vpack.c.bf16 %v7416, %v7412
    %v8107 = vpack.c.bf16 %v7418, %v7414
    %v8108 = vpack.c.bf16 %v7426, %v7422
    %v8109 = vpack.c.bf16 %v7428, %v7424
    %v8110 = vpack.c.bf16 %v7436, %v7432
    %v8111 = vpack.c.bf16 %v7438, %v7434
    %v8112 = vpack.c.bf16 %v7446, %v7442
    %v8113 = vpack.c.bf16 %v7448, %v7444
    %v8114 = vpack.c.bf16 %v7456, %v7452
    %v8115 = vpack.c.bf16 %v7458, %v7454
    %v8116 = vpack.c.bf16 %v7466, %v7462
    %v8117 = vpack.c.bf16 %v7468, %v7464
    %v8118 = vpack.c.bf16 %v7476, %v7472
    %v8119 = vpack.c.bf16 %v7478, %v7474
    %v8120 = vpack.c.bf16 %v7486, %v7482
    %v8121 = vpack.c.bf16 %v7488, %v7484
    %v8122 = vpack.c.bf16 %v7496, %v7492
    %v8123 = vpack.c.bf16 %v7498, %v7494
    %v8124 = vpack.c.bf16 %v7506, %v7502
    %v8125 = vpack.c.bf16 %v7508, %v7504
    %v8126 = vpack.c.bf16 %v7516, %v7512
    %v8127 = vpack.c.bf16 %v7518, %v7514
    %v8128 = vpack.c.bf16 %v7526, %v7522
    %v8129 = vpack.c.bf16 %v7528, %v7524
    %v8130 = vpack.c.bf16 %v7536, %v7532
    %v8131 = vpack.c.bf16 %v7538, %v7534
    %v8132 = vpack.c.bf16 %v7546, %v7542
    %v8133 = vpack.c.bf16 %v7548, %v7544
    %v8134 = vpack.c.bf16 %v7556, %v7552
    %v8135 = vpack.c.bf16 %v7558, %v7554
    %v8136 = vpack.c.bf16 %v7566, %v7562
    %v8137 = vpack.c.bf16 %v7568, %v7564
    %v8138 = vpack.c.bf16 %v7576, %v7572
    %v8139 = vpack.c.bf16 %v7578, %v7574
    %v8140 = vpack.c.bf16 %v7586, %v7582
    %v8141 = vpack.c.bf16 %v7588, %v7584
    %v8142 = vpack.c.bf16 %v7596, %v7592
    %v8143 = vpack.c.bf16 %v7598, %v7594
    %v8144 = vpack.c.bf16 %v7606, %v7602
    %v8145 = vpack.c.bf16 %v7608, %v7604
    %v8146 = vpack.c.bf16 %v7616, %v7612
    %v8147 = vpack.c.bf16 %v7618, %v7614
    %v8148 = vpack.c.bf16 %v7626, %v7622
    %v8149 = vpack.c.bf16 %v7628, %v7624
    %v8150 = vpack.c.bf16 %v7636, %v7632
    %v8151 = vpack.c.bf16 %v7638, %v7634
    %v8152 = vpack.c.bf16 %v7646, %v7642
    %v8153 = vpack.c.bf16 %v7648, %v7644
    %v8154 = vpack.c.bf16 %v7656, %v7652
    %v8155 = vpack.c.bf16 %v7658, %v7654
    %v8156 = vpack.c.bf16 %v7666, %v7662
    %v8157 = vpack.c.bf16 %v7668, %v7664
    %v8158 = vpack.c.bf16 %v7676, %v7672
    %v8159 = vpack.c.bf16 %v7678, %v7674
    %v8160 = vpack.c.bf16 %v7686, %v7682
    %v8161 = vpack.c.bf16 %v7688, %v7684
    %v8162 = vpack.c.bf16 %v7696, %v7692
    %v8163 = vpack.c.bf16 %v7698, %v7694
    %v8164 = vpack.c.bf16 %v7706, %v7702
    %v8165 = vpack.c.bf16 %v7708, %v7704
    %v8166 = vpack.c.bf16 %v7716, %v7712
    %v8167 = vpack.c.bf16 %v7718, %v7714
    %v8168 = vpack.c.bf16 %v7726, %v7722
    %v8169 = vpack.c.bf16 %v7728, %v7724
    %v8170 = vpack.c.bf16 %v7736, %v7732
    %v8171 = vpack.c.bf16 %v7738, %v7734
    %v8172 = vpack.c.bf16 %v7746, %v7742
    %v8173 = vpack.c.bf16 %v7748, %v7744
    %v8174 = vpack.c.bf16 %v7756, %v7752
    %v8175 = vpack.c.bf16 %v7758, %v7754
    %v8176 = vpack.c.bf16 %v7766, %v7762
    %v8177 = vpack.c.bf16 %v7768, %v7764
    %v8178 = vpack.c.bf16 %v7776, %v7772
    %v8179 = vpack.c.bf16 %v7778, %v7774
    %v8180 = vpack.c.bf16 %v7786, %v7782
    %v8181 = vpack.c.bf16 %v7788, %v7784
    %v8182 = vpack.c.bf16 %v7796, %v7792
    %v8183 = vpack.c.bf16 %v7798, %v7794
    %v8184 = vpack.c.bf16 %v7806, %v7802
    %v8185 = vpack.c.bf16 %v7808, %v7804
    %v8186 = vpack.c.bf16 %v7816, %v7812
    %v8187 = vpack.c.bf16 %v7818, %v7814
    %v8188 = vpack.c.bf16 %v7826, %v7822
    %v8189 = vpack.c.bf16 %v7828, %v7824
    %v8190 = vpack.c.bf16 %v7836, %v7832
    %v8191 = vpack.c.bf16 %v7838, %v7834
    %v8192 = vpack.c.bf16 %v7846, %v7842
    %v8193 = vpack.c.bf16 %v7848, %v7844
    %v8194 = vpack.c.bf16 %v7856, %v7852
    %v8195 = vpack.c.bf16 %v7858, %v7854
    %v8196 = vpack.c.bf16 %v7866, %v7862
    %v8197 = vpack.c.bf16 %v7868, %v7864
    %v8198 = vpack.c.bf16 %v7876, %v7872
    %v8199 = vpack.c.bf16 %v7878, %v7874
    %v8200 = vpack.c.bf16 %v7886, %v7882
    %v8201 = vpack.c.bf16 %v7888, %v7884
    %v8202 = vpack.c.bf16 %v7896, %v7892
    %v8203 = vpack.c.bf16 %v7898, %v7894
    %v8204 = vpack.c.bf16 %v7906, %v7902
    %v8205 = vpack.c.bf16 %v7908, %v7904
    %v8206 = vpack.c.bf16 %v7916, %v7912
    %v8207 = vpack.c.bf16 %v7918, %v7914
    %v8208 = vpack.c.bf16 %v7926, %v7922
    %v8209 = vpack.c.bf16 %v7928, %v7924
    %v8210 = vpack.c.bf16 %v7936, %v7932
    %v8211 = vpack.c.bf16 %v7938, %v7934
    %v8212 = vpack.c.bf16 %v7946, %v7942
    %v8213 = vpack.c.bf16 %v7948, %v7944
    %v8214 = vpack.c.bf16 %v7956, %v7952
    %v8215 = vpack.c.bf16 %v7958, %v7954
    %v8216 = vld [vmem:[%s9] sm:$0x3]
    %v8218 = vlaneseq
    %v8219 = vshrl.u32 %v8218, 7
    %v8220 = vsub.s32 0, %v8219
    %v8221 = vrot.slane %v8216, %v8220
    %v8222 = vlaneseq
    %v8223 = vshrl.u32 %v8222, 7
    %v8224 = vsub.s32 1, %v8223
    %v8225 = vrot.slane %v8216, %v8224
    %v8228 = vpack.c.bf16 %v8221, %v8221
    %v8229 = vpack.c.bf16 %v8225, %v8225
    %v8231 = vpack.i.b16 %v8228, %v8228
    %v8233 = vlaneseq
    %v8234 = vshrl.u32 %v8233, 7
    %v8235 = vsub.s32 0, %v8234
    %v8236 = vrot.slane %v8231, %v8235
    %v8238 = vpack.i.b16 %v8229, %v8229
    %v8240 = vlaneseq
    %v8241 = vshrl.u32 %v8240, 7
    %v8242 = vsub.s32 0, %v8241
    %v8243 = vrot.slane %v8238, %v8242
    %v8244 = vadd.bf16 %v7960, %v8236
    %v8245 = vadd.bf16 %v7961, %v8243
    %v8246 = vadd.bf16 %v7962, %v8236
    %v8247 = vadd.bf16 %v7963, %v8243
    %v8248 = vadd.bf16 %v7964, %v8236
    %v8249 = vadd.bf16 %v7965, %v8243
    %v8250 = vadd.bf16 %v7966, %v8236
    %v8251 = vadd.bf16 %v7967, %v8243
    %v8252 = vadd.bf16 %v7968, %v8236
    %v8253 = vadd.bf16 %v7969, %v8243
    %v8254 = vadd.bf16 %v7970, %v8236
    %v8255 = vadd.bf16 %v7971, %v8243
    %v8256 = vadd.bf16 %v7972, %v8236
    %v8257 = vadd.bf16 %v7973, %v8243
    %v8258 = vadd.bf16 %v7974, %v8236
    %v8259 = vadd.bf16 %v7975, %v8243
    %v8260 = vadd.bf16 %v7976, %v8236
    %v8261 = vadd.bf16 %v7977, %v8243
    %v8262 = vadd.bf16 %v7978, %v8236
    %v8263 = vadd.bf16 %v7979, %v8243
    %v8264 = vadd.bf16 %v7980, %v8236
    %v8265 = vadd.bf16 %v7981, %v8243
    %v8266 = vadd.bf16 %v7982, %v8236
    %v8267 = vadd.bf16 %v7983, %v8243
    %v8268 = vadd.bf16 %v7984, %v8236
    %v8269 = vadd.bf16 %v7985, %v8243
    %v8270 = vadd.bf16 %v7986, %v8236
    %v8271 = vadd.bf16 %v7987, %v8243
    %v8272 = vadd.bf16 %v7988, %v8236
    %v8273 = vadd.bf16 %v7989, %v8243
    %v8274 = vadd.bf16 %v7990, %v8236
    %v8275 = vadd.bf16 %v7991, %v8243
    %v8276 = vadd.bf16 %v7992, %v8236
    %v8277 = vadd.bf16 %v7993, %v8243
    %v8278 = vadd.bf16 %v7994, %v8236
    %v8279 = vadd.bf16 %v7995, %v8243
    %v8280 = vadd.bf16 %v7996, %v8236
    %v8281 = vadd.bf16 %v7997, %v8243
    %v8282 = vadd.bf16 %v7998, %v8236
    %v8283 = vadd.bf16 %v7999, %v8243
    %v8284 = vadd.bf16 %v8000, %v8236
    %v8285 = vadd.bf16 %v8001, %v8243
    %v8286 = vadd.bf16 %v8002, %v8236
    %v8287 = vadd.bf16 %v8003, %v8243
    %v8288 = vadd.bf16 %v8004, %v8236
    %v8289 = vadd.bf16 %v8005, %v8243
    %v8290 = vadd.bf16 %v8006, %v8236
    %v8291 = vadd.bf16 %v8007, %v8243
    %v8292 = vadd.bf16 %v8008, %v8236
    %v8293 = vadd.bf16 %v8009, %v8243
    %v8294 = vadd.bf16 %v8010, %v8236
    %v8295 = vadd.bf16 %v8011, %v8243
    %v8296 = vadd.bf16 %v8012, %v8236
    %v8297 = vadd.bf16 %v8013, %v8243
    %v8298 = vadd.bf16 %v8014, %v8236
    %v8299 = vadd.bf16 %v8015, %v8243
    %v8300 = vadd.bf16 %v8016, %v8236
    %v8301 = vadd.bf16 %v8017, %v8243
    %v8302 = vadd.bf16 %v8018, %v8236
    %v8303 = vadd.bf16 %v8019, %v8243
    %v8304 = vadd.bf16 %v8020, %v8236
    %v8305 = vadd.bf16 %v8021, %v8243
    %v8306 = vadd.bf16 %v8022, %v8236
    %v8307 = vadd.bf16 %v8023, %v8243
    %v8308 = vadd.bf16 %v8024, %v8236
    %v8309 = vadd.bf16 %v8025, %v8243
    %v8310 = vadd.bf16 %v8026, %v8236
    %v8311 = vadd.bf16 %v8027, %v8243
    %v8312 = vadd.bf16 %v8028, %v8236
    %v8313 = vadd.bf16 %v8029, %v8243
    %v8314 = vadd.bf16 %v8030, %v8236
    %v8315 = vadd.bf16 %v8031, %v8243
    %v8316 = vadd.bf16 %v8032, %v8236
    %v8317 = vadd.bf16 %v8033, %v8243
    %v8318 = vadd.bf16 %v8034, %v8236
    %v8319 = vadd.bf16 %v8035, %v8243
    %v8320 = vadd.bf16 %v8036, %v8236
    %v8321 = vadd.bf16 %v8037, %v8243
    %v8322 = vadd.bf16 %v8038, %v8236
    %v8323 = vadd.bf16 %v8039, %v8243
    %v8324 = vadd.bf16 %v8040, %v8236
    %v8325 = vadd.bf16 %v8041, %v8243
    %v8326 = vadd.bf16 %v8042, %v8236
    %v8327 = vadd.bf16 %v8043, %v8243
    %v8328 = vadd.bf16 %v8044, %v8236
    %v8329 = vadd.bf16 %v8045, %v8243
    %v8330 = vadd.bf16 %v8046, %v8236
    %v8331 = vadd.bf16 %v8047, %v8243
    %v8332 = vadd.bf16 %v8048, %v8236
    %v8333 = vadd.bf16 %v8049, %v8243
    %v8334 = vadd.bf16 %v8050, %v8236
    %v8335 = vadd.bf16 %v8051, %v8243
    %v8336 = vadd.bf16 %v8052, %v8236
    %v8337 = vadd.bf16 %v8053, %v8243
    %v8338 = vadd.bf16 %v8054, %v8236
    %v8339 = vadd.bf16 %v8055, %v8243
    %v8340 = vadd.bf16 %v8056, %v8236
    %v8341 = vadd.bf16 %v8057, %v8243
    %v8342 = vadd.bf16 %v8058, %v8236
    %v8343 = vadd.bf16 %v8059, %v8243
    %v8344 = vadd.bf16 %v8060, %v8236
    %v8345 = vadd.bf16 %v8061, %v8243
    %v8346 = vadd.bf16 %v8062, %v8236
    %v8347 = vadd.bf16 %v8063, %v8243
    %v8348 = vadd.bf16 %v8064, %v8236
    %v8349 = vadd.bf16 %v8065, %v8243
    %v8350 = vadd.bf16 %v8066, %v8236
    %v8351 = vadd.bf16 %v8067, %v8243
    %v8352 = vadd.bf16 %v8068, %v8236
    %v8353 = vadd.bf16 %v8069, %v8243
    %v8354 = vadd.bf16 %v8070, %v8236
    %v8355 = vadd.bf16 %v8071, %v8243
    %v8356 = vadd.bf16 %v8072, %v8236
    %v8357 = vadd.bf16 %v8073, %v8243
    %v8358 = vadd.bf16 %v8074, %v8236
    %v8359 = vadd.bf16 %v8075, %v8243
    %v8360 = vadd.bf16 %v8076, %v8236
    %v8361 = vadd.bf16 %v8077, %v8243
    %v8362 = vadd.bf16 %v8078, %v8236
    %v8363 = vadd.bf16 %v8079, %v8243
    %v8364 = vadd.bf16 %v8080, %v8236
    %v8365 = vadd.bf16 %v8081, %v8243
    %v8366 = vadd.bf16 %v8082, %v8236
    %v8367 = vadd.bf16 %v8083, %v8243
    %v8368 = vadd.bf16 %v8084, %v8236
    %v8369 = vadd.bf16 %v8085, %v8243
    %v8370 = vadd.bf16 %v8086, %v8236
    %v8371 = vadd.bf16 %v8087, %v8243
    %v8372 = vadd.bf16 %v8088, %v8236
    %v8373 = vadd.bf16 %v8089, %v8243
    %v8374 = vadd.bf16 %v8090, %v8236
    %v8375 = vadd.bf16 %v8091, %v8243
    %v8376 = vadd.bf16 %v8092, %v8236
    %v8377 = vadd.bf16 %v8093, %v8243
    %v8378 = vadd.bf16 %v8094, %v8236
    %v8379 = vadd.bf16 %v8095, %v8243
    %v8380 = vadd.bf16 %v8096, %v8236
    %v8381 = vadd.bf16 %v8097, %v8243
    %v8382 = vadd.bf16 %v8098, %v8236
    %v8383 = vadd.bf16 %v8099, %v8243
    %v8384 = vadd.bf16 %v8100, %v8236
    %v8385 = vadd.bf16 %v8101, %v8243
    %v8386 = vadd.bf16 %v8102, %v8236
    %v8387 = vadd.bf16 %v8103, %v8243
    %v8388 = vadd.bf16 %v8104, %v8236
    %v8389 = vadd.bf16 %v8105, %v8243
    %v8390 = vadd.bf16 %v8106, %v8236
    %v8391 = vadd.bf16 %v8107, %v8243
    %v8392 = vadd.bf16 %v8108, %v8236
    %v8393 = vadd.bf16 %v8109, %v8243
    %v8394 = vadd.bf16 %v8110, %v8236
    %v8395 = vadd.bf16 %v8111, %v8243
    %v8396 = vadd.bf16 %v8112, %v8236
    %v8397 = vadd.bf16 %v8113, %v8243
    %v8398 = vadd.bf16 %v8114, %v8236
    %v8399 = vadd.bf16 %v8115, %v8243
    %v8400 = vadd.bf16 %v8116, %v8236
    %v8401 = vadd.bf16 %v8117, %v8243
    %v8402 = vadd.bf16 %v8118, %v8236
    %v8403 = vadd.bf16 %v8119, %v8243
    %v8404 = vadd.bf16 %v8120, %v8236
    %v8405 = vadd.bf16 %v8121, %v8243
    %v8406 = vadd.bf16 %v8122, %v8236
    %v8407 = vadd.bf16 %v8123, %v8243
    %v8408 = vadd.bf16 %v8124, %v8236
    %v8409 = vadd.bf16 %v8125, %v8243
    %v8410 = vadd.bf16 %v8126, %v8236
    %v8411 = vadd.bf16 %v8127, %v8243
    %v8412 = vadd.bf16 %v8128, %v8236
    %v8413 = vadd.bf16 %v8129, %v8243
    %v8414 = vadd.bf16 %v8130, %v8236
    %v8415 = vadd.bf16 %v8131, %v8243
    %v8416 = vadd.bf16 %v8132, %v8236
    %v8417 = vadd.bf16 %v8133, %v8243
    %v8418 = vadd.bf16 %v8134, %v8236
    %v8419 = vadd.bf16 %v8135, %v8243
    %v8420 = vadd.bf16 %v8136, %v8236
    %v8421 = vadd.bf16 %v8137, %v8243
    %v8422 = vadd.bf16 %v8138, %v8236
    %v8423 = vadd.bf16 %v8139, %v8243
    %v8424 = vadd.bf16 %v8140, %v8236
    %v8425 = vadd.bf16 %v8141, %v8243
    %v8426 = vadd.bf16 %v8142, %v8236
    %v8427 = vadd.bf16 %v8143, %v8243
    %v8428 = vadd.bf16 %v8144, %v8236
    %v8429 = vadd.bf16 %v8145, %v8243
    %v8430 = vadd.bf16 %v8146, %v8236
    %v8431 = vadd.bf16 %v8147, %v8243
    %v8432 = vadd.bf16 %v8148, %v8236
    %v8433 = vadd.bf16 %v8149, %v8243
    %v8434 = vadd.bf16 %v8150, %v8236
    %v8435 = vadd.bf16 %v8151, %v8243
    %v8436 = vadd.bf16 %v8152, %v8236
    %v8437 = vadd.bf16 %v8153, %v8243
    %v8438 = vadd.bf16 %v8154, %v8236
    %v8439 = vadd.bf16 %v8155, %v8243
    %v8440 = vadd.bf16 %v8156, %v8236
    %v8441 = vadd.bf16 %v8157, %v8243
    %v8442 = vadd.bf16 %v8158, %v8236
    %v8443 = vadd.bf16 %v8159, %v8243
    %v8444 = vadd.bf16 %v8160, %v8236
    %v8445 = vadd.bf16 %v8161, %v8243
    %v8446 = vadd.bf16 %v8162, %v8236
    %v8447 = vadd.bf16 %v8163, %v8243
    %v8448 = vadd.bf16 %v8164, %v8236
    %v8449 = vadd.bf16 %v8165, %v8243
    %v8450 = vadd.bf16 %v8166, %v8236
    %v8451 = vadd.bf16 %v8167, %v8243
    %v8452 = vadd.bf16 %v8168, %v8236
    %v8453 = vadd.bf16 %v8169, %v8243
    %v8454 = vadd.bf16 %v8170, %v8236
    %v8455 = vadd.bf16 %v8171, %v8243
    %v8456 = vadd.bf16 %v8172, %v8236
    %v8457 = vadd.bf16 %v8173, %v8243
    %v8458 = vadd.bf16 %v8174, %v8236
    %v8459 = vadd.bf16 %v8175, %v8243
    %v8460 = vadd.bf16 %v8176, %v8236
    %v8461 = vadd.bf16 %v8177, %v8243
    %v8462 = vadd.bf16 %v8178, %v8236
    %v8463 = vadd.bf16 %v8179, %v8243
    %v8464 = vadd.bf16 %v8180, %v8236
    %v8465 = vadd.bf16 %v8181, %v8243
    %v8466 = vadd.bf16 %v8182, %v8236
    %v8467 = vadd.bf16 %v8183, %v8243
    %v8468 = vadd.bf16 %v8184, %v8236
    %v8469 = vadd.bf16 %v8185, %v8243
    %v8470 = vadd.bf16 %v8186, %v8236
    %v8471 = vadd.bf16 %v8187, %v8243
    %v8472 = vadd.bf16 %v8188, %v8236
    %v8473 = vadd.bf16 %v8189, %v8243
    %v8474 = vadd.bf16 %v8190, %v8236
    %v8475 = vadd.bf16 %v8191, %v8243
    %v8476 = vadd.bf16 %v8192, %v8236
    %v8477 = vadd.bf16 %v8193, %v8243
    %v8478 = vadd.bf16 %v8194, %v8236
    %v8479 = vadd.bf16 %v8195, %v8243
    %v8480 = vadd.bf16 %v8196, %v8236
    %v8481 = vadd.bf16 %v8197, %v8243
    %v8482 = vadd.bf16 %v8198, %v8236
    %v8483 = vadd.bf16 %v8199, %v8243
    %v8484 = vadd.bf16 %v8200, %v8236
    %v8485 = vadd.bf16 %v8201, %v8243
    %v8486 = vadd.bf16 %v8202, %v8236
    %v8487 = vadd.bf16 %v8203, %v8243
    %v8488 = vadd.bf16 %v8204, %v8236
    %v8489 = vadd.bf16 %v8205, %v8243
    %v8490 = vadd.bf16 %v8206, %v8236
    %v8491 = vadd.bf16 %v8207, %v8243
    %v8492 = vadd.bf16 %v8208, %v8236
    %v8493 = vadd.bf16 %v8209, %v8243
    %v8494 = vadd.bf16 %v8210, %v8236
    %v8495 = vadd.bf16 %v8211, %v8243
    %v8496 = vadd.bf16 %v8212, %v8236
    %v8497 = vadd.bf16 %v8213, %v8243
    %v8498 = vadd.bf16 %v8214, %v8236
    %v8499 = vadd.bf16 %v8215, %v8243
    %v8500 = vmul.bf16 %v8244, 1036860877
    %v8501 = vmul.bf16 %v8245, 1036860877
    %v8502 = vmul.bf16 %v8246, 1036860877
    %v8503 = vmul.bf16 %v8247, 1036860877
    %v8504 = vmul.bf16 %v8248, 1036860877
    %v8505 = vmul.bf16 %v8249, 1036860877
    %v8506 = vmul.bf16 %v8250, 1036860877
    %v8507 = vmul.bf16 %v8251, 1036860877
    %v8508 = vmul.bf16 %v8252, 1036860877
    %v8509 = vmul.bf16 %v8253, 1036860877
    %v8510 = vmul.bf16 %v8254, 1036860877
    %v8511 = vmul.bf16 %v8255, 1036860877
    %v8512 = vmul.bf16 %v8256, 1036860877
    %v8513 = vmul.bf16 %v8257, 1036860877
    %v8514 = vmul.bf16 %v8258, 1036860877
    %v8515 = vmul.bf16 %v8259, 1036860877
    %v8516 = vmul.bf16 %v8260, 1036860877
    %v8517 = vmul.bf16 %v8261, 1036860877
    %v8518 = vmul.bf16 %v8262, 1036860877
    %v8519 = vmul.bf16 %v8263, 1036860877
    %v8520 = vmul.bf16 %v8264, 1036860877
    %v8521 = vmul.bf16 %v8265, 1036860877
    %v8522 = vmul.bf16 %v8266, 1036860877
    %v8523 = vmul.bf16 %v8267, 1036860877
    %v8524 = vmul.bf16 %v8268, 1036860877
    %v8525 = vmul.bf16 %v8269, 1036860877
    %v8526 = vmul.bf16 %v8270, 1036860877
    %v8527 = vmul.bf16 %v8271, 1036860877
    %v8528 = vmul.bf16 %v8272, 1036860877
    %v8529 = vmul.bf16 %v8273, 1036860877
    %v8530 = vmul.bf16 %v8274, 1036860877
    %v8531 = vmul.bf16 %v8275, 1036860877
    %v8532 = vmul.bf16 %v8276, 1036860877
    %v8533 = vmul.bf16 %v8277, 1036860877
    %v8534 = vmul.bf16 %v8278, 1036860877
    %v8535 = vmul.bf16 %v8279, 1036860877
    %v8536 = vmul.bf16 %v8280, 1036860877
    %v8537 = vmul.bf16 %v8281, 1036860877
    %v8538 = vmul.bf16 %v8282, 1036860877
    %v8539 = vmul.bf16 %v8283, 1036860877
    %v8540 = vmul.bf16 %v8284, 1036860877
    %v8541 = vmul.bf16 %v8285, 1036860877
    %v8542 = vmul.bf16 %v8286, 1036860877
    %v8543 = vmul.bf16 %v8287, 1036860877
    %v8544 = vmul.bf16 %v8288, 1036860877
    %v8545 = vmul.bf16 %v8289, 1036860877
    %v8546 = vmul.bf16 %v8290, 1036860877
    %v8547 = vmul.bf16 %v8291, 1036860877
    %v8548 = vmul.bf16 %v8292, 1036860877
    %v8549 = vmul.bf16 %v8293, 1036860877
    %v8550 = vmul.bf16 %v8294, 1036860877
    %v8551 = vmul.bf16 %v8295, 1036860877
    %v8552 = vmul.bf16 %v8296, 1036860877
    %v8553 = vmul.bf16 %v8297, 1036860877
    %v8554 = vmul.bf16 %v8298, 1036860877
    %v8555 = vmul.bf16 %v8299, 1036860877
    %v8556 = vmul.bf16 %v8300, 1036860877
    %v8557 = vmul.bf16 %v8301, 1036860877
    %v8558 = vmul.bf16 %v8302, 1036860877
    %v8559 = vmul.bf16 %v8303, 1036860877
    %v8560 = vmul.bf16 %v8304, 1036860877
    %v8561 = vmul.bf16 %v8305, 1036860877
    %v8562 = vmul.bf16 %v8306, 1036860877
    %v8563 = vmul.bf16 %v8307, 1036860877
    %v8564 = vmul.bf16 %v8308, 1036860877
    %v8565 = vmul.bf16 %v8309, 1036860877
    %v8566 = vmul.bf16 %v8310, 1036860877
    %v8567 = vmul.bf16 %v8311, 1036860877
    %v8568 = vmul.bf16 %v8312, 1036860877
    %v8569 = vmul.bf16 %v8313, 1036860877
    %v8570 = vmul.bf16 %v8314, 1036860877
    %v8571 = vmul.bf16 %v8315, 1036860877
    %v8572 = vmul.bf16 %v8316, 1036860877
    %v8573 = vmul.bf16 %v8317, 1036860877
    %v8574 = vmul.bf16 %v8318, 1036860877
    %v8575 = vmul.bf16 %v8319, 1036860877
    %v8576 = vmul.bf16 %v8320, 1036860877
    %v8577 = vmul.bf16 %v8321, 1036860877
    %v8578 = vmul.bf16 %v8322, 1036860877
    %v8579 = vmul.bf16 %v8323, 1036860877
    %v8580 = vmul.bf16 %v8324, 1036860877
    %v8581 = vmul.bf16 %v8325, 1036860877
    %v8582 = vmul.bf16 %v8326, 1036860877
    %v8583 = vmul.bf16 %v8327, 1036860877
    %v8584 = vmul.bf16 %v8328, 1036860877
    %v8585 = vmul.bf16 %v8329, 1036860877
    %v8586 = vmul.bf16 %v8330, 1036860877
    %v8587 = vmul.bf16 %v8331, 1036860877
    %v8588 = vmul.bf16 %v8332, 1036860877
    %v8589 = vmul.bf16 %v8333, 1036860877
    %v8590 = vmul.bf16 %v8334, 1036860877
    %v8591 = vmul.bf16 %v8335, 1036860877
    %v8592 = vmul.bf16 %v8336, 1036860877
    %v8593 = vmul.bf16 %v8337, 1036860877
    %v8594 = vmul.bf16 %v8338, 1036860877
    %v8595 = vmul.bf16 %v8339, 1036860877
    %v8596 = vmul.bf16 %v8340, 1036860877
    %v8597 = vmul.bf16 %v8341, 1036860877
    %v8598 = vmul.bf16 %v8342, 1036860877
    %v8599 = vmul.bf16 %v8343, 1036860877
    %v8600 = vmul.bf16 %v8344, 1036860877
    %v8601 = vmul.bf16 %v8345, 1036860877
    %v8602 = vmul.bf16 %v8346, 1036860877
    %v8603 = vmul.bf16 %v8347, 1036860877
    %v8604 = vmul.bf16 %v8348, 1036860877
    %v8605 = vmul.bf16 %v8349, 1036860877
    %v8606 = vmul.bf16 %v8350, 1036860877
    %v8607 = vmul.bf16 %v8351, 1036860877
    %v8608 = vmul.bf16 %v8352, 1036860877
    %v8609 = vmul.bf16 %v8353, 1036860877
    %v8610 = vmul.bf16 %v8354, 1036860877
    %v8611 = vmul.bf16 %v8355, 1036860877
    %v8612 = vmul.bf16 %v8356, 1036860877
    %v8613 = vmul.bf16 %v8357, 1036860877
    %v8614 = vmul.bf16 %v8358, 1036860877
    %v8615 = vmul.bf16 %v8359, 1036860877
    %v8616 = vmul.bf16 %v8360, 1036860877
    %v8617 = vmul.bf16 %v8361, 1036860877
    %v8618 = vmul.bf16 %v8362, 1036860877
    %v8619 = vmul.bf16 %v8363, 1036860877
    %v8620 = vmul.bf16 %v8364, 1036860877
    %v8621 = vmul.bf16 %v8365, 1036860877
    %v8622 = vmul.bf16 %v8366, 1036860877
    %v8623 = vmul.bf16 %v8367, 1036860877
    %v8624 = vmul.bf16 %v8368, 1036860877
    %v8625 = vmul.bf16 %v8369, 1036860877
    %v8626 = vmul.bf16 %v8370, 1036860877
    %v8627 = vmul.bf16 %v8371, 1036860877
    %v8628 = vmul.bf16 %v8372, 1036860877
    %v8629 = vmul.bf16 %v8373, 1036860877
    %v8630 = vmul.bf16 %v8374, 1036860877
    %v8631 = vmul.bf16 %v8375, 1036860877
    %v8632 = vmul.bf16 %v8376, 1036860877
    %v8633 = vmul.bf16 %v8377, 1036860877
    %v8634 = vmul.bf16 %v8378, 1036860877
    %v8635 = vmul.bf16 %v8379, 1036860877
    %v8636 = vmul.bf16 %v8380, 1036860877
    %v8637 = vmul.bf16 %v8381, 1036860877
    %v8638 = vmul.bf16 %v8382, 1036860877
    %v8639 = vmul.bf16 %v8383, 1036860877
    %v8640 = vmul.bf16 %v8384, 1036860877
    %v8641 = vmul.bf16 %v8385, 1036860877
    %v8642 = vmul.bf16 %v8386, 1036860877
    %v8643 = vmul.bf16 %v8387, 1036860877
    %v8644 = vmul.bf16 %v8388, 1036860877
    %v8645 = vmul.bf16 %v8389, 1036860877
    %v8646 = vmul.bf16 %v8390, 1036860877
    %v8647 = vmul.bf16 %v8391, 1036860877
    %v8648 = vmul.bf16 %v8392, 1036860877
    %v8649 = vmul.bf16 %v8393, 1036860877
    %v8650 = vmul.bf16 %v8394, 1036860877
    %v8651 = vmul.bf16 %v8395, 1036860877
    %v8652 = vmul.bf16 %v8396, 1036860877
    %v8653 = vmul.bf16 %v8397, 1036860877
    %v8654 = vmul.bf16 %v8398, 1036860877
    %v8655 = vmul.bf16 %v8399, 1036860877
    %v8656 = vmul.bf16 %v8400, 1036860877
    %v8657 = vmul.bf16 %v8401, 1036860877
    %v8658 = vmul.bf16 %v8402, 1036860877
    %v8659 = vmul.bf16 %v8403, 1036860877
    %v8660 = vmul.bf16 %v8404, 1036860877
    %v8661 = vmul.bf16 %v8405, 1036860877
    %v8662 = vmul.bf16 %v8406, 1036860877
    %v8663 = vmul.bf16 %v8407, 1036860877
    %v8664 = vmul.bf16 %v8408, 1036860877
    %v8665 = vmul.bf16 %v8409, 1036860877
    %v8666 = vmul.bf16 %v8410, 1036860877
    %v8667 = vmul.bf16 %v8411, 1036860877
    %v8668 = vmul.bf16 %v8412, 1036860877
    %v8669 = vmul.bf16 %v8413, 1036860877
    %v8670 = vmul.bf16 %v8414, 1036860877
    %v8671 = vmul.bf16 %v8415, 1036860877
    %v8672 = vmul.bf16 %v8416, 1036860877
    %v8673 = vmul.bf16 %v8417, 1036860877
    %v8674 = vmul.bf16 %v8418, 1036860877
    %v8675 = vmul.bf16 %v8419, 1036860877
    %v8676 = vmul.bf16 %v8420, 1036860877
    %v8677 = vmul.bf16 %v8421, 1036860877
    %v8678 = vmul.bf16 %v8422, 1036860877
    %v8679 = vmul.bf16 %v8423, 1036860877
    %v8680 = vmul.bf16 %v8424, 1036860877
    %v8681 = vmul.bf16 %v8425, 1036860877
    %v8682 = vmul.bf16 %v8426, 1036860877
    %v8683 = vmul.bf16 %v8427, 1036860877
    %v8684 = vmul.bf16 %v8428, 1036860877
    %v8685 = vmul.bf16 %v8429, 1036860877
    %v8686 = vmul.bf16 %v8430, 1036860877
    %v8687 = vmul.bf16 %v8431, 1036860877
    %v8688 = vmul.bf16 %v8432, 1036860877
    %v8689 = vmul.bf16 %v8433, 1036860877
    %v8690 = vmul.bf16 %v8434, 1036860877
    %v8691 = vmul.bf16 %v8435, 1036860877
    %v8692 = vmul.bf16 %v8436, 1036860877
    %v8693 = vmul.bf16 %v8437, 1036860877
    %v8694 = vmul.bf16 %v8438, 1036860877
    %v8695 = vmul.bf16 %v8439, 1036860877
    %v8696 = vmul.bf16 %v8440, 1036860877
    %v8697 = vmul.bf16 %v8441, 1036860877
    %v8698 = vmul.bf16 %v8442, 1036860877
    %v8699 = vmul.bf16 %v8443, 1036860877
    %v8700 = vmul.bf16 %v8444, 1036860877
    %v8701 = vmul.bf16 %v8445, 1036860877
    %v8702 = vmul.bf16 %v8446, 1036860877
    %v8703 = vmul.bf16 %v8447, 1036860877
    %v8704 = vmul.bf16 %v8448, 1036860877
    %v8705 = vmul.bf16 %v8449, 1036860877
    %v8706 = vmul.bf16 %v8450, 1036860877
    %v8707 = vmul.bf16 %v8451, 1036860877
    %v8708 = vmul.bf16 %v8452, 1036860877
    %v8709 = vmul.bf16 %v8453, 1036860877
    %v8710 = vmul.bf16 %v8454, 1036860877
    %v8711 = vmul.bf16 %v8455, 1036860877
    %v8712 = vmul.bf16 %v8456, 1036860877
    %v8713 = vmul.bf16 %v8457, 1036860877
    %v8714 = vmul.bf16 %v8458, 1036860877
    %v8715 = vmul.bf16 %v8459, 1036860877
    %v8716 = vmul.bf16 %v8460, 1036860877
    %v8717 = vmul.bf16 %v8461, 1036860877
    %v8718 = vmul.bf16 %v8462, 1036860877
    %v8719 = vmul.bf16 %v8463, 1036860877
    %v8720 = vmul.bf16 %v8464, 1036860877
    %v8721 = vmul.bf16 %v8465, 1036860877
    %v8722 = vmul.bf16 %v8466, 1036860877
    %v8723 = vmul.bf16 %v8467, 1036860877
    %v8724 = vmul.bf16 %v8468, 1036860877
    %v8725 = vmul.bf16 %v8469, 1036860877
    %v8726 = vmul.bf16 %v8470, 1036860877
    %v8727 = vmul.bf16 %v8471, 1036860877
    %v8728 = vmul.bf16 %v8472, 1036860877
    %v8729 = vmul.bf16 %v8473, 1036860877
    %v8730 = vmul.bf16 %v8474, 1036860877
    %v8731 = vmul.bf16 %v8475, 1036860877
    %v8732 = vmul.bf16 %v8476, 1036860877
    %v8733 = vmul.bf16 %v8477, 1036860877
    %v8734 = vmul.bf16 %v8478, 1036860877
    %v8735 = vmul.bf16 %v8479, 1036860877
    %v8736 = vmul.bf16 %v8480, 1036860877
    %v8737 = vmul.bf16 %v8481, 1036860877
    %v8738 = vmul.bf16 %v8482, 1036860877
    %v8739 = vmul.bf16 %v8483, 1036860877
    %v8740 = vmul.bf16 %v8484, 1036860877
    %v8741 = vmul.bf16 %v8485, 1036860877
    %v8742 = vmul.bf16 %v8486, 1036860877
    %v8743 = vmul.bf16 %v8487, 1036860877
    %v8744 = vmul.bf16 %v8488, 1036860877
    %v8745 = vmul.bf16 %v8489, 1036860877
    %v8746 = vmul.bf16 %v8490, 1036860877
    %v8747 = vmul.bf16 %v8491, 1036860877
    %v8748 = vmul.bf16 %v8492, 1036860877
    %v8749 = vmul.bf16 %v8493, 1036860877
    %v8750 = vmul.bf16 %v8494, 1036860877
    %v8751 = vmul.bf16 %v8495, 1036860877
    %v8752 = vmul.bf16 %v8496, 1036860877
    %v8753 = vmul.bf16 %v8497, 1036860877
    %v8754 = vmul.bf16 %v8498, 1036860877
    %v8755 = vmul.bf16 %v8499, 1036860877
    %v8756 = vmax.bf16 %v8244, %v8500
    %v8757 = vmax.bf16 %v8245, %v8501
    %v8758 = vmax.bf16 %v8246, %v8502
    %v8759 = vmax.bf16 %v8247, %v8503
    %v8760 = vmax.bf16 %v8248, %v8504
    %v8761 = vmax.bf16 %v8249, %v8505
    %v8762 = vmax.bf16 %v8250, %v8506
    %v8763 = vmax.bf16 %v8251, %v8507
    %v8764 = vmax.bf16 %v8252, %v8508
    %v8765 = vmax.bf16 %v8253, %v8509
    %v8766 = vmax.bf16 %v8254, %v8510
    %v8767 = vmax.bf16 %v8255, %v8511
    %v8768 = vmax.bf16 %v8256, %v8512
    %v8769 = vmax.bf16 %v8257, %v8513
    %v8770 = vmax.bf16 %v8258, %v8514
    %v8771 = vmax.bf16 %v8259, %v8515
    %v8772 = vmax.bf16 %v8260, %v8516
    %v8773 = vmax.bf16 %v8261, %v8517
    %v8774 = vmax.bf16 %v8262, %v8518
    %v8775 = vmax.bf16 %v8263, %v8519
    %v8776 = vmax.bf16 %v8264, %v8520
    %v8777 = vmax.bf16 %v8265, %v8521
    %v8778 = vmax.bf16 %v8266, %v8522
    %v8779 = vmax.bf16 %v8267, %v8523
    %v8780 = vmax.bf16 %v8268, %v8524
    %v8781 = vmax.bf16 %v8269, %v8525
    %v8782 = vmax.bf16 %v8270, %v8526
    %v8783 = vmax.bf16 %v8271, %v8527
    %v8784 = vmax.bf16 %v8272, %v8528
    %v8785 = vmax.bf16 %v8273, %v8529
    %v8786 = vmax.bf16 %v8274, %v8530
    %v8787 = vmax.bf16 %v8275, %v8531
    %v8788 = vmax.bf16 %v8276, %v8532
    %v8789 = vmax.bf16 %v8277, %v8533
    %v8790 = vmax.bf16 %v8278, %v8534
    %v8791 = vmax.bf16 %v8279, %v8535
    %v8792 = vmax.bf16 %v8280, %v8536
    %v8793 = vmax.bf16 %v8281, %v8537
    %v8794 = vmax.bf16 %v8282, %v8538
    %v8795 = vmax.bf16 %v8283, %v8539
    %v8796 = vmax.bf16 %v8284, %v8540
    %v8797 = vmax.bf16 %v8285, %v8541
    %v8798 = vmax.bf16 %v8286, %v8542
    %v8799 = vmax.bf16 %v8287, %v8543
    %v8800 = vmax.bf16 %v8288, %v8544
    %v8801 = vmax.bf16 %v8289, %v8545
    %v8802 = vmax.bf16 %v8290, %v8546
    %v8803 = vmax.bf16 %v8291, %v8547
    %v8804 = vmax.bf16 %v8292, %v8548
    %v8805 = vmax.bf16 %v8293, %v8549
    %v8806 = vmax.bf16 %v8294, %v8550
    %v8807 = vmax.bf16 %v8295, %v8551
    %v8808 = vmax.bf16 %v8296, %v8552
    %v8809 = vmax.bf16 %v8297, %v8553
    %v8810 = vmax.bf16 %v8298, %v8554
    %v8811 = vmax.bf16 %v8299, %v8555
    %v8812 = vmax.bf16 %v8300, %v8556
    %v8813 = vmax.bf16 %v8301, %v8557
    %v8814 = vmax.bf16 %v8302, %v8558
    %v8815 = vmax.bf16 %v8303, %v8559
    %v8816 = vmax.bf16 %v8304, %v8560
    %v8817 = vmax.bf16 %v8305, %v8561
    %v8818 = vmax.bf16 %v8306, %v8562
    %v8819 = vmax.bf16 %v8307, %v8563
    %v8820 = vmax.bf16 %v8308, %v8564
    %v8821 = vmax.bf16 %v8309, %v8565
    %v8822 = vmax.bf16 %v8310, %v8566
    %v8823 = vmax.bf16 %v8311, %v8567
    %v8824 = vmax.bf16 %v8312, %v8568
    %v8825 = vmax.bf16 %v8313, %v8569
    %v8826 = vmax.bf16 %v8314, %v8570
    %v8827 = vmax.bf16 %v8315, %v8571
    %v8828 = vmax.bf16 %v8316, %v8572
    %v8829 = vmax.bf16 %v8317, %v8573
    %v8830 = vmax.bf16 %v8318, %v8574
    %v8831 = vmax.bf16 %v8319, %v8575
    %v8832 = vmax.bf16 %v8320, %v8576
    %v8833 = vmax.bf16 %v8321, %v8577
    %v8834 = vmax.bf16 %v8322, %v8578
    %v8835 = vmax.bf16 %v8323, %v8579
    %v8836 = vmax.bf16 %v8324, %v8580
    %v8837 = vmax.bf16 %v8325, %v8581
    %v8838 = vmax.bf16 %v8326, %v8582
    %v8839 = vmax.bf16 %v8327, %v8583
    %v8840 = vmax.bf16 %v8328, %v8584
    %v8841 = vmax.bf16 %v8329, %v8585
    %v8842 = vmax.bf16 %v8330, %v8586
    %v8843 = vmax.bf16 %v8331, %v8587
    %v8844 = vmax.bf16 %v8332, %v8588
    %v8845 = vmax.bf16 %v8333, %v8589
    %v8846 = vmax.bf16 %v8334, %v8590
    %v8847 = vmax.bf16 %v8335, %v8591
    %v8848 = vmax.bf16 %v8336, %v8592
    %v8849 = vmax.bf16 %v8337, %v8593
    %v8850 = vmax.bf16 %v8338, %v8594
    %v8851 = vmax.bf16 %v8339, %v8595
    %v8852 = vmax.bf16 %v8340, %v8596
    %v8853 = vmax.bf16 %v8341, %v8597
    %v8854 = vmax.bf16 %v8342, %v8598
    %v8855 = vmax.bf16 %v8343, %v8599
    %v8856 = vmax.bf16 %v8344, %v8600
    %v8857 = vmax.bf16 %v8345, %v8601
    %v8858 = vmax.bf16 %v8346, %v8602
    %v8859 = vmax.bf16 %v8347, %v8603
    %v8860 = vmax.bf16 %v8348, %v8604
    %v8861 = vmax.bf16 %v8349, %v8605
    %v8862 = vmax.bf16 %v8350, %v8606
    %v8863 = vmax.bf16 %v8351, %v8607
    %v8864 = vmax.bf16 %v8352, %v8608
    %v8865 = vmax.bf16 %v8353, %v8609
    %v8866 = vmax.bf16 %v8354, %v8610
    %v8867 = vmax.bf16 %v8355, %v8611
    %v8868 = vmax.bf16 %v8356, %v8612
    %v8869 = vmax.bf16 %v8357, %v8613
    %v8870 = vmax.bf16 %v8358, %v8614
    %v8871 = vmax.bf16 %v8359, %v8615
    %v8872 = vmax.bf16 %v8360, %v8616
    %v8873 = vmax.bf16 %v8361, %v8617
    %v8874 = vmax.bf16 %v8362, %v8618
    %v8875 = vmax.bf16 %v8363, %v8619
    %v8876 = vmax.bf16 %v8364, %v8620
    %v8877 = vmax.bf16 %v8365, %v8621
    %v8878 = vmax.bf16 %v8366, %v8622
    %v8879 = vmax.bf16 %v8367, %v8623
    %v8880 = vmax.bf16 %v8368, %v8624
    %v8881 = vmax.bf16 %v8369, %v8625
    %v8882 = vmax.bf16 %v8370, %v8626
    %v8883 = vmax.bf16 %v8371, %v8627
    %v8884 = vmax.bf16 %v8372, %v8628
    %v8885 = vmax.bf16 %v8373, %v8629
    %v8886 = vmax.bf16 %v8374, %v8630
    %v8887 = vmax.bf16 %v8375, %v8631
    %v8888 = vmax.bf16 %v8376, %v8632
    %v8889 = vmax.bf16 %v8377, %v8633
    %v8890 = vmax.bf16 %v8378, %v8634
    %v8891 = vmax.bf16 %v8379, %v8635
    %v8892 = vmax.bf16 %v8380, %v8636
    %v8893 = vmax.bf16 %v8381, %v8637
    %v8894 = vmax.bf16 %v8382, %v8638
    %v8895 = vmax.bf16 %v8383, %v8639
    %v8896 = vmax.bf16 %v8384, %v8640
    %v8897 = vmax.bf16 %v8385, %v8641
    %v8898 = vmax.bf16 %v8386, %v8642
    %v8899 = vmax.bf16 %v8387, %v8643
    %v8900 = vmax.bf16 %v8388, %v8644
    %v8901 = vmax.bf16 %v8389, %v8645
    %v8902 = vmax.bf16 %v8390, %v8646
    %v8903 = vmax.bf16 %v8391, %v8647
    %v8904 = vmax.bf16 %v8392, %v8648
    %v8905 = vmax.bf16 %v8393, %v8649
    %v8906 = vmax.bf16 %v8394, %v8650
    %v8907 = vmax.bf16 %v8395, %v8651
    %v8908 = vmax.bf16 %v8396, %v8652
    %v8909 = vmax.bf16 %v8397, %v8653
    %v8910 = vmax.bf16 %v8398, %v8654
    %v8911 = vmax.bf16 %v8399, %v8655
    %v8912 = vmax.bf16 %v8400, %v8656
    %v8913 = vmax.bf16 %v8401, %v8657
    %v8914 = vmax.bf16 %v8402, %v8658
    %v8915 = vmax.bf16 %v8403, %v8659
    %v8916 = vmax.bf16 %v8404, %v8660
    %v8917 = vmax.bf16 %v8405, %v8661
    %v8918 = vmax.bf16 %v8406, %v8662
    %v8919 = vmax.bf16 %v8407, %v8663
    %v8920 = vmax.bf16 %v8408, %v8664
    %v8921 = vmax.bf16 %v8409, %v8665
    %v8922 = vmax.bf16 %v8410, %v8666
    %v8923 = vmax.bf16 %v8411, %v8667
    %v8924 = vmax.bf16 %v8412, %v8668
    %v8925 = vmax.bf16 %v8413, %v8669
    %v8926 = vmax.bf16 %v8414, %v8670
    %v8927 = vmax.bf16 %v8415, %v8671
    %v8928 = vmax.bf16 %v8416, %v8672
    %v8929 = vmax.bf16 %v8417, %v8673
    %v8930 = vmax.bf16 %v8418, %v8674
    %v8931 = vmax.bf16 %v8419, %v8675
    %v8932 = vmax.bf16 %v8420, %v8676
    %v8933 = vmax.bf16 %v8421, %v8677
    %v8934 = vmax.bf16 %v8422, %v8678
    %v8935 = vmax.bf16 %v8423, %v8679
    %v8936 = vmax.bf16 %v8424, %v8680
    %v8937 = vmax.bf16 %v8425, %v8681
    %v8938 = vmax.bf16 %v8426, %v8682
    %v8939 = vmax.bf16 %v8427, %v8683
    %v8940 = vmax.bf16 %v8428, %v8684
    %v8941 = vmax.bf16 %v8429, %v8685
    %v8942 = vmax.bf16 %v8430, %v8686
    %v8943 = vmax.bf16 %v8431, %v8687
    %v8944 = vmax.bf16 %v8432, %v8688
    %v8945 = vmax.bf16 %v8433, %v8689
    %v8946 = vmax.bf16 %v8434, %v8690
    %v8947 = vmax.bf16 %v8435, %v8691
    %v8948 = vmax.bf16 %v8436, %v8692
    %v8949 = vmax.bf16 %v8437, %v8693
    %v8950 = vmax.bf16 %v8438, %v8694
    %v8951 = vmax.bf16 %v8439, %v8695
    %v8952 = vmax.bf16 %v8440, %v8696
    %v8953 = vmax.bf16 %v8441, %v8697
    %v8954 = vmax.bf16 %v8442, %v8698
    %v8955 = vmax.bf16 %v8443, %v8699
    %v8956 = vmax.bf16 %v8444, %v8700
    %v8957 = vmax.bf16 %v8445, %v8701
    %v8958 = vmax.bf16 %v8446, %v8702
    %v8959 = vmax.bf16 %v8447, %v8703
    %v8960 = vmax.bf16 %v8448, %v8704
    %v8961 = vmax.bf16 %v8449, %v8705
    %v8962 = vmax.bf16 %v8450, %v8706
    %v8963 = vmax.bf16 %v8451, %v8707
    %v8964 = vmax.bf16 %v8452, %v8708
    %v8965 = vmax.bf16 %v8453, %v8709
    %v8966 = vmax.bf16 %v8454, %v8710
    %v8967 = vmax.bf16 %v8455, %v8711
    %v8968 = vmax.bf16 %v8456, %v8712
    %v8969 = vmax.bf16 %v8457, %v8713
    %v8970 = vmax.bf16 %v8458, %v8714
    %v8971 = vmax.bf16 %v8459, %v8715
    %v8972 = vmax.bf16 %v8460, %v8716
    %v8973 = vmax.bf16 %v8461, %v8717
    %v8974 = vmax.bf16 %v8462, %v8718
    %v8975 = vmax.bf16 %v8463, %v8719
    %v8976 = vmax.bf16 %v8464, %v8720
    %v8977 = vmax.bf16 %v8465, %v8721
    %v8978 = vmax.bf16 %v8466, %v8722
    %v8979 = vmax.bf16 %v8467, %v8723
    %v8980 = vmax.bf16 %v8468, %v8724
    %v8981 = vmax.bf16 %v8469, %v8725
    %v8982 = vmax.bf16 %v8470, %v8726
    %v8983 = vmax.bf16 %v8471, %v8727
    %v8984 = vmax.bf16 %v8472, %v8728
    %v8985 = vmax.bf16 %v8473, %v8729
    %v8986 = vmax.bf16 %v8474, %v8730
    %v8987 = vmax.bf16 %v8475, %v8731
    %v8988 = vmax.bf16 %v8476, %v8732
    %v8989 = vmax.bf16 %v8477, %v8733
    %v8990 = vmax.bf16 %v8478, %v8734
    %v8991 = vmax.bf16 %v8479, %v8735
    %v8992 = vmax.bf16 %v8480, %v8736
    %v8993 = vmax.bf16 %v8481, %v8737
    %v8994 = vmax.bf16 %v8482, %v8738
    %v8995 = vmax.bf16 %v8483, %v8739
    %v8996 = vmax.bf16 %v8484, %v8740
    %v8997 = vmax.bf16 %v8485, %v8741
    %v8998 = vmax.bf16 %v8486, %v8742
    %v8999 = vmax.bf16 %v8487, %v8743
    %v9000 = vmax.bf16 %v8488, %v8744
    %v9001 = vmax.bf16 %v8489, %v8745
    %v9002 = vmax.bf16 %v8490, %v8746
    %v9003 = vmax.bf16 %v8491, %v8747
    %v9004 = vmax.bf16 %v8492, %v8748
    %v9005 = vmax.bf16 %v8493, %v8749
    %v9006 = vmax.bf16 %v8494, %v8750
    %v9007 = vmax.bf16 %v8495, %v8751
    %v9008 = vmax.bf16 %v8496, %v8752
    %v9009 = vmax.bf16 %v8497, %v8753
    %v9010 = vmax.bf16 %v8498, %v8754
    %v9011 = vmax.bf16 %v8499, %v8755
    %v9012 = vld [vmem:[%s10] sm:$0xf]
    %v9013 = vld [vmem:[%s10 + $0x4] sm:$0xf]
    %v9014 = vld [vmem:[%s10 + $0x8] sm:$0xf]
    %v9015 = vld [vmem:[%s10 + $0xc] sm:$0xf]
    %v9016 = vld [vmem:[%s10 + $0x10] sm:$0xf]
    %v9017 = vld [vmem:[%s10 + $0x14] sm:$0xf]
    %v9018 = vld [vmem:[%s10 + $0x18] sm:$0xf]
    %v9019 = vld [vmem:[%s10 + $0x1c] sm:$0xf]
    %v9020 = vld [vmem:[%s10 + $0x20] sm:$0xf]
    %v9021 = vld [vmem:[%s10 + $0x24] sm:$0xf]
    %v9022 = vld [vmem:[%s10 + $0x28] sm:$0xf]
    %v9023 = vld [vmem:[%s10 + $0x2c] sm:$0xf]
    %v9024 = vld [vmem:[%s10 + $0x30] sm:$0xf]
    %v9025 = vld [vmem:[%s10 + $0x34] sm:$0xf]
    %v9026 = vld [vmem:[%s10 + $0x38] sm:$0xf]
    %v9027 = vld [vmem:[%s10 + $0x3c] sm:$0xf]
    %v9028 = vld [vmem:[%s10 + $0x40] sm:$0xf]
    %v9029 = vld [vmem:[%s10 + $0x44] sm:$0xf]
    %v9030 = vld [vmem:[%s10 + $0x48] sm:$0xf]
    %v9031 = vld [vmem:[%s10 + $0x4c] sm:$0xf]
    %v9032 = vld [vmem:[%s10 + $0x50] sm:$0xf]
    %v9033 = vld [vmem:[%s10 + $0x54] sm:$0xf]
    %v9034 = vld [vmem:[%s10 + $0x58] sm:$0xf]
    %v9035 = vld [vmem:[%s10 + $0x5c] sm:$0xf]
    %v9036 = vld [vmem:[%s10 + $0x60] sm:$0xf]
    %v9037 = vld [vmem:[%s10 + $0x64] sm:$0xf]
    %v9038 = vld [vmem:[%s10 + $0x68] sm:$0xf]
    %v9039 = vld [vmem:[%s10 + $0x6c] sm:$0xf]
    %v9040 = vld [vmem:[%s10 + $0x70] sm:$0xf]
    %v9041 = vld [vmem:[%s10 + $0x74] sm:$0xf]
    %v9042 = vld [vmem:[%s10 + $0x78] sm:$0xf]
    %v9043 = vld [vmem:[%s10 + $0x7c] sm:$0xf]
    %v9044 = vld [vmem:[%s11] sm:$0x1]
    %v9046 = vlaneseq
    %v9047 = vshrl.u32 %v9046, 7
    %v9048 = vsub.s32 0, %v9047
    %v9049 = vrot.slane %v9044, %v9048
    %v9083 = vunpack.c.l.b16 %v9012
    %v9084 = vunpack.c.l.b16 %v9013
    %v9085 = vunpack.c.l.b16 %v9014
    %v9086 = vunpack.c.l.b16 %v9015
    %v9087 = vunpack.c.l.b16 %v9016
    %v9088 = vunpack.c.l.b16 %v9017
    %v9089 = vunpack.c.l.b16 %v9018
    %v9090 = vunpack.c.l.b16 %v9019
    %v9091 = vunpack.c.l.b16 %v9020
    %v9092 = vunpack.c.l.b16 %v9021
    %v9093 = vunpack.c.l.b16 %v9022
    %v9094 = vunpack.c.l.b16 %v9023
    %v9095 = vunpack.c.l.b16 %v9024
    %v9096 = vunpack.c.l.b16 %v9025
    %v9097 = vunpack.c.l.b16 %v9026
    %v9098 = vunpack.c.l.b16 %v9027
    %v9099 = vunpack.c.l.b16 %v9028
    %v9100 = vunpack.c.l.b16 %v9029
    %v9101 = vunpack.c.l.b16 %v9030
    %v9102 = vunpack.c.l.b16 %v9031
    %v9103 = vunpack.c.l.b16 %v9032
    %v9104 = vunpack.c.l.b16 %v9033
    %v9105 = vunpack.c.l.b16 %v9034
    %v9106 = vunpack.c.l.b16 %v9035
    %v9107 = vunpack.c.l.b16 %v9036
    %v9108 = vunpack.c.l.b16 %v9037
    %v9109 = vunpack.c.l.b16 %v9038
    %v9110 = vunpack.c.l.b16 %v9039
    %v9111 = vunpack.c.l.b16 %v9040
    %v9112 = vunpack.c.l.b16 %v9041
    %v9113 = vunpack.c.l.b16 %v9042
    %v9114 = vunpack.c.l.b16 %v9043
    %v9115 = vpack.c.b16 %v9084, %v9083
    %v9116 = vpack.c.b16 %v9086, %v9085
    %v9117 = vpack.c.b16 %v9088, %v9087
    %v9118 = vpack.c.b16 %v9090, %v9089
    %v9119 = vpack.c.b16 %v9092, %v9091
    %v9120 = vpack.c.b16 %v9094, %v9093
    %v9121 = vpack.c.b16 %v9096, %v9095
    %v9122 = vpack.c.b16 %v9098, %v9097
    %v9123 = vpack.c.b16 %v9100, %v9099
    %v9124 = vpack.c.b16 %v9102, %v9101
    %v9125 = vpack.c.b16 %v9104, %v9103
    %v9126 = vpack.c.b16 %v9106, %v9105
    %v9127 = vpack.c.b16 %v9108, %v9107
    %v9128 = vpack.c.b16 %v9110, %v9109
    %v9129 = vpack.c.b16 %v9112, %v9111
    %v9130 = vpack.c.b16 %v9114, %v9113
    %9147 = vmatprep.subr.bf16.mxu0 0
    %9148 = vmatpush1.bf16.msra.mxu0 %v9115
    %9149 = vmatprep.subr.bf16.mxu0 0
    %9150 = vmatpush1.bf16.msra.mxu0 %v9116
    %9151 = vmatprep.subr.bf16.mxu0 0
    %9152 = vmatpush1.bf16.msra.mxu0 %v9117
    %9153 = vmatprep.subr.bf16.mxu0 0
    %9154 = vmatpush1.bf16.msra.mxu0 %v9118
    %9155 = vmatprep.subr.bf16.mxu0 0
    %9156 = vmatpush1.bf16.msra.mxu0 %v9119
    %9157 = vmatprep.subr.bf16.mxu0 0
    %9158 = vmatpush1.bf16.msra.mxu0 %v9120
    %9159 = vmatprep.subr.bf16.mxu0 0
    %9160 = vmatpush1.bf16.msra.mxu0 %v9121
    %9161 = vmatprep.subr.bf16.mxu0 0
    %9162 = vmatpush1.bf16.msra.mxu0 %v9122
    %9163 = vmatprep.subr.bf16.mxu0 0
    %9164 = vmatpush1.bf16.msra.mxu0 %v9123
    %9165 = vmatprep.subr.bf16.mxu0 0
    %9166 = vmatpush1.bf16.msra.mxu0 %v9124
    %9167 = vmatprep.subr.bf16.mxu0 0
    %9168 = vmatpush1.bf16.msra.mxu0 %v9125
    %9169 = vmatprep.subr.bf16.mxu0 0
    %9170 = vmatpush1.bf16.msra.mxu0 %v9126
    %9171 = vmatprep.subr.bf16.mxu0 0
    %9172 = vmatpush1.bf16.msra.mxu0 %v9127
    %9173 = vmatprep.subr.bf16.mxu0 0
    %9174 = vmatpush1.bf16.msra.mxu0 %v9128
    %9175 = vmatprep.subr.bf16.mxu0 0
    %9176 = vmatpush1.bf16.msra.mxu0 %v9129
    %9177 = vmatprep.subr.bf16.mxu0 0
    %9178 = vmatpush1.bf16.msra.mxu0 %v9130
    %9179 = vmatprep.mubr.bf16.mxu0 %v8757
    %9180 = vmatmul.mubr.bf16.gmra.mrb[0].mxu0 %v8756
    %v9181 = vpop.f32.mrb[0].mxu0
    %v9182 = vadd.f32 %v9049, %v9181
    %v9183 = vpop.f32.mrb[0].mxu0
    %v9184 = vpop.f32.mrb[0].mxu0
    %v9185 = vadd.f32 %v9049, %v9184
    %v9186 = vpop.f32.mrb[0].mxu0
    %9187 = vmatprep.mubr.bf16.mxu0 %v8759
    %9188 = vmatmul.mubr.bf16.gmra.mrb[0].mxu0 %v8758
    %v9189 = vpop.f32.mrb[0].mxu0
    %v9190 = vadd.f32 %v9049, %v9189
    %v9191 = vpop.f32.mrb[0].mxu0
    %v9192 = vpop.f32.mrb[0].mxu0
    %v9193 = vadd.f32 %v9049, %v9192
    %v9194 = vpop.f32.mrb[0].mxu0
    %9195 = vmatprep.mubr.bf16.mxu0 %v8761
    %9196 = vmatmul.mubr.bf16.gmra.mrb[0].mxu0 %v8760
    %v9197 = vpop.f32.mrb[0].mxu0
    %v9198 = vadd.f32 %v9049, %v9197
    %v9199 = vpop.f32.mrb[0].mxu0
    %v9200 = vpop.f32.mrb[0].mxu0
    %v9201 = vadd.f32 %v9049, %v9200
    %v9202 = vpop.f32.mrb[0].mxu0
    %9203 = vmatprep.mubr.bf16.mxu0 %v8763
    %9204 = vmatmul.mubr.bf16.gmra.mrb[0].mxu0 %v8762
    %v9205 = vpop.f32.mrb[0].mxu0
    %v9206 = vadd.f32 %v9049, %v9205
    %v9207 = vpop.f32.mrb[0].mxu0
    %v9208 = vpop.f32.mrb[0].mxu0
    %v9209 = vadd.f32 %v9049, %v9208
    %v9210 = vpop.f32.mrb[0].mxu0
    %9211 = vmatprep.mubr.bf16.mxu0 %v8765
    %9212 = vmatmul.mubr.bf16.gmra.mrb[0].mxu0 %v8764
    %v9213 = vpop.f32.mrb[0].mxu0
    %v9214 = vadd.f32 %v9049, %v9213
    %v9215 = vpop.f32.mrb[0].mxu0
    %v9216 = vpop.f32.mrb[0].mxu0
    %v9217 = vadd.f32 %v9049, %v9216
    %v9218 = vpop.f32.mrb[0].mxu0
    %9219 = vmatprep.mubr.bf16.mxu0 %v8767
    %9220 = vmatmul.mubr.bf16.gmra.mrb[0].mxu0 %v8766
    %v9221 = vpop.f32.mrb[0].mxu0
    %v9222 = vadd.f32 %v9049, %v9221
    %v9223 = vpop.f32.mrb[0].mxu0
    %v9224 = vpop.f32.mrb[0].mxu0
    %v9225 = vadd.f32 %v9049, %v9224
    %v9226 = vpop.f32.mrb[0].mxu0
    %9227 = vmatprep.mubr.bf16.mxu0 %v8769
    %9228 = vmatmul.mubr.bf16.gmra.mrb[0].mxu0 %v8768
    %v9229 = vpop.f32.mrb[0].mxu0
    %v9230 = vadd.f32 %v9049, %v9229
    %v9231 = vpop.f32.mrb[0].mxu0
    %v9232 = vpop.f32.mrb[0].mxu0
    %v9233 = vadd.f32 %v9049, %v9232
    %v9234 = vpop.f32.mrb[0].mxu0
    %9235 = vmatprep.mubr.bf16.mxu0 %v8771
    %9236 = vmatmul.mubr.bf16.gmra.mrb[0].mxu0 %v8770
    %v9237 = vpop.f32.mrb[0].mxu0
    %v9238 = vadd.f32 %v9049, %v9237
    %v9239 = vpop.f32.mrb[0].mxu0
    %v9240 = vpop.f32.mrb[0].mxu0
    %v9241 = vadd.f32 %v9049, %v9240
    %v9242 = vpop.f32.mrb[0].mxu0
    %9243 = vmatprep.mubr.bf16.mxu0 %v8773
    %9244 = vmatmul.mubr.bf16.gmra.mrb[0].mxu0 %v8772
    %v9245 = vpop.f32.mrb[0].mxu0
    %v9246 = vadd.f32 %v9049, %v9245
    %v9247 = vpop.f32.mrb[0].mxu0
    %v9248 = vpop.f32.mrb[0].mxu0
    %v9249 = vadd.f32 %v9049, %v9248
    %v9250 = vpop.f32.mrb[0].mxu0
    %9251 = vmatprep.mubr.bf16.mxu0 %v8775
    %9252 = vmatmul.mubr.bf16.gmra.mrb[0].mxu0 %v8774
    %v9253 = vpop.f32.mrb[0].mxu0
    %v9254 = vadd.f32 %v9049, %v9253
    %v9255 = vpop.f32.mrb[0].mxu0
    %v9256 = vpop.f32.mrb[0].mxu0
    %v9257 = vadd.f32 %v9049, %v9256
    %v9258 = vpop.f32.mrb[0].mxu0
    %9259 = vmatprep.mubr.bf16.mxu0 %v8777
    %9260 = vmatmul.mubr.bf16.gmra.mrb[0].mxu0 %v8776
    %v9261 = vpop.f32.mrb[0].mxu0
    %v9262 = vadd.f32 %v9049, %v9261
    %v9263 = vpop.f32.mrb[0].mxu0
    %v9264 = vpop.f32.mrb[0].mxu0
    %v9265 = vadd.f32 %v9049, %v9264
    %v9266 = vpop.f32.mrb[0].mxu0
    %9267 = vmatprep.mubr.bf16.mxu0 %v8779
    %9268 = vmatmul.mubr.bf16.gmra.mrb[0].mxu0 %v8778
    %v9269 = vpop.f32.mrb[0].mxu0
    %v9270 = vadd.f32 %v9049, %v9269
    %v9271 = vpop.f32.mrb[0].mxu0
    %v9272 = vpop.f32.mrb[0].mxu0
    %v9273 = vadd.f32 %v9049, %v9272
    %v9274 = vpop.f32.mrb[0].mxu0
    %9275 = vmatprep.mubr.bf16.mxu0 %v8781
    %9276 = vmatmul.mubr.bf16.gmra.mrb[0].mxu0 %v8780
    %v9277 = vpop.f32.mrb[0].mxu0
    %v9278 = vadd.f32 %v9049, %v9277
    %v9279 = vpop.f32.mrb[0].mxu0
    %v9280 = vpop.f32.mrb[0].mxu0
    %v9281 = vadd.f32 %v9049, %v9280
    %v9282 = vpop.f32.mrb[0].mxu0
    %9283 = vmatprep.mubr.bf16.mxu0 %v8783
    %9284 = vmatmul.mubr.bf16.gmra.mrb[0].mxu0 %v8782
    %v9285 = vpop.f32.mrb[0].mxu0
    %v9286 = vadd.f32 %v9049, %v9285
    %v9287 = vpop.f32.mrb[0].mxu0
    %v9288 = vpop.f32.mrb[0].mxu0
    %v9289 = vadd.f32 %v9049, %v9288
    %v9290 = vpop.f32.mrb[0].mxu0
    %9291 = vmatprep.mubr.bf16.mxu0 %v8785
    %9292 = vmatmul.mubr.bf16.gmra.mrb[0].mxu0 %v8784
    %v9293 = vpop.f32.mrb[0].mxu0
    %v9294 = vadd.f32 %v9049, %v9293
    %v9295 = vpop.f32.mrb[0].mxu0
    %v9296 = vpop.f32.mrb[0].mxu0
    %v9297 = vadd.f32 %v9049, %v9296
    %v9298 = vpop.f32.mrb[0].mxu0
    %9299 = vmatprep.mubr.bf16.mxu0 %v8787
    %9300 = vmatmul.mubr.bf16.gmra.mrb[0].mxu0 %v8786
    %v9301 = vpop.f32.mrb[0].mxu0
    %v9302 = vadd.f32 %v9049, %v9301
    %v9303 = vpop.f32.mrb[0].mxu0
    %v9304 = vpop.f32.mrb[0].mxu0
    %v9305 = vadd.f32 %v9049, %v9304
    %v9306 = vpop.f32.mrb[0].mxu0
    %9307 = vmatprep.mubr.bf16.mxu0 %v8789
    %9308 = vmatmul.mubr.bf16.gmra.mrb[0].mxu0 %v8788
    %v9309 = vpop.f32.mrb[0].mxu0
    %v9310 = vadd.f32 %v9049, %v9309
    %v9311 = vpop.f32.mrb[0].mxu0
    %v9312 = vpop.f32.mrb[0].mxu0
    %v9313 = vadd.f32 %v9049, %v9312
    %v9314 = vpop.f32.mrb[0].mxu0
    %9315 = vmatprep.mubr.bf16.mxu0 %v8791
    %9316 = vmatmul.mubr.bf16.gmra.mrb[0].mxu0 %v8790
    %v9317 = vpop.f32.mrb[0].mxu0
    %v9318 = vadd.f32 %v9049, %v9317
    %v9319 = vpop.f32.mrb[0].mxu0
    %v9320 = vpop.f32.mrb[0].mxu0
    %v9321 = vadd.f32 %v9049, %v9320
    %v9322 = vpop.f32.mrb[0].mxu0
    %9323 = vmatprep.mubr.bf16.mxu0 %v8793
    %9324 = vmatmul.mubr.bf16.gmra.mrb[0].mxu0 %v8792
    %v9325 = vpop.f32.mrb[0].mxu0
    %v9326 = vadd.f32 %v9049, %v9325
    %v9327 = vpop.f32.mrb[0].mxu0
    %v9328 = vpop.f32.mrb[0].mxu0
    %v9329 = vadd.f32 %v9049, %v9328
    %v9330 = vpop.f32.mrb[0].mxu0
    %9331 = vmatprep.mubr.bf16.mxu0 %v8795
    %9332 = vmatmul.mubr.bf16.gmra.mrb[0].mxu0 %v8794
    %v9333 = vpop.f32.mrb[0].mxu0
    %v9334 = vadd.f32 %v9049, %v9333
    %v9335 = vpop.f32.mrb[0].mxu0
    %v9336 = vpop.f32.mrb[0].mxu0
    %v9337 = vadd.f32 %v9049, %v9336
    %v9338 = vpop.f32.mrb[0].mxu0
    %9339 = vmatprep.mubr.bf16.mxu0 %v8797
    %9340 = vmatmul.mubr.bf16.gmra.mrb[0].mxu0 %v8796
    %v9341 = vpop.f32.mrb[0].mxu0
    %v9342 = vadd.f32 %v9049, %v9341
    %v9343 = vpop.f32.mrb[0].mxu0
    %v9344 = vpop.f32.mrb[0].mxu0
    %v9345 = vadd.f32 %v9049, %v9344
    %v9346 = vpop.f32.mrb[0].mxu0
    %9347 = vmatprep.mubr.bf16.mxu0 %v8799
    %9348 = vmatmul.mubr.bf16.gmra.mrb[0].mxu0 %v8798
    %v9349 = vpop.f32.mrb[0].mxu0
    %v9350 = vadd.f32 %v9049, %v9349
    %v9351 = vpop.f32.mrb[0].mxu0
    %v9352 = vpop.f32.mrb[0].mxu0
    %v9353 = vadd.f32 %v9049, %v9352
    %v9354 = vpop.f32.mrb[0].mxu0
    %9355 = vmatprep.mubr.bf16.mxu0 %v8801
    %9356 = vmatmul.mubr.bf16.gmra.mrb[0].mxu0 %v8800
    %v9357 = vpop.f32.mrb[0].mxu0
    %v9358 = vadd.f32 %v9049, %v9357
    %v9359 = vpop.f32.mrb[0].mxu0
    %v9360 = vpop.f32.mrb[0].mxu0
    %v9361 = vadd.f32 %v9049, %v9360
    %v9362 = vpop.f32.mrb[0].mxu0
    %9363 = vmatprep.mubr.bf16.mxu0 %v8803
    %9364 = vmatmul.mubr.bf16.gmra.mrb[0].mxu0 %v8802
    %v9365 = vpop.f32.mrb[0].mxu0
    %v9366 = vadd.f32 %v9049, %v9365
    %v9367 = vpop.f32.mrb[0].mxu0
    %v9368 = vpop.f32.mrb[0].mxu0
    %v9369 = vadd.f32 %v9049, %v9368
    %v9370 = vpop.f32.mrb[0].mxu0
    %9371 = vmatprep.mubr.bf16.mxu0 %v8805
    %9372 = vmatmul.mubr.bf16.gmra.mrb[0].mxu0 %v8804
    %v9373 = vpop.f32.mrb[0].mxu0
    %v9374 = vadd.f32 %v9049, %v9373
    %v9375 = vpop.f32.mrb[0].mxu0
    %v9376 = vpop.f32.mrb[0].mxu0
    %v9377 = vadd.f32 %v9049, %v9376
    %v9378 = vpop.f32.mrb[0].mxu0
    %9379 = vmatprep.mubr.bf16.mxu0 %v8807
    %9380 = vmatmul.mubr.bf16.gmra.mrb[0].mxu0 %v8806
    %v9381 = vpop.f32.mrb[0].mxu0
    %v9382 = vadd.f32 %v9049, %v9381
    %v9383 = vpop.f32.mrb[0].mxu0
    %v9384 = vpop.f32.mrb[0].mxu0
    %v9385 = vadd.f32 %v9049, %v9384
    %v9386 = vpop.f32.mrb[0].mxu0
    %9387 = vmatprep.mubr.bf16.mxu0 %v8809
    %9388 = vmatmul.mubr.bf16.gmra.mrb[0].mxu0 %v8808
    %v9389 = vpop.f32.mrb[0].mxu0
    %v9390 = vadd.f32 %v9049, %v9389
    %v9391 = vpop.f32.mrb[0].mxu0
    %v9392 = vpop.f32.mrb[0].mxu0
    %v9393 = vadd.f32 %v9049, %v9392
    %v9394 = vpop.f32.mrb[0].mxu0
    %9395 = vmatprep.mubr.bf16.mxu0 %v8811
    %9396 = vmatmul.mubr.bf16.gmra.mrb[0].mxu0 %v8810
    %v9397 = vpop.f32.mrb[0].mxu0
    %v9398 = vadd.f32 %v9049, %v9397
    %v9399 = vpop.f32.mrb[0].mxu0
    %v9400 = vpop.f32.mrb[0].mxu0
    %v9401 = vadd.f32 %v9049, %v9400
    %v9402 = vpop.f32.mrb[0].mxu0
    %9403 = vmatprep.mubr.bf16.mxu0 %v8813
    %9404 = vmatmul.mubr.bf16.gmra.mrb[0].mxu0 %v8812
    %v9405 = vpop.f32.mrb[0].mxu0
    %v9406 = vadd.f32 %v9049, %v9405
    %v9407 = vpop.f32.mrb[0].mxu0
    %v9408 = vpop.f32.mrb[0].mxu0
    %v9409 = vadd.f32 %v9049, %v9408
    %v9410 = vpop.f32.mrb[0].mxu0
    %9411 = vmatprep.mubr.bf16.mxu0 %v8815
    %9412 = vmatmul.mubr.bf16.gmra.mrb[0].mxu0 %v8814
    %v9413 = vpop.f32.mrb[0].mxu0
    %v9414 = vadd.f32 %v9049, %v9413
    %v9415 = vpop.f32.mrb[0].mxu0
    %v9416 = vpop.f32.mrb[0].mxu0
    %v9417 = vadd.f32 %v9049, %v9416
    %v9418 = vpop.f32.mrb[0].mxu0
    %9419 = vmatprep.mubr.bf16.mxu0 %v8817
    %9420 = vmatmul.mubr.bf16.gmra.mrb[0].mxu0 %v8816
    %v9421 = vpop.f32.mrb[0].mxu0
    %v9422 = vadd.f32 %v9049, %v9421
    %v9423 = vpop.f32.mrb[0].mxu0
    %v9424 = vpop.f32.mrb[0].mxu0
    %v9425 = vadd.f32 %v9049, %v9424
    %v9426 = vpop.f32.mrb[0].mxu0
    %9427 = vmatprep.mubr.bf16.mxu0 %v8819
    %9428 = vmatmul.mubr.bf16.gmra.mrb[0].mxu0 %v8818
    %v9429 = vpop.f32.mrb[0].mxu0
    %v9430 = vadd.f32 %v9049, %v9429
    %v9431 = vpop.f32.mrb[0].mxu0
    %v9432 = vpop.f32.mrb[0].mxu0
    %v9433 = vadd.f32 %v9049, %v9432
    %v9434 = vpop.f32.mrb[0].mxu0
    %9435 = vmatprep.mubr.bf16.mxu0 %v8821
    %9436 = vmatmul.mubr.bf16.gmra.mrb[0].mxu0 %v8820
    %v9437 = vpop.f32.mrb[0].mxu0
    %v9438 = vadd.f32 %v9049, %v9437
    %v9439 = vpop.f32.mrb[0].mxu0
    %v9440 = vpop.f32.mrb[0].mxu0
    %v9441 = vadd.f32 %v9049, %v9440
    %v9442 = vpop.f32.mrb[0].mxu0
    %9443 = vmatprep.mubr.bf16.mxu0 %v8823
    %9444 = vmatmul.mubr.bf16.gmra.mrb[0].mxu0 %v8822
    %v9445 = vpop.f32.mrb[0].mxu0
    %v9446 = vadd.f32 %v9049, %v9445
    %v9447 = vpop.f32.mrb[0].mxu0
    %v9448 = vpop.f32.mrb[0].mxu0
    %v9449 = vadd.f32 %v9049, %v9448
    %v9450 = vpop.f32.mrb[0].mxu0
    %9451 = vmatprep.mubr.bf16.mxu0 %v8825
    %9452 = vmatmul.mubr.bf16.gmra.mrb[0].mxu0 %v8824
    %v9453 = vpop.f32.mrb[0].mxu0
    %v9454 = vadd.f32 %v9049, %v9453
    %v9455 = vpop.f32.mrb[0].mxu0
    %v9456 = vpop.f32.mrb[0].mxu0
    %v9457 = vadd.f32 %v9049, %v9456
    %v9458 = vpop.f32.mrb[0].mxu0
    %9459 = vmatprep.mubr.bf16.mxu0 %v8827
    %9460 = vmatmul.mubr.bf16.gmra.mrb[0].mxu0 %v8826
    %v9461 = vpop.f32.mrb[0].mxu0
    %v9462 = vadd.f32 %v9049, %v9461
    %v9463 = vpop.f32.mrb[0].mxu0
    %v9464 = vpop.f32.mrb[0].mxu0
    %v9465 = vadd.f32 %v9049, %v9464
    %v9466 = vpop.f32.mrb[0].mxu0
    %9467 = vmatprep.mubr.bf16.mxu0 %v8829
    %9468 = vmatmul.mubr.bf16.gmra.mrb[0].mxu0 %v8828
    %v9469 = vpop.f32.mrb[0].mxu0
    %v9470 = vadd.f32 %v9049, %v9469
    %v9471 = vpop.f32.mrb[0].mxu0
    %v9472 = vpop.f32.mrb[0].mxu0
    %v9473 = vadd.f32 %v9049, %v9472
    %v9474 = vpop.f32.mrb[0].mxu0
    %9475 = vmatprep.mubr.bf16.mxu0 %v8831
    %9476 = vmatmul.mubr.bf16.gmra.mrb[0].mxu0 %v8830
    %v9477 = vpop.f32.mrb[0].mxu0
    %v9478 = vadd.f32 %v9049, %v9477
    %v9479 = vpop.f32.mrb[0].mxu0
    %v9480 = vpop.f32.mrb[0].mxu0
    %v9481 = vadd.f32 %v9049, %v9480
    %v9482 = vpop.f32.mrb[0].mxu0
    %9483 = vmatprep.mubr.bf16.mxu0 %v8833
    %9484 = vmatmul.mubr.bf16.gmra.mrb[0].mxu0 %v8832
    %v9485 = vpop.f32.mrb[0].mxu0
    %v9486 = vadd.f32 %v9049, %v9485
    %v9487 = vpop.f32.mrb[0].mxu0
    %v9488 = vpop.f32.mrb[0].mxu0
    %v9489 = vadd.f32 %v9049, %v9488
    %v9490 = vpop.f32.mrb[0].mxu0
    %9491 = vmatprep.mubr.bf16.mxu0 %v8835
    %9492 = vmatmul.mubr.bf16.gmra.mrb[0].mxu0 %v8834
    %v9493 = vpop.f32.mrb[0].mxu0
    %v9494 = vadd.f32 %v9049, %v9493
    %v9495 = vpop.f32.mrb[0].mxu0
    %v9496 = vpop.f32.mrb[0].mxu0
    %v9497 = vadd.f32 %v9049, %v9496
    %v9498 = vpop.f32.mrb[0].mxu0
    %9499 = vmatprep.mubr.bf16.mxu0 %v8837
    %9500 = vmatmul.mubr.bf16.gmra.mrb[0].mxu0 %v8836
    %v9501 = vpop.f32.mrb[0].mxu0
    %v9502 = vadd.f32 %v9049, %v9501
    %v9503 = vpop.f32.mrb[0].mxu0
    %v9504 = vpop.f32.mrb[0].mxu0
    %v9505 = vadd.f32 %v9049, %v9504
    %v9506 = vpop.f32.mrb[0].mxu0
    %9507 = vmatprep.mubr.bf16.mxu0 %v8839
    %9508 = vmatmul.mubr.bf16.gmra.mrb[0].mxu0 %v8838
    %v9509 = vpop.f32.mrb[0].mxu0
    %v9510 = vadd.f32 %v9049, %v9509
    %v9511 = vpop.f32.mrb[0].mxu0
    %v9512 = vpop.f32.mrb[0].mxu0
    %v9513 = vadd.f32 %v9049, %v9512
    %v9514 = vpop.f32.mrb[0].mxu0
    %9515 = vmatprep.mubr.bf16.mxu0 %v8841
    %9516 = vmatmul.mubr.bf16.gmra.mrb[0].mxu0 %v8840
    %v9517 = vpop.f32.mrb[0].mxu0
    %v9518 = vadd.f32 %v9049, %v9517
    %v9519 = vpop.f32.mrb[0].mxu0
    %v9520 = vpop.f32.mrb[0].mxu0
    %v9521 = vadd.f32 %v9049, %v9520
    %v9522 = vpop.f32.mrb[0].mxu0
    %9523 = vmatprep.mubr.bf16.mxu0 %v8843
    %9524 = vmatmul.mubr.bf16.gmra.mrb[0].mxu0 %v8842
    %v9525 = vpop.f32.mrb[0].mxu0
    %v9526 = vadd.f32 %v9049, %v9525
    %v9527 = vpop.f32.mrb[0].mxu0
    %v9528 = vpop.f32.mrb[0].mxu0
    %v9529 = vadd.f32 %v9049, %v9528
    %v9530 = vpop.f32.mrb[0].mxu0
    %9531 = vmatprep.mubr.bf16.mxu0 %v8845
    %9532 = vmatmul.mubr.bf16.gmra.mrb[0].mxu0 %v8844
    %v9533 = vpop.f32.mrb[0].mxu0
    %v9534 = vadd.f32 %v9049, %v9533
    %v9535 = vpop.f32.mrb[0].mxu0
    %v9536 = vpop.f32.mrb[0].mxu0
    %v9537 = vadd.f32 %v9049, %v9536
    %v9538 = vpop.f32.mrb[0].mxu0
    %9539 = vmatprep.mubr.bf16.mxu0 %v8847
    %9540 = vmatmul.mubr.bf16.gmra.mrb[0].mxu0 %v8846
    %v9541 = vpop.f32.mrb[0].mxu0
    %v9542 = vadd.f32 %v9049, %v9541
    %v9543 = vpop.f32.mrb[0].mxu0
    %v9544 = vpop.f32.mrb[0].mxu0
    %v9545 = vadd.f32 %v9049, %v9544
    %v9546 = vpop.f32.mrb[0].mxu0
    %9547 = vmatprep.mubr.bf16.mxu0 %v8849
    %9548 = vmatmul.mubr.bf16.gmra.mrb[0].mxu0 %v8848
    %v9549 = vpop.f32.mrb[0].mxu0
    %v9550 = vadd.f32 %v9049, %v9549
    %v9551 = vpop.f32.mrb[0].mxu0
    %v9552 = vpop.f32.mrb[0].mxu0
    %v9553 = vadd.f32 %v9049, %v9552
    %v9554 = vpop.f32.mrb[0].mxu0
    %9555 = vmatprep.mubr.bf16.mxu0 %v8851
    %9556 = vmatmul.mubr.bf16.gmra.mrb[0].mxu0 %v8850
    %v9557 = vpop.f32.mrb[0].mxu0
    %v9558 = vadd.f32 %v9049, %v9557
    %v9559 = vpop.f32.mrb[0].mxu0
    %v9560 = vpop.f32.mrb[0].mxu0
    %v9561 = vadd.f32 %v9049, %v9560
    %v9562 = vpop.f32.mrb[0].mxu0
    %9563 = vmatprep.mubr.bf16.mxu0 %v8853
    %9564 = vmatmul.mubr.bf16.gmra.mrb[0].mxu0 %v8852
    %v9565 = vpop.f32.mrb[0].mxu0
    %v9566 = vadd.f32 %v9049, %v9565
    %v9567 = vpop.f32.mrb[0].mxu0
    %v9568 = vpop.f32.mrb[0].mxu0
    %v9569 = vadd.f32 %v9049, %v9568
    %v9570 = vpop.f32.mrb[0].mxu0
    %9571 = vmatprep.mubr.bf16.mxu0 %v8855
    %9572 = vmatmul.mubr.bf16.gmra.mrb[0].mxu0 %v8854
    %v9573 = vpop.f32.mrb[0].mxu0
    %v9574 = vadd.f32 %v9049, %v9573
    %v9575 = vpop.f32.mrb[0].mxu0
    %v9576 = vpop.f32.mrb[0].mxu0
    %v9577 = vadd.f32 %v9049, %v9576
    %v9578 = vpop.f32.mrb[0].mxu0
    %9579 = vmatprep.mubr.bf16.mxu0 %v8857
    %9580 = vmatmul.mubr.bf16.gmra.mrb[0].mxu0 %v8856
    %v9581 = vpop.f32.mrb[0].mxu0
    %v9582 = vadd.f32 %v9049, %v9581
    %v9583 = vpop.f32.mrb[0].mxu0
    %v9584 = vpop.f32.mrb[0].mxu0
    %v9585 = vadd.f32 %v9049, %v9584
    %v9586 = vpop.f32.mrb[0].mxu0
    %9587 = vmatprep.mubr.bf16.mxu0 %v8859
    %9588 = vmatmul.mubr.bf16.gmra.mrb[0].mxu0 %v8858
    %v9589 = vpop.f32.mrb[0].mxu0
    %v9590 = vadd.f32 %v9049, %v9589
    %v9591 = vpop.f32.mrb[0].mxu0
    %v9592 = vpop.f32.mrb[0].mxu0
    %v9593 = vadd.f32 %v9049, %v9592
    %v9594 = vpop.f32.mrb[0].mxu0
    %9595 = vmatprep.mubr.bf16.mxu0 %v8861
    %9596 = vmatmul.mubr.bf16.gmra.mrb[0].mxu0 %v8860
    %v9597 = vpop.f32.mrb[0].mxu0
    %v9598 = vadd.f32 %v9049, %v9597
    %v9599 = vpop.f32.mrb[0].mxu0
    %v9600 = vpop.f32.mrb[0].mxu0
    %v9601 = vadd.f32 %v9049, %v9600
    %v9602 = vpop.f32.mrb[0].mxu0
    %9603 = vmatprep.mubr.bf16.mxu0 %v8863
    %9604 = vmatmul.mubr.bf16.gmra.mrb[0].mxu0 %v8862
    %v9605 = vpop.f32.mrb[0].mxu0
    %v9606 = vadd.f32 %v9049, %v9605
    %v9607 = vpop.f32.mrb[0].mxu0
    %v9608 = vpop.f32.mrb[0].mxu0
    %v9609 = vadd.f32 %v9049, %v9608
    %v9610 = vpop.f32.mrb[0].mxu0
    %9611 = vmatprep.mubr.bf16.mxu0 %v8865
    %9612 = vmatmul.mubr.bf16.gmra.mrb[0].mxu0 %v8864
    %v9613 = vpop.f32.mrb[0].mxu0
    %v9614 = vadd.f32 %v9049, %v9613
    %v9615 = vpop.f32.mrb[0].mxu0
    %v9616 = vpop.f32.mrb[0].mxu0
    %v9617 = vadd.f32 %v9049, %v9616
    %v9618 = vpop.f32.mrb[0].mxu0
    %9619 = vmatprep.mubr.bf16.mxu0 %v8867
    %9620 = vmatmul.mubr.bf16.gmra.mrb[0].mxu0 %v8866
    %v9621 = vpop.f32.mrb[0].mxu0
    %v9622 = vadd.f32 %v9049, %v9621
    %v9623 = vpop.f32.mrb[0].mxu0
    %v9624 = vpop.f32.mrb[0].mxu0
    %v9625 = vadd.f32 %v9049, %v9624
    %v9626 = vpop.f32.mrb[0].mxu0
    %9627 = vmatprep.mubr.bf16.mxu0 %v8869
    %9628 = vmatmul.mubr.bf16.gmra.mrb[0].mxu0 %v8868
    %v9629 = vpop.f32.mrb[0].mxu0
    %v9630 = vadd.f32 %v9049, %v9629
    %v9631 = vpop.f32.mrb[0].mxu0
    %v9632 = vpop.f32.mrb[0].mxu0
    %v9633 = vadd.f32 %v9049, %v9632
    %v9634 = vpop.f32.mrb[0].mxu0
    %9635 = vmatprep.mubr.bf16.mxu0 %v8871
    %9636 = vmatmul.mubr.bf16.gmra.mrb[0].mxu0 %v8870
    %v9637 = vpop.f32.mrb[0].mxu0
    %v9638 = vadd.f32 %v9049, %v9637
    %v9639 = vpop.f32.mrb[0].mxu0
    %v9640 = vpop.f32.mrb[0].mxu0
    %v9641 = vadd.f32 %v9049, %v9640
    %v9642 = vpop.f32.mrb[0].mxu0
    %9643 = vmatprep.mubr.bf16.mxu0 %v8873
    %9644 = vmatmul.mubr.bf16.gmra.mrb[0].mxu0 %v8872
    %v9645 = vpop.f32.mrb[0].mxu0
    %v9646 = vadd.f32 %v9049, %v9645
    %v9647 = vpop.f32.mrb[0].mxu0
    %v9648 = vpop.f32.mrb[0].mxu0
    %v9649 = vadd.f32 %v9049, %v9648
    %v9650 = vpop.f32.mrb[0].mxu0
    %9651 = vmatprep.mubr.bf16.mxu0 %v8875
    %9652 = vmatmul.mubr.bf16.gmra.mrb[0].mxu0 %v8874
    %v9653 = vpop.f32.mrb[0].mxu0
    %v9654 = vadd.f32 %v9049, %v9653
    %v9655 = vpop.f32.mrb[0].mxu0
    %v9656 = vpop.f32.mrb[0].mxu0
    %v9657 = vadd.f32 %v9049, %v9656
    %v9658 = vpop.f32.mrb[0].mxu0
    %9659 = vmatprep.mubr.bf16.mxu0 %v8877
    %9660 = vmatmul.mubr.bf16.gmra.mrb[0].mxu0 %v8876
    %v9661 = vpop.f32.mrb[0].mxu0
    %v9662 = vadd.f32 %v9049, %v9661
    %v9663 = vpop.f32.mrb[0].mxu0
    %v9664 = vpop.f32.mrb[0].mxu0
    %v9665 = vadd.f32 %v9049, %v9664
    %v9666 = vpop.f32.mrb[0].mxu0
    %9667 = vmatprep.mubr.bf16.mxu0 %v8879
    %9668 = vmatmul.mubr.bf16.gmra.mrb[0].mxu0 %v8878
    %v9669 = vpop.f32.mrb[0].mxu0
    %v9670 = vadd.f32 %v9049, %v9669
    %v9671 = vpop.f32.mrb[0].mxu0
    %v9672 = vpop.f32.mrb[0].mxu0
    %v9673 = vadd.f32 %v9049, %v9672
    %v9674 = vpop.f32.mrb[0].mxu0
    %9675 = vmatprep.mubr.bf16.mxu0 %v8881
    %9676 = vmatmul.mubr.bf16.gmra.mrb[0].mxu0 %v8880
    %v9677 = vpop.f32.mrb[0].mxu0
    %v9678 = vadd.f32 %v9049, %v9677
    %v9679 = vpop.f32.mrb[0].mxu0
    %v9680 = vpop.f32.mrb[0].mxu0
    %v9681 = vadd.f32 %v9049, %v9680
    %v9682 = vpop.f32.mrb[0].mxu0
    %9683 = vmatprep.mubr.bf16.mxu0 %v8883
    %9684 = vmatmul.mubr.bf16.gmra.mrb[0].mxu0 %v8882
    %v9685 = vpop.f32.mrb[0].mxu0
    %v9686 = vadd.f32 %v9049, %v9685
    %v9687 = vpop.f32.mrb[0].mxu0
    %v9688 = vpop.f32.mrb[0].mxu0
    %v9689 = vadd.f32 %v9049, %v9688
    %v9690 = vpop.f32.mrb[0].mxu0
    %9691 = vmatprep.mubr.bf16.mxu0 %v8885
    %9692 = vmatmul.mubr.bf16.gmra.mrb[0].mxu0 %v8884
    %v9693 = vpop.f32.mrb[0].mxu0
    %v9694 = vadd.f32 %v9049, %v9693
    %v9695 = vpop.f32.mrb[0].mxu0
    %v9696 = vpop.f32.mrb[0].mxu0
    %v9697 = vadd.f32 %v9049, %v9696
    %v9698 = vpop.f32.mrb[0].mxu0
    %9699 = vmatprep.mubr.bf16.mxu0 %v8887
    %9700 = vmatmul.mubr.bf16.gmra.mrb[0].mxu0 %v8886
    %v9701 = vpop.f32.mrb[0].mxu0
    %v9702 = vadd.f32 %v9049, %v9701
    %v9703 = vpop.f32.mrb[0].mxu0
    %v9704 = vpop.f32.mrb[0].mxu0
    %v9705 = vadd.f32 %v9049, %v9704
    %v9706 = vpop.f32.mrb[0].mxu0
    %9707 = vmatprep.mubr.bf16.mxu0 %v8889
    %9708 = vmatmul.mubr.bf16.gmra.mrb[0].mxu0 %v8888
    %v9709 = vpop.f32.mrb[0].mxu0
    %v9710 = vadd.f32 %v9049, %v9709
    %v9711 = vpop.f32.mrb[0].mxu0
    %v9712 = vpop.f32.mrb[0].mxu0
    %v9713 = vadd.f32 %v9049, %v9712
    %v9714 = vpop.f32.mrb[0].mxu0
    %9715 = vmatprep.mubr.bf16.mxu0 %v8891
    %9716 = vmatmul.mubr.bf16.gmra.mrb[0].mxu0 %v8890
    %v9717 = vpop.f32.mrb[0].mxu0
    %v9718 = vadd.f32 %v9049, %v9717
    %v9719 = vpop.f32.mrb[0].mxu0
    %v9720 = vpop.f32.mrb[0].mxu0
    %v9721 = vadd.f32 %v9049, %v9720
    %v9722 = vpop.f32.mrb[0].mxu0
    %9723 = vmatprep.mubr.bf16.mxu0 %v8893
    %9724 = vmatmul.mubr.bf16.gmra.mrb[0].mxu0 %v8892
    %v9725 = vpop.f32.mrb[0].mxu0
    %v9726 = vadd.f32 %v9049, %v9725
    %v9727 = vpop.f32.mrb[0].mxu0
    %v9728 = vpop.f32.mrb[0].mxu0
    %v9729 = vadd.f32 %v9049, %v9728
    %v9730 = vpop.f32.mrb[0].mxu0
    %9731 = vmatprep.mubr.bf16.mxu0 %v8895
    %9732 = vmatmul.mubr.bf16.gmra.mrb[0].mxu0 %v8894
    %v9733 = vpop.f32.mrb[0].mxu0
    %v9734 = vadd.f32 %v9049, %v9733
    %v9735 = vpop.f32.mrb[0].mxu0
    %v9736 = vpop.f32.mrb[0].mxu0
    %v9737 = vadd.f32 %v9049, %v9736
    %v9738 = vpop.f32.mrb[0].mxu0
    %9739 = vmatprep.mubr.bf16.mxu0 %v8897
    %9740 = vmatmul.mubr.bf16.gmra.mrb[0].mxu0 %v8896
    %v9741 = vpop.f32.mrb[0].mxu0
    %v9742 = vadd.f32 %v9049, %v9741
    %v9743 = vpop.f32.mrb[0].mxu0
    %v9744 = vpop.f32.mrb[0].mxu0
    %v9745 = vadd.f32 %v9049, %v9744
    %v9746 = vpop.f32.mrb[0].mxu0
    %9747 = vmatprep.mubr.bf16.mxu0 %v8899
    %9748 = vmatmul.mubr.bf16.gmra.mrb[0].mxu0 %v8898
    %v9749 = vpop.f32.mrb[0].mxu0
    %v9750 = vadd.f32 %v9049, %v9749
    %v9751 = vpop.f32.mrb[0].mxu0
    %v9752 = vpop.f32.mrb[0].mxu0
    %v9753 = vadd.f32 %v9049, %v9752
    %v9754 = vpop.f32.mrb[0].mxu0
    %9755 = vmatprep.mubr.bf16.mxu0 %v8901
    %9756 = vmatmul.mubr.bf16.gmra.mrb[0].mxu0 %v8900
    %v9757 = vpop.f32.mrb[0].mxu0
    %v9758 = vadd.f32 %v9049, %v9757
    %v9759 = vpop.f32.mrb[0].mxu0
    %v9760 = vpop.f32.mrb[0].mxu0
    %v9761 = vadd.f32 %v9049, %v9760
    %v9762 = vpop.f32.mrb[0].mxu0
    %9763 = vmatprep.mubr.bf16.mxu0 %v8903
    %9764 = vmatmul.mubr.bf16.gmra.mrb[0].mxu0 %v8902
    %v9765 = vpop.f32.mrb[0].mxu0
    %v9766 = vadd.f32 %v9049, %v9765
    %v9767 = vpop.f32.mrb[0].mxu0
    %v9768 = vpop.f32.mrb[0].mxu0
    %v9769 = vadd.f32 %v9049, %v9768
    %v9770 = vpop.f32.mrb[0].mxu0
    %9771 = vmatprep.mubr.bf16.mxu0 %v8905
    %9772 = vmatmul.mubr.bf16.gmra.mrb[0].mxu0 %v8904
    %v9773 = vpop.f32.mrb[0].mxu0
    %v9774 = vadd.f32 %v9049, %v9773
    %v9775 = vpop.f32.mrb[0].mxu0
    %v9776 = vpop.f32.mrb[0].mxu0
    %v9777 = vadd.f32 %v9049, %v9776
    %v9778 = vpop.f32.mrb[0].mxu0
    %9779 = vmatprep.mubr.bf16.mxu0 %v8907
    %9780 = vmatmul.mubr.bf16.gmra.mrb[0].mxu0 %v8906
    %v9781 = vpop.f32.mrb[0].mxu0
    %v9782 = vadd.f32 %v9049, %v9781
    %v9783 = vpop.f32.mrb[0].mxu0
    %v9784 = vpop.f32.mrb[0].mxu0
    %v9785 = vadd.f32 %v9049, %v9784
    %v9786 = vpop.f32.mrb[0].mxu0
    %9787 = vmatprep.mubr.bf16.mxu0 %v8909
    %9788 = vmatmul.mubr.bf16.gmra.mrb[0].mxu0 %v8908
    %v9789 = vpop.f32.mrb[0].mxu0
    %v9790 = vadd.f32 %v9049, %v9789
    %v9791 = vpop.f32.mrb[0].mxu0
    %v9792 = vpop.f32.mrb[0].mxu0
    %v9793 = vadd.f32 %v9049, %v9792
    %v9794 = vpop.f32.mrb[0].mxu0
    %9795 = vmatprep.mubr.bf16.mxu0 %v8911
    %9796 = vmatmul.mubr.bf16.gmra.mrb[0].mxu0 %v8910
    %v9797 = vpop.f32.mrb[0].mxu0
    %v9798 = vadd.f32 %v9049, %v9797
    %v9799 = vpop.f32.mrb[0].mxu0
    %v9800 = vpop.f32.mrb[0].mxu0
    %v9801 = vadd.f32 %v9049, %v9800
    %v9802 = vpop.f32.mrb[0].mxu0
    %9803 = vmatprep.mubr.bf16.mxu0 %v8913
    %9804 = vmatmul.mubr.bf16.gmra.mrb[0].mxu0 %v8912
    %v9805 = vpop.f32.mrb[0].mxu0
    %v9806 = vadd.f32 %v9049, %v9805
    %v9807 = vpop.f32.mrb[0].mxu0
    %v9808 = vpop.f32.mrb[0].mxu0
    %v9809 = vadd.f32 %v9049, %v9808
    %v9810 = vpop.f32.mrb[0].mxu0
    %9811 = vmatprep.mubr.bf16.mxu0 %v8915
    %9812 = vmatmul.mubr.bf16.gmra.mrb[0].mxu0 %v8914
    %v9813 = vpop.f32.mrb[0].mxu0
    %v9814 = vadd.f32 %v9049, %v9813
    %v9815 = vpop.f32.mrb[0].mxu0
    %v9816 = vpop.f32.mrb[0].mxu0
    %v9817 = vadd.f32 %v9049, %v9816
    %v9818 = vpop.f32.mrb[0].mxu0
    %9819 = vmatprep.mubr.bf16.mxu0 %v8917
    %9820 = vmatmul.mubr.bf16.gmra.mrb[0].mxu0 %v8916
    %v9821 = vpop.f32.mrb[0].mxu0
    %v9822 = vadd.f32 %v9049, %v9821
    %v9823 = vpop.f32.mrb[0].mxu0
    %v9824 = vpop.f32.mrb[0].mxu0
    %v9825 = vadd.f32 %v9049, %v9824
    %v9826 = vpop.f32.mrb[0].mxu0
    %9827 = vmatprep.mubr.bf16.mxu0 %v8919
    %9828 = vmatmul.mubr.bf16.gmra.mrb[0].mxu0 %v8918
    %v9829 = vpop.f32.mrb[0].mxu0
    %v9830 = vadd.f32 %v9049, %v9829
    %v9831 = vpop.f32.mrb[0].mxu0
    %v9832 = vpop.f32.mrb[0].mxu0
    %v9833 = vadd.f32 %v9049, %v9832
    %v9834 = vpop.f32.mrb[0].mxu0
    %9835 = vmatprep.mubr.bf16.mxu0 %v8921
    %9836 = vmatmul.mubr.bf16.gmra.mrb[0].mxu0 %v8920
    %v9837 = vpop.f32.mrb[0].mxu0
    %v9838 = vadd.f32 %v9049, %v9837
    %v9839 = vpop.f32.mrb[0].mxu0
    %v9840 = vpop.f32.mrb[0].mxu0
    %v9841 = vadd.f32 %v9049, %v9840
    %v9842 = vpop.f32.mrb[0].mxu0
    %9843 = vmatprep.mubr.bf16.mxu0 %v8923
    %9844 = vmatmul.mubr.bf16.gmra.mrb[0].mxu0 %v8922
    %v9845 = vpop.f32.mrb[0].mxu0
    %v9846 = vadd.f32 %v9049, %v9845
    %v9847 = vpop.f32.mrb[0].mxu0
    %v9848 = vpop.f32.mrb[0].mxu0
    %v9849 = vadd.f32 %v9049, %v9848
    %v9850 = vpop.f32.mrb[0].mxu0
    %9851 = vmatprep.mubr.bf16.mxu0 %v8925
    %9852 = vmatmul.mubr.bf16.gmra.mrb[0].mxu0 %v8924
    %v9853 = vpop.f32.mrb[0].mxu0
    %v9854 = vadd.f32 %v9049, %v9853
    %v9855 = vpop.f32.mrb[0].mxu0
    %v9856 = vpop.f32.mrb[0].mxu0
    %v9857 = vadd.f32 %v9049, %v9856
    %v9858 = vpop.f32.mrb[0].mxu0
    %9859 = vmatprep.mubr.bf16.mxu0 %v8927
    %9860 = vmatmul.mubr.bf16.gmra.mrb[0].mxu0 %v8926
    %v9861 = vpop.f32.mrb[0].mxu0
    %v9862 = vadd.f32 %v9049, %v9861
    %v9863 = vpop.f32.mrb[0].mxu0
    %v9864 = vpop.f32.mrb[0].mxu0
    %v9865 = vadd.f32 %v9049, %v9864
    %v9866 = vpop.f32.mrb[0].mxu0
    %9867 = vmatprep.mubr.bf16.mxu0 %v8929
    %9868 = vmatmul.mubr.bf16.gmra.mrb[0].mxu0 %v8928
    %v9869 = vpop.f32.mrb[0].mxu0
    %v9870 = vadd.f32 %v9049, %v9869
    %v9871 = vpop.f32.mrb[0].mxu0
    %v9872 = vpop.f32.mrb[0].mxu0
    %v9873 = vadd.f32 %v9049, %v9872
    %v9874 = vpop.f32.mrb[0].mxu0
    %9875 = vmatprep.mubr.bf16.mxu0 %v8931
    %9876 = vmatmul.mubr.bf16.gmra.mrb[0].mxu0 %v8930
    %v9877 = vpop.f32.mrb[0].mxu0
    %v9878 = vadd.f32 %v9049, %v9877
    %v9879 = vpop.f32.mrb[0].mxu0
    %v9880 = vpop.f32.mrb[0].mxu0
    %v9881 = vadd.f32 %v9049, %v9880
    %v9882 = vpop.f32.mrb[0].mxu0
    %9883 = vmatprep.mubr.bf16.mxu0 %v8933
    %9884 = vmatmul.mubr.bf16.gmra.mrb[0].mxu0 %v8932
    %v9885 = vpop.f32.mrb[0].mxu0
    %v9886 = vadd.f32 %v9049, %v9885
    %v9887 = vpop.f32.mrb[0].mxu0
    %v9888 = vpop.f32.mrb[0].mxu0
    %v9889 = vadd.f32 %v9049, %v9888
    %v9890 = vpop.f32.mrb[0].mxu0
    %9891 = vmatprep.mubr.bf16.mxu0 %v8935
    %9892 = vmatmul.mubr.bf16.gmra.mrb[0].mxu0 %v8934
    %v9893 = vpop.f32.mrb[0].mxu0
    %v9894 = vadd.f32 %v9049, %v9893
    %v9895 = vpop.f32.mrb[0].mxu0
    %v9896 = vpop.f32.mrb[0].mxu0
    %v9897 = vadd.f32 %v9049, %v9896
    %v9898 = vpop.f32.mrb[0].mxu0
    %9899 = vmatprep.mubr.bf16.mxu0 %v8937
    %9900 = vmatmul.mubr.bf16.gmra.mrb[0].mxu0 %v8936
    %v9901 = vpop.f32.mrb[0].mxu0
    %v9902 = vadd.f32 %v9049, %v9901
    %v9903 = vpop.f32.mrb[0].mxu0
    %v9904 = vpop.f32.mrb[0].mxu0
    %v9905 = vadd.f32 %v9049, %v9904
    %v9906 = vpop.f32.mrb[0].mxu0
    %9907 = vmatprep.mubr.bf16.mxu0 %v8939
    %9908 = vmatmul.mubr.bf16.gmra.mrb[0].mxu0 %v8938
    %v9909 = vpop.f32.mrb[0].mxu0
    %v9910 = vadd.f32 %v9049, %v9909
    %v9911 = vpop.f32.mrb[0].mxu0
    %v9912 = vpop.f32.mrb[0].mxu0
    %v9913 = vadd.f32 %v9049, %v9912
    %v9914 = vpop.f32.mrb[0].mxu0
    %9915 = vmatprep.mubr.bf16.mxu0 %v8941
    %9916 = vmatmul.mubr.bf16.gmra.mrb[0].mxu0 %v8940
    %v9917 = vpop.f32.mrb[0].mxu0
    %v9918 = vadd.f32 %v9049, %v9917
    %v9919 = vpop.f32.mrb[0].mxu0
    %v9920 = vpop.f32.mrb[0].mxu0
    %v9921 = vadd.f32 %v9049, %v9920
    %v9922 = vpop.f32.mrb[0].mxu0
    %9923 = vmatprep.mubr.bf16.mxu0 %v8943
    %9924 = vmatmul.mubr.bf16.gmra.mrb[0].mxu0 %v8942
    %v9925 = vpop.f32.mrb[0].mxu0
    %v9926 = vadd.f32 %v9049, %v9925
    %v9927 = vpop.f32.mrb[0].mxu0
    %v9928 = vpop.f32.mrb[0].mxu0
    %v9929 = vadd.f32 %v9049, %v9928
    %v9930 = vpop.f32.mrb[0].mxu0
    %9931 = vmatprep.mubr.bf16.mxu0 %v8945
    %9932 = vmatmul.mubr.bf16.gmra.mrb[0].mxu0 %v8944
    %v9933 = vpop.f32.mrb[0].mxu0
    %v9934 = vadd.f32 %v9049, %v9933
    %v9935 = vpop.f32.mrb[0].mxu0
    %v9936 = vpop.f32.mrb[0].mxu0
    %v9937 = vadd.f32 %v9049, %v9936
    %v9938 = vpop.f32.mrb[0].mxu0
    %9939 = vmatprep.mubr.bf16.mxu0 %v8947
    %9940 = vmatmul.mubr.bf16.gmra.mrb[0].mxu0 %v8946
    %v9941 = vpop.f32.mrb[0].mxu0
    %v9942 = vadd.f32 %v9049, %v9941
    %v9943 = vpop.f32.mrb[0].mxu0
    %v9944 = vpop.f32.mrb[0].mxu0
    %v9945 = vadd.f32 %v9049, %v9944
    %v9946 = vpop.f32.mrb[0].mxu0
    %9947 = vmatprep.mubr.bf16.mxu0 %v8949
    %9948 = vmatmul.mubr.bf16.gmra.mrb[0].mxu0 %v8948
    %v9949 = vpop.f32.mrb[0].mxu0
    %v9950 = vadd.f32 %v9049, %v9949
    %v9951 = vpop.f32.mrb[0].mxu0
    %v9952 = vpop.f32.mrb[0].mxu0
    %v9953 = vadd.f32 %v9049, %v9952
    %v9954 = vpop.f32.mrb[0].mxu0
    %9955 = vmatprep.mubr.bf16.mxu0 %v8951
    %9956 = vmatmul.mubr.bf16.gmra.mrb[0].mxu0 %v8950
    %v9957 = vpop.f32.mrb[0].mxu0
    %v9958 = vadd.f32 %v9049, %v9957
    %v9959 = vpop.f32.mrb[0].mxu0
    %v9960 = vpop.f32.mrb[0].mxu0
    %v9961 = vadd.f32 %v9049, %v9960
    %v9962 = vpop.f32.mrb[0].mxu0
    %9963 = vmatprep.mubr.bf16.mxu0 %v8953
    %9964 = vmatmul.mubr.bf16.gmra.mrb[0].mxu0 %v8952
    %v9965 = vpop.f32.mrb[0].mxu0
    %v9966 = vadd.f32 %v9049, %v9965
    %v9967 = vpop.f32.mrb[0].mxu0
    %v9968 = vpop.f32.mrb[0].mxu0
    %v9969 = vadd.f32 %v9049, %v9968
    %v9970 = vpop.f32.mrb[0].mxu0
    %9971 = vmatprep.mubr.bf16.mxu0 %v8955
    %9972 = vmatmul.mubr.bf16.gmra.mrb[0].mxu0 %v8954
    %v9973 = vpop.f32.mrb[0].mxu0
    %v9974 = vadd.f32 %v9049, %v9973
    %v9975 = vpop.f32.mrb[0].mxu0
    %v9976 = vpop.f32.mrb[0].mxu0
    %v9977 = vadd.f32 %v9049, %v9976
    %v9978 = vpop.f32.mrb[0].mxu0
    %9979 = vmatprep.mubr.bf16.mxu0 %v8957
    %9980 = vmatmul.mubr.bf16.gmra.mrb[0].mxu0 %v8956
    %v9981 = vpop.f32.mrb[0].mxu0
    %v9982 = vadd.f32 %v9049, %v9981
    %v9983 = vpop.f32.mrb[0].mxu0
    %v9984 = vpop.f32.mrb[0].mxu0
    %v9985 = vadd.f32 %v9049, %v9984
    %v9986 = vpop.f32.mrb[0].mxu0
    %9987 = vmatprep.mubr.bf16.mxu0 %v8959
    %9988 = vmatmul.mubr.bf16.gmra.mrb[0].mxu0 %v8958
    %v9989 = vpop.f32.mrb[0].mxu0
    %v9990 = vadd.f32 %v9049, %v9989
    %v9991 = vpop.f32.mrb[0].mxu0
    %v9992 = vpop.f32.mrb[0].mxu0
    %v9993 = vadd.f32 %v9049, %v9992
    %v9994 = vpop.f32.mrb[0].mxu0
    %9995 = vmatprep.mubr.bf16.mxu0 %v8961
    %9996 = vmatmul.mubr.bf16.gmra.mrb[0].mxu0 %v8960
    %v9997 = vpop.f32.mrb[0].mxu0
    %v9998 = vadd.f32 %v9049, %v9997
    %v9999 = vpop.f32.mrb[0].mxu0
    %v10000 = vpop.f32.mrb[0].mxu0
    %v10001 = vadd.f32 %v9049, %v10000
    %v10002 = vpop.f32.mrb[0].mxu0
    %10003 = vmatprep.mubr.bf16.mxu0 %v8963
    %10004 = vmatmul.mubr.bf16.gmra.mrb[0].mxu0 %v8962
    %v10005 = vpop.f32.mrb[0].mxu0
    %v10006 = vadd.f32 %v9049, %v10005
    %v10007 = vpop.f32.mrb[0].mxu0
    %v10008 = vpop.f32.mrb[0].mxu0
    %v10009 = vadd.f32 %v9049, %v10008
    %v10010 = vpop.f32.mrb[0].mxu0
    %10011 = vmatprep.mubr.bf16.mxu0 %v8965
    %10012 = vmatmul.mubr.bf16.gmra.mrb[0].mxu0 %v8964
    %v10013 = vpop.f32.mrb[0].mxu0
    %v10014 = vadd.f32 %v9049, %v10013
    %v10015 = vpop.f32.mrb[0].mxu0
    %v10016 = vpop.f32.mrb[0].mxu0
    %v10017 = vadd.f32 %v9049, %v10016
    %v10018 = vpop.f32.mrb[0].mxu0
    %10019 = vmatprep.mubr.bf16.mxu0 %v8967
    %10020 = vmatmul.mubr.bf16.gmra.mrb[0].mxu0 %v8966
    %v10021 = vpop.f32.mrb[0].mxu0
    %v10022 = vadd.f32 %v9049, %v10021
    %v10023 = vpop.f32.mrb[0].mxu0
    %v10024 = vpop.f32.mrb[0].mxu0
    %v10025 = vadd.f32 %v9049, %v10024
    %v10026 = vpop.f32.mrb[0].mxu0
    %10027 = vmatprep.mubr.bf16.mxu0 %v8969
    %10028 = vmatmul.mubr.bf16.gmra.mrb[0].mxu0 %v8968
    %v10029 = vpop.f32.mrb[0].mxu0
    %v10030 = vadd.f32 %v9049, %v10029
    %v10031 = vpop.f32.mrb[0].mxu0
    %v10032 = vpop.f32.mrb[0].mxu0
    %v10033 = vadd.f32 %v9049, %v10032
    %v10034 = vpop.f32.mrb[0].mxu0
    %10035 = vmatprep.mubr.bf16.mxu0 %v8971
    %10036 = vmatmul.mubr.bf16.gmra.mrb[0].mxu0 %v8970
    %v10037 = vpop.f32.mrb[0].mxu0
    %v10038 = vadd.f32 %v9049, %v10037
    %v10039 = vpop.f32.mrb[0].mxu0
    %v10040 = vpop.f32.mrb[0].mxu0
    %v10041 = vadd.f32 %v9049, %v10040
    %v10042 = vpop.f32.mrb[0].mxu0
    %10043 = vmatprep.mubr.bf16.mxu0 %v8973
    %10044 = vmatmul.mubr.bf16.gmra.mrb[0].mxu0 %v8972
    %v10045 = vpop.f32.mrb[0].mxu0
    %v10046 = vadd.f32 %v9049, %v10045
    %v10047 = vpop.f32.mrb[0].mxu0
    %v10048 = vpop.f32.mrb[0].mxu0
    %v10049 = vadd.f32 %v9049, %v10048
    %v10050 = vpop.f32.mrb[0].mxu0
    %10051 = vmatprep.mubr.bf16.mxu0 %v8975
    %10052 = vmatmul.mubr.bf16.gmra.mrb[0].mxu0 %v8974
    %v10053 = vpop.f32.mrb[0].mxu0
    %v10054 = vadd.f32 %v9049, %v10053
    %v10055 = vpop.f32.mrb[0].mxu0
    %v10056 = vpop.f32.mrb[0].mxu0
    %v10057 = vadd.f32 %v9049, %v10056
    %v10058 = vpop.f32.mrb[0].mxu0
    %10059 = vmatprep.mubr.bf16.mxu0 %v8977
    %10060 = vmatmul.mubr.bf16.gmra.mrb[0].mxu0 %v8976
    %v10061 = vpop.f32.mrb[0].mxu0
    %v10062 = vadd.f32 %v9049, %v10061
    %v10063 = vpop.f32.mrb[0].mxu0
    %v10064 = vpop.f32.mrb[0].mxu0
    %v10065 = vadd.f32 %v9049, %v10064
    %v10066 = vpop.f32.mrb[0].mxu0
    %10067 = vmatprep.mubr.bf16.mxu0 %v8979
    %10068 = vmatmul.mubr.bf16.gmra.mrb[0].mxu0 %v8978
    %v10069 = vpop.f32.mrb[0].mxu0
    %v10070 = vadd.f32 %v9049, %v10069
    %v10071 = vpop.f32.mrb[0].mxu0
    %v10072 = vpop.f32.mrb[0].mxu0
    %v10073 = vadd.f32 %v9049, %v10072
    %v10074 = vpop.f32.mrb[0].mxu0
    %10075 = vmatprep.mubr.bf16.mxu0 %v8981
    %10076 = vmatmul.mubr.bf16.gmra.mrb[0].mxu0 %v8980
    %v10077 = vpop.f32.mrb[0].mxu0
    %v10078 = vadd.f32 %v9049, %v10077
    %v10079 = vpop.f32.mrb[0].mxu0
    %v10080 = vpop.f32.mrb[0].mxu0
    %v10081 = vadd.f32 %v9049, %v10080
    %v10082 = vpop.f32.mrb[0].mxu0
    %10083 = vmatprep.mubr.bf16.mxu0 %v8983
    %10084 = vmatmul.mubr.bf16.gmra.mrb[0].mxu0 %v8982
    %v10085 = vpop.f32.mrb[0].mxu0
    %v10086 = vadd.f32 %v9049, %v10085
    %v10087 = vpop.f32.mrb[0].mxu0
    %v10088 = vpop.f32.mrb[0].mxu0
    %v10089 = vadd.f32 %v9049, %v10088
    %v10090 = vpop.f32.mrb[0].mxu0
    %10091 = vmatprep.mubr.bf16.mxu0 %v8985
    %10092 = vmatmul.mubr.bf16.gmra.mrb[0].mxu0 %v8984
    %v10093 = vpop.f32.mrb[0].mxu0
    %v10094 = vadd.f32 %v9049, %v10093
    %v10095 = vpop.f32.mrb[0].mxu0
    %v10096 = vpop.f32.mrb[0].mxu0
    %v10097 = vadd.f32 %v9049, %v10096
    %v10098 = vpop.f32.mrb[0].mxu0
    %10099 = vmatprep.mubr.bf16.mxu0 %v8987
    %10100 = vmatmul.mubr.bf16.gmra.mrb[0].mxu0 %v8986
    %v10101 = vpop.f32.mrb[0].mxu0
    %v10102 = vadd.f32 %v9049, %v10101
    %v10103 = vpop.f32.mrb[0].mxu0
    %v10104 = vpop.f32.mrb[0].mxu0
    %v10105 = vadd.f32 %v9049, %v10104
    %v10106 = vpop.f32.mrb[0].mxu0
    %10107 = vmatprep.mubr.bf16.mxu0 %v8989
    %10108 = vmatmul.mubr.bf16.gmra.mrb[0].mxu0 %v8988
    %v10109 = vpop.f32.mrb[0].mxu0
    %v10110 = vadd.f32 %v9049, %v10109
    %v10111 = vpop.f32.mrb[0].mxu0
    %v10112 = vpop.f32.mrb[0].mxu0
    %v10113 = vadd.f32 %v9049, %v10112
    %v10114 = vpop.f32.mrb[0].mxu0
    %10115 = vmatprep.mubr.bf16.mxu0 %v8991
    %10116 = vmatmul.mubr.bf16.gmra.mrb[0].mxu0 %v8990
    %v10117 = vpop.f32.mrb[0].mxu0
    %v10118 = vadd.f32 %v9049, %v10117
    %v10119 = vpop.f32.mrb[0].mxu0
    %v10120 = vpop.f32.mrb[0].mxu0
    %v10121 = vadd.f32 %v9049, %v10120
    %v10122 = vpop.f32.mrb[0].mxu0
    %10123 = vmatprep.mubr.bf16.mxu0 %v8993
    %10124 = vmatmul.mubr.bf16.gmra.mrb[0].mxu0 %v8992
    %v10125 = vpop.f32.mrb[0].mxu0
    %v10126 = vadd.f32 %v9049, %v10125
    %v10127 = vpop.f32.mrb[0].mxu0
    %v10128 = vpop.f32.mrb[0].mxu0
    %v10129 = vadd.f32 %v9049, %v10128
    %v10130 = vpop.f32.mrb[0].mxu0
    %10131 = vmatprep.mubr.bf16.mxu0 %v8995
    %10132 = vmatmul.mubr.bf16.gmra.mrb[0].mxu0 %v8994
    %v10133 = vpop.f32.mrb[0].mxu0
    %v10134 = vadd.f32 %v9049, %v10133
    %v10135 = vpop.f32.mrb[0].mxu0
    %v10136 = vpop.f32.mrb[0].mxu0
    %v10137 = vadd.f32 %v9049, %v10136
    %v10138 = vpop.f32.mrb[0].mxu0
    %10139 = vmatprep.mubr.bf16.mxu0 %v8997
    %10140 = vmatmul.mubr.bf16.gmra.mrb[0].mxu0 %v8996
    %v10141 = vpop.f32.mrb[0].mxu0
    %v10142 = vadd.f32 %v9049, %v10141
    %v10143 = vpop.f32.mrb[0].mxu0
    %v10144 = vpop.f32.mrb[0].mxu0
    %v10145 = vadd.f32 %v9049, %v10144
    %v10146 = vpop.f32.mrb[0].mxu0
    %10147 = vmatprep.mubr.bf16.mxu0 %v8999
    %10148 = vmatmul.mubr.bf16.gmra.mrb[0].mxu0 %v8998
    %v10149 = vpop.f32.mrb[0].mxu0
    %v10150 = vadd.f32 %v9049, %v10149
    %v10151 = vpop.f32.mrb[0].mxu0
    %v10152 = vpop.f32.mrb[0].mxu0
    %v10153 = vadd.f32 %v9049, %v10152
    %v10154 = vpop.f32.mrb[0].mxu0
    %10155 = vmatprep.mubr.bf16.mxu0 %v9001
    %10156 = vmatmul.mubr.bf16.gmra.mrb[0].mxu0 %v9000
    %v10157 = vpop.f32.mrb[0].mxu0
    %v10158 = vadd.f32 %v9049, %v10157
    %v10159 = vpop.f32.mrb[0].mxu0
    %v10160 = vpop.f32.mrb[0].mxu0
    %v10161 = vadd.f32 %v9049, %v10160
    %v10162 = vpop.f32.mrb[0].mxu0
    %10163 = vmatprep.mubr.bf16.mxu0 %v9003
    %10164 = vmatmul.mubr.bf16.gmra.mrb[0].mxu0 %v9002
    %v10165 = vpop.f32.mrb[0].mxu0
    %v10166 = vadd.f32 %v9049, %v10165
    %v10167 = vpop.f32.mrb[0].mxu0
    %v10168 = vpop.f32.mrb[0].mxu0
    %v10169 = vadd.f32 %v9049, %v10168
    %v10170 = vpop.f32.mrb[0].mxu0
    %10171 = vmatprep.mubr.bf16.mxu0 %v9005
    %10172 = vmatmul.mubr.bf16.gmra.mrb[0].mxu0 %v9004
    %v10173 = vpop.f32.mrb[0].mxu0
    %v10174 = vadd.f32 %v9049, %v10173
    %v10175 = vpop.f32.mrb[0].mxu0
    %v10176 = vpop.f32.mrb[0].mxu0
    %v10177 = vadd.f32 %v9049, %v10176
    %v10178 = vpop.f32.mrb[0].mxu0
    %10179 = vmatprep.mubr.bf16.mxu0 %v9007
    %10180 = vmatmul.mubr.bf16.gmra.mrb[0].mxu0 %v9006
    %v10181 = vpop.f32.mrb[0].mxu0
    %v10182 = vadd.f32 %v9049, %v10181
    %v10183 = vpop.f32.mrb[0].mxu0
    %v10184 = vpop.f32.mrb[0].mxu0
    %v10185 = vadd.f32 %v9049, %v10184
    %v10186 = vpop.f32.mrb[0].mxu0
    %10187 = vmatprep.mubr.bf16.mxu0 %v9009
    %10188 = vmatmul.mubr.bf16.gmra.mrb[0].mxu0 %v9008
    %v10189 = vpop.f32.mrb[0].mxu0
    %v10190 = vadd.f32 %v9049, %v10189
    %v10191 = vpop.f32.mrb[0].mxu0
    %v10192 = vpop.f32.mrb[0].mxu0
    %v10193 = vadd.f32 %v9049, %v10192
    %v10194 = vpop.f32.mrb[0].mxu0
    %10195 = vmatprep.mubr.bf16.mxu0 %v9011
    %10196 = vmatmul.mubr.bf16.gmra.mrb[0].mxu0 %v9010
    %v10197 = vpop.f32.mrb[0].mxu0
    %v10198 = vadd.f32 %v9049, %v10197
    %v10199 = vpop.f32.mrb[0].mxu0
    %v10200 = vpop.f32.mrb[0].mxu0
    %v10201 = vadd.f32 %v9049, %v10200
    %v10202 = vpop.f32.mrb[0].mxu0
    %10203 = vdwg.mxu0
    %v10204 = vmul.f32 %v9182, 0.1
    %v10205 = vmul.f32 %v9185, 0.1
    %v10206 = vmul.f32 %v9190, 0.1
    %v10207 = vmul.f32 %v9193, 0.1
    %v10208 = vmul.f32 %v9198, 0.1
    %v10209 = vmul.f32 %v9201, 0.1
    %v10210 = vmul.f32 %v9206, 0.1
    %v10211 = vmul.f32 %v9209, 0.1
    %v10212 = vmul.f32 %v9214, 0.1
    %v10213 = vmul.f32 %v9217, 0.1
    %v10214 = vmul.f32 %v9222, 0.1
    %v10215 = vmul.f32 %v9225, 0.1
    %v10216 = vmul.f32 %v9230, 0.1
    %v10217 = vmul.f32 %v9233, 0.1
    %v10218 = vmul.f32 %v9238, 0.1
    %v10219 = vmul.f32 %v9241, 0.1
    %v10220 = vmul.f32 %v9246, 0.1
    %v10221 = vmul.f32 %v9249, 0.1
    %v10222 = vmul.f32 %v9254, 0.1
    %v10223 = vmul.f32 %v9257, 0.1
    %v10224 = vmul.f32 %v9262, 0.1
    %v10225 = vmul.f32 %v9265, 0.1
    %v10226 = vmul.f32 %v9270, 0.1
    %v10227 = vmul.f32 %v9273, 0.1
    %v10228 = vmul.f32 %v9278, 0.1
    %v10229 = vmul.f32 %v9281, 0.1
    %v10230 = vmul.f32 %v9286, 0.1
    %v10231 = vmul.f32 %v9289, 0.1
    %v10232 = vmul.f32 %v9294, 0.1
    %v10233 = vmul.f32 %v9297, 0.1
    %v10234 = vmul.f32 %v9302, 0.1
    %v10235 = vmul.f32 %v9305, 0.1
    %v10236 = vmul.f32 %v9310, 0.1
    %v10237 = vmul.f32 %v9313, 0.1
    %v10238 = vmul.f32 %v9318, 0.1
    %v10239 = vmul.f32 %v9321, 0.1
    %v10240 = vmul.f32 %v9326, 0.1
    %v10241 = vmul.f32 %v9329, 0.1
    %v10242 = vmul.f32 %v9334, 0.1
    %v10243 = vmul.f32 %v9337, 0.1
    %v10244 = vmul.f32 %v9342, 0.1
    %v10245 = vmul.f32 %v9345, 0.1
    %v10246 = vmul.f32 %v9350, 0.1
    %v10247 = vmul.f32 %v9353, 0.1
    %v10248 = vmul.f32 %v9358, 0.1
    %v10249 = vmul.f32 %v9361, 0.1
    %v10250 = vmul.f32 %v9366, 0.1
    %v10251 = vmul.f32 %v9369, 0.1
    %v10252 = vmul.f32 %v9374, 0.1
    %v10253 = vmul.f32 %v9377, 0.1
    %v10254 = vmul.f32 %v9382, 0.1
    %v10255 = vmul.f32 %v9385, 0.1
    %v10256 = vmul.f32 %v9390, 0.1
    %v10257 = vmul.f32 %v9393, 0.1
    %v10258 = vmul.f32 %v9398, 0.1
    %v10259 = vmul.f32 %v9401, 0.1
    %v10260 = vmul.f32 %v9406, 0.1
    %v10261 = vmul.f32 %v9409, 0.1
    %v10262 = vmul.f32 %v9414, 0.1
    %v10263 = vmul.f32 %v9417, 0.1
    %v10264 = vmul.f32 %v9422, 0.1
    %v10265 = vmul.f32 %v9425, 0.1
    %v10266 = vmul.f32 %v9430, 0.1
    %v10267 = vmul.f32 %v9433, 0.1
    %v10268 = vmul.f32 %v9438, 0.1
    %v10269 = vmul.f32 %v9441, 0.1
    %v10270 = vmul.f32 %v9446, 0.1
    %v10271 = vmul.f32 %v9449, 0.1
    %v10272 = vmul.f32 %v9454, 0.1
    %v10273 = vmul.f32 %v9457, 0.1
    %v10274 = vmul.f32 %v9462, 0.1
    %v10275 = vmul.f32 %v9465, 0.1
    %v10276 = vmul.f32 %v9470, 0.1
    %v10277 = vmul.f32 %v9473, 0.1
    %v10278 = vmul.f32 %v9478, 0.1
    %v10279 = vmul.f32 %v9481, 0.1
    %v10280 = vmul.f32 %v9486, 0.1
    %v10281 = vmul.f32 %v9489, 0.1
    %v10282 = vmul.f32 %v9494, 0.1
    %v10283 = vmul.f32 %v9497, 0.1
    %v10284 = vmul.f32 %v9502, 0.1
    %v10285 = vmul.f32 %v9505, 0.1
    %v10286 = vmul.f32 %v9510, 0.1
    %v10287 = vmul.f32 %v9513, 0.1
    %v10288 = vmul.f32 %v9518, 0.1
    %v10289 = vmul.f32 %v9521, 0.1
    %v10290 = vmul.f32 %v9526, 0.1
    %v10291 = vmul.f32 %v9529, 0.1
    %v10292 = vmul.f32 %v9534, 0.1
    %v10293 = vmul.f32 %v9537, 0.1
    %v10294 = vmul.f32 %v9542, 0.1
    %v10295 = vmul.f32 %v9545, 0.1
    %v10296 = vmul.f32 %v9550, 0.1
    %v10297 = vmul.f32 %v9553, 0.1
    %v10298 = vmul.f32 %v9558, 0.1
    %v10299 = vmul.f32 %v9561, 0.1
    %v10300 = vmul.f32 %v9566, 0.1
    %v10301 = vmul.f32 %v9569, 0.1
    %v10302 = vmul.f32 %v9574, 0.1
    %v10303 = vmul.f32 %v9577, 0.1
    %v10304 = vmul.f32 %v9582, 0.1
    %v10305 = vmul.f32 %v9585, 0.1
    %v10306 = vmul.f32 %v9590, 0.1
    %v10307 = vmul.f32 %v9593, 0.1
    %v10308 = vmul.f32 %v9598, 0.1
    %v10309 = vmul.f32 %v9601, 0.1
    %v10310 = vmul.f32 %v9606, 0.1
    %v10311 = vmul.f32 %v9609, 0.1
    %v10312 = vmul.f32 %v9614, 0.1
    %v10313 = vmul.f32 %v9617, 0.1
    %v10314 = vmul.f32 %v9622, 0.1
    %v10315 = vmul.f32 %v9625, 0.1
    %v10316 = vmul.f32 %v9630, 0.1
    %v10317 = vmul.f32 %v9633, 0.1
    %v10318 = vmul.f32 %v9638, 0.1
    %v10319 = vmul.f32 %v9641, 0.1
    %v10320 = vmul.f32 %v9646, 0.1
    %v10321 = vmul.f32 %v9649, 0.1
    %v10322 = vmul.f32 %v9654, 0.1
    %v10323 = vmul.f32 %v9657, 0.1
    %v10324 = vmul.f32 %v9662, 0.1
    %v10325 = vmul.f32 %v9665, 0.1
    %v10326 = vmul.f32 %v9670, 0.1
    %v10327 = vmul.f32 %v9673, 0.1
    %v10328 = vmul.f32 %v9678, 0.1
    %v10329 = vmul.f32 %v9681, 0.1
    %v10330 = vmul.f32 %v9686, 0.1
    %v10331 = vmul.f32 %v9689, 0.1
    %v10332 = vmul.f32 %v9694, 0.1
    %v10333 = vmul.f32 %v9697, 0.1
    %v10334 = vmul.f32 %v9702, 0.1
    %v10335 = vmul.f32 %v9705, 0.1
    %v10336 = vmul.f32 %v9710, 0.1
    %v10337 = vmul.f32 %v9713, 0.1
    %v10338 = vmul.f32 %v9718, 0.1
    %v10339 = vmul.f32 %v9721, 0.1
    %v10340 = vmul.f32 %v9726, 0.1
    %v10341 = vmul.f32 %v9729, 0.1
    %v10342 = vmul.f32 %v9734, 0.1
    %v10343 = vmul.f32 %v9737, 0.1
    %v10344 = vmul.f32 %v9742, 0.1
    %v10345 = vmul.f32 %v9745, 0.1
    %v10346 = vmul.f32 %v9750, 0.1
    %v10347 = vmul.f32 %v9753, 0.1
    %v10348 = vmul.f32 %v9758, 0.1
    %v10349 = vmul.f32 %v9761, 0.1
    %v10350 = vmul.f32 %v9766, 0.1
    %v10351 = vmul.f32 %v9769, 0.1
    %v10352 = vmul.f32 %v9774, 0.1
    %v10353 = vmul.f32 %v9777, 0.1
    %v10354 = vmul.f32 %v9782, 0.1
    %v10355 = vmul.f32 %v9785, 0.1
    %v10356 = vmul.f32 %v9790, 0.1
    %v10357 = vmul.f32 %v9793, 0.1
    %v10358 = vmul.f32 %v9798, 0.1
    %v10359 = vmul.f32 %v9801, 0.1
    %v10360 = vmul.f32 %v9806, 0.1
    %v10361 = vmul.f32 %v9809, 0.1
    %v10362 = vmul.f32 %v9814, 0.1
    %v10363 = vmul.f32 %v9817, 0.1
    %v10364 = vmul.f32 %v9822, 0.1
    %v10365 = vmul.f32 %v9825, 0.1
    %v10366 = vmul.f32 %v9830, 0.1
    %v10367 = vmul.f32 %v9833, 0.1
    %v10368 = vmul.f32 %v9838, 0.1
    %v10369 = vmul.f32 %v9841, 0.1
    %v10370 = vmul.f32 %v9846, 0.1
    %v10371 = vmul.f32 %v9849, 0.1
    %v10372 = vmul.f32 %v9854, 0.1
    %v10373 = vmul.f32 %v9857, 0.1
    %v10374 = vmul.f32 %v9862, 0.1
    %v10375 = vmul.f32 %v9865, 0.1
    %v10376 = vmul.f32 %v9870, 0.1
    %v10377 = vmul.f32 %v9873, 0.1
    %v10378 = vmul.f32 %v9878, 0.1
    %v10379 = vmul.f32 %v9881, 0.1
    %v10380 = vmul.f32 %v9886, 0.1
    %v10381 = vmul.f32 %v9889, 0.1
    %v10382 = vmul.f32 %v9894, 0.1
    %v10383 = vmul.f32 %v9897, 0.1
    %v10384 = vmul.f32 %v9902, 0.1
    %v10385 = vmul.f32 %v9905, 0.1
    %v10386 = vmul.f32 %v9910, 0.1
    %v10387 = vmul.f32 %v9913, 0.1
    %v10388 = vmul.f32 %v9918, 0.1
    %v10389 = vmul.f32 %v9921, 0.1
    %v10390 = vmul.f32 %v9926, 0.1
    %v10391 = vmul.f32 %v9929, 0.1
    %v10392 = vmul.f32 %v9934, 0.1
    %v10393 = vmul.f32 %v9937, 0.1
    %v10394 = vmul.f32 %v9942, 0.1
    %v10395 = vmul.f32 %v9945, 0.1
    %v10396 = vmul.f32 %v9950, 0.1
    %v10397 = vmul.f32 %v9953, 0.1
    %v10398 = vmul.f32 %v9958, 0.1
    %v10399 = vmul.f32 %v9961, 0.1
    %v10400 = vmul.f32 %v9966, 0.1
    %v10401 = vmul.f32 %v9969, 0.1
    %v10402 = vmul.f32 %v9974, 0.1
    %v10403 = vmul.f32 %v9977, 0.1
    %v10404 = vmul.f32 %v9982, 0.1
    %v10405 = vmul.f32 %v9985, 0.1
    %v10406 = vmul.f32 %v9990, 0.1
    %v10407 = vmul.f32 %v9993, 0.1
    %v10408 = vmul.f32 %v9998, 0.1
    %v10409 = vmul.f32 %v10001, 0.1
    %v10410 = vmul.f32 %v10006, 0.1
    %v10411 = vmul.f32 %v10009, 0.1
    %v10412 = vmul.f32 %v10014, 0.1
    %v10413 = vmul.f32 %v10017, 0.1
    %v10414 = vmul.f32 %v10022, 0.1
    %v10415 = vmul.f32 %v10025, 0.1
    %v10416 = vmul.f32 %v10030, 0.1
    %v10417 = vmul.f32 %v10033, 0.1
    %v10418 = vmul.f32 %v10038, 0.1
    %v10419 = vmul.f32 %v10041, 0.1
    %v10420 = vmul.f32 %v10046, 0.1
    %v10421 = vmul.f32 %v10049, 0.1
    %v10422 = vmul.f32 %v10054, 0.1
    %v10423 = vmul.f32 %v10057, 0.1
    %v10424 = vmul.f32 %v10062, 0.1
    %v10425 = vmul.f32 %v10065, 0.1
    %v10426 = vmul.f32 %v10070, 0.1
    %v10427 = vmul.f32 %v10073, 0.1
    %v10428 = vmul.f32 %v10078, 0.1
    %v10429 = vmul.f32 %v10081, 0.1
    %v10430 = vmul.f32 %v10086, 0.1
    %v10431 = vmul.f32 %v10089, 0.1
    %v10432 = vmul.f32 %v10094, 0.1
    %v10433 = vmul.f32 %v10097, 0.1
    %v10434 = vmul.f32 %v10102, 0.1
    %v10435 = vmul.f32 %v10105, 0.1
    %v10436 = vmul.f32 %v10110, 0.1
    %v10437 = vmul.f32 %v10113, 0.1
    %v10438 = vmul.f32 %v10118, 0.1
    %v10439 = vmul.f32 %v10121, 0.1
    %v10440 = vmul.f32 %v10126, 0.1
    %v10441 = vmul.f32 %v10129, 0.1
    %v10442 = vmul.f32 %v10134, 0.1
    %v10443 = vmul.f32 %v10137, 0.1
    %v10444 = vmul.f32 %v10142, 0.1
    %v10445 = vmul.f32 %v10145, 0.1
    %v10446 = vmul.f32 %v10150, 0.1
    %v10447 = vmul.f32 %v10153, 0.1
    %v10448 = vmul.f32 %v10158, 0.1
    %v10449 = vmul.f32 %v10161, 0.1
    %v10450 = vmul.f32 %v10166, 0.1
    %v10451 = vmul.f32 %v10169, 0.1
    %v10452 = vmul.f32 %v10174, 0.1
    %v10453 = vmul.f32 %v10177, 0.1
    %v10454 = vmul.f32 %v10182, 0.1
    %v10455 = vmul.f32 %v10185, 0.1
    %v10456 = vmul.f32 %v10190, 0.1
    %v10457 = vmul.f32 %v10193, 0.1
    %v10458 = vmul.f32 %v10198, 0.1
    %v10459 = vmul.f32 %v10201, 0.1
    %v10460 = vmax.f32 %v9182, %v10204
    %v10461 = vmax.f32 %v9185, %v10205
    %v10462 = vmax.f32 %v9190, %v10206
    %v10463 = vmax.f32 %v9193, %v10207
    %v10464 = vmax.f32 %v9198, %v10208
    %v10465 = vmax.f32 %v9201, %v10209
    %v10466 = vmax.f32 %v9206, %v10210
    %v10467 = vmax.f32 %v9209, %v10211
    %v10468 = vmax.f32 %v9214, %v10212
    %v10469 = vmax.f32 %v9217, %v10213
    %v10470 = vmax.f32 %v9222, %v10214
    %v10471 = vmax.f32 %v9225, %v10215
    %v10472 = vmax.f32 %v9230, %v10216
    %v10473 = vmax.f32 %v9233, %v10217
    %v10474 = vmax.f32 %v9238, %v10218
    %v10475 = vmax.f32 %v9241, %v10219
    %v10476 = vmax.f32 %v9246, %v10220
    %v10477 = vmax.f32 %v9249, %v10221
    %v10478 = vmax.f32 %v9254, %v10222
    %v10479 = vmax.f32 %v9257, %v10223
    %v10480 = vmax.f32 %v9262, %v10224
    %v10481 = vmax.f32 %v9265, %v10225
    %v10482 = vmax.f32 %v9270, %v10226
    %v10483 = vmax.f32 %v9273, %v10227
    %v10484 = vmax.f32 %v9278, %v10228
    %v10485 = vmax.f32 %v9281, %v10229
    %v10486 = vmax.f32 %v9286, %v10230
    %v10487 = vmax.f32 %v9289, %v10231
    %v10488 = vmax.f32 %v9294, %v10232
    %v10489 = vmax.f32 %v9297, %v10233
    %v10490 = vmax.f32 %v9302, %v10234
    %v10491 = vmax.f32 %v9305, %v10235
    %v10492 = vmax.f32 %v9310, %v10236
    %v10493 = vmax.f32 %v9313, %v10237
    %v10494 = vmax.f32 %v9318, %v10238
    %v10495 = vmax.f32 %v9321, %v10239
    %v10496 = vmax.f32 %v9326, %v10240
    %v10497 = vmax.f32 %v9329, %v10241
    %v10498 = vmax.f32 %v9334, %v10242
    %v10499 = vmax.f32 %v9337, %v10243
    %v10500 = vmax.f32 %v9342, %v10244
    %v10501 = vmax.f32 %v9345, %v10245
    %v10502 = vmax.f32 %v9350, %v10246
    %v10503 = vmax.f32 %v9353, %v10247
    %v10504 = vmax.f32 %v9358, %v10248
    %v10505 = vmax.f32 %v9361, %v10249
    %v10506 = vmax.f32 %v9366, %v10250
    %v10507 = vmax.f32 %v9369, %v10251
    %v10508 = vmax.f32 %v9374, %v10252
    %v10509 = vmax.f32 %v9377, %v10253
    %v10510 = vmax.f32 %v9382, %v10254
    %v10511 = vmax.f32 %v9385, %v10255
    %v10512 = vmax.f32 %v9390, %v10256
    %v10513 = vmax.f32 %v9393, %v10257
    %v10514 = vmax.f32 %v9398, %v10258
    %v10515 = vmax.f32 %v9401, %v10259
    %v10516 = vmax.f32 %v9406, %v10260
    %v10517 = vmax.f32 %v9409, %v10261
    %v10518 = vmax.f32 %v9414, %v10262
    %v10519 = vmax.f32 %v9417, %v10263
    %v10520 = vmax.f32 %v9422, %v10264
    %v10521 = vmax.f32 %v9425, %v10265
    %v10522 = vmax.f32 %v9430, %v10266
    %v10523 = vmax.f32 %v9433, %v10267
    %v10524 = vmax.f32 %v9438, %v10268
    %v10525 = vmax.f32 %v9441, %v10269
    %v10526 = vmax.f32 %v9446, %v10270
    %v10527 = vmax.f32 %v9449, %v10271
    %v10528 = vmax.f32 %v9454, %v10272
    %v10529 = vmax.f32 %v9457, %v10273
    %v10530 = vmax.f32 %v9462, %v10274
    %v10531 = vmax.f32 %v9465, %v10275
    %v10532 = vmax.f32 %v9470, %v10276
    %v10533 = vmax.f32 %v9473, %v10277
    %v10534 = vmax.f32 %v9478, %v10278
    %v10535 = vmax.f32 %v9481, %v10279
    %v10536 = vmax.f32 %v9486, %v10280
    %v10537 = vmax.f32 %v9489, %v10281
    %v10538 = vmax.f32 %v9494, %v10282
    %v10539 = vmax.f32 %v9497, %v10283
    %v10540 = vmax.f32 %v9502, %v10284
    %v10541 = vmax.f32 %v9505, %v10285
    %v10542 = vmax.f32 %v9510, %v10286
    %v10543 = vmax.f32 %v9513, %v10287
    %v10544 = vmax.f32 %v9518, %v10288
    %v10545 = vmax.f32 %v9521, %v10289
    %v10546 = vmax.f32 %v9526, %v10290
    %v10547 = vmax.f32 %v9529, %v10291
    %v10548 = vmax.f32 %v9534, %v10292
    %v10549 = vmax.f32 %v9537, %v10293
    %v10550 = vmax.f32 %v9542, %v10294
    %v10551 = vmax.f32 %v9545, %v10295
    %v10552 = vmax.f32 %v9550, %v10296
    %v10553 = vmax.f32 %v9553, %v10297
    %v10554 = vmax.f32 %v9558, %v10298
    %v10555 = vmax.f32 %v9561, %v10299
    %v10556 = vmax.f32 %v9566, %v10300
    %v10557 = vmax.f32 %v9569, %v10301
    %v10558 = vmax.f32 %v9574, %v10302
    %v10559 = vmax.f32 %v9577, %v10303
    %v10560 = vmax.f32 %v9582, %v10304
    %v10561 = vmax.f32 %v9585, %v10305
    %v10562 = vmax.f32 %v9590, %v10306
    %v10563 = vmax.f32 %v9593, %v10307
    %v10564 = vmax.f32 %v9598, %v10308
    %v10565 = vmax.f32 %v9601, %v10309
    %v10566 = vmax.f32 %v9606, %v10310
    %v10567 = vmax.f32 %v9609, %v10311
    %v10568 = vmax.f32 %v9614, %v10312
    %v10569 = vmax.f32 %v9617, %v10313
    %v10570 = vmax.f32 %v9622, %v10314
    %v10571 = vmax.f32 %v9625, %v10315
    %v10572 = vmax.f32 %v9630, %v10316
    %v10573 = vmax.f32 %v9633, %v10317
    %v10574 = vmax.f32 %v9638, %v10318
    %v10575 = vmax.f32 %v9641, %v10319
    %v10576 = vmax.f32 %v9646, %v10320
    %v10577 = vmax.f32 %v9649, %v10321
    %v10578 = vmax.f32 %v9654, %v10322
    %v10579 = vmax.f32 %v9657, %v10323
    %v10580 = vmax.f32 %v9662, %v10324
    %v10581 = vmax.f32 %v9665, %v10325
    %v10582 = vmax.f32 %v9670, %v10326
    %v10583 = vmax.f32 %v9673, %v10327
    %v10584 = vmax.f32 %v9678, %v10328
    %v10585 = vmax.f32 %v9681, %v10329
    %v10586 = vmax.f32 %v9686, %v10330
    %v10587 = vmax.f32 %v9689, %v10331
    %v10588 = vmax.f32 %v9694, %v10332
    %v10589 = vmax.f32 %v9697, %v10333
    %v10590 = vmax.f32 %v9702, %v10334
    %v10591 = vmax.f32 %v9705, %v10335
    %v10592 = vmax.f32 %v9710, %v10336
    %v10593 = vmax.f32 %v9713, %v10337
    %v10594 = vmax.f32 %v9718, %v10338
    %v10595 = vmax.f32 %v9721, %v10339
    %v10596 = vmax.f32 %v9726, %v10340
    %v10597 = vmax.f32 %v9729, %v10341
    %v10598 = vmax.f32 %v9734, %v10342
    %v10599 = vmax.f32 %v9737, %v10343
    %v10600 = vmax.f32 %v9742, %v10344
    %v10601 = vmax.f32 %v9745, %v10345
    %v10602 = vmax.f32 %v9750, %v10346
    %v10603 = vmax.f32 %v9753, %v10347
    %v10604 = vmax.f32 %v9758, %v10348
    %v10605 = vmax.f32 %v9761, %v10349
    %v10606 = vmax.f32 %v9766, %v10350
    %v10607 = vmax.f32 %v9769, %v10351
    %v10608 = vmax.f32 %v9774, %v10352
    %v10609 = vmax.f32 %v9777, %v10353
    %v10610 = vmax.f32 %v9782, %v10354
    %v10611 = vmax.f32 %v9785, %v10355
    %v10612 = vmax.f32 %v9790, %v10356
    %v10613 = vmax.f32 %v9793, %v10357
    %v10614 = vmax.f32 %v9798, %v10358
    %v10615 = vmax.f32 %v9801, %v10359
    %v10616 = vmax.f32 %v9806, %v10360
    %v10617 = vmax.f32 %v9809, %v10361
    %v10618 = vmax.f32 %v9814, %v10362
    %v10619 = vmax.f32 %v9817, %v10363
    %v10620 = vmax.f32 %v9822, %v10364
    %v10621 = vmax.f32 %v9825, %v10365
    %v10622 = vmax.f32 %v9830, %v10366
    %v10623 = vmax.f32 %v9833, %v10367
    %v10624 = vmax.f32 %v9838, %v10368
    %v10625 = vmax.f32 %v9841, %v10369
    %v10626 = vmax.f32 %v9846, %v10370
    %v10627 = vmax.f32 %v9849, %v10371
    %v10628 = vmax.f32 %v9854, %v10372
    %v10629 = vmax.f32 %v9857, %v10373
    %v10630 = vmax.f32 %v9862, %v10374
    %v10631 = vmax.f32 %v9865, %v10375
    %v10632 = vmax.f32 %v9870, %v10376
    %v10633 = vmax.f32 %v9873, %v10377
    %v10634 = vmax.f32 %v9878, %v10378
    %v10635 = vmax.f32 %v9881, %v10379
    %v10636 = vmax.f32 %v9886, %v10380
    %v10637 = vmax.f32 %v9889, %v10381
    %v10638 = vmax.f32 %v9894, %v10382
    %v10639 = vmax.f32 %v9897, %v10383
    %v10640 = vmax.f32 %v9902, %v10384
    %v10641 = vmax.f32 %v9905, %v10385
    %v10642 = vmax.f32 %v9910, %v10386
    %v10643 = vmax.f32 %v9913, %v10387
    %v10644 = vmax.f32 %v9918, %v10388
    %v10645 = vmax.f32 %v9921, %v10389
    %v10646 = vmax.f32 %v9926, %v10390
    %v10647 = vmax.f32 %v9929, %v10391
    %v10648 = vmax.f32 %v9934, %v10392
    %v10649 = vmax.f32 %v9937, %v10393
    %v10650 = vmax.f32 %v9942, %v10394
    %v10651 = vmax.f32 %v9945, %v10395
    %v10652 = vmax.f32 %v9950, %v10396
    %v10653 = vmax.f32 %v9953, %v10397
    %v10654 = vmax.f32 %v9958, %v10398
    %v10655 = vmax.f32 %v9961, %v10399
    %v10656 = vmax.f32 %v9966, %v10400
    %v10657 = vmax.f32 %v9969, %v10401
    %v10658 = vmax.f32 %v9974, %v10402
    %v10659 = vmax.f32 %v9977, %v10403
    %v10660 = vmax.f32 %v9982, %v10404
    %v10661 = vmax.f32 %v9985, %v10405
    %v10662 = vmax.f32 %v9990, %v10406
    %v10663 = vmax.f32 %v9993, %v10407
    %v10664 = vmax.f32 %v9998, %v10408
    %v10665 = vmax.f32 %v10001, %v10409
    %v10666 = vmax.f32 %v10006, %v10410
    %v10667 = vmax.f32 %v10009, %v10411
    %v10668 = vmax.f32 %v10014, %v10412
    %v10669 = vmax.f32 %v10017, %v10413
    %v10670 = vmax.f32 %v10022, %v10414
    %v10671 = vmax.f32 %v10025, %v10415
    %v10672 = vmax.f32 %v10030, %v10416
    %v10673 = vmax.f32 %v10033, %v10417
    %v10674 = vmax.f32 %v10038, %v10418
    %v10675 = vmax.f32 %v10041, %v10419
    %v10676 = vmax.f32 %v10046, %v10420
    %v10677 = vmax.f32 %v10049, %v10421
    %v10678 = vmax.f32 %v10054, %v10422
    %v10679 = vmax.f32 %v10057, %v10423
    %v10680 = vmax.f32 %v10062, %v10424
    %v10681 = vmax.f32 %v10065, %v10425
    %v10682 = vmax.f32 %v10070, %v10426
    %v10683 = vmax.f32 %v10073, %v10427
    %v10684 = vmax.f32 %v10078, %v10428
    %v10685 = vmax.f32 %v10081, %v10429
    %v10686 = vmax.f32 %v10086, %v10430
    %v10687 = vmax.f32 %v10089, %v10431
    %v10688 = vmax.f32 %v10094, %v10432
    %v10689 = vmax.f32 %v10097, %v10433
    %v10690 = vmax.f32 %v10102, %v10434
    %v10691 = vmax.f32 %v10105, %v10435
    %v10692 = vmax.f32 %v10110, %v10436
    %v10693 = vmax.f32 %v10113, %v10437
    %v10694 = vmax.f32 %v10118, %v10438
    %v10695 = vmax.f32 %v10121, %v10439
    %v10696 = vmax.f32 %v10126, %v10440
    %v10697 = vmax.f32 %v10129, %v10441
    %v10698 = vmax.f32 %v10134, %v10442
    %v10699 = vmax.f32 %v10137, %v10443
    %v10700 = vmax.f32 %v10142, %v10444
    %v10701 = vmax.f32 %v10145, %v10445
    %v10702 = vmax.f32 %v10150, %v10446
    %v10703 = vmax.f32 %v10153, %v10447
    %v10704 = vmax.f32 %v10158, %v10448
    %v10705 = vmax.f32 %v10161, %v10449
    %v10706 = vmax.f32 %v10166, %v10450
    %v10707 = vmax.f32 %v10169, %v10451
    %v10708 = vmax.f32 %v10174, %v10452
    %v10709 = vmax.f32 %v10177, %v10453
    %v10710 = vmax.f32 %v10182, %v10454
    %v10711 = vmax.f32 %v10185, %v10455
    %v10712 = vmax.f32 %v10190, %v10456
    %v10713 = vmax.f32 %v10193, %v10457
    %v10714 = vmax.f32 %v10198, %v10458
    %v10715 = vmax.f32 %v10201, %v10459
    %v10716 = vmax.f32 %v10460, %v10461
    %v10717 = vmax.f32 %v10716, %v10462
    %v10718 = vmax.f32 %v10717, %v10463
    %v10719 = vmax.f32 %v10718, %v10464
    %v10720 = vmax.f32 %v10719, %v10465
    %v10721 = vmax.f32 %v10720, %v10466
    %v10722 = vmax.f32 %v10721, %v10467
    %v10723 = vmax.f32 %v10722, %v10468
    %v10724 = vmax.f32 %v10723, %v10469
    %v10725 = vmax.f32 %v10724, %v10470
    %v10726 = vmax.f32 %v10725, %v10471
    %v10727 = vmax.f32 %v10726, %v10472
    %v10728 = vmax.f32 %v10727, %v10473
    %v10729 = vmax.f32 %v10728, %v10474
    %v10730 = vmax.f32 %v10729, %v10475
    %v10731 = vmax.f32 %v10730, %v10476
    %v10732 = vmax.f32 %v10731, %v10477
    %v10733 = vmax.f32 %v10732, %v10478
    %v10734 = vmax.f32 %v10733, %v10479
    %v10735 = vmax.f32 %v10734, %v10480
    %v10736 = vmax.f32 %v10735, %v10481
    %v10737 = vmax.f32 %v10736, %v10482
    %v10738 = vmax.f32 %v10737, %v10483
    %v10739 = vmax.f32 %v10738, %v10484
    %v10740 = vmax.f32 %v10739, %v10485
    %v10741 = vmax.f32 %v10740, %v10486
    %v10742 = vmax.f32 %v10741, %v10487
    %v10743 = vmax.f32 %v10742, %v10488
    %v10744 = vmax.f32 %v10743, %v10489
    %v10745 = vmax.f32 %v10744, %v10490
    %v10746 = vmax.f32 %v10745, %v10491
    %v10747 = vrot.slane %v10746, 4
    %v10748 = vmax.f32 %v10746, %v10747
    %v10749 = vrot.slane %v10748, 2
    %v10750 = vmax.f32 %v10748, %v10749
    %v10751 = vrot.slane %v10750, 1
    %v10752 = vmax.f32 %v10750, %v10751
    %v10753 = vmax.f32 %v10492, %v10493
    %v10754 = vmax.f32 %v10753, %v10494
    %v10755 = vmax.f32 %v10754, %v10495
    %v10756 = vmax.f32 %v10755, %v10496
    %v10757 = vmax.f32 %v10756, %v10497
    %v10758 = vmax.f32 %v10757, %v10498
    %v10759 = vmax.f32 %v10758, %v10499
    %v10760 = vmax.f32 %v10759, %v10500
    %v10761 = vmax.f32 %v10760, %v10501
    %v10762 = vmax.f32 %v10761, %v10502
    %v10763 = vmax.f32 %v10762, %v10503
    %v10764 = vmax.f32 %v10763, %v10504
    %v10765 = vmax.f32 %v10764, %v10505
    %v10766 = vmax.f32 %v10765, %v10506
    %v10767 = vmax.f32 %v10766, %v10507
    %v10768 = vmax.f32 %v10767, %v10508
    %v10769 = vmax.f32 %v10768, %v10509
    %v10770 = vmax.f32 %v10769, %v10510
    %v10771 = vmax.f32 %v10770, %v10511
    %v10772 = vmax.f32 %v10771, %v10512
    %v10773 = vmax.f32 %v10772, %v10513
    %v10774 = vmax.f32 %v10773, %v10514
    %v10775 = vmax.f32 %v10774, %v10515
    %v10776 = vmax.f32 %v10775, %v10516
    %v10777 = vmax.f32 %v10776, %v10517
    %v10778 = vmax.f32 %v10777, %v10518
    %v10779 = vmax.f32 %v10778, %v10519
    %v10780 = vmax.f32 %v10779, %v10520
    %v10781 = vmax.f32 %v10780, %v10521
    %v10782 = vmax.f32 %v10781, %v10522
    %v10783 = vmax.f32 %v10782, %v10523
    %v10784 = vrot.slane %v10783, 4
    %v10785 = vmax.f32 %v10783, %v10784
    %v10786 = vrot.slane %v10785, 2
    %v10787 = vmax.f32 %v10785, %v10786
    %v10788 = vrot.slane %v10787, 1
    %v10789 = vmax.f32 %v10787, %v10788
    %v10790 = vmax.f32 %v10524, %v10525
    %v10791 = vmax.f32 %v10790, %v10526
    %v10792 = vmax.f32 %v10791, %v10527
    %v10793 = vmax.f32 %v10792, %v10528
    %v10794 = vmax.f32 %v10793, %v10529
    %v10795 = vmax.f32 %v10794, %v10530
    %v10796 = vmax.f32 %v10795, %v10531
    %v10797 = vmax.f32 %v10796, %v10532
    %v10798 = vmax.f32 %v10797, %v10533
    %v10799 = vmax.f32 %v10798, %v10534
    %v10800 = vmax.f32 %v10799, %v10535
    %v10801 = vmax.f32 %v10800, %v10536
    %v10802 = vmax.f32 %v10801, %v10537
    %v10803 = vmax.f32 %v10802, %v10538
    %v10804 = vmax.f32 %v10803, %v10539
    %v10805 = vmax.f32 %v10804, %v10540
    %v10806 = vmax.f32 %v10805, %v10541
    %v10807 = vmax.f32 %v10806, %v10542
    %v10808 = vmax.f32 %v10807, %v10543
    %v10809 = vmax.f32 %v10808, %v10544
    %v10810 = vmax.f32 %v10809, %v10545
    %v10811 = vmax.f32 %v10810, %v10546
    %v10812 = vmax.f32 %v10811, %v10547
    %v10813 = vmax.f32 %v10812, %v10548
    %v10814 = vmax.f32 %v10813, %v10549
    %v10815 = vmax.f32 %v10814, %v10550
    %v10816 = vmax.f32 %v10815, %v10551
    %v10817 = vmax.f32 %v10816, %v10552
    %v10818 = vmax.f32 %v10817, %v10553
    %v10819 = vmax.f32 %v10818, %v10554
    %v10820 = vmax.f32 %v10819, %v10555
    %v10821 = vrot.slane %v10820, 4
    %v10822 = vmax.f32 %v10820, %v10821
    %v10823 = vrot.slane %v10822, 2
    %v10824 = vmax.f32 %v10822, %v10823
    %v10825 = vrot.slane %v10824, 1
    %v10826 = vmax.f32 %v10824, %v10825
    %v10827 = vmax.f32 %v10556, %v10557
    %v10828 = vmax.f32 %v10827, %v10558
    %v10829 = vmax.f32 %v10828, %v10559
    %v10830 = vmax.f32 %v10829, %v10560
    %v10831 = vmax.f32 %v10830, %v10561
    %v10832 = vmax.f32 %v10831, %v10562
    %v10833 = vmax.f32 %v10832, %v10563
    %v10834 = vmax.f32 %v10833, %v10564
    %v10835 = vmax.f32 %v10834, %v10565
    %v10836 = vmax.f32 %v10835, %v10566
    %v10837 = vmax.f32 %v10836, %v10567
    %v10838 = vmax.f32 %v10837, %v10568
    %v10839 = vmax.f32 %v10838, %v10569
    %v10840 = vmax.f32 %v10839, %v10570
    %v10841 = vmax.f32 %v10840, %v10571
    %v10842 = vmax.f32 %v10841, %v10572
    %v10843 = vmax.f32 %v10842, %v10573
    %v10844 = vmax.f32 %v10843, %v10574
    %v10845 = vmax.f32 %v10844, %v10575
    %v10846 = vmax.f32 %v10845, %v10576
    %v10847 = vmax.f32 %v10846, %v10577
    %v10848 = vmax.f32 %v10847, %v10578
    %v10849 = vmax.f32 %v10848, %v10579
    %v10850 = vmax.f32 %v10849, %v10580
    %v10851 = vmax.f32 %v10850, %v10581
    %v10852 = vmax.f32 %v10851, %v10582
    %v10853 = vmax.f32 %v10852, %v10583
    %v10854 = vmax.f32 %v10853, %v10584
    %v10855 = vmax.f32 %v10854, %v10585
    %v10856 = vmax.f32 %v10855, %v10586
    %v10857 = vmax.f32 %v10856, %v10587
    %v10858 = vrot.slane %v10857, 4
    %v10859 = vmax.f32 %v10857, %v10858
    %v10860 = vrot.slane %v10859, 2
    %v10861 = vmax.f32 %v10859, %v10860
    %v10862 = vrot.slane %v10861, 1
    %v10863 = vmax.f32 %v10861, %v10862
    %v10864 = vmax.f32 %v10588, %v10589
    %v10865 = vmax.f32 %v10864, %v10590
    %v10866 = vmax.f32 %v10865, %v10591
    %v10867 = vmax.f32 %v10866, %v10592
    %v10868 = vmax.f32 %v10867, %v10593
    %v10869 = vmax.f32 %v10868, %v10594
    %v10870 = vmax.f32 %v10869, %v10595
    %v10871 = vmax.f32 %v10870, %v10596
    %v10872 = vmax.f32 %v10871, %v10597
    %v10873 = vmax.f32 %v10872, %v10598
    %v10874 = vmax.f32 %v10873, %v10599
    %v10875 = vmax.f32 %v10874, %v10600
    %v10876 = vmax.f32 %v10875, %v10601
    %v10877 = vmax.f32 %v10876, %v10602
    %v10878 = vmax.f32 %v10877, %v10603
    %v10879 = vmax.f32 %v10878, %v10604
    %v10880 = vmax.f32 %v10879, %v10605
    %v10881 = vmax.f32 %v10880, %v10606
    %v10882 = vmax.f32 %v10881, %v10607
    %v10883 = vmax.f32 %v10882, %v10608
    %v10884 = vmax.f32 %v10883, %v10609
    %v10885 = vmax.f32 %v10884, %v10610
    %v10886 = vmax.f32 %v10885, %v10611
    %v10887 = vmax.f32 %v10886, %v10612
    %v10888 = vmax.f32 %v10887, %v10613
    %v10889 = vmax.f32 %v10888, %v10614
    %v10890 = vmax.f32 %v10889, %v10615
    %v10891 = vmax.f32 %v10890, %v10616
    %v10892 = vmax.f32 %v10891, %v10617
    %v10893 = vmax.f32 %v10892, %v10618
    %v10894 = vmax.f32 %v10893, %v10619
    %v10895 = vrot.slane %v10894, 4
    %v10896 = vmax.f32 %v10894, %v10895
    %v10897 = vrot.slane %v10896, 2
    %v10898 = vmax.f32 %v10896, %v10897
    %v10899 = vrot.slane %v10898, 1
    %v10900 = vmax.f32 %v10898, %v10899
    %v10901 = vmax.f32 %v10620, %v10621
    %v10902 = vmax.f32 %v10901, %v10622
    %v10903 = vmax.f32 %v10902, %v10623
    %v10904 = vmax.f32 %v10903, %v10624
    %v10905 = vmax.f32 %v10904, %v10625
    %v10906 = vmax.f32 %v10905, %v10626
    %v10907 = vmax.f32 %v10906, %v10627
    %v10908 = vmax.f32 %v10907, %v10628
    %v10909 = vmax.f32 %v10908, %v10629
    %v10910 = vmax.f32 %v10909, %v10630
    %v10911 = vmax.f32 %v10910, %v10631
    %v10912 = vmax.f32 %v10911, %v10632
    %v10913 = vmax.f32 %v10912, %v10633
    %v10914 = vmax.f32 %v10913, %v10634
    %v10915 = vmax.f32 %v10914, %v10635
    %v10916 = vmax.f32 %v10915, %v10636
    %v10917 = vmax.f32 %v10916, %v10637
    %v10918 = vmax.f32 %v10917, %v10638
    %v10919 = vmax.f32 %v10918, %v10639
    %v10920 = vmax.f32 %v10919, %v10640
    %v10921 = vmax.f32 %v10920, %v10641
    %v10922 = vmax.f32 %v10921, %v10642
    %v10923 = vmax.f32 %v10922, %v10643
    %v10924 = vmax.f32 %v10923, %v10644
    %v10925 = vmax.f32 %v10924, %v10645
    %v10926 = vmax.f32 %v10925, %v10646
    %v10927 = vmax.f32 %v10926, %v10647
    %v10928 = vmax.f32 %v10927, %v10648
    %v10929 = vmax.f32 %v10928, %v10649
    %v10930 = vmax.f32 %v10929, %v10650
    %v10931 = vmax.f32 %v10930, %v10651
    %v10932 = vrot.slane %v10931, 4
    %v10933 = vmax.f32 %v10931, %v10932
    %v10934 = vrot.slane %v10933, 2
    %v10935 = vmax.f32 %v10933, %v10934
    %v10936 = vrot.slane %v10935, 1
    %v10937 = vmax.f32 %v10935, %v10936
    %v10938 = vmax.f32 %v10652, %v10653
    %v10939 = vmax.f32 %v10938, %v10654
    %v10940 = vmax.f32 %v10939, %v10655
    %v10941 = vmax.f32 %v10940, %v10656
    %v10942 = vmax.f32 %v10941, %v10657
    %v10943 = vmax.f32 %v10942, %v10658
    %v10944 = vmax.f32 %v10943, %v10659
    %v10945 = vmax.f32 %v10944, %v10660
    %v10946 = vmax.f32 %v10945, %v10661
    %v10947 = vmax.f32 %v10946, %v10662
    %v10948 = vmax.f32 %v10947, %v10663
    %v10949 = vmax.f32 %v10948, %v10664
    %v10950 = vmax.f32 %v10949, %v10665
    %v10951 = vmax.f32 %v10950, %v10666
    %v10952 = vmax.f32 %v10951, %v10667
    %v10953 = vmax.f32 %v10952, %v10668
    %v10954 = vmax.f32 %v10953, %v10669
    %v10955 = vmax.f32 %v10954, %v10670
    %v10956 = vmax.f32 %v10955, %v10671
    %v10957 = vmax.f32 %v10956, %v10672
    %v10958 = vmax.f32 %v10957, %v10673
    %v10959 = vmax.f32 %v10958, %v10674
    %v10960 = vmax.f32 %v10959, %v10675
    %v10961 = vmax.f32 %v10960, %v10676
    %v10962 = vmax.f32 %v10961, %v10677
    %v10963 = vmax.f32 %v10962, %v10678
    %v10964 = vmax.f32 %v10963, %v10679
    %v10965 = vmax.f32 %v10964, %v10680
    %v10966 = vmax.f32 %v10965, %v10681
    %v10967 = vmax.f32 %v10966, %v10682
    %v10968 = vmax.f32 %v10967, %v10683
    %v10969 = vrot.slane %v10968, 4
    %v10970 = vmax.f32 %v10968, %v10969
    %v10971 = vrot.slane %v10970, 2
    %v10972 = vmax.f32 %v10970, %v10971
    %v10973 = vrot.slane %v10972, 1
    %v10974 = vmax.f32 %v10972, %v10973
    %v10975 = vmax.f32 %v10684, %v10685
    %v10976 = vmax.f32 %v10975, %v10686
    %v10977 = vmax.f32 %v10976, %v10687
    %v10978 = vmax.f32 %v10977, %v10688
    %v10979 = vmax.f32 %v10978, %v10689
    %v10980 = vmax.f32 %v10979, %v10690
    %v10981 = vmax.f32 %v10980, %v10691
    %v10982 = vmax.f32 %v10981, %v10692
    %v10983 = vmax.f32 %v10982, %v10693
    %v10984 = vmax.f32 %v10983, %v10694
    %v10985 = vmax.f32 %v10984, %v10695
    %v10986 = vmax.f32 %v10985, %v10696
    %v10987 = vmax.f32 %v10986, %v10697
    %v10988 = vmax.f32 %v10987, %v10698
    %v10989 = vmax.f32 %v10988, %v10699
    %v10990 = vmax.f32 %v10989, %v10700
    %v10991 = vmax.f32 %v10990, %v10701
    %v10992 = vmax.f32 %v10991, %v10702
    %v10993 = vmax.f32 %v10992, %v10703
    %v10994 = vmax.f32 %v10993, %v10704
    %v10995 = vmax.f32 %v10994, %v10705
    %v10996 = vmax.f32 %v10995, %v10706
    %v10997 = vmax.f32 %v10996, %v10707
    %v10998 = vmax.f32 %v10997, %v10708
    %v10999 = vmax.f32 %v10998, %v10709
    %v11000 = vmax.f32 %v10999, %v10710
    %v11001 = vmax.f32 %v11000, %v10711
    %v11002 = vmax.f32 %v11001, %v10712
    %v11003 = vmax.f32 %v11002, %v10713
    %v11004 = vmax.f32 %v11003, %v10714
    %v11005 = vmax.f32 %v11004, %v10715
    %v11006 = vrot.slane %v11005, 4
    %v11007 = vmax.f32 %v11005, %v11006
    %v11008 = vrot.slane %v11007, 2
    %v11009 = vmax.f32 %v11007, %v11008
    %v11010 = vrot.slane %v11009, 1
    %v11011 = vmax.f32 %v11009, %v11010
    %p11012 = scmp.eq.s32.totalorder 0, 0
    // Predicated region
    $region58: #{tpu_custom_call.1} parent=1 // pred_check
      %p11013 = pneg %p11012
    $region59: #{tpu_custom_call.1} parent=1 // pred_check_branch
      %11015 = sbr.rel (%p11013) target = $region61
    $region60: #{tpu_custom_call.1} parent=1 // pred_region
      %vm11024 = vcmask 1041409
      %v11025 = vsel %vm11024, %v10789, %v10752
      %vm11026 = vcmask 1042434
      %v11027 = vsel %vm11026, %v10826, %v11025
      %vm11028 = vcmask 1043459
      %v11029 = vsel %vm11028, %v10863, %v11027
      %vm11030 = vcmask 1044484
      %v11031 = vsel %vm11030, %v10900, %v11029
      %vm11032 = vcmask 1045509
      %v11033 = vsel %vm11032, %v10937, %v11031
      %vm11034 = vcmask 1046534
      %v11035 = vsel %vm11034, %v10974, %v11033
      %vm11036 = vcmask 1047559
      %v11037 = vsel %vm11036, %v11011, %v11035
      %11039 = vst [vmem:[#allocation2] sm:$0xff] %v11037
    $region61: #{tpu_custom_call.1} parent=1 // pred_fallthru
      _
    %p11040 = scmp.gt.s32.totalorder 0, 0
    // Predicated region
    $region62: #{tpu_custom_call.1} parent=1 // pred_check
      %p11041 = pneg %p11040
    $region63: #{tpu_custom_call.1} parent=1 // pred_check_branch
      %11043 = sbr.rel (%p11041) target = $region65
    $region64: #{tpu_custom_call.1} parent=1 // pred_region
      %v11044 = vld [vmem:[#allocation2] sm:$0xff]
      %vm11053 = vcmask 1041409
      %v11054 = vsel %vm11053, %v10789, %v10752
      %vm11055 = vcmask 1042434
      %v11056 = vsel %vm11055, %v10826, %v11054
      %vm11057 = vcmask 1043459
      %v11058 = vsel %vm11057, %v10863, %v11056
      %vm11059 = vcmask 1044484
      %v11060 = vsel %vm11059, %v10900, %v11058
      %vm11061 = vcmask 1045509
      %v11062 = vsel %vm11061, %v10937, %v11060
      %vm11063 = vcmask 1046534
      %v11064 = vsel %vm11063, %v10974, %v11062
      %vm11065 = vcmask 1047559
      %v11066 = vsel %vm11065, %v11011, %v11064
      %v11068 = vmax.f32 %v11044, %v11066
      %11069 = vst [vmem:[#allocation2] sm:$0xff] %v11068
    $region65: #{tpu_custom_call.1} parent=1 // pred_fallthru
      _
    // Predicated region
    $region66: #{tpu_custom_call.1} parent=1 // pred_check
      %p11070 = pneg %p11012
    $region67: #{tpu_custom_call.1} parent=1 // pred_check_branch
      %11072 = sbr.rel (%p11070) target = $region69
    $region68: #{tpu_custom_call.1} parent=1 // pred_region
      %v11073 = vld [vmem:[#allocation2] sm:$0xff]
      %v11074 = vpack.c.bf16 %v11073, %v11073
      %v11075 = vld [vmem:[%s12] sm:$0xf]
      %v11076 = vld [vmem:[%s12 + $0x4] sm:$0xf]
      %v11077 = vld [vmem:[%s12 + $0x8] sm:$0xf]
      %v11078 = vld [vmem:[%s12 + $0xc] sm:$0xf]
      %v11079 = vld [vmem:[%s12 + $0x10] sm:$0xf]
      %v11080 = vld [vmem:[%s12 + $0x14] sm:$0xf]
      %v11081 = vld [vmem:[%s12 + $0x18] sm:$0xf]
      %v11082 = vld [vmem:[%s12 + $0x1c] sm:$0xf]
      %v11083 = vld [vmem:[%s12 + $0x20] sm:$0xf]
      %v11084 = vld [vmem:[%s12 + $0x24] sm:$0xf]
      %v11085 = vld [vmem:[%s12 + $0x28] sm:$0xf]
      %v11086 = vld [vmem:[%s12 + $0x2c] sm:$0xf]
      %v11087 = vld [vmem:[%s12 + $0x30] sm:$0xf]
      %v11088 = vld [vmem:[%s12 + $0x34] sm:$0xf]
      %v11089 = vld [vmem:[%s12 + $0x38] sm:$0xf]
      %v11090 = vld [vmem:[%s12 + $0x3c] sm:$0xf]
      %v11091 = vld [vmem:[%s13] sm:$0x1]
      %v11093 = vlaneseq
      %v11094 = vshrl.u32 %v11093, 7
      %v11095 = vsub.s32 0, %v11094
      %v11096 = vrot.slane %v11091, %v11095
      %v11114 = vunpack.c.l.b16 %v11075
      %v11115 = vunpack.c.l.b16 %v11076
      %v11116 = vunpack.c.l.b16 %v11077
      %v11117 = vunpack.c.l.b16 %v11078
      %v11118 = vunpack.c.l.b16 %v11079
      %v11119 = vunpack.c.l.b16 %v11080
      %v11120 = vunpack.c.l.b16 %v11081
      %v11121 = vunpack.c.l.b16 %v11082
      %v11122 = vunpack.c.l.b16 %v11083
      %v11123 = vunpack.c.l.b16 %v11084
      %v11124 = vunpack.c.l.b16 %v11085
      %v11125 = vunpack.c.l.b16 %v11086
      %v11126 = vunpack.c.l.b16 %v11087
      %v11127 = vunpack.c.l.b16 %v11088
      %v11128 = vunpack.c.l.b16 %v11089
      %v11129 = vunpack.c.l.b16 %v11090
      %v11130 = vpack.c.b16 %v11115, %v11114
      %v11131 = vpack.c.b16 %v11117, %v11116
      %v11132 = vpack.c.b16 %v11119, %v11118
      %v11133 = vpack.c.b16 %v11121, %v11120
      %v11134 = vpack.c.b16 %v11123, %v11122
      %v11135 = vpack.c.b16 %v11125, %v11124
      %v11136 = vpack.c.b16 %v11127, %v11126
      %v11137 = vpack.c.b16 %v11129, %v11128
      %11146 = vmatprep.subr.bf16.mxu0 0
      %11147 = vmatpush1.bf16.msra.mxu0 %v11130
      %11148 = vmatprep.subr.bf16.mxu0 0
      %11149 = vmatpush1.bf16.msra.mxu0 %v11131
      %11150 = vmatprep.subr.bf16.mxu0 0
      %11151 = vmatpush1.bf16.msra.mxu0 %v11132
      %11152 = vmatprep.subr.bf16.mxu0 0
      %11153 = vmatpush1.bf16.msra.mxu0 %v11133
      %11154 = vmatprep.subr.bf16.mxu0 0
      %11155 = vmatpush1.bf16.msra.mxu0 %v11134
      %11156 = vmatprep.subr.bf16.mxu0 0
      %11157 = vmatpush1.bf16.msra.mxu0 %v11135
      %11158 = vmatprep.subr.bf16.mxu0 0
      %11159 = vmatpush1.bf16.msra.mxu0 %v11136
      %11160 = vmatprep.subr.bf16.mxu0 0
      %11161 = vmatpush1.bf16.msra.mxu0 %v11137
      %11162 = vmatprep.subr.bf16.mxu0 0
      %11163 = vmatpush1.bf16.msra.mxu0 0
      %11164 = vmatprep.subr.bf16.mxu0 0
      %11165 = vmatpush1.bf16.msra.mxu0 0
      %11166 = vmatprep.subr.bf16.mxu0 0
      %11167 = vmatpush1.bf16.msra.mxu0 0
      %11168 = vmatprep.subr.bf16.mxu0 0
      %11169 = vmatpush1.bf16.msra.mxu0 0
      %11170 = vmatprep.subr.bf16.mxu0 0
      %11171 = vmatpush1.bf16.msra.mxu0 0
      %11172 = vmatprep.subr.bf16.mxu0 0
      %11173 = vmatpush1.bf16.msra.mxu0 0
      %11174 = vmatprep.subr.bf16.mxu0 0
      %11175 = vmatpush1.bf16.msra.mxu0 0
      %11176 = vmatprep.subr.bf16.mxu0 0
      %11177 = vmatpush1.bf16.msra.mxu0 0
      %11178 = vmatprep.mubr.bf16.mxu0 0
      %11179 = vmatmul.mubr.bf16.gmra.mrb[0].mxu0 %v11074
      %v11180 = vpop.f32.mrb[0].mxu0
      %v11181 = vadd.f32 %v11096, %v11180
      %v11182 = vpop.f32.mrb[0].mxu0
      %v11183 = vpop.f32.mrb[0].mxu0
      %v11184 = vpop.f32.mrb[0].mxu0
      %11185 = vdwg.mxu0
      %v11186 = vmul.f32 %v11181, 0.5
      %v11187 = vmul.f32 %v11186, 1.442695
      %v11188 = vpow.pop %v11187
      %v11189 = vld [vmem:[%s1] sm:$0xff]
      %11191 = vrot.lane.b32.xlu0 %v11189, 64
      %v11192 = vpop.permute.xlu0 %11191
      %v11194 = vmul.f32 %v11188, %v11192
      %11196 = vrot.lane.b32.xlu0 %v11194, 64
      %v11197 = vpop.permute.xlu0 %11196
      %v11199 = vadd.f32 %v11181, %v11197
      %v11200 = vsel %vm2946, %v11199, 0.0
      %11201 = vst [vmem:[#allocation3] sm:$0xff] %v11181
      %11202 = vst [vmem:[#allocation3 + $0x8] sm:$0xff] %v11200
    $region69: #{tpu_custom_call.1} parent=1 // pred_fallthru
      _
    // Predicated region
    $region70: #{tpu_custom_call.1} parent=1 // pred_check
      _
    $region71: #{tpu_custom_call.1} parent=1 // pred_check_branch
      %11204 = sbr.rel (0) target = $region73
    $region72: #{tpu_custom_call.1} parent=1 // pred_region
      %s11206 = ssub.s32 256, 256
      %11207 = vsyncadd [#allocation4], %s11206
      %s11209 = sshll.u32 [#allocation3], 4
      %s11210 = int_to_ptr.vmem [resolvable:$true] %s11209
      %11212 = dma.vmem_to_hbm [thread:$0]  %s11210, 256, %s14, [#allocation4]
    $region73: #{tpu_custom_call.1} parent=1 // pred_fallthru
      _
    // Predicated region
    $region74: #{tpu_custom_call.1} parent=1 // pred_check
      _
    $region75: #{tpu_custom_call.1} parent=1 // pred_check_branch
      %11214 = sbr.rel (0) target = $region77
    $region76: #{tpu_custom_call.1} parent=1 // pred_region
      %11215 = dma.done [#allocation4], 256
    $region77: #{tpu_custom_call.1} parent=1 // pred_fallthru
      _
    %11216 = vsyncpa [#allocation4], 1

</llo_original>
